<compile_context>
chip_gen: v5e
topology: v5e:2x2
jax: 0.10.0
libtpu: 0.0.40
codegen_flags: <defaults>
</compile_context>

<pallas_src>
import math

import jax
import jax.numpy as jnp
from jax import lax
from jax.experimental import pallas as pl
from jax.experimental.pallas import tpu as pltpu

F32 = jnp.float32

# Eigen / XLA f32 erf rational approximation (odd numerator / even denominator).
_ERF_ALPHA = (-2.72614225801306e-10, 2.77068142495902e-08, -2.10102402082508e-06,
              -5.69250639462346e-05, -7.34990630326855e-04, -2.95459980854025e-03,
              -1.60960333262415e-02)
_ERF_BETA = (-1.45660718464996e-05, -2.13374055278905e-04, -1.68282697438203e-03,
             -7.37332916720468e-03, -1.42647390514189e-02)


def _recip(x):
    """1/x via EUP approx reciprocal + one Newton step (~f32 accurate, off the VPU slot)."""
    r = pl.reciprocal(x, approx=True)
    return r * (2.0 - x * r)


def _erf(x):
    # TODO(synk): exact torch.erf has no Pallas primitive; this rational approx is ~1e-7.
    x = jnp.clip(x, -4.0, 4.0)
    x2 = x * x
    p = x2 * _ERF_ALPHA[0] + _ERF_ALPHA[1]
    for c in _ERF_ALPHA[2:]:
        p = p * x2 + c
    p = p * x
    q = x2 * _ERF_BETA[0] + _ERF_BETA[1]
    for c in _ERF_BETA[2:]:
        q = q * x2 + c
    return p * _recip(q)


def _gelu_exact(x):
    return 0.5 * x * (1.0 + _erf(x * 0.7071067811865476))


# ----------------------------------------------------------------------------
# The fused forward kernel: one grid step == one full sequence (encoder -> blocks -> decoder)
# ----------------------------------------------------------------------------
def _make_fused_kernel(L, H, N2, nb):
    def kernel(x_ref, encw_ref, encb_ref,
               logdt_ref, logA_ref, Aim_ref, Cre_ref, Cim_ref,
               d_ref, mixw_ref, mixb_ref,
               decw_ref, decb_ref, out_ref):
        # ----- encoder: Linear(Din -> H) applied per timestep -----
        act = jnp.dot(x_ref[...], encw_ref[...],
                      preferred_element_type=F32) + encb_ref[...]          # (L, H)

        # Block-invariant causal masks (int32 index math), hoisted out of the block loop.
        lrow = lax.broadcasted_iota(jnp.int32, (L, H), 0)
        masks = [lrow >= lag for lag in range(L)]                          # masks[0] unused

        for i in range(nb):                       # statically unrolled over the S4 blocks
            # ----- S4ConvKernel setup:  w = exp(dt*A),  C' = C*(exp(dtA)-1)/A  on (N2, H)
            dt = jnp.exp(logdt_ref[i])            # (1, H)
            a_re = -jnp.exp(logA_ref[i])          # (N2, H)   A = -exp(log_A_re) + i*A_im
            a_im = Aim_ref[i]
            dta_re = a_re * dt
            dta_im = a_im * dt
            er = jnp.exp(dta_re)                  # only 3*N2*H transcendentals per block
            wr = er * jnp.cos(dta_im)             # w = exp(dtA)
            wi = er * jnp.sin(dta_im)
            inv_den = _recip(a_re * a_re + a_im * a_im)
            e_re = wr - 1.0                       # exp(dtA) - 1
            e_im = wi
            q_re = (e_re * a_re + e_im * a_im) * inv_den     # (exp(dtA) - 1) / A
            q_im = (e_im * a_re - e_re * a_im) * inv_den
            c_re = Cre_ref[i]
            c_im = Cim_ref[i]
            cp_re = c_re * q_re - c_im * q_im     # C' = C * (exp(dtA) - 1) / A
            cp_im = c_re * q_im + c_im * q_re

            # Complex-power recurrence for cp*w^lag: two chains (even/odd lags, step w^2)
            # so the serial dependence chain is half as long.
            w2r = wr * wr - wi * wi
            w2i = 2.0 * wr * wi
            pe_r, pe_i = cp_re, cp_im                         # lags 0, 2, 4, ...
            po_r = cp_re * wr - cp_im * wi                    # lags 1, 3, 5, ...
            po_i = cp_re * wi + cp_im * wr

            # ----- causal conv  y[l] = sum_{lag<=l} k[lag] * act[l-lag]
            #       (== rfft(n=2L) conv truncated to L), unrolled roll+mask lag loop with
            #       two partial accumulators.  k[lag] = 2 * sum_n Re(cp * w^lag).
            y0 = act * (2.0 * jnp.sum(pe_r, axis=0, keepdims=True))        # lag 0
            y1 = jnp.zeros_like(act)
            for lag in range(1, L):
                if lag % 2 == 1:
                    kr = 2.0 * jnp.sum(po_r, axis=0, keepdims=True)
                    if lag + 2 < L:               # advance odd chain for its next lag
                        po_r, po_i = (po_r * w2r - po_i * w2i,
                                      po_r * w2i + po_i * w2r)
                else:
                    pe_r, pe_i = (pe_r * w2r - pe_i * w2i,    # advance even chain to `lag`
                                  pe_r * w2i + pe_i * w2r)
                    kr = 2.0 * jnp.sum(pe_r, axis=0, keepdims=True)
                shifted = jnp.where(masks[lag],
                                    pltpu.roll(act, shift=lag, axis=0), 0.0)
                if lag % 2 == 1:
                    y1 = y1 + kr * shifted
                else:
                    y0 = y0 + kr * shifted

            y = (y0 + y1) + act * d_ref[i]        # per-channel D skip
            # nn.Dropout(p=0.01) is identity in eval mode.
            u = _gelu_exact(y)                    # exact (erf) GELU

            # ----- fused 1x1 Conv1d(H -> 2H) + GLU(channels) + residual: ONE MXU call -----
            z = jnp.dot(u, mixw_ref[i], preferred_element_type=F32) + mixb_ref[i]   # (L, 2H)
            act = z[:, :H] * jax.nn.sigmoid(z[:, H:]) + act

        # ----- decoder on the last timestep of this sequence only -----
        out_ref[...] = jnp.dot(act[L - 1:L, :], decw_ref[...],
                               preferred_element_type=F32) + decb_ref[...]           # (1, O)

    return kernel


# ----------------------------------------------------------------------------
# Parameters (deterministic, matching the PyTorch __init__ shapes) + one-time packing
# ----------------------------------------------------------------------------
def init_params(key, state_dim, measurement_dim, input_dim=4, output_dim=1, num_layers=4):
    H, N2 = measurement_dim, state_dim // 2
    keys = jax.random.split(key, 4 + num_layers)
    kin = 1.0 / math.sqrt(input_dim)
    kd = 1.0 / math.sqrt(H)
    params = {
        'enc_w': jax.random.uniform(keys[0], (H, input_dim), F32, -kin, kin),
        'enc_b': jax.random.uniform(keys[1], (H,), F32, -kin, kin),
        'dec_w': jax.random.uniform(keys[2], (output_dim, H), F32, -kd, kd),
        'dec_b': jax.random.uniform(keys[3], (output_dim,), F32, -kd, kd),
        'blocks': [],
    }
    lo, hi = math.log(0.001), math.log(0.1)
    for i in range(num_layers):
        bk = jax.random.split(keys[4 + i], 7)
        params['blocks'].append(dict(
            log_dt=jax.random.uniform(bk[0], (H,), F32, lo, hi),
            C_re=jax.random.normal(bk[1], (H, N2), F32),
            C_im=jax.random.normal(bk[2], (H, N2), F32),
            log_A_re=jax.random.normal(bk[3], (H, N2), F32),
            A_im=jnp.ones((H, N2), F32),
            D=jax.random.normal(bk[4], (H,), F32),
            conv_w=jax.random.uniform(bk[5], (2 * H, H), F32, -kd, kd),   # Conv1d(H,2H,1) weight
            conv_b=jax.random.uniform(bk[6], (2 * H,), F32, -kd, kd),
        ))
    return params


def pack_params(params):
    """One-time repacking into kernel-friendly, stacked-per-block layouts."""
    blocks = params['blocks']

    def stk(fn):
        return jnp.stack([fn(b) for b in blocks]).astype(F32)

    return {
        'enc_w_t': params['enc_w'].T.astype(F32),                    # (Din, H)
        'enc_b': params['enc_b'].reshape(1, -1).astype(F32),         # (1, H)
        'dec_w_t': params['dec_w'].T.astype(F32),                    # (H, O)
        'dec_b': params['dec_b'].reshape(1, -1).astype(F32),         # (1, O)
        'log_dt': stk(lambda b: b['log_dt'].reshape(1, -1)),         # (nb, 1, H)
        'log_A_re_t': stk(lambda b: b['log_A_re'].T),                # (nb, N2, H)
        'A_im_t': stk(lambda b: b['A_im'].T),                        # (nb, N2, H)
        'C_re_t': stk(lambda b: b['C_re'].T),                        # (nb, N2, H)
        'C_im_t': stk(lambda b: b['C_im'].T),                        # (nb, N2, H)
        'D': stk(lambda b: b['D'].reshape(1, -1)),                   # (nb, 1, H)
        # fused GLU weight/bias: columns [0:H] = value half, [H:2H] = gate half
        'mix_w_t': stk(lambda b: b['conv_w'].T),                     # (nb, H, 2H)
        'mix_b': stk(lambda b: b['conv_b'].reshape(1, -1)),          # (nb, 1, 2H)
    }


# ----------------------------------------------------------------------------
# Forward pass: ONE pallas_call with a batch-parallel grid, nothing else.
# ----------------------------------------------------------------------------
def _full_block(p):
    """Whole-array block, same block index at every grid step (params stay VMEM-resident)."""
    zeros = (0,) * p.ndim
    return pl.BlockSpec(p.shape, lambda b: zeros)


@jax.jit
def model_forward(packed, x):
    """x: (B, L, Din) -> (B, output_dim)."""
    B, L, Din = x.shape
    nb, N2, H = packed['log_A_re_t'].shape
    O = packed['dec_w_t'].shape[1]
    x = x.astype(F32)

    param_args = (packed['enc_w_t'], packed['enc_b'],
                  packed['log_dt'], packed['log_A_re_t'], packed['A_im_t'],
                  packed['C_re_t'], packed['C_im_t'], packed['D'],
                  packed['mix_w_t'], packed['mix_b'],
                  packed['dec_w_t'], packed['dec_b'])

    out = pl.pallas_call(
        _make_fused_kernel(L, H, N2, nb),
        out_shape=jax.ShapeDtypeStruct((B, 1, O), F32),
        grid=(B,),                                                   # one sequence per step
        in_specs=[pl.BlockSpec((None, L, Din), lambda b: (b, 0, 0))]
                 + [_full_block(p) for p in param_args],
        out_specs=pl.BlockSpec((None, 1, O), lambda b: (b, 0, 0)),
        compiler_params=pltpu.CompilerParams(dimension_semantics=("parallel",)),
    )(x, *param_args)
    return out.reshape(B, O)


if __name__ == "__main__":
    B, L = 2, 16
    state_dim, measurement_dim, input_dim, output_dim, num_layers = 16, 32, 4, 1, 4

    key = jax.random.PRNGKey(0)
    pkey, xkey = jax.random.split(key)
    params = init_params(pkey, state_dim, measurement_dim, input_dim, output_dim, num_layers)
    packed = pack_params(params)
    x = jax.random.normal(xkey, (B, L, input_dim), F32)

    out = model_forward(packed, x)
    out = jax.block_until_ready(out)
    assert out.shape == (B, output_dim), out.shape
    assert bool(jnp.all(jnp.isfinite(out)))
    print("KERNEL_OK")
</pallas_src>

<mosaic_0001>
module attributes {stable_mosaic.version = 11 : i64} {
  func.func @kernel(%arg0: i32, %arg1: memref<1x16x4xf32, #tpu.memory_space<vmem>>, %arg2: memref<4x32xf32, #tpu.memory_space<vmem>>, %arg3: memref<1x32xf32, #tpu.memory_space<vmem>>, %arg4: memref<4x1x32xf32, #tpu.memory_space<vmem>>, %arg5: memref<4x8x32xf32, #tpu.memory_space<vmem>>, %arg6: memref<4x8x32xf32, #tpu.memory_space<vmem>>, %arg7: memref<4x8x32xf32, #tpu.memory_space<vmem>>, %arg8: memref<4x8x32xf32, #tpu.memory_space<vmem>>, %arg9: memref<4x1x32xf32, #tpu.memory_space<vmem>>, %arg10: memref<4x32x64xf32, #tpu.memory_space<vmem>>, %arg11: memref<4x1x64xf32, #tpu.memory_space<vmem>>, %arg12: memref<32x1xf32, #tpu.memory_space<vmem>>, %arg13: memref<1x1xf32, #tpu.memory_space<vmem>>, %arg14: memref<1x1x1xf32, #tpu.memory_space<vmem>>) attributes {dimension_semantics = [#tpu.dimension_semantics<parallel>], iteration_bounds = array<i64: 2>, scalar_prefetch = 0 : i64, scratch_operands = 0 : i64, tpu.core_type = #tpu.core_type<tc>, window_params = [{transform_indices = @transform_0, window_bounds = array<i64: 1, 16, 4>}, {pipeline_mode = #tpu.pipeline_mode<synchronous>, transform_indices = @transform_1, window_bounds = array<i64: 4, 32>}, {pipeline_mode = #tpu.pipeline_mode<synchronous>, transform_indices = @transform_2, window_bounds = array<i64: 1, 32>}, {pipeline_mode = #tpu.pipeline_mode<synchronous>, transform_indices = @transform_3, window_bounds = array<i64: 4, 1, 32>}, {pipeline_mode = #tpu.pipeline_mode<synchronous>, transform_indices = @transform_4, window_bounds = array<i64: 4, 8, 32>}, {pipeline_mode = #tpu.pipeline_mode<synchronous>, transform_indices = @transform_5, window_bounds = array<i64: 4, 8, 32>}, {pipeline_mode = #tpu.pipeline_mode<synchronous>, transform_indices = @transform_6, window_bounds = array<i64: 4, 8, 32>}, {pipeline_mode = #tpu.pipeline_mode<synchronous>, transform_indices = @transform_7, window_bounds = array<i64: 4, 8, 32>}, {pipeline_mode = #tpu.pipeline_mode<synchronous>, transform_indices = @transform_8, window_bounds = array<i64: 4, 1, 32>}, {pipeline_mode = #tpu.pipeline_mode<synchronous>, transform_indices = @transform_9, window_bounds = array<i64: 4, 32, 64>}, {pipeline_mode = #tpu.pipeline_mode<synchronous>, transform_indices = @transform_10, window_bounds = array<i64: 4, 1, 64>}, {pipeline_mode = #tpu.pipeline_mode<synchronous>, transform_indices = @transform_11, window_bounds = array<i64: 32, 1>}, {pipeline_mode = #tpu.pipeline_mode<synchronous>, transform_indices = @transform_12, window_bounds = array<i64: 1, 1>}, {transform_indices = @transform_13, window_bounds = array<i64: 1, 1, 1>}]} {
    %c0 = arith.constant 0 : index
    %c0_0 = arith.constant 0 : index
    %c0_1 = arith.constant 0 : index
    %0 = vector.load %arg1[%c0, %c0_0, %c0_1] : memref<1x16x4xf32, #tpu.memory_space<vmem>>, vector<1x16x4xf32>
    %1 = vector.shape_cast %0 : vector<1x16x4xf32> to vector<16x4xf32>
    %c0_2 = arith.constant 0 : index
    %c0_3 = arith.constant 0 : index
    %2 = vector.load %arg2[%c0_2, %c0_3] : memref<4x32xf32, #tpu.memory_space<vmem>>, vector<4x32xf32>
    %cst = arith.constant dense<0.000000e+00> : vector<16x32xf32>
    %3 = tpu.matmul %1, %2, %cst {dimension_numbers = #tpu.dot_dimension_numbers<[1], [0], [0], [1], [0, 0, 1, 1], [], []>} : vector<16x4xf32>, vector<4x32xf32>, vector<16x32xf32> -> vector<16x32xf32>
    %c0_4 = arith.constant 0 : index
    %c0_5 = arith.constant 0 : index
    %4 = vector.load %arg3[%c0_4, %c0_5] : memref<1x32xf32, #tpu.memory_space<vmem>>, vector<1x32xf32>
    %5 = vector.broadcast %4 : vector<1x32xf32> to vector<16x32xf32>
    %6 = arith.addf %3, %5 : vector<16x32xf32>
    %7 = tpu.iota {dimensions = array<i32: 0>} : vector<16x32xi32>
    %c1_i32 = arith.constant 1 : i32
    %8 = vector.broadcast %c1_i32 : i32 to vector<16x32xi32>
    %9 = arith.cmpi sge, %7, %8 : vector<16x32xi32>
    %c2_i32 = arith.constant 2 : i32
    %10 = vector.broadcast %c2_i32 : i32 to vector<16x32xi32>
    %11 = arith.cmpi sge, %7, %10 : vector<16x32xi32>
    %c3_i32 = arith.constant 3 : i32
    %12 = vector.broadcast %c3_i32 : i32 to vector<16x32xi32>
    %13 = arith.cmpi sge, %7, %12 : vector<16x32xi32>
    %c4_i32 = arith.constant 4 : i32
    %14 = vector.broadcast %c4_i32 : i32 to vector<16x32xi32>
    %15 = arith.cmpi sge, %7, %14 : vector<16x32xi32>
    %c5_i32 = arith.constant 5 : i32
    %16 = vector.broadcast %c5_i32 : i32 to vector<16x32xi32>
    %17 = arith.cmpi sge, %7, %16 : vector<16x32xi32>
    %c6_i32 = arith.constant 6 : i32
    %18 = vector.broadcast %c6_i32 : i32 to vector<16x32xi32>
    %19 = arith.cmpi sge, %7, %18 : vector<16x32xi32>
    %c7_i32 = arith.constant 7 : i32
    %20 = vector.broadcast %c7_i32 : i32 to vector<16x32xi32>
    %21 = arith.cmpi sge, %7, %20 : vector<16x32xi32>
    %c8_i32 = arith.constant 8 : i32
    %22 = vector.broadcast %c8_i32 : i32 to vector<16x32xi32>
    %23 = arith.cmpi sge, %7, %22 : vector<16x32xi32>
    %c9_i32 = arith.constant 9 : i32
    %24 = vector.broadcast %c9_i32 : i32 to vector<16x32xi32>
    %25 = arith.cmpi sge, %7, %24 : vector<16x32xi32>
    %c10_i32 = arith.constant 10 : i32
    %26 = vector.broadcast %c10_i32 : i32 to vector<16x32xi32>
    %27 = arith.cmpi sge, %7, %26 : vector<16x32xi32>
    %c11_i32 = arith.constant 11 : i32
    %28 = vector.broadcast %c11_i32 : i32 to vector<16x32xi32>
    %29 = arith.cmpi sge, %7, %28 : vector<16x32xi32>
    %c12_i32 = arith.constant 12 : i32
    %30 = vector.broadcast %c12_i32 : i32 to vector<16x32xi32>
    %31 = arith.cmpi sge, %7, %30 : vector<16x32xi32>
    %c13_i32 = arith.constant 13 : i32
    %32 = vector.broadcast %c13_i32 : i32 to vector<16x32xi32>
    %33 = arith.cmpi sge, %7, %32 : vector<16x32xi32>
    %c14_i32 = arith.constant 14 : i32
    %34 = vector.broadcast %c14_i32 : i32 to vector<16x32xi32>
    %35 = arith.cmpi sge, %7, %34 : vector<16x32xi32>
    %c15_i32 = arith.constant 15 : i32
    %36 = vector.broadcast %c15_i32 : i32 to vector<16x32xi32>
    %37 = arith.cmpi sge, %7, %36 : vector<16x32xi32>
    %c0_6 = arith.constant 0 : index
    %c0_7 = arith.constant 0 : index
    %c0_8 = arith.constant 0 : index
    %38 = vector.load %arg4[%c0_6, %c0_7, %c0_8] : memref<4x1x32xf32, #tpu.memory_space<vmem>>, vector<1x1x32xf32>
    %39 = vector.shape_cast %38 : vector<1x1x32xf32> to vector<1x32xf32>
    %40 = math.exp %39 : vector<1x32xf32>
    %c0_9 = arith.constant 0 : index
    %c0_10 = arith.constant 0 : index
    %c0_11 = arith.constant 0 : index
    %41 = vector.load %arg5[%c0_9, %c0_10, %c0_11] : memref<4x8x32xf32, #tpu.memory_space<vmem>>, vector<1x8x32xf32>
    %42 = vector.shape_cast %41 : vector<1x8x32xf32> to vector<8x32xf32>
    %43 = math.exp %42 : vector<8x32xf32>
    %cst_12 = arith.constant 0.000000e+00 : f32
    %44 = vector.broadcast %cst_12 : f32 to vector<8x32xf32>
    %45 = arith.subf %44, %43 : vector<8x32xf32>
    %c0_13 = arith.constant 0 : index
    %c0_14 = arith.constant 0 : index
    %c0_15 = arith.constant 0 : index
    %46 = vector.load %arg6[%c0_13, %c0_14, %c0_15] : memref<4x8x32xf32, #tpu.memory_space<vmem>>, vector<1x8x32xf32>
    %47 = vector.shape_cast %46 : vector<1x8x32xf32> to vector<8x32xf32>
    %48 = vector.broadcast %40 : vector<1x32xf32> to vector<8x32xf32>
    %49 = arith.mulf %45, %48 : vector<8x32xf32>
    %50 = vector.broadcast %40 : vector<1x32xf32> to vector<8x32xf32>
    %51 = arith.mulf %47, %50 : vector<8x32xf32>
    %52 = math.exp %49 : vector<8x32xf32>
    %53 = math.cos %51 : vector<8x32xf32>
    %54 = arith.mulf %52, %53 : vector<8x32xf32>
    %55 = math.sin %51 : vector<8x32xf32>
    %56 = arith.mulf %52, %55 : vector<8x32xf32>
    %57 = arith.mulf %45, %45 : vector<8x32xf32>
    %58 = arith.mulf %47, %47 : vector<8x32xf32>
    %59 = arith.addf %57, %58 : vector<8x32xf32>
    %60 = tpu.reciprocal %59 {approx = true} : vector<8x32xf32> -> vector<8x32xf32>
    %61 = arith.mulf %59, %60 : vector<8x32xf32>
    %cst_16 = arith.constant 2.000000e+00 : f32
    %62 = vector.broadcast %cst_16 : f32 to vector<8x32xf32>
    %63 = arith.subf %62, %61 : vector<8x32xf32>
    %64 = arith.mulf %60, %63 : vector<8x32xf32>
    %cst_17 = arith.constant 1.000000e+00 : f32
    %65 = vector.broadcast %cst_17 : f32 to vector<8x32xf32>
    %66 = arith.subf %54, %65 : vector<8x32xf32>
    %67 = arith.mulf %66, %45 : vector<8x32xf32>
    %68 = arith.mulf %56, %47 : vector<8x32xf32>
    %69 = arith.addf %67, %68 : vector<8x32xf32>
    %70 = arith.mulf %69, %64 : vector<8x32xf32>
    %71 = arith.mulf %56, %45 : vector<8x32xf32>
    %72 = arith.mulf %66, %47 : vector<8x32xf32>
    %73 = arith.subf %71, %72 : vector<8x32xf32>
    %74 = arith.mulf %73, %64 : vector<8x32xf32>
    %c0_18 = arith.constant 0 : index
    %c0_19 = arith.constant 0 : index
    %c0_20 = arith.constant 0 : index
    %75 = vector.load %arg7[%c0_18, %c0_19, %c0_20] : memref<4x8x32xf32, #tpu.memory_space<vmem>>, vector<1x8x32xf32>
    %76 = vector.shape_cast %75 : vector<1x8x32xf32> to vector<8x32xf32>
    %c0_21 = arith.constant 0 : index
    %c0_22 = arith.constant 0 : index
    %c0_23 = arith.constant 0 : index
    %77 = vector.load %arg8[%c0_21, %c0_22, %c0_23] : memref<4x8x32xf32, #tpu.memory_space<vmem>>, vector<1x8x32xf32>
    %78 = vector.shape_cast %77 : vector<1x8x32xf32> to vector<8x32xf32>
    %79 = arith.mulf %76, %70 : vector<8x32xf32>
    %80 = arith.mulf %78, %74 : vector<8x32xf32>
    %81 = arith.subf %79, %80 : vector<8x32xf32>
    %82 = arith.mulf %76, %74 : vector<8x32xf32>
    %83 = arith.mulf %78, %70 : vector<8x32xf32>
    %84 = arith.addf %82, %83 : vector<8x32xf32>
    %85 = arith.mulf %54, %54 : vector<8x32xf32>
    %86 = arith.mulf %56, %56 : vector<8x32xf32>
    %87 = arith.subf %85, %86 : vector<8x32xf32>
    %cst_24 = arith.constant 2.000000e+00 : f32
    %88 = vector.broadcast %cst_24 : f32 to vector<8x32xf32>
    %89 = arith.mulf %88, %54 : vector<8x32xf32>
    %90 = arith.mulf %89, %56 : vector<8x32xf32>
    %91 = arith.mulf %81, %54 : vector<8x32xf32>
    %92 = arith.mulf %84, %56 : vector<8x32xf32>
    %93 = arith.subf %91, %92 : vector<8x32xf32>
    %94 = arith.mulf %81, %56 : vector<8x32xf32>
    %95 = arith.mulf %84, %54 : vector<8x32xf32>
    %96 = arith.addf %94, %95 : vector<8x32xf32>
    %cst_25 = arith.constant dense<0.000000e+00> : vector<32xf32>
    %97 = vector.multi_reduction <add>, %81, %cst_25 [0] : vector<8x32xf32> to vector<32xf32>
    %98 = vector.shape_cast %97 : vector<32xf32> to vector<1x32xf32>
    %cst_26 = arith.constant 2.000000e+00 : f32
    %99 = vector.broadcast %cst_26 : f32 to vector<1x32xf32>
    %100 = arith.mulf %99, %98 : vector<1x32xf32>
    %101 = vector.broadcast %100 : vector<1x32xf32> to vector<16x32xf32>
    %102 = arith.mulf %6, %101 : vector<16x32xf32>
    %cst_27 = arith.constant 0.000000e+00 : f32
    %103 = vector.broadcast %cst_27 : f32 to vector<16x32xf32>
    %cst_28 = arith.constant dense<0.000000e+00> : vector<32xf32>
    %104 = vector.multi_reduction <add>, %93, %cst_28 [0] : vector<8x32xf32> to vector<32xf32>
    %105 = vector.shape_cast %104 : vector<32xf32> to vector<1x32xf32>
    %cst_29 = arith.constant 2.000000e+00 : f32
    %106 = vector.broadcast %cst_29 : f32 to vector<1x32xf32>
    %107 = arith.mulf %106, %105 : vector<1x32xf32>
    %108 = arith.mulf %93, %87 : vector<8x32xf32>
    %109 = arith.mulf %96, %90 : vector<8x32xf32>
    %110 = arith.subf %108, %109 : vector<8x32xf32>
    %111 = arith.mulf %93, %90 : vector<8x32xf32>
    %112 = arith.mulf %96, %87 : vector<8x32xf32>
    %113 = arith.addf %111, %112 : vector<8x32xf32>
    %c1_i32_30 = arith.constant 1 : i32
    %114 = tpu.dynamic_rotate %6 by %c1_i32_30 dim 0 : vector<16x32xf32>, i32 -> vector<16x32xf32>
    %cst_31 = arith.constant 0.000000e+00 : f32
    %115 = vector.broadcast %cst_31 : f32 to vector<16x32xf32>
    %116 = arith.select %9, %114, %115 : vector<16x32xi1>, vector<16x32xf32>
    %117 = vector.broadcast %107 : vector<1x32xf32> to vector<16x32xf32>
    %118 = arith.mulf %117, %116 : vector<16x32xf32>
    %119 = arith.addf %103, %118 : vector<16x32xf32>
    %120 = arith.mulf %81, %87 : vector<8x32xf32>
    %121 = arith.mulf %84, %90 : vector<8x32xf32>
    %122 = arith.subf %120, %121 : vector<8x32xf32>
    %123 = arith.mulf %81, %90 : vector<8x32xf32>
    %124 = arith.mulf %84, %87 : vector<8x32xf32>
    %125 = arith.addf %123, %124 : vector<8x32xf32>
    %cst_32 = arith.constant dense<0.000000e+00> : vector<32xf32>
    %126 = vector.multi_reduction <add>, %122, %cst_32 [0] : vector<8x32xf32> to vector<32xf32>
    %127 = vector.shape_cast %126 : vector<32xf32> to vector<1x32xf32>
    %cst_33 = arith.constant 2.000000e+00 : f32
    %128 = vector.broadcast %cst_33 : f32 to vector<1x32xf32>
    %129 = arith.mulf %128, %127 : vector<1x32xf32>
    %c2_i32_34 = arith.constant 2 : i32
    %130 = tpu.dynamic_rotate %6 by %c2_i32_34 dim 0 : vector<16x32xf32>, i32 -> vector<16x32xf32>
    %cst_35 = arith.constant 0.000000e+00 : f32
    %131 = vector.broadcast %cst_35 : f32 to vector<16x32xf32>
    %132 = arith.select %11, %130, %131 : vector<16x32xi1>, vector<16x32xf32>
    %133 = vector.broadcast %129 : vector<1x32xf32> to vector<16x32xf32>
    %134 = arith.mulf %133, %132 : vector<16x32xf32>
    %135 = arith.addf %102, %134 : vector<16x32xf32>
    %cst_36 = arith.constant dense<0.000000e+00> : vector<32xf32>
    %136 = vector.multi_reduction <add>, %110, %cst_36 [0] : vector<8x32xf32> to vector<32xf32>
    %137 = vector.shape_cast %136 : vector<32xf32> to vector<1x32xf32>
    %cst_37 = arith.constant 2.000000e+00 : f32
    %138 = vector.broadcast %cst_37 : f32 to vector<1x32xf32>
    %139 = arith.mulf %138, %137 : vector<1x32xf32>
    %140 = arith.mulf %110, %87 : vector<8x32xf32>
    %141 = arith.mulf %113, %90 : vector<8x32xf32>
    %142 = arith.subf %140, %141 : vector<8x32xf32>
    %143 = arith.mulf %110, %90 : vector<8x32xf32>
    %144 = arith.mulf %113, %87 : vector<8x32xf32>
    %145 = arith.addf %143, %144 : vector<8x32xf32>
    %c3_i32_38 = arith.constant 3 : i32
    %146 = tpu.dynamic_rotate %6 by %c3_i32_38 dim 0 : vector<16x32xf32>, i32 -> vector<16x32xf32>
    %cst_39 = arith.constant 0.000000e+00 : f32
    %147 = vector.broadcast %cst_39 : f32 to vector<16x32xf32>
    %148 = arith.select %13, %146, %147 : vector<16x32xi1>, vector<16x32xf32>
    %149 = vector.broadcast %139 : vector<1x32xf32> to vector<16x32xf32>
    %150 = arith.mulf %149, %148 : vector<16x32xf32>
    %151 = arith.addf %119, %150 : vector<16x32xf32>
    %152 = arith.mulf %122, %87 : vector<8x32xf32>
    %153 = arith.mulf %125, %90 : vector<8x32xf32>
    %154 = arith.subf %152, %153 : vector<8x32xf32>
    %155 = arith.mulf %122, %90 : vector<8x32xf32>
    %156 = arith.mulf %125, %87 : vector<8x32xf32>
    %157 = arith.addf %155, %156 : vector<8x32xf32>
    %cst_40 = arith.constant dense<0.000000e+00> : vector<32xf32>
    %158 = vector.multi_reduction <add>, %154, %cst_40 [0] : vector<8x32xf32> to vector<32xf32>
    %159 = vector.shape_cast %158 : vector<32xf32> to vector<1x32xf32>
    %cst_41 = arith.constant 2.000000e+00 : f32
    %160 = vector.broadcast %cst_41 : f32 to vector<1x32xf32>
    %161 = arith.mulf %160, %159 : vector<1x32xf32>
    %c4_i32_42 = arith.constant 4 : i32
    %162 = tpu.dynamic_rotate %6 by %c4_i32_42 dim 0 : vector<16x32xf32>, i32 -> vector<16x32xf32>
    %cst_43 = arith.constant 0.000000e+00 : f32
    %163 = vector.broadcast %cst_43 : f32 to vector<16x32xf32>
    %164 = arith.select %15, %162, %163 : vector<16x32xi1>, vector<16x32xf32>
    %165 = vector.broadcast %161 : vector<1x32xf32> to vector<16x32xf32>
    %166 = arith.mulf %165, %164 : vector<16x32xf32>
    %167 = arith.addf %135, %166 : vector<16x32xf32>
    %cst_44 = arith.constant dense<0.000000e+00> : vector<32xf32>
    %168 = vector.multi_reduction <add>, %142, %cst_44 [0] : vector<8x32xf32> to vector<32xf32>
    %169 = vector.shape_cast %168 : vector<32xf32> to vector<1x32xf32>
    %cst_45 = arith.constant 2.000000e+00 : f32
    %170 = vector.broadcast %cst_45 : f32 to vector<1x32xf32>
    %171 = arith.mulf %170, %169 : vector<1x32xf32>
    %172 = arith.mulf %142, %87 : vector<8x32xf32>
    %173 = arith.mulf %145, %90 : vector<8x32xf32>
    %174 = arith.subf %172, %173 : vector<8x32xf32>
    %175 = arith.mulf %142, %90 : vector<8x32xf32>
    %176 = arith.mulf %145, %87 : vector<8x32xf32>
    %177 = arith.addf %175, %176 : vector<8x32xf32>
    %c5_i32_46 = arith.constant 5 : i32
    %178 = tpu.dynamic_rotate %6 by %c5_i32_46 dim 0 : vector<16x32xf32>, i32 -> vector<16x32xf32>
    %cst_47 = arith.constant 0.000000e+00 : f32
    %179 = vector.broadcast %cst_47 : f32 to vector<16x32xf32>
    %180 = arith.select %17, %178, %179 : vector<16x32xi1>, vector<16x32xf32>
    %181 = vector.broadcast %171 : vector<1x32xf32> to vector<16x32xf32>
    %182 = arith.mulf %181, %180 : vector<16x32xf32>
    %183 = arith.addf %151, %182 : vector<16x32xf32>
    %184 = arith.mulf %154, %87 : vector<8x32xf32>
    %185 = arith.mulf %157, %90 : vector<8x32xf32>
    %186 = arith.subf %184, %185 : vector<8x32xf32>
    %187 = arith.mulf %154, %90 : vector<8x32xf32>
    %188 = arith.mulf %157, %87 : vector<8x32xf32>
    %189 = arith.addf %187, %188 : vector<8x32xf32>
    %cst_48 = arith.constant dense<0.000000e+00> : vector<32xf32>
    %190 = vector.multi_reduction <add>, %186, %cst_48 [0] : vector<8x32xf32> to vector<32xf32>
    %191 = vector.shape_cast %190 : vector<32xf32> to vector<1x32xf32>
    %cst_49 = arith.constant 2.000000e+00 : f32
    %192 = vector.broadcast %cst_49 : f32 to vector<1x32xf32>
    %193 = arith.mulf %192, %191 : vector<1x32xf32>
    %c6_i32_50 = arith.constant 6 : i32
    %194 = tpu.dynamic_rotate %6 by %c6_i32_50 dim 0 : vector<16x32xf32>, i32 -> vector<16x32xf32>
    %cst_51 = arith.constant 0.000000e+00 : f32
    %195 = vector.broadcast %cst_51 : f32 to vector<16x32xf32>
    %196 = arith.select %19, %194, %195 : vector<16x32xi1>, vector<16x32xf32>
    %197 = vector.broadcast %193 : vector<1x32xf32> to vector<16x32xf32>
    %198 = arith.mulf %197, %196 : vector<16x32xf32>
    %199 = arith.addf %167, %198 : vector<16x32xf32>
    %cst_52 = arith.constant dense<0.000000e+00> : vector<32xf32>
    %200 = vector.multi_reduction <add>, %174, %cst_52 [0] : vector<8x32xf32> to vector<32xf32>
    %201 = vector.shape_cast %200 : vector<32xf32> to vector<1x32xf32>
    %cst_53 = arith.constant 2.000000e+00 : f32
    %202 = vector.broadcast %cst_53 : f32 to vector<1x32xf32>
    %203 = arith.mulf %202, %201 : vector<1x32xf32>
    %204 = arith.mulf %174, %87 : vector<8x32xf32>
    %205 = arith.mulf %177, %90 : vector<8x32xf32>
    %206 = arith.subf %204, %205 : vector<8x32xf32>
    %207 = arith.mulf %174, %90 : vector<8x32xf32>
    %208 = arith.mulf %177, %87 : vector<8x32xf32>
    %209 = arith.addf %207, %208 : vector<8x32xf32>
    %c7_i32_54 = arith.constant 7 : i32
    %210 = tpu.dynamic_rotate %6 by %c7_i32_54 dim 0 : vector<16x32xf32>, i32 -> vector<16x32xf32>
    %cst_55 = arith.constant 0.000000e+00 : f32
    %211 = vector.broadcast %cst_55 : f32 to vector<16x32xf32>
    %212 = arith.select %21, %210, %211 : vector<16x32xi1>, vector<16x32xf32>
    %213 = vector.broadcast %203 : vector<1x32xf32> to vector<16x32xf32>
    %214 = arith.mulf %213, %212 : vector<16x32xf32>
    %215 = arith.addf %183, %214 : vector<16x32xf32>
    %216 = arith.mulf %186, %87 : vector<8x32xf32>
    %217 = arith.mulf %189, %90 : vector<8x32xf32>
    %218 = arith.subf %216, %217 : vector<8x32xf32>
    %219 = arith.mulf %186, %90 : vector<8x32xf32>
    %220 = arith.mulf %189, %87 : vector<8x32xf32>
    %221 = arith.addf %219, %220 : vector<8x32xf32>
    %cst_56 = arith.constant dense<0.000000e+00> : vector<32xf32>
    %222 = vector.multi_reduction <add>, %218, %cst_56 [0] : vector<8x32xf32> to vector<32xf32>
    %223 = vector.shape_cast %222 : vector<32xf32> to vector<1x32xf32>
    %cst_57 = arith.constant 2.000000e+00 : f32
    %224 = vector.broadcast %cst_57 : f32 to vector<1x32xf32>
    %225 = arith.mulf %224, %223 : vector<1x32xf32>
    %c8_i32_58 = arith.constant 8 : i32
    %226 = tpu.dynamic_rotate %6 by %c8_i32_58 dim 0 : vector<16x32xf32>, i32 -> vector<16x32xf32>
    %cst_59 = arith.constant 0.000000e+00 : f32
    %227 = vector.broadcast %cst_59 : f32 to vector<16x32xf32>
    %228 = arith.select %23, %226, %227 : vector<16x32xi1>, vector<16x32xf32>
    %229 = vector.broadcast %225 : vector<1x32xf32> to vector<16x32xf32>
    %230 = arith.mulf %229, %228 : vector<16x32xf32>
    %231 = arith.addf %199, %230 : vector<16x32xf32>
    %cst_60 = arith.constant dense<0.000000e+00> : vector<32xf32>
    %232 = vector.multi_reduction <add>, %206, %cst_60 [0] : vector<8x32xf32> to vector<32xf32>
    %233 = vector.shape_cast %232 : vector<32xf32> to vector<1x32xf32>
    %cst_61 = arith.constant 2.000000e+00 : f32
    %234 = vector.broadcast %cst_61 : f32 to vector<1x32xf32>
    %235 = arith.mulf %234, %233 : vector<1x32xf32>
    %236 = arith.mulf %206, %87 : vector<8x32xf32>
    %237 = arith.mulf %209, %90 : vector<8x32xf32>
    %238 = arith.subf %236, %237 : vector<8x32xf32>
    %239 = arith.mulf %206, %90 : vector<8x32xf32>
    %240 = arith.mulf %209, %87 : vector<8x32xf32>
    %241 = arith.addf %239, %240 : vector<8x32xf32>
    %c9_i32_62 = arith.constant 9 : i32
    %242 = tpu.dynamic_rotate %6 by %c9_i32_62 dim 0 : vector<16x32xf32>, i32 -> vector<16x32xf32>
    %cst_63 = arith.constant 0.000000e+00 : f32
    %243 = vector.broadcast %cst_63 : f32 to vector<16x32xf32>
    %244 = arith.select %25, %242, %243 : vector<16x32xi1>, vector<16x32xf32>
    %245 = vector.broadcast %235 : vector<1x32xf32> to vector<16x32xf32>
    %246 = arith.mulf %245, %244 : vector<16x32xf32>
    %247 = arith.addf %215, %246 : vector<16x32xf32>
    %248 = arith.mulf %218, %87 : vector<8x32xf32>
    %249 = arith.mulf %221, %90 : vector<8x32xf32>
    %250 = arith.subf %248, %249 : vector<8x32xf32>
    %251 = arith.mulf %218, %90 : vector<8x32xf32>
    %252 = arith.mulf %221, %87 : vector<8x32xf32>
    %253 = arith.addf %251, %252 : vector<8x32xf32>
    %cst_64 = arith.constant dense<0.000000e+00> : vector<32xf32>
    %254 = vector.multi_reduction <add>, %250, %cst_64 [0] : vector<8x32xf32> to vector<32xf32>
    %255 = vector.shape_cast %254 : vector<32xf32> to vector<1x32xf32>
    %cst_65 = arith.constant 2.000000e+00 : f32
    %256 = vector.broadcast %cst_65 : f32 to vector<1x32xf32>
    %257 = arith.mulf %256, %255 : vector<1x32xf32>
    %c10_i32_66 = arith.constant 10 : i32
    %258 = tpu.dynamic_rotate %6 by %c10_i32_66 dim 0 : vector<16x32xf32>, i32 -> vector<16x32xf32>
    %cst_67 = arith.constant 0.000000e+00 : f32
    %259 = vector.broadcast %cst_67 : f32 to vector<16x32xf32>
    %260 = arith.select %27, %258, %259 : vector<16x32xi1>, vector<16x32xf32>
    %261 = vector.broadcast %257 : vector<1x32xf32> to vector<16x32xf32>
    %262 = arith.mulf %261, %260 : vector<16x32xf32>
    %263 = arith.addf %231, %262 : vector<16x32xf32>
    %cst_68 = arith.constant dense<0.000000e+00> : vector<32xf32>
    %264 = vector.multi_reduction <add>, %238, %cst_68 [0] : vector<8x32xf32> to vector<32xf32>
    %265 = vector.shape_cast %264 : vector<32xf32> to vector<1x32xf32>
    %cst_69 = arith.constant 2.000000e+00 : f32
    %266 = vector.broadcast %cst_69 : f32 to vector<1x32xf32>
    %267 = arith.mulf %266, %265 : vector<1x32xf32>
    %268 = arith.mulf %238, %87 : vector<8x32xf32>
    %269 = arith.mulf %241, %90 : vector<8x32xf32>
    %270 = arith.subf %268, %269 : vector<8x32xf32>
    %271 = arith.mulf %238, %90 : vector<8x32xf32>
    %272 = arith.mulf %241, %87 : vector<8x32xf32>
    %273 = arith.addf %271, %272 : vector<8x32xf32>
    %c11_i32_70 = arith.constant 11 : i32
    %274 = tpu.dynamic_rotate %6 by %c11_i32_70 dim 0 : vector<16x32xf32>, i32 -> vector<16x32xf32>
    %cst_71 = arith.constant 0.000000e+00 : f32
    %275 = vector.broadcast %cst_71 : f32 to vector<16x32xf32>
    %276 = arith.select %29, %274, %275 : vector<16x32xi1>, vector<16x32xf32>
    %277 = vector.broadcast %267 : vector<1x32xf32> to vector<16x32xf32>
    %278 = arith.mulf %277, %276 : vector<16x32xf32>
    %279 = arith.addf %247, %278 : vector<16x32xf32>
    %280 = arith.mulf %250, %87 : vector<8x32xf32>
    %281 = arith.mulf %253, %90 : vector<8x32xf32>
    %282 = arith.subf %280, %281 : vector<8x32xf32>
    %283 = arith.mulf %250, %90 : vector<8x32xf32>
    %284 = arith.mulf %253, %87 : vector<8x32xf32>
    %285 = arith.addf %283, %284 : vector<8x32xf32>
    %cst_72 = arith.constant dense<0.000000e+00> : vector<32xf32>
    %286 = vector.multi_reduction <add>, %282, %cst_72 [0] : vector<8x32xf32> to vector<32xf32>
    %287 = vector.shape_cast %286 : vector<32xf32> to vector<1x32xf32>
    %cst_73 = arith.constant 2.000000e+00 : f32
    %288 = vector.broadcast %cst_73 : f32 to vector<1x32xf32>
    %289 = arith.mulf %288, %287 : vector<1x32xf32>
    %c12_i32_74 = arith.constant 12 : i32
    %290 = tpu.dynamic_rotate %6 by %c12_i32_74 dim 0 : vector<16x32xf32>, i32 -> vector<16x32xf32>
    %cst_75 = arith.constant 0.000000e+00 : f32
    %291 = vector.broadcast %cst_75 : f32 to vector<16x32xf32>
    %292 = arith.select %31, %290, %291 : vector<16x32xi1>, vector<16x32xf32>
    %293 = vector.broadcast %289 : vector<1x32xf32> to vector<16x32xf32>
    %294 = arith.mulf %293, %292 : vector<16x32xf32>
    %295 = arith.addf %263, %294 : vector<16x32xf32>
    %cst_76 = arith.constant dense<0.000000e+00> : vector<32xf32>
    %296 = vector.multi_reduction <add>, %270, %cst_76 [0] : vector<8x32xf32> to vector<32xf32>
    %297 = vector.shape_cast %296 : vector<32xf32> to vector<1x32xf32>
    %cst_77 = arith.constant 2.000000e+00 : f32
    %298 = vector.broadcast %cst_77 : f32 to vector<1x32xf32>
    %299 = arith.mulf %298, %297 : vector<1x32xf32>
    %300 = arith.mulf %270, %87 : vector<8x32xf32>
    %301 = arith.mulf %273, %90 : vector<8x32xf32>
    %302 = arith.subf %300, %301 : vector<8x32xf32>
    %c13_i32_78 = arith.constant 13 : i32
    %303 = tpu.dynamic_rotate %6 by %c13_i32_78 dim 0 : vector<16x32xf32>, i32 -> vector<16x32xf32>
    %cst_79 = arith.constant 0.000000e+00 : f32
    %304 = vector.broadcast %cst_79 : f32 to vector<16x32xf32>
    %305 = arith.select %33, %303, %304 : vector<16x32xi1>, vector<16x32xf32>
    %306 = vector.broadcast %299 : vector<1x32xf32> to vector<16x32xf32>
    %307 = arith.mulf %306, %305 : vector<16x32xf32>
    %308 = arith.addf %279, %307 : vector<16x32xf32>
    %309 = arith.mulf %282, %87 : vector<8x32xf32>
    %310 = arith.mulf %285, %90 : vector<8x32xf32>
    %311 = arith.subf %309, %310 : vector<8x32xf32>
    %cst_80 = arith.constant dense<0.000000e+00> : vector<32xf32>
    %312 = vector.multi_reduction <add>, %311, %cst_80 [0] : vector<8x32xf32> to vector<32xf32>
    %313 = vector.shape_cast %312 : vector<32xf32> to vector<1x32xf32>
    %cst_81 = arith.constant 2.000000e+00 : f32
    %314 = vector.broadcast %cst_81 : f32 to vector<1x32xf32>
    %315 = arith.mulf %314, %313 : vector<1x32xf32>
    %c14_i32_82 = arith.constant 14 : i32
    %316 = tpu.dynamic_rotate %6 by %c14_i32_82 dim 0 : vector<16x32xf32>, i32 -> vector<16x32xf32>
    %cst_83 = arith.constant 0.000000e+00 : f32
    %317 = vector.broadcast %cst_83 : f32 to vector<16x32xf32>
    %318 = arith.select %35, %316, %317 : vector<16x32xi1>, vector<16x32xf32>
    %319 = vector.broadcast %315 : vector<1x32xf32> to vector<16x32xf32>
    %320 = arith.mulf %319, %318 : vector<16x32xf32>
    %321 = arith.addf %295, %320 : vector<16x32xf32>
    %cst_84 = arith.constant dense<0.000000e+00> : vector<32xf32>
    %322 = vector.multi_reduction <add>, %302, %cst_84 [0] : vector<8x32xf32> to vector<32xf32>
    %323 = vector.shape_cast %322 : vector<32xf32> to vector<1x32xf32>
    %cst_85 = arith.constant 2.000000e+00 : f32
    %324 = vector.broadcast %cst_85 : f32 to vector<1x32xf32>
    %325 = arith.mulf %324, %323 : vector<1x32xf32>
    %c15_i32_86 = arith.constant 15 : i32
    %326 = tpu.dynamic_rotate %6 by %c15_i32_86 dim 0 : vector<16x32xf32>, i32 -> vector<16x32xf32>
    %cst_87 = arith.constant 0.000000e+00 : f32
    %327 = vector.broadcast %cst_87 : f32 to vector<16x32xf32>
    %328 = arith.select %37, %326, %327 : vector<16x32xi1>, vector<16x32xf32>
    %329 = vector.broadcast %325 : vector<1x32xf32> to vector<16x32xf32>
    %330 = arith.mulf %329, %328 : vector<16x32xf32>
    %331 = arith.addf %308, %330 : vector<16x32xf32>
    %332 = arith.addf %321, %331 : vector<16x32xf32>
    %c0_88 = arith.constant 0 : index
    %c0_89 = arith.constant 0 : index
    %c0_90 = arith.constant 0 : index
    %333 = vector.load %arg9[%c0_88, %c0_89, %c0_90] : memref<4x1x32xf32, #tpu.memory_space<vmem>>, vector<1x1x32xf32>
    %334 = vector.shape_cast %333 : vector<1x1x32xf32> to vector<1x32xf32>
    %335 = vector.broadcast %334 : vector<1x32xf32> to vector<16x32xf32>
    %336 = arith.mulf %6, %335 : vector<16x32xf32>
    %337 = arith.addf %332, %336 : vector<16x32xf32>
    %cst_91 = arith.constant 5.000000e-01 : f32
    %338 = vector.broadcast %cst_91 : f32 to vector<16x32xf32>
    %339 = arith.mulf %338, %337 : vector<16x32xf32>
    %cst_92 = arith.constant 0.707106769 : f32
    %340 = vector.broadcast %cst_92 : f32 to vector<16x32xf32>
    %341 = arith.mulf %337, %340 : vector<16x32xf32>
    %cst_93 = arith.constant -4.000000e+00 : f32
    %cst_94 = arith.constant 4.000000e+00 : f32
    %342 = vector.broadcast %cst_93 : f32 to vector<16x32xf32>
    %343 = arith.maximumf %342, %341 : vector<16x32xf32>
    %344 = vector.broadcast %cst_94 : f32 to vector<16x32xf32>
    %345 = arith.minimumf %344, %343 : vector<16x32xf32>
    %346 = arith.mulf %345, %345 : vector<16x32xf32>
    %cst_95 = arith.constant -2.72614237E-10 : f32
    %347 = vector.broadcast %cst_95 : f32 to vector<16x32xf32>
    %348 = arith.mulf %346, %347 : vector<16x32xf32>
    %cst_96 = arith.constant 2.77068146E-8 : f32
    %349 = vector.broadcast %cst_96 : f32 to vector<16x32xf32>
    %350 = arith.addf %348, %349 : vector<16x32xf32>
    %351 = arith.mulf %350, %346 : vector<16x32xf32>
    %cst_97 = arith.constant -2.10102394E-6 : f32
    %352 = vector.broadcast %cst_97 : f32 to vector<16x32xf32>
    %353 = arith.addf %351, %352 : vector<16x32xf32>
    %354 = arith.mulf %353, %346 : vector<16x32xf32>
    %cst_98 = arith.constant -5.69250624E-5 : f32
    %355 = vector.broadcast %cst_98 : f32 to vector<16x32xf32>
    %356 = arith.addf %354, %355 : vector<16x32xf32>
    %357 = arith.mulf %356, %346 : vector<16x32xf32>
    %cst_99 = arith.constant -7.34990637E-4 : f32
    %358 = vector.broadcast %cst_99 : f32 to vector<16x32xf32>
    %359 = arith.addf %357, %358 : vector<16x32xf32>
    %360 = arith.mulf %359, %346 : vector<16x32xf32>
    %cst_100 = arith.constant -2.954600e-03 : f32
    %361 = vector.broadcast %cst_100 : f32 to vector<16x32xf32>
    %362 = arith.addf %360, %361 : vector<16x32xf32>
    %363 = arith.mulf %362, %346 : vector<16x32xf32>
    %cst_101 = arith.constant -0.0160960332 : f32
    %364 = vector.broadcast %cst_101 : f32 to vector<16x32xf32>
    %365 = arith.addf %363, %364 : vector<16x32xf32>
    %366 = arith.mulf %365, %345 : vector<16x32xf32>
    %cst_102 = arith.constant -1.45660715E-5 : f32
    %367 = vector.broadcast %cst_102 : f32 to vector<16x32xf32>
    %368 = arith.mulf %346, %367 : vector<16x32xf32>
    %cst_103 = arith.constant -2.13374049E-4 : f32
    %369 = vector.broadcast %cst_103 : f32 to vector<16x32xf32>
    %370 = arith.addf %368, %369 : vector<16x32xf32>
    %371 = arith.mulf %370, %346 : vector<16x32xf32>
    %cst_104 = arith.constant -0.00168282702 : f32
    %372 = vector.broadcast %cst_104 : f32 to vector<16x32xf32>
    %373 = arith.addf %371, %372 : vector<16x32xf32>
    %374 = arith.mulf %373, %346 : vector<16x32xf32>
    %cst_105 = arith.constant -0.00737332925 : f32
    %375 = vector.broadcast %cst_105 : f32 to vector<16x32xf32>
    %376 = arith.addf %374, %375 : vector<16x32xf32>
    %377 = arith.mulf %376, %346 : vector<16x32xf32>
    %cst_106 = arith.constant -0.0142647391 : f32
    %378 = vector.broadcast %cst_106 : f32 to vector<16x32xf32>
    %379 = arith.addf %377, %378 : vector<16x32xf32>
    %380 = tpu.reciprocal %379 {approx = true} : vector<16x32xf32> -> vector<16x32xf32>
    %381 = arith.mulf %379, %380 : vector<16x32xf32>
    %cst_107 = arith.constant 2.000000e+00 : f32
    %382 = vector.broadcast %cst_107 : f32 to vector<16x32xf32>
    %383 = arith.subf %382, %381 : vector<16x32xf32>
    %384 = arith.mulf %380, %383 : vector<16x32xf32>
    %385 = arith.mulf %366, %384 : vector<16x32xf32>
    %cst_108 = arith.constant 1.000000e+00 : f32
    %386 = vector.broadcast %cst_108 : f32 to vector<16x32xf32>
    %387 = arith.addf %386, %385 : vector<16x32xf32>
    %388 = arith.mulf %339, %387 : vector<16x32xf32>
    %c0_109 = arith.constant 0 : index
    %c0_110 = arith.constant 0 : index
    %c0_111 = arith.constant 0 : index
    %389 = vector.load %arg10[%c0_109, %c0_110, %c0_111] : memref<4x32x64xf32, #tpu.memory_space<vmem>>, vector<1x32x64xf32>
    %390 = vector.shape_cast %389 : vector<1x32x64xf32> to vector<32x64xf32>
    %cst_112 = arith.constant dense<0.000000e+00> : vector<16x64xf32>
    %391 = tpu.matmul %388, %390, %cst_112 {dimension_numbers = #tpu.dot_dimension_numbers<[1], [0], [0], [1], [0, 0, 1, 1], [], []>} : vector<16x32xf32>, vector<32x64xf32>, vector<16x64xf32> -> vector<16x64xf32>
    %c0_113 = arith.constant 0 : index
    %c0_114 = arith.constant 0 : index
    %c0_115 = arith.constant 0 : index
    %392 = vector.load %arg11[%c0_113, %c0_114, %c0_115] : memref<4x1x64xf32, #tpu.memory_space<vmem>>, vector<1x1x64xf32>
    %393 = vector.shape_cast %392 : vector<1x1x64xf32> to vector<1x64xf32>
    %394 = vector.broadcast %393 : vector<1x64xf32> to vector<16x64xf32>
    %395 = arith.addf %391, %394 : vector<16x64xf32>
    %396 = vector.extract_strided_slice %395 {offsets = [0, 0], sizes = [16, 32], strides = [1, 1]} : vector<16x64xf32> to vector<16x32xf32>
    %397 = vector.extract_strided_slice %395 {offsets = [0, 32], sizes = [16, 32], strides = [1, 1]} : vector<16x64xf32> to vector<16x32xf32>
    %398 = arith.negf %397 : vector<16x32xf32>
    %399 = math.exp %398 : vector<16x32xf32>
    %cst_116 = arith.constant 1.000000e+00 : f32
    %400 = vector.broadcast %cst_116 : f32 to vector<16x32xf32>
    %401 = arith.addf %400, %399 : vector<16x32xf32>
    %402 = arith.divf %400, %401 : vector<16x32xf32>
    %403 = arith.mulf %396, %402 : vector<16x32xf32>
    %404 = arith.addf %403, %6 : vector<16x32xf32>
    %c1 = arith.constant 1 : index
    %c0_117 = arith.constant 0 : index
    %c0_118 = arith.constant 0 : index
    %405 = vector.load %arg4[%c1, %c0_117, %c0_118] : memref<4x1x32xf32, #tpu.memory_space<vmem>>, vector<1x1x32xf32>
    %406 = vector.shape_cast %405 : vector<1x1x32xf32> to vector<1x32xf32>
    %407 = math.exp %406 : vector<1x32xf32>
    %c1_119 = arith.constant 1 : index
    %c0_120 = arith.constant 0 : index
    %c0_121 = arith.constant 0 : index
    %408 = vector.load %arg5[%c1_119, %c0_120, %c0_121] : memref<4x8x32xf32, #tpu.memory_space<vmem>>, vector<1x8x32xf32>
    %409 = vector.shape_cast %408 : vector<1x8x32xf32> to vector<8x32xf32>
    %410 = math.exp %409 : vector<8x32xf32>
    %cst_122 = arith.constant 0.000000e+00 : f32
    %411 = vector.broadcast %cst_122 : f32 to vector<8x32xf32>
    %412 = arith.subf %411, %410 : vector<8x32xf32>
    %c1_123 = arith.constant 1 : index
    %c0_124 = arith.constant 0 : index
    %c0_125 = arith.constant 0 : index
    %413 = vector.load %arg6[%c1_123, %c0_124, %c0_125] : memref<4x8x32xf32, #tpu.memory_space<vmem>>, vector<1x8x32xf32>
    %414 = vector.shape_cast %413 : vector<1x8x32xf32> to vector<8x32xf32>
    %415 = vector.broadcast %407 : vector<1x32xf32> to vector<8x32xf32>
    %416 = arith.mulf %412, %415 : vector<8x32xf32>
    %417 = vector.broadcast %407 : vector<1x32xf32> to vector<8x32xf32>
    %418 = arith.mulf %414, %417 : vector<8x32xf32>
    %419 = math.exp %416 : vector<8x32xf32>
    %420 = math.cos %418 : vector<8x32xf32>
    %421 = arith.mulf %419, %420 : vector<8x32xf32>
    %422 = math.sin %418 : vector<8x32xf32>
    %423 = arith.mulf %419, %422 : vector<8x32xf32>
    %424 = arith.mulf %412, %412 : vector<8x32xf32>
    %425 = arith.mulf %414, %414 : vector<8x32xf32>
    %426 = arith.addf %424, %425 : vector<8x32xf32>
    %427 = tpu.reciprocal %426 {approx = true} : vector<8x32xf32> -> vector<8x32xf32>
    %428 = arith.mulf %426, %427 : vector<8x32xf32>
    %cst_126 = arith.constant 2.000000e+00 : f32
    %429 = vector.broadcast %cst_126 : f32 to vector<8x32xf32>
    %430 = arith.subf %429, %428 : vector<8x32xf32>
    %431 = arith.mulf %427, %430 : vector<8x32xf32>
    %cst_127 = arith.constant 1.000000e+00 : f32
    %432 = vector.broadcast %cst_127 : f32 to vector<8x32xf32>
    %433 = arith.subf %421, %432 : vector<8x32xf32>
    %434 = arith.mulf %433, %412 : vector<8x32xf32>
    %435 = arith.mulf %423, %414 : vector<8x32xf32>
    %436 = arith.addf %434, %435 : vector<8x32xf32>
    %437 = arith.mulf %436, %431 : vector<8x32xf32>
    %438 = arith.mulf %423, %412 : vector<8x32xf32>
    %439 = arith.mulf %433, %414 : vector<8x32xf32>
    %440 = arith.subf %438, %439 : vector<8x32xf32>
    %441 = arith.mulf %440, %431 : vector<8x32xf32>
    %c1_128 = arith.constant 1 : index
    %c0_129 = arith.constant 0 : index
    %c0_130 = arith.constant 0 : index
    %442 = vector.load %arg7[%c1_128, %c0_129, %c0_130] : memref<4x8x32xf32, #tpu.memory_space<vmem>>, vector<1x8x32xf32>
    %443 = vector.shape_cast %442 : vector<1x8x32xf32> to vector<8x32xf32>
    %c1_131 = arith.constant 1 : index
    %c0_132 = arith.constant 0 : index
    %c0_133 = arith.constant 0 : index
    %444 = vector.load %arg8[%c1_131, %c0_132, %c0_133] : memref<4x8x32xf32, #tpu.memory_space<vmem>>, vector<1x8x32xf32>
    %445 = vector.shape_cast %444 : vector<1x8x32xf32> to vector<8x32xf32>
    %446 = arith.mulf %443, %437 : vector<8x32xf32>
    %447 = arith.mulf %445, %441 : vector<8x32xf32>
    %448 = arith.subf %446, %447 : vector<8x32xf32>
    %449 = arith.mulf %443, %441 : vector<8x32xf32>
    %450 = arith.mulf %445, %437 : vector<8x32xf32>
    %451 = arith.addf %449, %450 : vector<8x32xf32>
    %452 = arith.mulf %421, %421 : vector<8x32xf32>
    %453 = arith.mulf %423, %423 : vector<8x32xf32>
    %454 = arith.subf %452, %453 : vector<8x32xf32>
    %cst_134 = arith.constant 2.000000e+00 : f32
    %455 = vector.broadcast %cst_134 : f32 to vector<8x32xf32>
    %456 = arith.mulf %455, %421 : vector<8x32xf32>
    %457 = arith.mulf %456, %423 : vector<8x32xf32>
    %458 = arith.mulf %448, %421 : vector<8x32xf32>
    %459 = arith.mulf %451, %423 : vector<8x32xf32>
    %460 = arith.subf %458, %459 : vector<8x32xf32>
    %461 = arith.mulf %448, %423 : vector<8x32xf32>
    %462 = arith.mulf %451, %421 : vector<8x32xf32>
    %463 = arith.addf %461, %462 : vector<8x32xf32>
    %cst_135 = arith.constant dense<0.000000e+00> : vector<32xf32>
    %464 = vector.multi_reduction <add>, %448, %cst_135 [0] : vector<8x32xf32> to vector<32xf32>
    %465 = vector.shape_cast %464 : vector<32xf32> to vector<1x32xf32>
    %cst_136 = arith.constant 2.000000e+00 : f32
    %466 = vector.broadcast %cst_136 : f32 to vector<1x32xf32>
    %467 = arith.mulf %466, %465 : vector<1x32xf32>
    %468 = vector.broadcast %467 : vector<1x32xf32> to vector<16x32xf32>
    %469 = arith.mulf %404, %468 : vector<16x32xf32>
    %cst_137 = arith.constant 0.000000e+00 : f32
    %470 = vector.broadcast %cst_137 : f32 to vector<16x32xf32>
    %cst_138 = arith.constant dense<0.000000e+00> : vector<32xf32>
    %471 = vector.multi_reduction <add>, %460, %cst_138 [0] : vector<8x32xf32> to vector<32xf32>
    %472 = vector.shape_cast %471 : vector<32xf32> to vector<1x32xf32>
    %cst_139 = arith.constant 2.000000e+00 : f32
    %473 = vector.broadcast %cst_139 : f32 to vector<1x32xf32>
    %474 = arith.mulf %473, %472 : vector<1x32xf32>
    %475 = arith.mulf %460, %454 : vector<8x32xf32>
    %476 = arith.mulf %463, %457 : vector<8x32xf32>
    %477 = arith.subf %475, %476 : vector<8x32xf32>
    %478 = arith.mulf %460, %457 : vector<8x32xf32>
    %479 = arith.mulf %463, %454 : vector<8x32xf32>
    %480 = arith.addf %478, %479 : vector<8x32xf32>
    %c1_i32_140 = arith.constant 1 : i32
    %481 = tpu.dynamic_rotate %404 by %c1_i32_140 dim 0 : vector<16x32xf32>, i32 -> vector<16x32xf32>
    %cst_141 = arith.constant 0.000000e+00 : f32
    %482 = vector.broadcast %cst_141 : f32 to vector<16x32xf32>
    %483 = arith.select %9, %481, %482 : vector<16x32xi1>, vector<16x32xf32>
    %484 = vector.broadcast %474 : vector<1x32xf32> to vector<16x32xf32>
    %485 = arith.mulf %484, %483 : vector<16x32xf32>
    %486 = arith.addf %470, %485 : vector<16x32xf32>
    %487 = arith.mulf %448, %454 : vector<8x32xf32>
    %488 = arith.mulf %451, %457 : vector<8x32xf32>
    %489 = arith.subf %487, %488 : vector<8x32xf32>
    %490 = arith.mulf %448, %457 : vector<8x32xf32>
    %491 = arith.mulf %451, %454 : vector<8x32xf32>
    %492 = arith.addf %490, %491 : vector<8x32xf32>
    %cst_142 = arith.constant dense<0.000000e+00> : vector<32xf32>
    %493 = vector.multi_reduction <add>, %489, %cst_142 [0] : vector<8x32xf32> to vector<32xf32>
    %494 = vector.shape_cast %493 : vector<32xf32> to vector<1x32xf32>
    %cst_143 = arith.constant 2.000000e+00 : f32
    %495 = vector.broadcast %cst_143 : f32 to vector<1x32xf32>
    %496 = arith.mulf %495, %494 : vector<1x32xf32>
    %c2_i32_144 = arith.constant 2 : i32
    %497 = tpu.dynamic_rotate %404 by %c2_i32_144 dim 0 : vector<16x32xf32>, i32 -> vector<16x32xf32>
    %cst_145 = arith.constant 0.000000e+00 : f32
    %498 = vector.broadcast %cst_145 : f32 to vector<16x32xf32>
    %499 = arith.select %11, %497, %498 : vector<16x32xi1>, vector<16x32xf32>
    %500 = vector.broadcast %496 : vector<1x32xf32> to vector<16x32xf32>
    %501 = arith.mulf %500, %499 : vector<16x32xf32>
    %502 = arith.addf %469, %501 : vector<16x32xf32>
    %cst_146 = arith.constant dense<0.000000e+00> : vector<32xf32>
    %503 = vector.multi_reduction <add>, %477, %cst_146 [0] : vector<8x32xf32> to vector<32xf32>
    %504 = vector.shape_cast %503 : vector<32xf32> to vector<1x32xf32>
    %cst_147 = arith.constant 2.000000e+00 : f32
    %505 = vector.broadcast %cst_147 : f32 to vector<1x32xf32>
    %506 = arith.mulf %505, %504 : vector<1x32xf32>
    %507 = arith.mulf %477, %454 : vector<8x32xf32>
    %508 = arith.mulf %480, %457 : vector<8x32xf32>
    %509 = arith.subf %507, %508 : vector<8x32xf32>
    %510 = arith.mulf %477, %457 : vector<8x32xf32>
    %511 = arith.mulf %480, %454 : vector<8x32xf32>
    %512 = arith.addf %510, %511 : vector<8x32xf32>
    %c3_i32_148 = arith.constant 3 : i32
    %513 = tpu.dynamic_rotate %404 by %c3_i32_148 dim 0 : vector<16x32xf32>, i32 -> vector<16x32xf32>
    %cst_149 = arith.constant 0.000000e+00 : f32
    %514 = vector.broadcast %cst_149 : f32 to vector<16x32xf32>
    %515 = arith.select %13, %513, %514 : vector<16x32xi1>, vector<16x32xf32>
    %516 = vector.broadcast %506 : vector<1x32xf32> to vector<16x32xf32>
    %517 = arith.mulf %516, %515 : vector<16x32xf32>
    %518 = arith.addf %486, %517 : vector<16x32xf32>
    %519 = arith.mulf %489, %454 : vector<8x32xf32>
    %520 = arith.mulf %492, %457 : vector<8x32xf32>
    %521 = arith.subf %519, %520 : vector<8x32xf32>
    %522 = arith.mulf %489, %457 : vector<8x32xf32>
    %523 = arith.mulf %492, %454 : vector<8x32xf32>
    %524 = arith.addf %522, %523 : vector<8x32xf32>
    %cst_150 = arith.constant dense<0.000000e+00> : vector<32xf32>
    %525 = vector.multi_reduction <add>, %521, %cst_150 [0] : vector<8x32xf32> to vector<32xf32>
    %526 = vector.shape_cast %525 : vector<32xf32> to vector<1x32xf32>
    %cst_151 = arith.constant 2.000000e+00 : f32
    %527 = vector.broadcast %cst_151 : f32 to vector<1x32xf32>
    %528 = arith.mulf %527, %526 : vector<1x32xf32>
    %c4_i32_152 = arith.constant 4 : i32
    %529 = tpu.dynamic_rotate %404 by %c4_i32_152 dim 0 : vector<16x32xf32>, i32 -> vector<16x32xf32>
    %cst_153 = arith.constant 0.000000e+00 : f32
    %530 = vector.broadcast %cst_153 : f32 to vector<16x32xf32>
    %531 = arith.select %15, %529, %530 : vector<16x32xi1>, vector<16x32xf32>
    %532 = vector.broadcast %528 : vector<1x32xf32> to vector<16x32xf32>
    %533 = arith.mulf %532, %531 : vector<16x32xf32>
    %534 = arith.addf %502, %533 : vector<16x32xf32>
    %cst_154 = arith.constant dense<0.000000e+00> : vector<32xf32>
    %535 = vector.multi_reduction <add>, %509, %cst_154 [0] : vector<8x32xf32> to vector<32xf32>
    %536 = vector.shape_cast %535 : vector<32xf32> to vector<1x32xf32>
    %cst_155 = arith.constant 2.000000e+00 : f32
    %537 = vector.broadcast %cst_155 : f32 to vector<1x32xf32>
    %538 = arith.mulf %537, %536 : vector<1x32xf32>
    %539 = arith.mulf %509, %454 : vector<8x32xf32>
    %540 = arith.mulf %512, %457 : vector<8x32xf32>
    %541 = arith.subf %539, %540 : vector<8x32xf32>
    %542 = arith.mulf %509, %457 : vector<8x32xf32>
    %543 = arith.mulf %512, %454 : vector<8x32xf32>
    %544 = arith.addf %542, %543 : vector<8x32xf32>
    %c5_i32_156 = arith.constant 5 : i32
    %545 = tpu.dynamic_rotate %404 by %c5_i32_156 dim 0 : vector<16x32xf32>, i32 -> vector<16x32xf32>
    %cst_157 = arith.constant 0.000000e+00 : f32
    %546 = vector.broadcast %cst_157 : f32 to vector<16x32xf32>
    %547 = arith.select %17, %545, %546 : vector<16x32xi1>, vector<16x32xf32>
    %548 = vector.broadcast %538 : vector<1x32xf32> to vector<16x32xf32>
    %549 = arith.mulf %548, %547 : vector<16x32xf32>
    %550 = arith.addf %518, %549 : vector<16x32xf32>
    %551 = arith.mulf %521, %454 : vector<8x32xf32>
    %552 = arith.mulf %524, %457 : vector<8x32xf32>
    %553 = arith.subf %551, %552 : vector<8x32xf32>
    %554 = arith.mulf %521, %457 : vector<8x32xf32>
    %555 = arith.mulf %524, %454 : vector<8x32xf32>
    %556 = arith.addf %554, %555 : vector<8x32xf32>
    %cst_158 = arith.constant dense<0.000000e+00> : vector<32xf32>
    %557 = vector.multi_reduction <add>, %553, %cst_158 [0] : vector<8x32xf32> to vector<32xf32>
    %558 = vector.shape_cast %557 : vector<32xf32> to vector<1x32xf32>
    %cst_159 = arith.constant 2.000000e+00 : f32
    %559 = vector.broadcast %cst_159 : f32 to vector<1x32xf32>
    %560 = arith.mulf %559, %558 : vector<1x32xf32>
    %c6_i32_160 = arith.constant 6 : i32
    %561 = tpu.dynamic_rotate %404 by %c6_i32_160 dim 0 : vector<16x32xf32>, i32 -> vector<16x32xf32>
    %cst_161 = arith.constant 0.000000e+00 : f32
    %562 = vector.broadcast %cst_161 : f32 to vector<16x32xf32>
    %563 = arith.select %19, %561, %562 : vector<16x32xi1>, vector<16x32xf32>
    %564 = vector.broadcast %560 : vector<1x32xf32> to vector<16x32xf32>
    %565 = arith.mulf %564, %563 : vector<16x32xf32>
    %566 = arith.addf %534, %565 : vector<16x32xf32>
    %cst_162 = arith.constant dense<0.000000e+00> : vector<32xf32>
    %567 = vector.multi_reduction <add>, %541, %cst_162 [0] : vector<8x32xf32> to vector<32xf32>
    %568 = vector.shape_cast %567 : vector<32xf32> to vector<1x32xf32>
    %cst_163 = arith.constant 2.000000e+00 : f32
    %569 = vector.broadcast %cst_163 : f32 to vector<1x32xf32>
    %570 = arith.mulf %569, %568 : vector<1x32xf32>
    %571 = arith.mulf %541, %454 : vector<8x32xf32>
    %572 = arith.mulf %544, %457 : vector<8x32xf32>
    %573 = arith.subf %571, %572 : vector<8x32xf32>
    %574 = arith.mulf %541, %457 : vector<8x32xf32>
    %575 = arith.mulf %544, %454 : vector<8x32xf32>
    %576 = arith.addf %574, %575 : vector<8x32xf32>
    %c7_i32_164 = arith.constant 7 : i32
    %577 = tpu.dynamic_rotate %404 by %c7_i32_164 dim 0 : vector<16x32xf32>, i32 -> vector<16x32xf32>
    %cst_165 = arith.constant 0.000000e+00 : f32
    %578 = vector.broadcast %cst_165 : f32 to vector<16x32xf32>
    %579 = arith.select %21, %577, %578 : vector<16x32xi1>, vector<16x32xf32>
    %580 = vector.broadcast %570 : vector<1x32xf32> to vector<16x32xf32>
    %581 = arith.mulf %580, %579 : vector<16x32xf32>
    %582 = arith.addf %550, %581 : vector<16x32xf32>
    %583 = arith.mulf %553, %454 : vector<8x32xf32>
    %584 = arith.mulf %556, %457 : vector<8x32xf32>
    %585 = arith.subf %583, %584 : vector<8x32xf32>
    %586 = arith.mulf %553, %457 : vector<8x32xf32>
    %587 = arith.mulf %556, %454 : vector<8x32xf32>
    %588 = arith.addf %586, %587 : vector<8x32xf32>
    %cst_166 = arith.constant dense<0.000000e+00> : vector<32xf32>
    %589 = vector.multi_reduction <add>, %585, %cst_166 [0] : vector<8x32xf32> to vector<32xf32>
    %590 = vector.shape_cast %589 : vector<32xf32> to vector<1x32xf32>
    %cst_167 = arith.constant 2.000000e+00 : f32
    %591 = vector.broadcast %cst_167 : f32 to vector<1x32xf32>
    %592 = arith.mulf %591, %590 : vector<1x32xf32>
    %c8_i32_168 = arith.constant 8 : i32
    %593 = tpu.dynamic_rotate %404 by %c8_i32_168 dim 0 : vector<16x32xf32>, i32 -> vector<16x32xf32>
    %cst_169 = arith.constant 0.000000e+00 : f32
    %594 = vector.broadcast %cst_169 : f32 to vector<16x32xf32>
    %595 = arith.select %23, %593, %594 : vector<16x32xi1>, vector<16x32xf32>
    %596 = vector.broadcast %592 : vector<1x32xf32> to vector<16x32xf32>
    %597 = arith.mulf %596, %595 : vector<16x32xf32>
    %598 = arith.addf %566, %597 : vector<16x32xf32>
    %cst_170 = arith.constant dense<0.000000e+00> : vector<32xf32>
    %599 = vector.multi_reduction <add>, %573, %cst_170 [0] : vector<8x32xf32> to vector<32xf32>
    %600 = vector.shape_cast %599 : vector<32xf32> to vector<1x32xf32>
    %cst_171 = arith.constant 2.000000e+00 : f32
    %601 = vector.broadcast %cst_171 : f32 to vector<1x32xf32>
    %602 = arith.mulf %601, %600 : vector<1x32xf32>
    %603 = arith.mulf %573, %454 : vector<8x32xf32>
    %604 = arith.mulf %576, %457 : vector<8x32xf32>
    %605 = arith.subf %603, %604 : vector<8x32xf32>
    %606 = arith.mulf %573, %457 : vector<8x32xf32>
    %607 = arith.mulf %576, %454 : vector<8x32xf32>
    %608 = arith.addf %606, %607 : vector<8x32xf32>
    %c9_i32_172 = arith.constant 9 : i32
    %609 = tpu.dynamic_rotate %404 by %c9_i32_172 dim 0 : vector<16x32xf32>, i32 -> vector<16x32xf32>
    %cst_173 = arith.constant 0.000000e+00 : f32
    %610 = vector.broadcast %cst_173 : f32 to vector<16x32xf32>
    %611 = arith.select %25, %609, %610 : vector<16x32xi1>, vector<16x32xf32>
    %612 = vector.broadcast %602 : vector<1x32xf32> to vector<16x32xf32>
    %613 = arith.mulf %612, %611 : vector<16x32xf32>
    %614 = arith.addf %582, %613 : vector<16x32xf32>
    %615 = arith.mulf %585, %454 : vector<8x32xf32>
    %616 = arith.mulf %588, %457 : vector<8x32xf32>
    %617 = arith.subf %615, %616 : vector<8x32xf32>
    %618 = arith.mulf %585, %457 : vector<8x32xf32>
    %619 = arith.mulf %588, %454 : vector<8x32xf32>
    %620 = arith.addf %618, %619 : vector<8x32xf32>
    %cst_174 = arith.constant dense<0.000000e+00> : vector<32xf32>
    %621 = vector.multi_reduction <add>, %617, %cst_174 [0] : vector<8x32xf32> to vector<32xf32>
    %622 = vector.shape_cast %621 : vector<32xf32> to vector<1x32xf32>
    %cst_175 = arith.constant 2.000000e+00 : f32
    %623 = vector.broadcast %cst_175 : f32 to vector<1x32xf32>
    %624 = arith.mulf %623, %622 : vector<1x32xf32>
    %c10_i32_176 = arith.constant 10 : i32
    %625 = tpu.dynamic_rotate %404 by %c10_i32_176 dim 0 : vector<16x32xf32>, i32 -> vector<16x32xf32>
    %cst_177 = arith.constant 0.000000e+00 : f32
    %626 = vector.broadcast %cst_177 : f32 to vector<16x32xf32>
    %627 = arith.select %27, %625, %626 : vector<16x32xi1>, vector<16x32xf32>
    %628 = vector.broadcast %624 : vector<1x32xf32> to vector<16x32xf32>
    %629 = arith.mulf %628, %627 : vector<16x32xf32>
    %630 = arith.addf %598, %629 : vector<16x32xf32>
    %cst_178 = arith.constant dense<0.000000e+00> : vector<32xf32>
    %631 = vector.multi_reduction <add>, %605, %cst_178 [0] : vector<8x32xf32> to vector<32xf32>
    %632 = vector.shape_cast %631 : vector<32xf32> to vector<1x32xf32>
    %cst_179 = arith.constant 2.000000e+00 : f32
    %633 = vector.broadcast %cst_179 : f32 to vector<1x32xf32>
    %634 = arith.mulf %633, %632 : vector<1x32xf32>
    %635 = arith.mulf %605, %454 : vector<8x32xf32>
    %636 = arith.mulf %608, %457 : vector<8x32xf32>
    %637 = arith.subf %635, %636 : vector<8x32xf32>
    %638 = arith.mulf %605, %457 : vector<8x32xf32>
    %639 = arith.mulf %608, %454 : vector<8x32xf32>
    %640 = arith.addf %638, %639 : vector<8x32xf32>
    %c11_i32_180 = arith.constant 11 : i32
    %641 = tpu.dynamic_rotate %404 by %c11_i32_180 dim 0 : vector<16x32xf32>, i32 -> vector<16x32xf32>
    %cst_181 = arith.constant 0.000000e+00 : f32
    %642 = vector.broadcast %cst_181 : f32 to vector<16x32xf32>
    %643 = arith.select %29, %641, %642 : vector<16x32xi1>, vector<16x32xf32>
    %644 = vector.broadcast %634 : vector<1x32xf32> to vector<16x32xf32>
    %645 = arith.mulf %644, %643 : vector<16x32xf32>
    %646 = arith.addf %614, %645 : vector<16x32xf32>
    %647 = arith.mulf %617, %454 : vector<8x32xf32>
    %648 = arith.mulf %620, %457 : vector<8x32xf32>
    %649 = arith.subf %647, %648 : vector<8x32xf32>
    %650 = arith.mulf %617, %457 : vector<8x32xf32>
    %651 = arith.mulf %620, %454 : vector<8x32xf32>
    %652 = arith.addf %650, %651 : vector<8x32xf32>
    %cst_182 = arith.constant dense<0.000000e+00> : vector<32xf32>
    %653 = vector.multi_reduction <add>, %649, %cst_182 [0] : vector<8x32xf32> to vector<32xf32>
    %654 = vector.shape_cast %653 : vector<32xf32> to vector<1x32xf32>
    %cst_183 = arith.constant 2.000000e+00 : f32
    %655 = vector.broadcast %cst_183 : f32 to vector<1x32xf32>
    %656 = arith.mulf %655, %654 : vector<1x32xf32>
    %c12_i32_184 = arith.constant 12 : i32
    %657 = tpu.dynamic_rotate %404 by %c12_i32_184 dim 0 : vector<16x32xf32>, i32 -> vector<16x32xf32>
    %cst_185 = arith.constant 0.000000e+00 : f32
    %658 = vector.broadcast %cst_185 : f32 to vector<16x32xf32>
    %659 = arith.select %31, %657, %658 : vector<16x32xi1>, vector<16x32xf32>
    %660 = vector.broadcast %656 : vector<1x32xf32> to vector<16x32xf32>
    %661 = arith.mulf %660, %659 : vector<16x32xf32>
    %662 = arith.addf %630, %661 : vector<16x32xf32>
    %cst_186 = arith.constant dense<0.000000e+00> : vector<32xf32>
    %663 = vector.multi_reduction <add>, %637, %cst_186 [0] : vector<8x32xf32> to vector<32xf32>
    %664 = vector.shape_cast %663 : vector<32xf32> to vector<1x32xf32>
    %cst_187 = arith.constant 2.000000e+00 : f32
    %665 = vector.broadcast %cst_187 : f32 to vector<1x32xf32>
    %666 = arith.mulf %665, %664 : vector<1x32xf32>
    %667 = arith.mulf %637, %454 : vector<8x32xf32>
    %668 = arith.mulf %640, %457 : vector<8x32xf32>
    %669 = arith.subf %667, %668 : vector<8x32xf32>
    %c13_i32_188 = arith.constant 13 : i32
    %670 = tpu.dynamic_rotate %404 by %c13_i32_188 dim 0 : vector<16x32xf32>, i32 -> vector<16x32xf32>
    %cst_189 = arith.constant 0.000000e+00 : f32
    %671 = vector.broadcast %cst_189 : f32 to vector<16x32xf32>
    %672 = arith.select %33, %670, %671 : vector<16x32xi1>, vector<16x32xf32>
    %673 = vector.broadcast %666 : vector<1x32xf32> to vector<16x32xf32>
    %674 = arith.mulf %673, %672 : vector<16x32xf32>
    %675 = arith.addf %646, %674 : vector<16x32xf32>
    %676 = arith.mulf %649, %454 : vector<8x32xf32>
    %677 = arith.mulf %652, %457 : vector<8x32xf32>
    %678 = arith.subf %676, %677 : vector<8x32xf32>
    %cst_190 = arith.constant dense<0.000000e+00> : vector<32xf32>
    %679 = vector.multi_reduction <add>, %678, %cst_190 [0] : vector<8x32xf32> to vector<32xf32>
    %680 = vector.shape_cast %679 : vector<32xf32> to vector<1x32xf32>
    %cst_191 = arith.constant 2.000000e+00 : f32
    %681 = vector.broadcast %cst_191 : f32 to vector<1x32xf32>
    %682 = arith.mulf %681, %680 : vector<1x32xf32>
    %c14_i32_192 = arith.constant 14 : i32
    %683 = tpu.dynamic_rotate %404 by %c14_i32_192 dim 0 : vector<16x32xf32>, i32 -> vector<16x32xf32>
    %cst_193 = arith.constant 0.000000e+00 : f32
    %684 = vector.broadcast %cst_193 : f32 to vector<16x32xf32>
    %685 = arith.select %35, %683, %684 : vector<16x32xi1>, vector<16x32xf32>
    %686 = vector.broadcast %682 : vector<1x32xf32> to vector<16x32xf32>
    %687 = arith.mulf %686, %685 : vector<16x32xf32>
    %688 = arith.addf %662, %687 : vector<16x32xf32>
    %cst_194 = arith.constant dense<0.000000e+00> : vector<32xf32>
    %689 = vector.multi_reduction <add>, %669, %cst_194 [0] : vector<8x32xf32> to vector<32xf32>
    %690 = vector.shape_cast %689 : vector<32xf32> to vector<1x32xf32>
    %cst_195 = arith.constant 2.000000e+00 : f32
    %691 = vector.broadcast %cst_195 : f32 to vector<1x32xf32>
    %692 = arith.mulf %691, %690 : vector<1x32xf32>
    %c15_i32_196 = arith.constant 15 : i32
    %693 = tpu.dynamic_rotate %404 by %c15_i32_196 dim 0 : vector<16x32xf32>, i32 -> vector<16x32xf32>
    %cst_197 = arith.constant 0.000000e+00 : f32
    %694 = vector.broadcast %cst_197 : f32 to vector<16x32xf32>
    %695 = arith.select %37, %693, %694 : vector<16x32xi1>, vector<16x32xf32>
    %696 = vector.broadcast %692 : vector<1x32xf32> to vector<16x32xf32>
    %697 = arith.mulf %696, %695 : vector<16x32xf32>
    %698 = arith.addf %675, %697 : vector<16x32xf32>
    %699 = arith.addf %688, %698 : vector<16x32xf32>
    %c1_198 = arith.constant 1 : index
    %c0_199 = arith.constant 0 : index
    %c0_200 = arith.constant 0 : index
    %700 = vector.load %arg9[%c1_198, %c0_199, %c0_200] : memref<4x1x32xf32, #tpu.memory_space<vmem>>, vector<1x1x32xf32>
    %701 = vector.shape_cast %700 : vector<1x1x32xf32> to vector<1x32xf32>
    %702 = vector.broadcast %701 : vector<1x32xf32> to vector<16x32xf32>
    %703 = arith.mulf %404, %702 : vector<16x32xf32>
    %704 = arith.addf %699, %703 : vector<16x32xf32>
    %cst_201 = arith.constant 5.000000e-01 : f32
    %705 = vector.broadcast %cst_201 : f32 to vector<16x32xf32>
    %706 = arith.mulf %705, %704 : vector<16x32xf32>
    %cst_202 = arith.constant 0.707106769 : f32
    %707 = vector.broadcast %cst_202 : f32 to vector<16x32xf32>
    %708 = arith.mulf %704, %707 : vector<16x32xf32>
    %cst_203 = arith.constant -4.000000e+00 : f32
    %cst_204 = arith.constant 4.000000e+00 : f32
    %709 = vector.broadcast %cst_203 : f32 to vector<16x32xf32>
    %710 = arith.maximumf %709, %708 : vector<16x32xf32>
    %711 = vector.broadcast %cst_204 : f32 to vector<16x32xf32>
    %712 = arith.minimumf %711, %710 : vector<16x32xf32>
    %713 = arith.mulf %712, %712 : vector<16x32xf32>
    %cst_205 = arith.constant -2.72614237E-10 : f32
    %714 = vector.broadcast %cst_205 : f32 to vector<16x32xf32>
    %715 = arith.mulf %713, %714 : vector<16x32xf32>
    %cst_206 = arith.constant 2.77068146E-8 : f32
    %716 = vector.broadcast %cst_206 : f32 to vector<16x32xf32>
    %717 = arith.addf %715, %716 : vector<16x32xf32>
    %718 = arith.mulf %717, %713 : vector<16x32xf32>
    %cst_207 = arith.constant -2.10102394E-6 : f32
    %719 = vector.broadcast %cst_207 : f32 to vector<16x32xf32>
    %720 = arith.addf %718, %719 : vector<16x32xf32>
    %721 = arith.mulf %720, %713 : vector<16x32xf32>
    %cst_208 = arith.constant -5.69250624E-5 : f32
    %722 = vector.broadcast %cst_208 : f32 to vector<16x32xf32>
    %723 = arith.addf %721, %722 : vector<16x32xf32>
    %724 = arith.mulf %723, %713 : vector<16x32xf32>
    %cst_209 = arith.constant -7.34990637E-4 : f32
    %725 = vector.broadcast %cst_209 : f32 to vector<16x32xf32>
    %726 = arith.addf %724, %725 : vector<16x32xf32>
    %727 = arith.mulf %726, %713 : vector<16x32xf32>
    %cst_210 = arith.constant -2.954600e-03 : f32
    %728 = vector.broadcast %cst_210 : f32 to vector<16x32xf32>
    %729 = arith.addf %727, %728 : vector<16x32xf32>
    %730 = arith.mulf %729, %713 : vector<16x32xf32>
    %cst_211 = arith.constant -0.0160960332 : f32
    %731 = vector.broadcast %cst_211 : f32 to vector<16x32xf32>
    %732 = arith.addf %730, %731 : vector<16x32xf32>
    %733 = arith.mulf %732, %712 : vector<16x32xf32>
    %cst_212 = arith.constant -1.45660715E-5 : f32
    %734 = vector.broadcast %cst_212 : f32 to vector<16x32xf32>
    %735 = arith.mulf %713, %734 : vector<16x32xf32>
    %cst_213 = arith.constant -2.13374049E-4 : f32
    %736 = vector.broadcast %cst_213 : f32 to vector<16x32xf32>
    %737 = arith.addf %735, %736 : vector<16x32xf32>
    %738 = arith.mulf %737, %713 : vector<16x32xf32>
    %cst_214 = arith.constant -0.00168282702 : f32
    %739 = vector.broadcast %cst_214 : f32 to vector<16x32xf32>
    %740 = arith.addf %738, %739 : vector<16x32xf32>
    %741 = arith.mulf %740, %713 : vector<16x32xf32>
    %cst_215 = arith.constant -0.00737332925 : f32
    %742 = vector.broadcast %cst_215 : f32 to vector<16x32xf32>
    %743 = arith.addf %741, %742 : vector<16x32xf32>
    %744 = arith.mulf %743, %713 : vector<16x32xf32>
    %cst_216 = arith.constant -0.0142647391 : f32
    %745 = vector.broadcast %cst_216 : f32 to vector<16x32xf32>
    %746 = arith.addf %744, %745 : vector<16x32xf32>
    %747 = tpu.reciprocal %746 {approx = true} : vector<16x32xf32> -> vector<16x32xf32>
    %748 = arith.mulf %746, %747 : vector<16x32xf32>
    %cst_217 = arith.constant 2.000000e+00 : f32
    %749 = vector.broadcast %cst_217 : f32 to vector<16x32xf32>
    %750 = arith.subf %749, %748 : vector<16x32xf32>
    %751 = arith.mulf %747, %750 : vector<16x32xf32>
    %752 = arith.mulf %733, %751 : vector<16x32xf32>
    %cst_218 = arith.constant 1.000000e+00 : f32
    %753 = vector.broadcast %cst_218 : f32 to vector<16x32xf32>
    %754 = arith.addf %753, %752 : vector<16x32xf32>
    %755 = arith.mulf %706, %754 : vector<16x32xf32>
    %c1_219 = arith.constant 1 : index
    %c0_220 = arith.constant 0 : index
    %c0_221 = arith.constant 0 : index
    %756 = vector.load %arg10[%c1_219, %c0_220, %c0_221] : memref<4x32x64xf32, #tpu.memory_space<vmem>>, vector<1x32x64xf32>
    %757 = vector.shape_cast %756 : vector<1x32x64xf32> to vector<32x64xf32>
    %cst_222 = arith.constant dense<0.000000e+00> : vector<16x64xf32>
    %758 = tpu.matmul %755, %757, %cst_222 {dimension_numbers = #tpu.dot_dimension_numbers<[1], [0], [0], [1], [0, 0, 1, 1], [], []>} : vector<16x32xf32>, vector<32x64xf32>, vector<16x64xf32> -> vector<16x64xf32>
    %c1_223 = arith.constant 1 : index
    %c0_224 = arith.constant 0 : index
    %c0_225 = arith.constant 0 : index
    %759 = vector.load %arg11[%c1_223, %c0_224, %c0_225] : memref<4x1x64xf32, #tpu.memory_space<vmem>>, vector<1x1x64xf32>
    %760 = vector.shape_cast %759 : vector<1x1x64xf32> to vector<1x64xf32>
    %761 = vector.broadcast %760 : vector<1x64xf32> to vector<16x64xf32>
    %762 = arith.addf %758, %761 : vector<16x64xf32>
    %763 = vector.extract_strided_slice %762 {offsets = [0, 0], sizes = [16, 32], strides = [1, 1]} : vector<16x64xf32> to vector<16x32xf32>
    %764 = vector.extract_strided_slice %762 {offsets = [0, 32], sizes = [16, 32], strides = [1, 1]} : vector<16x64xf32> to vector<16x32xf32>
    %765 = arith.negf %764 : vector<16x32xf32>
    %766 = math.exp %765 : vector<16x32xf32>
    %cst_226 = arith.constant 1.000000e+00 : f32
    %767 = vector.broadcast %cst_226 : f32 to vector<16x32xf32>
    %768 = arith.addf %767, %766 : vector<16x32xf32>
    %769 = arith.divf %767, %768 : vector<16x32xf32>
    %770 = arith.mulf %763, %769 : vector<16x32xf32>
    %771 = arith.addf %770, %404 : vector<16x32xf32>
    %c2 = arith.constant 2 : index
    %c0_227 = arith.constant 0 : index
    %c0_228 = arith.constant 0 : index
    %772 = vector.load %arg4[%c2, %c0_227, %c0_228] : memref<4x1x32xf32, #tpu.memory_space<vmem>>, vector<1x1x32xf32>
    %773 = vector.shape_cast %772 : vector<1x1x32xf32> to vector<1x32xf32>
    %774 = math.exp %773 : vector<1x32xf32>
    %c2_229 = arith.constant 2 : index
    %c0_230 = arith.constant 0 : index
    %c0_231 = arith.constant 0 : index
    %775 = vector.load %arg5[%c2_229, %c0_230, %c0_231] : memref<4x8x32xf32, #tpu.memory_space<vmem>>, vector<1x8x32xf32>
    %776 = vector.shape_cast %775 : vector<1x8x32xf32> to vector<8x32xf32>
    %777 = math.exp %776 : vector<8x32xf32>
    %cst_232 = arith.constant 0.000000e+00 : f32
    %778 = vector.broadcast %cst_232 : f32 to vector<8x32xf32>
    %779 = arith.subf %778, %777 : vector<8x32xf32>
    %c2_233 = arith.constant 2 : index
    %c0_234 = arith.constant 0 : index
    %c0_235 = arith.constant 0 : index
    %780 = vector.load %arg6[%c2_233, %c0_234, %c0_235] : memref<4x8x32xf32, #tpu.memory_space<vmem>>, vector<1x8x32xf32>
    %781 = vector.shape_cast %780 : vector<1x8x32xf32> to vector<8x32xf32>
    %782 = vector.broadcast %774 : vector<1x32xf32> to vector<8x32xf32>
    %783 = arith.mulf %779, %782 : vector<8x32xf32>
    %784 = vector.broadcast %774 : vector<1x32xf32> to vector<8x32xf32>
    %785 = arith.mulf %781, %784 : vector<8x32xf32>
    %786 = math.exp %783 : vector<8x32xf32>
    %787 = math.cos %785 : vector<8x32xf32>
    %788 = arith.mulf %786, %787 : vector<8x32xf32>
    %789 = math.sin %785 : vector<8x32xf32>
    %790 = arith.mulf %786, %789 : vector<8x32xf32>
    %791 = arith.mulf %779, %779 : vector<8x32xf32>
    %792 = arith.mulf %781, %781 : vector<8x32xf32>
    %793 = arith.addf %791, %792 : vector<8x32xf32>
    %794 = tpu.reciprocal %793 {approx = true} : vector<8x32xf32> -> vector<8x32xf32>
    %795 = arith.mulf %793, %794 : vector<8x32xf32>
    %cst_236 = arith.constant 2.000000e+00 : f32
    %796 = vector.broadcast %cst_236 : f32 to vector<8x32xf32>
    %797 = arith.subf %796, %795 : vector<8x32xf32>
    %798 = arith.mulf %794, %797 : vector<8x32xf32>
    %cst_237 = arith.constant 1.000000e+00 : f32
    %799 = vector.broadcast %cst_237 : f32 to vector<8x32xf32>
    %800 = arith.subf %788, %799 : vector<8x32xf32>
    %801 = arith.mulf %800, %779 : vector<8x32xf32>
    %802 = arith.mulf %790, %781 : vector<8x32xf32>
    %803 = arith.addf %801, %802 : vector<8x32xf32>
    %804 = arith.mulf %803, %798 : vector<8x32xf32>
    %805 = arith.mulf %790, %779 : vector<8x32xf32>
    %806 = arith.mulf %800, %781 : vector<8x32xf32>
    %807 = arith.subf %805, %806 : vector<8x32xf32>
    %808 = arith.mulf %807, %798 : vector<8x32xf32>
    %c2_238 = arith.constant 2 : index
    %c0_239 = arith.constant 0 : index
    %c0_240 = arith.constant 0 : index
    %809 = vector.load %arg7[%c2_238, %c0_239, %c0_240] : memref<4x8x32xf32, #tpu.memory_space<vmem>>, vector<1x8x32xf32>
    %810 = vector.shape_cast %809 : vector<1x8x32xf32> to vector<8x32xf32>
    %c2_241 = arith.constant 2 : index
    %c0_242 = arith.constant 0 : index
    %c0_243 = arith.constant 0 : index
    %811 = vector.load %arg8[%c2_241, %c0_242, %c0_243] : memref<4x8x32xf32, #tpu.memory_space<vmem>>, vector<1x8x32xf32>
    %812 = vector.shape_cast %811 : vector<1x8x32xf32> to vector<8x32xf32>
    %813 = arith.mulf %810, %804 : vector<8x32xf32>
    %814 = arith.mulf %812, %808 : vector<8x32xf32>
    %815 = arith.subf %813, %814 : vector<8x32xf32>
    %816 = arith.mulf %810, %808 : vector<8x32xf32>
    %817 = arith.mulf %812, %804 : vector<8x32xf32>
    %818 = arith.addf %816, %817 : vector<8x32xf32>
    %819 = arith.mulf %788, %788 : vector<8x32xf32>
    %820 = arith.mulf %790, %790 : vector<8x32xf32>
    %821 = arith.subf %819, %820 : vector<8x32xf32>
    %cst_244 = arith.constant 2.000000e+00 : f32
    %822 = vector.broadcast %cst_244 : f32 to vector<8x32xf32>
    %823 = arith.mulf %822, %788 : vector<8x32xf32>
    %824 = arith.mulf %823, %790 : vector<8x32xf32>
    %825 = arith.mulf %815, %788 : vector<8x32xf32>
    %826 = arith.mulf %818, %790 : vector<8x32xf32>
    %827 = arith.subf %825, %826 : vector<8x32xf32>
    %828 = arith.mulf %815, %790 : vector<8x32xf32>
    %829 = arith.mulf %818, %788 : vector<8x32xf32>
    %830 = arith.addf %828, %829 : vector<8x32xf32>
    %cst_245 = arith.constant dense<0.000000e+00> : vector<32xf32>
    %831 = vector.multi_reduction <add>, %815, %cst_245 [0] : vector<8x32xf32> to vector<32xf32>
    %832 = vector.shape_cast %831 : vector<32xf32> to vector<1x32xf32>
    %cst_246 = arith.constant 2.000000e+00 : f32
    %833 = vector.broadcast %cst_246 : f32 to vector<1x32xf32>
    %834 = arith.mulf %833, %832 : vector<1x32xf32>
    %835 = vector.broadcast %834 : vector<1x32xf32> to vector<16x32xf32>
    %836 = arith.mulf %771, %835 : vector<16x32xf32>
    %cst_247 = arith.constant 0.000000e+00 : f32
    %837 = vector.broadcast %cst_247 : f32 to vector<16x32xf32>
    %cst_248 = arith.constant dense<0.000000e+00> : vector<32xf32>
    %838 = vector.multi_reduction <add>, %827, %cst_248 [0] : vector<8x32xf32> to vector<32xf32>
    %839 = vector.shape_cast %838 : vector<32xf32> to vector<1x32xf32>
    %cst_249 = arith.constant 2.000000e+00 : f32
    %840 = vector.broadcast %cst_249 : f32 to vector<1x32xf32>
    %841 = arith.mulf %840, %839 : vector<1x32xf32>
    %842 = arith.mulf %827, %821 : vector<8x32xf32>
    %843 = arith.mulf %830, %824 : vector<8x32xf32>
    %844 = arith.subf %842, %843 : vector<8x32xf32>
    %845 = arith.mulf %827, %824 : vector<8x32xf32>
    %846 = arith.mulf %830, %821 : vector<8x32xf32>
    %847 = arith.addf %845, %846 : vector<8x32xf32>
    %c1_i32_250 = arith.constant 1 : i32
    %848 = tpu.dynamic_rotate %771 by %c1_i32_250 dim 0 : vector<16x32xf32>, i32 -> vector<16x32xf32>
    %cst_251 = arith.constant 0.000000e+00 : f32
    %849 = vector.broadcast %cst_251 : f32 to vector<16x32xf32>
    %850 = arith.select %9, %848, %849 : vector<16x32xi1>, vector<16x32xf32>
    %851 = vector.broadcast %841 : vector<1x32xf32> to vector<16x32xf32>
    %852 = arith.mulf %851, %850 : vector<16x32xf32>
    %853 = arith.addf %837, %852 : vector<16x32xf32>
    %854 = arith.mulf %815, %821 : vector<8x32xf32>
    %855 = arith.mulf %818, %824 : vector<8x32xf32>
    %856 = arith.subf %854, %855 : vector<8x32xf32>
    %857 = arith.mulf %815, %824 : vector<8x32xf32>
    %858 = arith.mulf %818, %821 : vector<8x32xf32>
    %859 = arith.addf %857, %858 : vector<8x32xf32>
    %cst_252 = arith.constant dense<0.000000e+00> : vector<32xf32>
    %860 = vector.multi_reduction <add>, %856, %cst_252 [0] : vector<8x32xf32> to vector<32xf32>
    %861 = vector.shape_cast %860 : vector<32xf32> to vector<1x32xf32>
    %cst_253 = arith.constant 2.000000e+00 : f32
    %862 = vector.broadcast %cst_253 : f32 to vector<1x32xf32>
    %863 = arith.mulf %862, %861 : vector<1x32xf32>
    %c2_i32_254 = arith.constant 2 : i32
    %864 = tpu.dynamic_rotate %771 by %c2_i32_254 dim 0 : vector<16x32xf32>, i32 -> vector<16x32xf32>
    %cst_255 = arith.constant 0.000000e+00 : f32
    %865 = vector.broadcast %cst_255 : f32 to vector<16x32xf32>
    %866 = arith.select %11, %864, %865 : vector<16x32xi1>, vector<16x32xf32>
    %867 = vector.broadcast %863 : vector<1x32xf32> to vector<16x32xf32>
    %868 = arith.mulf %867, %866 : vector<16x32xf32>
    %869 = arith.addf %836, %868 : vector<16x32xf32>
    %cst_256 = arith.constant dense<0.000000e+00> : vector<32xf32>
    %870 = vector.multi_reduction <add>, %844, %cst_256 [0] : vector<8x32xf32> to vector<32xf32>
    %871 = vector.shape_cast %870 : vector<32xf32> to vector<1x32xf32>
    %cst_257 = arith.constant 2.000000e+00 : f32
    %872 = vector.broadcast %cst_257 : f32 to vector<1x32xf32>
    %873 = arith.mulf %872, %871 : vector<1x32xf32>
    %874 = arith.mulf %844, %821 : vector<8x32xf32>
    %875 = arith.mulf %847, %824 : vector<8x32xf32>
    %876 = arith.subf %874, %875 : vector<8x32xf32>
    %877 = arith.mulf %844, %824 : vector<8x32xf32>
    %878 = arith.mulf %847, %821 : vector<8x32xf32>
    %879 = arith.addf %877, %878 : vector<8x32xf32>
    %c3_i32_258 = arith.constant 3 : i32
    %880 = tpu.dynamic_rotate %771 by %c3_i32_258 dim 0 : vector<16x32xf32>, i32 -> vector<16x32xf32>
    %cst_259 = arith.constant 0.000000e+00 : f32
    %881 = vector.broadcast %cst_259 : f32 to vector<16x32xf32>
    %882 = arith.select %13, %880, %881 : vector<16x32xi1>, vector<16x32xf32>
    %883 = vector.broadcast %873 : vector<1x32xf32> to vector<16x32xf32>
    %884 = arith.mulf %883, %882 : vector<16x32xf32>
    %885 = arith.addf %853, %884 : vector<16x32xf32>
    %886 = arith.mulf %856, %821 : vector<8x32xf32>
    %887 = arith.mulf %859, %824 : vector<8x32xf32>
    %888 = arith.subf %886, %887 : vector<8x32xf32>
    %889 = arith.mulf %856, %824 : vector<8x32xf32>
    %890 = arith.mulf %859, %821 : vector<8x32xf32>
    %891 = arith.addf %889, %890 : vector<8x32xf32>
    %cst_260 = arith.constant dense<0.000000e+00> : vector<32xf32>
    %892 = vector.multi_reduction <add>, %888, %cst_260 [0] : vector<8x32xf32> to vector<32xf32>
    %893 = vector.shape_cast %892 : vector<32xf32> to vector<1x32xf32>
    %cst_261 = arith.constant 2.000000e+00 : f32
    %894 = vector.broadcast %cst_261 : f32 to vector<1x32xf32>
    %895 = arith.mulf %894, %893 : vector<1x32xf32>
    %c4_i32_262 = arith.constant 4 : i32
    %896 = tpu.dynamic_rotate %771 by %c4_i32_262 dim 0 : vector<16x32xf32>, i32 -> vector<16x32xf32>
    %cst_263 = arith.constant 0.000000e+00 : f32
    %897 = vector.broadcast %cst_263 : f32 to vector<16x32xf32>
    %898 = arith.select %15, %896, %897 : vector<16x32xi1>, vector<16x32xf32>
    %899 = vector.broadcast %895 : vector<1x32xf32> to vector<16x32xf32>
    %900 = arith.mulf %899, %898 : vector<16x32xf32>
    %901 = arith.addf %869, %900 : vector<16x32xf32>
    %cst_264 = arith.constant dense<0.000000e+00> : vector<32xf32>
    %902 = vector.multi_reduction <add>, %876, %cst_264 [0] : vector<8x32xf32> to vector<32xf32>
    %903 = vector.shape_cast %902 : vector<32xf32> to vector<1x32xf32>
    %cst_265 = arith.constant 2.000000e+00 : f32
    %904 = vector.broadcast %cst_265 : f32 to vector<1x32xf32>
    %905 = arith.mulf %904, %903 : vector<1x32xf32>
    %906 = arith.mulf %876, %821 : vector<8x32xf32>
    %907 = arith.mulf %879, %824 : vector<8x32xf32>
    %908 = arith.subf %906, %907 : vector<8x32xf32>
    %909 = arith.mulf %876, %824 : vector<8x32xf32>
    %910 = arith.mulf %879, %821 : vector<8x32xf32>
    %911 = arith.addf %909, %910 : vector<8x32xf32>
    %c5_i32_266 = arith.constant 5 : i32
    %912 = tpu.dynamic_rotate %771 by %c5_i32_266 dim 0 : vector<16x32xf32>, i32 -> vector<16x32xf32>
    %cst_267 = arith.constant 0.000000e+00 : f32
    %913 = vector.broadcast %cst_267 : f32 to vector<16x32xf32>
    %914 = arith.select %17, %912, %913 : vector<16x32xi1>, vector<16x32xf32>
    %915 = vector.broadcast %905 : vector<1x32xf32> to vector<16x32xf32>
    %916 = arith.mulf %915, %914 : vector<16x32xf32>
    %917 = arith.addf %885, %916 : vector<16x32xf32>
    %918 = arith.mulf %888, %821 : vector<8x32xf32>
    %919 = arith.mulf %891, %824 : vector<8x32xf32>
    %920 = arith.subf %918, %919 : vector<8x32xf32>
    %921 = arith.mulf %888, %824 : vector<8x32xf32>
    %922 = arith.mulf %891, %821 : vector<8x32xf32>
    %923 = arith.addf %921, %922 : vector<8x32xf32>
    %cst_268 = arith.constant dense<0.000000e+00> : vector<32xf32>
    %924 = vector.multi_reduction <add>, %920, %cst_268 [0] : vector<8x32xf32> to vector<32xf32>
    %925 = vector.shape_cast %924 : vector<32xf32> to vector<1x32xf32>
    %cst_269 = arith.constant 2.000000e+00 : f32
    %926 = vector.broadcast %cst_269 : f32 to vector<1x32xf32>
    %927 = arith.mulf %926, %925 : vector<1x32xf32>
    %c6_i32_270 = arith.constant 6 : i32
    %928 = tpu.dynamic_rotate %771 by %c6_i32_270 dim 0 : vector<16x32xf32>, i32 -> vector<16x32xf32>
    %cst_271 = arith.constant 0.000000e+00 : f32
    %929 = vector.broadcast %cst_271 : f32 to vector<16x32xf32>
    %930 = arith.select %19, %928, %929 : vector<16x32xi1>, vector<16x32xf32>
    %931 = vector.broadcast %927 : vector<1x32xf32> to vector<16x32xf32>
    %932 = arith.mulf %931, %930 : vector<16x32xf32>
    %933 = arith.addf %901, %932 : vector<16x32xf32>
    %cst_272 = arith.constant dense<0.000000e+00> : vector<32xf32>
    %934 = vector.multi_reduction <add>, %908, %cst_272 [0] : vector<8x32xf32> to vector<32xf32>
    %935 = vector.shape_cast %934 : vector<32xf32> to vector<1x32xf32>
    %cst_273 = arith.constant 2.000000e+00 : f32
    %936 = vector.broadcast %cst_273 : f32 to vector<1x32xf32>
    %937 = arith.mulf %936, %935 : vector<1x32xf32>
    %938 = arith.mulf %908, %821 : vector<8x32xf32>
    %939 = arith.mulf %911, %824 : vector<8x32xf32>
    %940 = arith.subf %938, %939 : vector<8x32xf32>
    %941 = arith.mulf %908, %824 : vector<8x32xf32>
    %942 = arith.mulf %911, %821 : vector<8x32xf32>
    %943 = arith.addf %941, %942 : vector<8x32xf32>
    %c7_i32_274 = arith.constant 7 : i32
    %944 = tpu.dynamic_rotate %771 by %c7_i32_274 dim 0 : vector<16x32xf32>, i32 -> vector<16x32xf32>
    %cst_275 = arith.constant 0.000000e+00 : f32
    %945 = vector.broadcast %cst_275 : f32 to vector<16x32xf32>
    %946 = arith.select %21, %944, %945 : vector<16x32xi1>, vector<16x32xf32>
    %947 = vector.broadcast %937 : vector<1x32xf32> to vector<16x32xf32>
    %948 = arith.mulf %947, %946 : vector<16x32xf32>
    %949 = arith.addf %917, %948 : vector<16x32xf32>
    %950 = arith.mulf %920, %821 : vector<8x32xf32>
    %951 = arith.mulf %923, %824 : vector<8x32xf32>
    %952 = arith.subf %950, %951 : vector<8x32xf32>
    %953 = arith.mulf %920, %824 : vector<8x32xf32>
    %954 = arith.mulf %923, %821 : vector<8x32xf32>
    %955 = arith.addf %953, %954 : vector<8x32xf32>
    %cst_276 = arith.constant dense<0.000000e+00> : vector<32xf32>
    %956 = vector.multi_reduction <add>, %952, %cst_276 [0] : vector<8x32xf32> to vector<32xf32>
    %957 = vector.shape_cast %956 : vector<32xf32> to vector<1x32xf32>
    %cst_277 = arith.constant 2.000000e+00 : f32
    %958 = vector.broadcast %cst_277 : f32 to vector<1x32xf32>
    %959 = arith.mulf %958, %957 : vector<1x32xf32>
    %c8_i32_278 = arith.constant 8 : i32
    %960 = tpu.dynamic_rotate %771 by %c8_i32_278 dim 0 : vector<16x32xf32>, i32 -> vector<16x32xf32>
    %cst_279 = arith.constant 0.000000e+00 : f32
    %961 = vector.broadcast %cst_279 : f32 to vector<16x32xf32>
    %962 = arith.select %23, %960, %961 : vector<16x32xi1>, vector<16x32xf32>
    %963 = vector.broadcast %959 : vector<1x32xf32> to vector<16x32xf32>
    %964 = arith.mulf %963, %962 : vector<16x32xf32>
    %965 = arith.addf %933, %964 : vector<16x32xf32>
    %cst_280 = arith.constant dense<0.000000e+00> : vector<32xf32>
    %966 = vector.multi_reduction <add>, %940, %cst_280 [0] : vector<8x32xf32> to vector<32xf32>
    %967 = vector.shape_cast %966 : vector<32xf32> to vector<1x32xf32>
    %cst_281 = arith.constant 2.000000e+00 : f32
    %968 = vector.broadcast %cst_281 : f32 to vector<1x32xf32>
    %969 = arith.mulf %968, %967 : vector<1x32xf32>
    %970 = arith.mulf %940, %821 : vector<8x32xf32>
    %971 = arith.mulf %943, %824 : vector<8x32xf32>
    %972 = arith.subf %970, %971 : vector<8x32xf32>
    %973 = arith.mulf %940, %824 : vector<8x32xf32>
    %974 = arith.mulf %943, %821 : vector<8x32xf32>
    %975 = arith.addf %973, %974 : vector<8x32xf32>
    %c9_i32_282 = arith.constant 9 : i32
    %976 = tpu.dynamic_rotate %771 by %c9_i32_282 dim 0 : vector<16x32xf32>, i32 -> vector<16x32xf32>
    %cst_283 = arith.constant 0.000000e+00 : f32
    %977 = vector.broadcast %cst_283 : f32 to vector<16x32xf32>
    %978 = arith.select %25, %976, %977 : vector<16x32xi1>, vector<16x32xf32>
    %979 = vector.broadcast %969 : vector<1x32xf32> to vector<16x32xf32>
    %980 = arith.mulf %979, %978 : vector<16x32xf32>
    %981 = arith.addf %949, %980 : vector<16x32xf32>
    %982 = arith.mulf %952, %821 : vector<8x32xf32>
    %983 = arith.mulf %955, %824 : vector<8x32xf32>
    %984 = arith.subf %982, %983 : vector<8x32xf32>
    %985 = arith.mulf %952, %824 : vector<8x32xf32>
    %986 = arith.mulf %955, %821 : vector<8x32xf32>
    %987 = arith.addf %985, %986 : vector<8x32xf32>
    %cst_284 = arith.constant dense<0.000000e+00> : vector<32xf32>
    %988 = vector.multi_reduction <add>, %984, %cst_284 [0] : vector<8x32xf32> to vector<32xf32>
    %989 = vector.shape_cast %988 : vector<32xf32> to vector<1x32xf32>
    %cst_285 = arith.constant 2.000000e+00 : f32
    %990 = vector.broadcast %cst_285 : f32 to vector<1x32xf32>
    %991 = arith.mulf %990, %989 : vector<1x32xf32>
    %c10_i32_286 = arith.constant 10 : i32
    %992 = tpu.dynamic_rotate %771 by %c10_i32_286 dim 0 : vector<16x32xf32>, i32 -> vector<16x32xf32>
    %cst_287 = arith.constant 0.000000e+00 : f32
    %993 = vector.broadcast %cst_287 : f32 to vector<16x32xf32>
    %994 = arith.select %27, %992, %993 : vector<16x32xi1>, vector<16x32xf32>
    %995 = vector.broadcast %991 : vector<1x32xf32> to vector<16x32xf32>
    %996 = arith.mulf %995, %994 : vector<16x32xf32>
    %997 = arith.addf %965, %996 : vector<16x32xf32>
    %cst_288 = arith.constant dense<0.000000e+00> : vector<32xf32>
    %998 = vector.multi_reduction <add>, %972, %cst_288 [0] : vector<8x32xf32> to vector<32xf32>
    %999 = vector.shape_cast %998 : vector<32xf32> to vector<1x32xf32>
    %cst_289 = arith.constant 2.000000e+00 : f32
    %1000 = vector.broadcast %cst_289 : f32 to vector<1x32xf32>
    %1001 = arith.mulf %1000, %999 : vector<1x32xf32>
    %1002 = arith.mulf %972, %821 : vector<8x32xf32>
    %1003 = arith.mulf %975, %824 : vector<8x32xf32>
    %1004 = arith.subf %1002, %1003 : vector<8x32xf32>
    %1005 = arith.mulf %972, %824 : vector<8x32xf32>
    %1006 = arith.mulf %975, %821 : vector<8x32xf32>
    %1007 = arith.addf %1005, %1006 : vector<8x32xf32>
    %c11_i32_290 = arith.constant 11 : i32
    %1008 = tpu.dynamic_rotate %771 by %c11_i32_290 dim 0 : vector<16x32xf32>, i32 -> vector<16x32xf32>
    %cst_291 = arith.constant 0.000000e+00 : f32
    %1009 = vector.broadcast %cst_291 : f32 to vector<16x32xf32>
    %1010 = arith.select %29, %1008, %1009 : vector<16x32xi1>, vector<16x32xf32>
    %1011 = vector.broadcast %1001 : vector<1x32xf32> to vector<16x32xf32>
    %1012 = arith.mulf %1011, %1010 : vector<16x32xf32>
    %1013 = arith.addf %981, %1012 : vector<16x32xf32>
    %1014 = arith.mulf %984, %821 : vector<8x32xf32>
    %1015 = arith.mulf %987, %824 : vector<8x32xf32>
    %1016 = arith.subf %1014, %1015 : vector<8x32xf32>
    %1017 = arith.mulf %984, %824 : vector<8x32xf32>
    %1018 = arith.mulf %987, %821 : vector<8x32xf32>
    %1019 = arith.addf %1017, %1018 : vector<8x32xf32>
    %cst_292 = arith.constant dense<0.000000e+00> : vector<32xf32>
    %1020 = vector.multi_reduction <add>, %1016, %cst_292 [0] : vector<8x32xf32> to vector<32xf32>
    %1021 = vector.shape_cast %1020 : vector<32xf32> to vector<1x32xf32>
    %cst_293 = arith.constant 2.000000e+00 : f32
    %1022 = vector.broadcast %cst_293 : f32 to vector<1x32xf32>
    %1023 = arith.mulf %1022, %1021 : vector<1x32xf32>
    %c12_i32_294 = arith.constant 12 : i32
    %1024 = tpu.dynamic_rotate %771 by %c12_i32_294 dim 0 : vector<16x32xf32>, i32 -> vector<16x32xf32>
    %cst_295 = arith.constant 0.000000e+00 : f32
    %1025 = vector.broadcast %cst_295 : f32 to vector<16x32xf32>
    %1026 = arith.select %31, %1024, %1025 : vector<16x32xi1>, vector<16x32xf32>
    %1027 = vector.broadcast %1023 : vector<1x32xf32> to vector<16x32xf32>
    %1028 = arith.mulf %1027, %1026 : vector<16x32xf32>
    %1029 = arith.addf %997, %1028 : vector<16x32xf32>
    %cst_296 = arith.constant dense<0.000000e+00> : vector<32xf32>
    %1030 = vector.multi_reduction <add>, %1004, %cst_296 [0] : vector<8x32xf32> to vector<32xf32>
    %1031 = vector.shape_cast %1030 : vector<32xf32> to vector<1x32xf32>
    %cst_297 = arith.constant 2.000000e+00 : f32
    %1032 = vector.broadcast %cst_297 : f32 to vector<1x32xf32>
    %1033 = arith.mulf %1032, %1031 : vector<1x32xf32>
    %1034 = arith.mulf %1004, %821 : vector<8x32xf32>
    %1035 = arith.mulf %1007, %824 : vector<8x32xf32>
    %1036 = arith.subf %1034, %1035 : vector<8x32xf32>
    %c13_i32_298 = arith.constant 13 : i32
    %1037 = tpu.dynamic_rotate %771 by %c13_i32_298 dim 0 : vector<16x32xf32>, i32 -> vector<16x32xf32>
    %cst_299 = arith.constant 0.000000e+00 : f32
    %1038 = vector.broadcast %cst_299 : f32 to vector<16x32xf32>
    %1039 = arith.select %33, %1037, %1038 : vector<16x32xi1>, vector<16x32xf32>
    %1040 = vector.broadcast %1033 : vector<1x32xf32> to vector<16x32xf32>
    %1041 = arith.mulf %1040, %1039 : vector<16x32xf32>
    %1042 = arith.addf %1013, %1041 : vector<16x32xf32>
    %1043 = arith.mulf %1016, %821 : vector<8x32xf32>
    %1044 = arith.mulf %1019, %824 : vector<8x32xf32>
    %1045 = arith.subf %1043, %1044 : vector<8x32xf32>
    %cst_300 = arith.constant dense<0.000000e+00> : vector<32xf32>
    %1046 = vector.multi_reduction <add>, %1045, %cst_300 [0] : vector<8x32xf32> to vector<32xf32>
    %1047 = vector.shape_cast %1046 : vector<32xf32> to vector<1x32xf32>
    %cst_301 = arith.constant 2.000000e+00 : f32
    %1048 = vector.broadcast %cst_301 : f32 to vector<1x32xf32>
    %1049 = arith.mulf %1048, %1047 : vector<1x32xf32>
    %c14_i32_302 = arith.constant 14 : i32
    %1050 = tpu.dynamic_rotate %771 by %c14_i32_302 dim 0 : vector<16x32xf32>, i32 -> vector<16x32xf32>
    %cst_303 = arith.constant 0.000000e+00 : f32
    %1051 = vector.broadcast %cst_303 : f32 to vector<16x32xf32>
    %1052 = arith.select %35, %1050, %1051 : vector<16x32xi1>, vector<16x32xf32>
    %1053 = vector.broadcast %1049 : vector<1x32xf32> to vector<16x32xf32>
    %1054 = arith.mulf %1053, %1052 : vector<16x32xf32>
    %1055 = arith.addf %1029, %1054 : vector<16x32xf32>
    %cst_304 = arith.constant dense<0.000000e+00> : vector<32xf32>
    %1056 = vector.multi_reduction <add>, %1036, %cst_304 [0] : vector<8x32xf32> to vector<32xf32>
    %1057 = vector.shape_cast %1056 : vector<32xf32> to vector<1x32xf32>
    %cst_305 = arith.constant 2.000000e+00 : f32
    %1058 = vector.broadcast %cst_305 : f32 to vector<1x32xf32>
    %1059 = arith.mulf %1058, %1057 : vector<1x32xf32>
    %c15_i32_306 = arith.constant 15 : i32
    %1060 = tpu.dynamic_rotate %771 by %c15_i32_306 dim 0 : vector<16x32xf32>, i32 -> vector<16x32xf32>
    %cst_307 = arith.constant 0.000000e+00 : f32
    %1061 = vector.broadcast %cst_307 : f32 to vector<16x32xf32>
    %1062 = arith.select %37, %1060, %1061 : vector<16x32xi1>, vector<16x32xf32>
    %1063 = vector.broadcast %1059 : vector<1x32xf32> to vector<16x32xf32>
    %1064 = arith.mulf %1063, %1062 : vector<16x32xf32>
    %1065 = arith.addf %1042, %1064 : vector<16x32xf32>
    %1066 = arith.addf %1055, %1065 : vector<16x32xf32>
    %c2_308 = arith.constant 2 : index
    %c0_309 = arith.constant 0 : index
    %c0_310 = arith.constant 0 : index
    %1067 = vector.load %arg9[%c2_308, %c0_309, %c0_310] : memref<4x1x32xf32, #tpu.memory_space<vmem>>, vector<1x1x32xf32>
    %1068 = vector.shape_cast %1067 : vector<1x1x32xf32> to vector<1x32xf32>
    %1069 = vector.broadcast %1068 : vector<1x32xf32> to vector<16x32xf32>
    %1070 = arith.mulf %771, %1069 : vector<16x32xf32>
    %1071 = arith.addf %1066, %1070 : vector<16x32xf32>
    %cst_311 = arith.constant 5.000000e-01 : f32
    %1072 = vector.broadcast %cst_311 : f32 to vector<16x32xf32>
    %1073 = arith.mulf %1072, %1071 : vector<16x32xf32>
    %cst_312 = arith.constant 0.707106769 : f32
    %1074 = vector.broadcast %cst_312 : f32 to vector<16x32xf32>
    %1075 = arith.mulf %1071, %1074 : vector<16x32xf32>
    %cst_313 = arith.constant -4.000000e+00 : f32
    %cst_314 = arith.constant 4.000000e+00 : f32
    %1076 = vector.broadcast %cst_313 : f32 to vector<16x32xf32>
    %1077 = arith.maximumf %1076, %1075 : vector<16x32xf32>
    %1078 = vector.broadcast %cst_314 : f32 to vector<16x32xf32>
    %1079 = arith.minimumf %1078, %1077 : vector<16x32xf32>
    %1080 = arith.mulf %1079, %1079 : vector<16x32xf32>
    %cst_315 = arith.constant -2.72614237E-10 : f32
    %1081 = vector.broadcast %cst_315 : f32 to vector<16x32xf32>
    %1082 = arith.mulf %1080, %1081 : vector<16x32xf32>
    %cst_316 = arith.constant 2.77068146E-8 : f32
    %1083 = vector.broadcast %cst_316 : f32 to vector<16x32xf32>
    %1084 = arith.addf %1082, %1083 : vector<16x32xf32>
    %1085 = arith.mulf %1084, %1080 : vector<16x32xf32>
    %cst_317 = arith.constant -2.10102394E-6 : f32
    %1086 = vector.broadcast %cst_317 : f32 to vector<16x32xf32>
    %1087 = arith.addf %1085, %1086 : vector<16x32xf32>
    %1088 = arith.mulf %1087, %1080 : vector<16x32xf32>
    %cst_318 = arith.constant -5.69250624E-5 : f32
    %1089 = vector.broadcast %cst_318 : f32 to vector<16x32xf32>
    %1090 = arith.addf %1088, %1089 : vector<16x32xf32>
    %1091 = arith.mulf %1090, %1080 : vector<16x32xf32>
    %cst_319 = arith.constant -7.34990637E-4 : f32
    %1092 = vector.broadcast %cst_319 : f32 to vector<16x32xf32>
    %1093 = arith.addf %1091, %1092 : vector<16x32xf32>
    %1094 = arith.mulf %1093, %1080 : vector<16x32xf32>
    %cst_320 = arith.constant -2.954600e-03 : f32
    %1095 = vector.broadcast %cst_320 : f32 to vector<16x32xf32>
    %1096 = arith.addf %1094, %1095 : vector<16x32xf32>
    %1097 = arith.mulf %1096, %1080 : vector<16x32xf32>
    %cst_321 = arith.constant -0.0160960332 : f32
    %1098 = vector.broadcast %cst_321 : f32 to vector<16x32xf32>
    %1099 = arith.addf %1097, %1098 : vector<16x32xf32>
    %1100 = arith.mulf %1099, %1079 : vector<16x32xf32>
    %cst_322 = arith.constant -1.45660715E-5 : f32
    %1101 = vector.broadcast %cst_322 : f32 to vector<16x32xf32>
    %1102 = arith.mulf %1080, %1101 : vector<16x32xf32>
    %cst_323 = arith.constant -2.13374049E-4 : f32
    %1103 = vector.broadcast %cst_323 : f32 to vector<16x32xf32>
    %1104 = arith.addf %1102, %1103 : vector<16x32xf32>
    %1105 = arith.mulf %1104, %1080 : vector<16x32xf32>
    %cst_324 = arith.constant -0.00168282702 : f32
    %1106 = vector.broadcast %cst_324 : f32 to vector<16x32xf32>
    %1107 = arith.addf %1105, %1106 : vector<16x32xf32>
    %1108 = arith.mulf %1107, %1080 : vector<16x32xf32>
    %cst_325 = arith.constant -0.00737332925 : f32
    %1109 = vector.broadcast %cst_325 : f32 to vector<16x32xf32>
    %1110 = arith.addf %1108, %1109 : vector<16x32xf32>
    %1111 = arith.mulf %1110, %1080 : vector<16x32xf32>
    %cst_326 = arith.constant -0.0142647391 : f32
    %1112 = vector.broadcast %cst_326 : f32 to vector<16x32xf32>
    %1113 = arith.addf %1111, %1112 : vector<16x32xf32>
    %1114 = tpu.reciprocal %1113 {approx = true} : vector<16x32xf32> -> vector<16x32xf32>
    %1115 = arith.mulf %1113, %1114 : vector<16x32xf32>
    %cst_327 = arith.constant 2.000000e+00 : f32
    %1116 = vector.broadcast %cst_327 : f32 to vector<16x32xf32>
    %1117 = arith.subf %1116, %1115 : vector<16x32xf32>
    %1118 = arith.mulf %1114, %1117 : vector<16x32xf32>
    %1119 = arith.mulf %1100, %1118 : vector<16x32xf32>
    %cst_328 = arith.constant 1.000000e+00 : f32
    %1120 = vector.broadcast %cst_328 : f32 to vector<16x32xf32>
    %1121 = arith.addf %1120, %1119 : vector<16x32xf32>
    %1122 = arith.mulf %1073, %1121 : vector<16x32xf32>
    %c2_329 = arith.constant 2 : index
    %c0_330 = arith.constant 0 : index
    %c0_331 = arith.constant 0 : index
    %1123 = vector.load %arg10[%c2_329, %c0_330, %c0_331] : memref<4x32x64xf32, #tpu.memory_space<vmem>>, vector<1x32x64xf32>
    %1124 = vector.shape_cast %1123 : vector<1x32x64xf32> to vector<32x64xf32>
    %cst_332 = arith.constant dense<0.000000e+00> : vector<16x64xf32>
    %1125 = tpu.matmul %1122, %1124, %cst_332 {dimension_numbers = #tpu.dot_dimension_numbers<[1], [0], [0], [1], [0, 0, 1, 1], [], []>} : vector<16x32xf32>, vector<32x64xf32>, vector<16x64xf32> -> vector<16x64xf32>
    %c2_333 = arith.constant 2 : index
    %c0_334 = arith.constant 0 : index
    %c0_335 = arith.constant 0 : index
    %1126 = vector.load %arg11[%c2_333, %c0_334, %c0_335] : memref<4x1x64xf32, #tpu.memory_space<vmem>>, vector<1x1x64xf32>
    %1127 = vector.shape_cast %1126 : vector<1x1x64xf32> to vector<1x64xf32>
    %1128 = vector.broadcast %1127 : vector<1x64xf32> to vector<16x64xf32>
    %1129 = arith.addf %1125, %1128 : vector<16x64xf32>
    %1130 = vector.extract_strided_slice %1129 {offsets = [0, 0], sizes = [16, 32], strides = [1, 1]} : vector<16x64xf32> to vector<16x32xf32>
    %1131 = vector.extract_strided_slice %1129 {offsets = [0, 32], sizes = [16, 32], strides = [1, 1]} : vector<16x64xf32> to vector<16x32xf32>
    %1132 = arith.negf %1131 : vector<16x32xf32>
    %1133 = math.exp %1132 : vector<16x32xf32>
    %cst_336 = arith.constant 1.000000e+00 : f32
    %1134 = vector.broadcast %cst_336 : f32 to vector<16x32xf32>
    %1135 = arith.addf %1134, %1133 : vector<16x32xf32>
    %1136 = arith.divf %1134, %1135 : vector<16x32xf32>
    %1137 = arith.mulf %1130, %1136 : vector<16x32xf32>
    %1138 = arith.addf %1137, %771 : vector<16x32xf32>
    %c3 = arith.constant 3 : index
    %c0_337 = arith.constant 0 : index
    %c0_338 = arith.constant 0 : index
    %1139 = vector.load %arg4[%c3, %c0_337, %c0_338] : memref<4x1x32xf32, #tpu.memory_space<vmem>>, vector<1x1x32xf32>
    %1140 = vector.shape_cast %1139 : vector<1x1x32xf32> to vector<1x32xf32>
    %1141 = math.exp %1140 : vector<1x32xf32>
    %c3_339 = arith.constant 3 : index
    %c0_340 = arith.constant 0 : index
    %c0_341 = arith.constant 0 : index
    %1142 = vector.load %arg5[%c3_339, %c0_340, %c0_341] : memref<4x8x32xf32, #tpu.memory_space<vmem>>, vector<1x8x32xf32>
    %1143 = vector.shape_cast %1142 : vector<1x8x32xf32> to vector<8x32xf32>
    %1144 = math.exp %1143 : vector<8x32xf32>
    %cst_342 = arith.constant 0.000000e+00 : f32
    %1145 = vector.broadcast %cst_342 : f32 to vector<8x32xf32>
    %1146 = arith.subf %1145, %1144 : vector<8x32xf32>
    %c3_343 = arith.constant 3 : index
    %c0_344 = arith.constant 0 : index
    %c0_345 = arith.constant 0 : index
    %1147 = vector.load %arg6[%c3_343, %c0_344, %c0_345] : memref<4x8x32xf32, #tpu.memory_space<vmem>>, vector<1x8x32xf32>
    %1148 = vector.shape_cast %1147 : vector<1x8x32xf32> to vector<8x32xf32>
    %1149 = vector.broadcast %1141 : vector<1x32xf32> to vector<8x32xf32>
    %1150 = arith.mulf %1146, %1149 : vector<8x32xf32>
    %1151 = vector.broadcast %1141 : vector<1x32xf32> to vector<8x32xf32>
    %1152 = arith.mulf %1148, %1151 : vector<8x32xf32>
    %1153 = math.exp %1150 : vector<8x32xf32>
    %1154 = math.cos %1152 : vector<8x32xf32>
    %1155 = arith.mulf %1153, %1154 : vector<8x32xf32>
    %1156 = math.sin %1152 : vector<8x32xf32>
    %1157 = arith.mulf %1153, %1156 : vector<8x32xf32>
    %1158 = arith.mulf %1146, %1146 : vector<8x32xf32>
    %1159 = arith.mulf %1148, %1148 : vector<8x32xf32>
    %1160 = arith.addf %1158, %1159 : vector<8x32xf32>
    %1161 = tpu.reciprocal %1160 {approx = true} : vector<8x32xf32> -> vector<8x32xf32>
    %1162 = arith.mulf %1160, %1161 : vector<8x32xf32>
    %cst_346 = arith.constant 2.000000e+00 : f32
    %1163 = vector.broadcast %cst_346 : f32 to vector<8x32xf32>
    %1164 = arith.subf %1163, %1162 : vector<8x32xf32>
    %1165 = arith.mulf %1161, %1164 : vector<8x32xf32>
    %cst_347 = arith.constant 1.000000e+00 : f32
    %1166 = vector.broadcast %cst_347 : f32 to vector<8x32xf32>
    %1167 = arith.subf %1155, %1166 : vector<8x32xf32>
    %1168 = arith.mulf %1167, %1146 : vector<8x32xf32>
    %1169 = arith.mulf %1157, %1148 : vector<8x32xf32>
    %1170 = arith.addf %1168, %1169 : vector<8x32xf32>
    %1171 = arith.mulf %1170, %1165 : vector<8x32xf32>
    %1172 = arith.mulf %1157, %1146 : vector<8x32xf32>
    %1173 = arith.mulf %1167, %1148 : vector<8x32xf32>
    %1174 = arith.subf %1172, %1173 : vector<8x32xf32>
    %1175 = arith.mulf %1174, %1165 : vector<8x32xf32>
    %c3_348 = arith.constant 3 : index
    %c0_349 = arith.constant 0 : index
    %c0_350 = arith.constant 0 : index
    %1176 = vector.load %arg7[%c3_348, %c0_349, %c0_350] : memref<4x8x32xf32, #tpu.memory_space<vmem>>, vector<1x8x32xf32>
    %1177 = vector.shape_cast %1176 : vector<1x8x32xf32> to vector<8x32xf32>
    %c3_351 = arith.constant 3 : index
    %c0_352 = arith.constant 0 : index
    %c0_353 = arith.constant 0 : index
    %1178 = vector.load %arg8[%c3_351, %c0_352, %c0_353] : memref<4x8x32xf32, #tpu.memory_space<vmem>>, vector<1x8x32xf32>
    %1179 = vector.shape_cast %1178 : vector<1x8x32xf32> to vector<8x32xf32>
    %1180 = arith.mulf %1177, %1171 : vector<8x32xf32>
    %1181 = arith.mulf %1179, %1175 : vector<8x32xf32>
    %1182 = arith.subf %1180, %1181 : vector<8x32xf32>
    %1183 = arith.mulf %1177, %1175 : vector<8x32xf32>
    %1184 = arith.mulf %1179, %1171 : vector<8x32xf32>
    %1185 = arith.addf %1183, %1184 : vector<8x32xf32>
    %1186 = arith.mulf %1155, %1155 : vector<8x32xf32>
    %1187 = arith.mulf %1157, %1157 : vector<8x32xf32>
    %1188 = arith.subf %1186, %1187 : vector<8x32xf32>
    %cst_354 = arith.constant 2.000000e+00 : f32
    %1189 = vector.broadcast %cst_354 : f32 to vector<8x32xf32>
    %1190 = arith.mulf %1189, %1155 : vector<8x32xf32>
    %1191 = arith.mulf %1190, %1157 : vector<8x32xf32>
    %1192 = arith.mulf %1182, %1155 : vector<8x32xf32>
    %1193 = arith.mulf %1185, %1157 : vector<8x32xf32>
    %1194 = arith.subf %1192, %1193 : vector<8x32xf32>
    %1195 = arith.mulf %1182, %1157 : vector<8x32xf32>
    %1196 = arith.mulf %1185, %1155 : vector<8x32xf32>
    %1197 = arith.addf %1195, %1196 : vector<8x32xf32>
    %cst_355 = arith.constant dense<0.000000e+00> : vector<32xf32>
    %1198 = vector.multi_reduction <add>, %1182, %cst_355 [0] : vector<8x32xf32> to vector<32xf32>
    %1199 = vector.shape_cast %1198 : vector<32xf32> to vector<1x32xf32>
    %cst_356 = arith.constant 2.000000e+00 : f32
    %1200 = vector.broadcast %cst_356 : f32 to vector<1x32xf32>
    %1201 = arith.mulf %1200, %1199 : vector<1x32xf32>
    %1202 = vector.broadcast %1201 : vector<1x32xf32> to vector<16x32xf32>
    %1203 = arith.mulf %1138, %1202 : vector<16x32xf32>
    %cst_357 = arith.constant 0.000000e+00 : f32
    %1204 = vector.broadcast %cst_357 : f32 to vector<16x32xf32>
    %cst_358 = arith.constant dense<0.000000e+00> : vector<32xf32>
    %1205 = vector.multi_reduction <add>, %1194, %cst_358 [0] : vector<8x32xf32> to vector<32xf32>
    %1206 = vector.shape_cast %1205 : vector<32xf32> to vector<1x32xf32>
    %cst_359 = arith.constant 2.000000e+00 : f32
    %1207 = vector.broadcast %cst_359 : f32 to vector<1x32xf32>
    %1208 = arith.mulf %1207, %1206 : vector<1x32xf32>
    %1209 = arith.mulf %1194, %1188 : vector<8x32xf32>
    %1210 = arith.mulf %1197, %1191 : vector<8x32xf32>
    %1211 = arith.subf %1209, %1210 : vector<8x32xf32>
    %1212 = arith.mulf %1194, %1191 : vector<8x32xf32>
    %1213 = arith.mulf %1197, %1188 : vector<8x32xf32>
    %1214 = arith.addf %1212, %1213 : vector<8x32xf32>
    %c1_i32_360 = arith.constant 1 : i32
    %1215 = tpu.dynamic_rotate %1138 by %c1_i32_360 dim 0 : vector<16x32xf32>, i32 -> vector<16x32xf32>
    %cst_361 = arith.constant 0.000000e+00 : f32
    %1216 = vector.broadcast %cst_361 : f32 to vector<16x32xf32>
    %1217 = arith.select %9, %1215, %1216 : vector<16x32xi1>, vector<16x32xf32>
    %1218 = vector.broadcast %1208 : vector<1x32xf32> to vector<16x32xf32>
    %1219 = arith.mulf %1218, %1217 : vector<16x32xf32>
    %1220 = arith.addf %1204, %1219 : vector<16x32xf32>
    %1221 = arith.mulf %1182, %1188 : vector<8x32xf32>
    %1222 = arith.mulf %1185, %1191 : vector<8x32xf32>
    %1223 = arith.subf %1221, %1222 : vector<8x32xf32>
    %1224 = arith.mulf %1182, %1191 : vector<8x32xf32>
    %1225 = arith.mulf %1185, %1188 : vector<8x32xf32>
    %1226 = arith.addf %1224, %1225 : vector<8x32xf32>
    %cst_362 = arith.constant dense<0.000000e+00> : vector<32xf32>
    %1227 = vector.multi_reduction <add>, %1223, %cst_362 [0] : vector<8x32xf32> to vector<32xf32>
    %1228 = vector.shape_cast %1227 : vector<32xf32> to vector<1x32xf32>
    %cst_363 = arith.constant 2.000000e+00 : f32
    %1229 = vector.broadcast %cst_363 : f32 to vector<1x32xf32>
    %1230 = arith.mulf %1229, %1228 : vector<1x32xf32>
    %c2_i32_364 = arith.constant 2 : i32
    %1231 = tpu.dynamic_rotate %1138 by %c2_i32_364 dim 0 : vector<16x32xf32>, i32 -> vector<16x32xf32>
    %cst_365 = arith.constant 0.000000e+00 : f32
    %1232 = vector.broadcast %cst_365 : f32 to vector<16x32xf32>
    %1233 = arith.select %11, %1231, %1232 : vector<16x32xi1>, vector<16x32xf32>
    %1234 = vector.broadcast %1230 : vector<1x32xf32> to vector<16x32xf32>
    %1235 = arith.mulf %1234, %1233 : vector<16x32xf32>
    %1236 = arith.addf %1203, %1235 : vector<16x32xf32>
    %cst_366 = arith.constant dense<0.000000e+00> : vector<32xf32>
    %1237 = vector.multi_reduction <add>, %1211, %cst_366 [0] : vector<8x32xf32> to vector<32xf32>
    %1238 = vector.shape_cast %1237 : vector<32xf32> to vector<1x32xf32>
    %cst_367 = arith.constant 2.000000e+00 : f32
    %1239 = vector.broadcast %cst_367 : f32 to vector<1x32xf32>
    %1240 = arith.mulf %1239, %1238 : vector<1x32xf32>
    %1241 = arith.mulf %1211, %1188 : vector<8x32xf32>
    %1242 = arith.mulf %1214, %1191 : vector<8x32xf32>
    %1243 = arith.subf %1241, %1242 : vector<8x32xf32>
    %1244 = arith.mulf %1211, %1191 : vector<8x32xf32>
    %1245 = arith.mulf %1214, %1188 : vector<8x32xf32>
    %1246 = arith.addf %1244, %1245 : vector<8x32xf32>
    %c3_i32_368 = arith.constant 3 : i32
    %1247 = tpu.dynamic_rotate %1138 by %c3_i32_368 dim 0 : vector<16x32xf32>, i32 -> vector<16x32xf32>
    %cst_369 = arith.constant 0.000000e+00 : f32
    %1248 = vector.broadcast %cst_369 : f32 to vector<16x32xf32>
    %1249 = arith.select %13, %1247, %1248 : vector<16x32xi1>, vector<16x32xf32>
    %1250 = vector.broadcast %1240 : vector<1x32xf32> to vector<16x32xf32>
    %1251 = arith.mulf %1250, %1249 : vector<16x32xf32>
    %1252 = arith.addf %1220, %1251 : vector<16x32xf32>
    %1253 = arith.mulf %1223, %1188 : vector<8x32xf32>
    %1254 = arith.mulf %1226, %1191 : vector<8x32xf32>
    %1255 = arith.subf %1253, %1254 : vector<8x32xf32>
    %1256 = arith.mulf %1223, %1191 : vector<8x32xf32>
    %1257 = arith.mulf %1226, %1188 : vector<8x32xf32>
    %1258 = arith.addf %1256, %1257 : vector<8x32xf32>
    %cst_370 = arith.constant dense<0.000000e+00> : vector<32xf32>
    %1259 = vector.multi_reduction <add>, %1255, %cst_370 [0] : vector<8x32xf32> to vector<32xf32>
    %1260 = vector.shape_cast %1259 : vector<32xf32> to vector<1x32xf32>
    %cst_371 = arith.constant 2.000000e+00 : f32
    %1261 = vector.broadcast %cst_371 : f32 to vector<1x32xf32>
    %1262 = arith.mulf %1261, %1260 : vector<1x32xf32>
    %c4_i32_372 = arith.constant 4 : i32
    %1263 = tpu.dynamic_rotate %1138 by %c4_i32_372 dim 0 : vector<16x32xf32>, i32 -> vector<16x32xf32>
    %cst_373 = arith.constant 0.000000e+00 : f32
    %1264 = vector.broadcast %cst_373 : f32 to vector<16x32xf32>
    %1265 = arith.select %15, %1263, %1264 : vector<16x32xi1>, vector<16x32xf32>
    %1266 = vector.broadcast %1262 : vector<1x32xf32> to vector<16x32xf32>
    %1267 = arith.mulf %1266, %1265 : vector<16x32xf32>
    %1268 = arith.addf %1236, %1267 : vector<16x32xf32>
    %cst_374 = arith.constant dense<0.000000e+00> : vector<32xf32>
    %1269 = vector.multi_reduction <add>, %1243, %cst_374 [0] : vector<8x32xf32> to vector<32xf32>
    %1270 = vector.shape_cast %1269 : vector<32xf32> to vector<1x32xf32>
    %cst_375 = arith.constant 2.000000e+00 : f32
    %1271 = vector.broadcast %cst_375 : f32 to vector<1x32xf32>
    %1272 = arith.mulf %1271, %1270 : vector<1x32xf32>
    %1273 = arith.mulf %1243, %1188 : vector<8x32xf32>
    %1274 = arith.mulf %1246, %1191 : vector<8x32xf32>
    %1275 = arith.subf %1273, %1274 : vector<8x32xf32>
    %1276 = arith.mulf %1243, %1191 : vector<8x32xf32>
    %1277 = arith.mulf %1246, %1188 : vector<8x32xf32>
    %1278 = arith.addf %1276, %1277 : vector<8x32xf32>
    %c5_i32_376 = arith.constant 5 : i32
    %1279 = tpu.dynamic_rotate %1138 by %c5_i32_376 dim 0 : vector<16x32xf32>, i32 -> vector<16x32xf32>
    %cst_377 = arith.constant 0.000000e+00 : f32
    %1280 = vector.broadcast %cst_377 : f32 to vector<16x32xf32>
    %1281 = arith.select %17, %1279, %1280 : vector<16x32xi1>, vector<16x32xf32>
    %1282 = vector.broadcast %1272 : vector<1x32xf32> to vector<16x32xf32>
    %1283 = arith.mulf %1282, %1281 : vector<16x32xf32>
    %1284 = arith.addf %1252, %1283 : vector<16x32xf32>
    %1285 = arith.mulf %1255, %1188 : vector<8x32xf32>
    %1286 = arith.mulf %1258, %1191 : vector<8x32xf32>
    %1287 = arith.subf %1285, %1286 : vector<8x32xf32>
    %1288 = arith.mulf %1255, %1191 : vector<8x32xf32>
    %1289 = arith.mulf %1258, %1188 : vector<8x32xf32>
    %1290 = arith.addf %1288, %1289 : vector<8x32xf32>
    %cst_378 = arith.constant dense<0.000000e+00> : vector<32xf32>
    %1291 = vector.multi_reduction <add>, %1287, %cst_378 [0] : vector<8x32xf32> to vector<32xf32>
    %1292 = vector.shape_cast %1291 : vector<32xf32> to vector<1x32xf32>
    %cst_379 = arith.constant 2.000000e+00 : f32
    %1293 = vector.broadcast %cst_379 : f32 to vector<1x32xf32>
    %1294 = arith.mulf %1293, %1292 : vector<1x32xf32>
    %c6_i32_380 = arith.constant 6 : i32
    %1295 = tpu.dynamic_rotate %1138 by %c6_i32_380 dim 0 : vector<16x32xf32>, i32 -> vector<16x32xf32>
    %cst_381 = arith.constant 0.000000e+00 : f32
    %1296 = vector.broadcast %cst_381 : f32 to vector<16x32xf32>
    %1297 = arith.select %19, %1295, %1296 : vector<16x32xi1>, vector<16x32xf32>
    %1298 = vector.broadcast %1294 : vector<1x32xf32> to vector<16x32xf32>
    %1299 = arith.mulf %1298, %1297 : vector<16x32xf32>
    %1300 = arith.addf %1268, %1299 : vector<16x32xf32>
    %cst_382 = arith.constant dense<0.000000e+00> : vector<32xf32>
    %1301 = vector.multi_reduction <add>, %1275, %cst_382 [0] : vector<8x32xf32> to vector<32xf32>
    %1302 = vector.shape_cast %1301 : vector<32xf32> to vector<1x32xf32>
    %cst_383 = arith.constant 2.000000e+00 : f32
    %1303 = vector.broadcast %cst_383 : f32 to vector<1x32xf32>
    %1304 = arith.mulf %1303, %1302 : vector<1x32xf32>
    %1305 = arith.mulf %1275, %1188 : vector<8x32xf32>
    %1306 = arith.mulf %1278, %1191 : vector<8x32xf32>
    %1307 = arith.subf %1305, %1306 : vector<8x32xf32>
    %1308 = arith.mulf %1275, %1191 : vector<8x32xf32>
    %1309 = arith.mulf %1278, %1188 : vector<8x32xf32>
    %1310 = arith.addf %1308, %1309 : vector<8x32xf32>
    %c7_i32_384 = arith.constant 7 : i32
    %1311 = tpu.dynamic_rotate %1138 by %c7_i32_384 dim 0 : vector<16x32xf32>, i32 -> vector<16x32xf32>
    %cst_385 = arith.constant 0.000000e+00 : f32
    %1312 = vector.broadcast %cst_385 : f32 to vector<16x32xf32>
    %1313 = arith.select %21, %1311, %1312 : vector<16x32xi1>, vector<16x32xf32>
    %1314 = vector.broadcast %1304 : vector<1x32xf32> to vector<16x32xf32>
    %1315 = arith.mulf %1314, %1313 : vector<16x32xf32>
    %1316 = arith.addf %1284, %1315 : vector<16x32xf32>
    %1317 = arith.mulf %1287, %1188 : vector<8x32xf32>
    %1318 = arith.mulf %1290, %1191 : vector<8x32xf32>
    %1319 = arith.subf %1317, %1318 : vector<8x32xf32>
    %1320 = arith.mulf %1287, %1191 : vector<8x32xf32>
    %1321 = arith.mulf %1290, %1188 : vector<8x32xf32>
    %1322 = arith.addf %1320, %1321 : vector<8x32xf32>
    %cst_386 = arith.constant dense<0.000000e+00> : vector<32xf32>
    %1323 = vector.multi_reduction <add>, %1319, %cst_386 [0] : vector<8x32xf32> to vector<32xf32>
    %1324 = vector.shape_cast %1323 : vector<32xf32> to vector<1x32xf32>
    %cst_387 = arith.constant 2.000000e+00 : f32
    %1325 = vector.broadcast %cst_387 : f32 to vector<1x32xf32>
    %1326 = arith.mulf %1325, %1324 : vector<1x32xf32>
    %c8_i32_388 = arith.constant 8 : i32
    %1327 = tpu.dynamic_rotate %1138 by %c8_i32_388 dim 0 : vector<16x32xf32>, i32 -> vector<16x32xf32>
    %cst_389 = arith.constant 0.000000e+00 : f32
    %1328 = vector.broadcast %cst_389 : f32 to vector<16x32xf32>
    %1329 = arith.select %23, %1327, %1328 : vector<16x32xi1>, vector<16x32xf32>
    %1330 = vector.broadcast %1326 : vector<1x32xf32> to vector<16x32xf32>
    %1331 = arith.mulf %1330, %1329 : vector<16x32xf32>
    %1332 = arith.addf %1300, %1331 : vector<16x32xf32>
    %cst_390 = arith.constant dense<0.000000e+00> : vector<32xf32>
    %1333 = vector.multi_reduction <add>, %1307, %cst_390 [0] : vector<8x32xf32> to vector<32xf32>
    %1334 = vector.shape_cast %1333 : vector<32xf32> to vector<1x32xf32>
    %cst_391 = arith.constant 2.000000e+00 : f32
    %1335 = vector.broadcast %cst_391 : f32 to vector<1x32xf32>
    %1336 = arith.mulf %1335, %1334 : vector<1x32xf32>
    %1337 = arith.mulf %1307, %1188 : vector<8x32xf32>
    %1338 = arith.mulf %1310, %1191 : vector<8x32xf32>
    %1339 = arith.subf %1337, %1338 : vector<8x32xf32>
    %1340 = arith.mulf %1307, %1191 : vector<8x32xf32>
    %1341 = arith.mulf %1310, %1188 : vector<8x32xf32>
    %1342 = arith.addf %1340, %1341 : vector<8x32xf32>
    %c9_i32_392 = arith.constant 9 : i32
    %1343 = tpu.dynamic_rotate %1138 by %c9_i32_392 dim 0 : vector<16x32xf32>, i32 -> vector<16x32xf32>
    %cst_393 = arith.constant 0.000000e+00 : f32
    %1344 = vector.broadcast %cst_393 : f32 to vector<16x32xf32>
    %1345 = arith.select %25, %1343, %1344 : vector<16x32xi1>, vector<16x32xf32>
    %1346 = vector.broadcast %1336 : vector<1x32xf32> to vector<16x32xf32>
    %1347 = arith.mulf %1346, %1345 : vector<16x32xf32>
    %1348 = arith.addf %1316, %1347 : vector<16x32xf32>
    %1349 = arith.mulf %1319, %1188 : vector<8x32xf32>
    %1350 = arith.mulf %1322, %1191 : vector<8x32xf32>
    %1351 = arith.subf %1349, %1350 : vector<8x32xf32>
    %1352 = arith.mulf %1319, %1191 : vector<8x32xf32>
    %1353 = arith.mulf %1322, %1188 : vector<8x32xf32>
    %1354 = arith.addf %1352, %1353 : vector<8x32xf32>
    %cst_394 = arith.constant dense<0.000000e+00> : vector<32xf32>
    %1355 = vector.multi_reduction <add>, %1351, %cst_394 [0] : vector<8x32xf32> to vector<32xf32>
    %1356 = vector.shape_cast %1355 : vector<32xf32> to vector<1x32xf32>
    %cst_395 = arith.constant 2.000000e+00 : f32
    %1357 = vector.broadcast %cst_395 : f32 to vector<1x32xf32>
    %1358 = arith.mulf %1357, %1356 : vector<1x32xf32>
    %c10_i32_396 = arith.constant 10 : i32
    %1359 = tpu.dynamic_rotate %1138 by %c10_i32_396 dim 0 : vector<16x32xf32>, i32 -> vector<16x32xf32>
    %cst_397 = arith.constant 0.000000e+00 : f32
    %1360 = vector.broadcast %cst_397 : f32 to vector<16x32xf32>
    %1361 = arith.select %27, %1359, %1360 : vector<16x32xi1>, vector<16x32xf32>
    %1362 = vector.broadcast %1358 : vector<1x32xf32> to vector<16x32xf32>
    %1363 = arith.mulf %1362, %1361 : vector<16x32xf32>
    %1364 = arith.addf %1332, %1363 : vector<16x32xf32>
    %cst_398 = arith.constant dense<0.000000e+00> : vector<32xf32>
    %1365 = vector.multi_reduction <add>, %1339, %cst_398 [0] : vector<8x32xf32> to vector<32xf32>
    %1366 = vector.shape_cast %1365 : vector<32xf32> to vector<1x32xf32>
    %cst_399 = arith.constant 2.000000e+00 : f32
    %1367 = vector.broadcast %cst_399 : f32 to vector<1x32xf32>
    %1368 = arith.mulf %1367, %1366 : vector<1x32xf32>
    %1369 = arith.mulf %1339, %1188 : vector<8x32xf32>
    %1370 = arith.mulf %1342, %1191 : vector<8x32xf32>
    %1371 = arith.subf %1369, %1370 : vector<8x32xf32>
    %1372 = arith.mulf %1339, %1191 : vector<8x32xf32>
    %1373 = arith.mulf %1342, %1188 : vector<8x32xf32>
    %1374 = arith.addf %1372, %1373 : vector<8x32xf32>
    %c11_i32_400 = arith.constant 11 : i32
    %1375 = tpu.dynamic_rotate %1138 by %c11_i32_400 dim 0 : vector<16x32xf32>, i32 -> vector<16x32xf32>
    %cst_401 = arith.constant 0.000000e+00 : f32
    %1376 = vector.broadcast %cst_401 : f32 to vector<16x32xf32>
    %1377 = arith.select %29, %1375, %1376 : vector<16x32xi1>, vector<16x32xf32>
    %1378 = vector.broadcast %1368 : vector<1x32xf32> to vector<16x32xf32>
    %1379 = arith.mulf %1378, %1377 : vector<16x32xf32>
    %1380 = arith.addf %1348, %1379 : vector<16x32xf32>
    %1381 = arith.mulf %1351, %1188 : vector<8x32xf32>
    %1382 = arith.mulf %1354, %1191 : vector<8x32xf32>
    %1383 = arith.subf %1381, %1382 : vector<8x32xf32>
    %1384 = arith.mulf %1351, %1191 : vector<8x32xf32>
    %1385 = arith.mulf %1354, %1188 : vector<8x32xf32>
    %1386 = arith.addf %1384, %1385 : vector<8x32xf32>
    %cst_402 = arith.constant dense<0.000000e+00> : vector<32xf32>
    %1387 = vector.multi_reduction <add>, %1383, %cst_402 [0] : vector<8x32xf32> to vector<32xf32>
    %1388 = vector.shape_cast %1387 : vector<32xf32> to vector<1x32xf32>
    %cst_403 = arith.constant 2.000000e+00 : f32
    %1389 = vector.broadcast %cst_403 : f32 to vector<1x32xf32>
    %1390 = arith.mulf %1389, %1388 : vector<1x32xf32>
    %c12_i32_404 = arith.constant 12 : i32
    %1391 = tpu.dynamic_rotate %1138 by %c12_i32_404 dim 0 : vector<16x32xf32>, i32 -> vector<16x32xf32>
    %cst_405 = arith.constant 0.000000e+00 : f32
    %1392 = vector.broadcast %cst_405 : f32 to vector<16x32xf32>
    %1393 = arith.select %31, %1391, %1392 : vector<16x32xi1>, vector<16x32xf32>
    %1394 = vector.broadcast %1390 : vector<1x32xf32> to vector<16x32xf32>
    %1395 = arith.mulf %1394, %1393 : vector<16x32xf32>
    %1396 = arith.addf %1364, %1395 : vector<16x32xf32>
    %cst_406 = arith.constant dense<0.000000e+00> : vector<32xf32>
    %1397 = vector.multi_reduction <add>, %1371, %cst_406 [0] : vector<8x32xf32> to vector<32xf32>
    %1398 = vector.shape_cast %1397 : vector<32xf32> to vector<1x32xf32>
    %cst_407 = arith.constant 2.000000e+00 : f32
    %1399 = vector.broadcast %cst_407 : f32 to vector<1x32xf32>
    %1400 = arith.mulf %1399, %1398 : vector<1x32xf32>
    %1401 = arith.mulf %1371, %1188 : vector<8x32xf32>
    %1402 = arith.mulf %1374, %1191 : vector<8x32xf32>
    %1403 = arith.subf %1401, %1402 : vector<8x32xf32>
    %c13_i32_408 = arith.constant 13 : i32
    %1404 = tpu.dynamic_rotate %1138 by %c13_i32_408 dim 0 : vector<16x32xf32>, i32 -> vector<16x32xf32>
    %cst_409 = arith.constant 0.000000e+00 : f32
    %1405 = vector.broadcast %cst_409 : f32 to vector<16x32xf32>
    %1406 = arith.select %33, %1404, %1405 : vector<16x32xi1>, vector<16x32xf32>
    %1407 = vector.broadcast %1400 : vector<1x32xf32> to vector<16x32xf32>
    %1408 = arith.mulf %1407, %1406 : vector<16x32xf32>
    %1409 = arith.addf %1380, %1408 : vector<16x32xf32>
    %1410 = arith.mulf %1383, %1188 : vector<8x32xf32>
    %1411 = arith.mulf %1386, %1191 : vector<8x32xf32>
    %1412 = arith.subf %1410, %1411 : vector<8x32xf32>
    %cst_410 = arith.constant dense<0.000000e+00> : vector<32xf32>
    %1413 = vector.multi_reduction <add>, %1412, %cst_410 [0] : vector<8x32xf32> to vector<32xf32>
    %1414 = vector.shape_cast %1413 : vector<32xf32> to vector<1x32xf32>
    %cst_411 = arith.constant 2.000000e+00 : f32
    %1415 = vector.broadcast %cst_411 : f32 to vector<1x32xf32>
    %1416 = arith.mulf %1415, %1414 : vector<1x32xf32>
    %c14_i32_412 = arith.constant 14 : i32
    %1417 = tpu.dynamic_rotate %1138 by %c14_i32_412 dim 0 : vector<16x32xf32>, i32 -> vector<16x32xf32>
    %cst_413 = arith.constant 0.000000e+00 : f32
    %1418 = vector.broadcast %cst_413 : f32 to vector<16x32xf32>
    %1419 = arith.select %35, %1417, %1418 : vector<16x32xi1>, vector<16x32xf32>
    %1420 = vector.broadcast %1416 : vector<1x32xf32> to vector<16x32xf32>
    %1421 = arith.mulf %1420, %1419 : vector<16x32xf32>
    %1422 = arith.addf %1396, %1421 : vector<16x32xf32>
    %cst_414 = arith.constant dense<0.000000e+00> : vector<32xf32>
    %1423 = vector.multi_reduction <add>, %1403, %cst_414 [0] : vector<8x32xf32> to vector<32xf32>
    %1424 = vector.shape_cast %1423 : vector<32xf32> to vector<1x32xf32>
    %cst_415 = arith.constant 2.000000e+00 : f32
    %1425 = vector.broadcast %cst_415 : f32 to vector<1x32xf32>
    %1426 = arith.mulf %1425, %1424 : vector<1x32xf32>
    %c15_i32_416 = arith.constant 15 : i32
    %1427 = tpu.dynamic_rotate %1138 by %c15_i32_416 dim 0 : vector<16x32xf32>, i32 -> vector<16x32xf32>
    %cst_417 = arith.constant 0.000000e+00 : f32
    %1428 = vector.broadcast %cst_417 : f32 to vector<16x32xf32>
    %1429 = arith.select %37, %1427, %1428 : vector<16x32xi1>, vector<16x32xf32>
    %1430 = vector.broadcast %1426 : vector<1x32xf32> to vector<16x32xf32>
    %1431 = arith.mulf %1430, %1429 : vector<16x32xf32>
    %1432 = arith.addf %1409, %1431 : vector<16x32xf32>
    %1433 = arith.addf %1422, %1432 : vector<16x32xf32>
    %c3_418 = arith.constant 3 : index
    %c0_419 = arith.constant 0 : index
    %c0_420 = arith.constant 0 : index
    %1434 = vector.load %arg9[%c3_418, %c0_419, %c0_420] : memref<4x1x32xf32, #tpu.memory_space<vmem>>, vector<1x1x32xf32>
    %1435 = vector.shape_cast %1434 : vector<1x1x32xf32> to vector<1x32xf32>
    %1436 = vector.broadcast %1435 : vector<1x32xf32> to vector<16x32xf32>
    %1437 = arith.mulf %1138, %1436 : vector<16x32xf32>
    %1438 = arith.addf %1433, %1437 : vector<16x32xf32>
    %cst_421 = arith.constant 5.000000e-01 : f32
    %1439 = vector.broadcast %cst_421 : f32 to vector<16x32xf32>
    %1440 = arith.mulf %1439, %1438 : vector<16x32xf32>
    %cst_422 = arith.constant 0.707106769 : f32
    %1441 = vector.broadcast %cst_422 : f32 to vector<16x32xf32>
    %1442 = arith.mulf %1438, %1441 : vector<16x32xf32>
    %cst_423 = arith.constant -4.000000e+00 : f32
    %cst_424 = arith.constant 4.000000e+00 : f32
    %1443 = vector.broadcast %cst_423 : f32 to vector<16x32xf32>
    %1444 = arith.maximumf %1443, %1442 : vector<16x32xf32>
    %1445 = vector.broadcast %cst_424 : f32 to vector<16x32xf32>
    %1446 = arith.minimumf %1445, %1444 : vector<16x32xf32>
    %1447 = arith.mulf %1446, %1446 : vector<16x32xf32>
    %cst_425 = arith.constant -2.72614237E-10 : f32
    %1448 = vector.broadcast %cst_425 : f32 to vector<16x32xf32>
    %1449 = arith.mulf %1447, %1448 : vector<16x32xf32>
    %cst_426 = arith.constant 2.77068146E-8 : f32
    %1450 = vector.broadcast %cst_426 : f32 to vector<16x32xf32>
    %1451 = arith.addf %1449, %1450 : vector<16x32xf32>
    %1452 = arith.mulf %1451, %1447 : vector<16x32xf32>
    %cst_427 = arith.constant -2.10102394E-6 : f32
    %1453 = vector.broadcast %cst_427 : f32 to vector<16x32xf32>
    %1454 = arith.addf %1452, %1453 : vector<16x32xf32>
    %1455 = arith.mulf %1454, %1447 : vector<16x32xf32>
    %cst_428 = arith.constant -5.69250624E-5 : f32
    %1456 = vector.broadcast %cst_428 : f32 to vector<16x32xf32>
    %1457 = arith.addf %1455, %1456 : vector<16x32xf32>
    %1458 = arith.mulf %1457, %1447 : vector<16x32xf32>
    %cst_429 = arith.constant -7.34990637E-4 : f32
    %1459 = vector.broadcast %cst_429 : f32 to vector<16x32xf32>
    %1460 = arith.addf %1458, %1459 : vector<16x32xf32>
    %1461 = arith.mulf %1460, %1447 : vector<16x32xf32>
    %cst_430 = arith.constant -2.954600e-03 : f32
    %1462 = vector.broadcast %cst_430 : f32 to vector<16x32xf32>
    %1463 = arith.addf %1461, %1462 : vector<16x32xf32>
    %1464 = arith.mulf %1463, %1447 : vector<16x32xf32>
    %cst_431 = arith.constant -0.0160960332 : f32
    %1465 = vector.broadcast %cst_431 : f32 to vector<16x32xf32>
    %1466 = arith.addf %1464, %1465 : vector<16x32xf32>
    %1467 = arith.mulf %1466, %1446 : vector<16x32xf32>
    %cst_432 = arith.constant -1.45660715E-5 : f32
    %1468 = vector.broadcast %cst_432 : f32 to vector<16x32xf32>
    %1469 = arith.mulf %1447, %1468 : vector<16x32xf32>
    %cst_433 = arith.constant -2.13374049E-4 : f32
    %1470 = vector.broadcast %cst_433 : f32 to vector<16x32xf32>
    %1471 = arith.addf %1469, %1470 : vector<16x32xf32>
    %1472 = arith.mulf %1471, %1447 : vector<16x32xf32>
    %cst_434 = arith.constant -0.00168282702 : f32
    %1473 = vector.broadcast %cst_434 : f32 to vector<16x32xf32>
    %1474 = arith.addf %1472, %1473 : vector<16x32xf32>
    %1475 = arith.mulf %1474, %1447 : vector<16x32xf32>
    %cst_435 = arith.constant -0.00737332925 : f32
    %1476 = vector.broadcast %cst_435 : f32 to vector<16x32xf32>
    %1477 = arith.addf %1475, %1476 : vector<16x32xf32>
    %1478 = arith.mulf %1477, %1447 : vector<16x32xf32>
    %cst_436 = arith.constant -0.0142647391 : f32
    %1479 = vector.broadcast %cst_436 : f32 to vector<16x32xf32>
    %1480 = arith.addf %1478, %1479 : vector<16x32xf32>
    %1481 = tpu.reciprocal %1480 {approx = true} : vector<16x32xf32> -> vector<16x32xf32>
    %1482 = arith.mulf %1480, %1481 : vector<16x32xf32>
    %cst_437 = arith.constant 2.000000e+00 : f32
    %1483 = vector.broadcast %cst_437 : f32 to vector<16x32xf32>
    %1484 = arith.subf %1483, %1482 : vector<16x32xf32>
    %1485 = arith.mulf %1481, %1484 : vector<16x32xf32>
    %1486 = arith.mulf %1467, %1485 : vector<16x32xf32>
    %cst_438 = arith.constant 1.000000e+00 : f32
    %1487 = vector.broadcast %cst_438 : f32 to vector<16x32xf32>
    %1488 = arith.addf %1487, %1486 : vector<16x32xf32>
    %1489 = arith.mulf %1440, %1488 : vector<16x32xf32>
    %c3_439 = arith.constant 3 : index
    %c0_440 = arith.constant 0 : index
    %c0_441 = arith.constant 0 : index
    %1490 = vector.load %arg10[%c3_439, %c0_440, %c0_441] : memref<4x32x64xf32, #tpu.memory_space<vmem>>, vector<1x32x64xf32>
    %1491 = vector.shape_cast %1490 : vector<1x32x64xf32> to vector<32x64xf32>
    %cst_442 = arith.constant dense<0.000000e+00> : vector<16x64xf32>
    %1492 = tpu.matmul %1489, %1491, %cst_442 {dimension_numbers = #tpu.dot_dimension_numbers<[1], [0], [0], [1], [0, 0, 1, 1], [], []>} : vector<16x32xf32>, vector<32x64xf32>, vector<16x64xf32> -> vector<16x64xf32>
    %c3_443 = arith.constant 3 : index
    %c0_444 = arith.constant 0 : index
    %c0_445 = arith.constant 0 : index
    %1493 = vector.load %arg11[%c3_443, %c0_444, %c0_445] : memref<4x1x64xf32, #tpu.memory_space<vmem>>, vector<1x1x64xf32>
    %1494 = vector.shape_cast %1493 : vector<1x1x64xf32> to vector<1x64xf32>
    %1495 = vector.broadcast %1494 : vector<1x64xf32> to vector<16x64xf32>
    %1496 = arith.addf %1492, %1495 : vector<16x64xf32>
    %1497 = vector.extract_strided_slice %1496 {offsets = [0, 0], sizes = [16, 32], strides = [1, 1]} : vector<16x64xf32> to vector<16x32xf32>
    %1498 = vector.extract_strided_slice %1496 {offsets = [0, 32], sizes = [16, 32], strides = [1, 1]} : vector<16x64xf32> to vector<16x32xf32>
    %1499 = arith.negf %1498 : vector<16x32xf32>
    %1500 = math.exp %1499 : vector<16x32xf32>
    %cst_446 = arith.constant 1.000000e+00 : f32
    %1501 = vector.broadcast %cst_446 : f32 to vector<16x32xf32>
    %1502 = arith.addf %1501, %1500 : vector<16x32xf32>
    %1503 = arith.divf %1501, %1502 : vector<16x32xf32>
    %1504 = arith.mulf %1497, %1503 : vector<16x32xf32>
    %1505 = arith.addf %1504, %1138 : vector<16x32xf32>
    %1506 = vector.extract_strided_slice %1505 {offsets = [15, 0], sizes = [1, 32], strides = [1, 1]} : vector<16x32xf32> to vector<1x32xf32>
    %c0_447 = arith.constant 0 : index
    %c0_448 = arith.constant 0 : index
    %1507 = vector.load %arg12[%c0_447, %c0_448] : memref<32x1xf32, #tpu.memory_space<vmem>>, vector<32x1xf32>
    %cst_449 = arith.constant dense<0.000000e+00> : vector<1x1xf32>
    %1508 = tpu.matmul %1506, %1507, %cst_449 {dimension_numbers = #tpu.dot_dimension_numbers<[1], [0], [0], [1], [0, 0, 1, 1], [], []>} : vector<1x32xf32>, vector<32x1xf32>, vector<1x1xf32> -> vector<1x1xf32>
    %c0_450 = arith.constant 0 : index
    %c0_451 = arith.constant 0 : index
    %1509 = vector.load %arg13[%c0_450, %c0_451] : memref<1x1xf32, #tpu.memory_space<vmem>>, vector<1x1xf32>
    %1510 = arith.addf %1508, %1509 : vector<1x1xf32>
    %c0_452 = arith.constant 0 : index
    %c0_453 = arith.constant 0 : index
    %c0_454 = arith.constant 0 : index
    %1511 = vector.load %arg14[%c0_452, %c0_453, %c0_454] : memref<1x1x1xf32, #tpu.memory_space<vmem>>, vector<1x1x1xf32>
    %1512 = vector.shape_cast %1511 : vector<1x1x1xf32> to vector<1x1xf32>
    %1513 = vector.shape_cast %1510 : vector<1x1xf32> to vector<1x1x1xf32>
    tpu.vector_store %arg14[%c0_452, %c0_453, %c0_454], %1513 {strides = array<i32>} : memref<1x1x1xf32, #tpu.memory_space<vmem>>, vector<1x1x1xf32>,
    return
  }
  func.func @transform_0(%arg0: i32) -> (i32, i32, i32) {
    %c0_i32 = arith.constant 0 : i32
    %c0_i32_0 = arith.constant 0 : i32
    %c0_i32_1 = arith.constant 0 : i32
    return %arg0, %c0_i32, %c0_i32_0 : i32, i32, i32
  }
  func.func @transform_1(%arg0: i32) -> (i32, i32) {
    %c0_i32 = arith.constant 0 : i32
    %c0_i32_0 = arith.constant 0 : i32
    %c0_i32_1 = arith.constant 0 : i32
    return %c0_i32, %c0_i32_0 : i32, i32
  }
  func.func @transform_2(%arg0: i32) -> (i32, i32) {
    %c0_i32 = arith.constant 0 : i32
    %c0_i32_0 = arith.constant 0 : i32
    %c0_i32_1 = arith.constant 0 : i32
    return %c0_i32, %c0_i32_0 : i32, i32
  }
  func.func @transform_3(%arg0: i32) -> (i32, i32, i32) {
    %c0_i32 = arith.constant 0 : i32
    %c0_i32_0 = arith.constant 0 : i32
    %c0_i32_1 = arith.constant 0 : i32
    %c0_i32_2 = arith.constant 0 : i32
    return %c0_i32, %c0_i32_0, %c0_i32_1 : i32, i32, i32
  }
  func.func @transform_4(%arg0: i32) -> (i32, i32, i32) {
    %c0_i32 = arith.constant 0 : i32
    %c0_i32_0 = arith.constant 0 : i32
    %c0_i32_1 = arith.constant 0 : i32
    %c0_i32_2 = arith.constant 0 : i32
    return %c0_i32, %c0_i32_0, %c0_i32_1 : i32, i32, i32
  }
  func.func @transform_5(%arg0: i32) -> (i32, i32, i32) {
    %c0_i32 = arith.constant 0 : i32
    %c0_i32_0 = arith.constant 0 : i32
    %c0_i32_1 = arith.constant 0 : i32
    %c0_i32_2 = arith.constant 0 : i32
    return %c0_i32, %c0_i32_0, %c0_i32_1 : i32, i32, i32
  }
  func.func @transform_6(%arg0: i32) -> (i32, i32, i32) {
    %c0_i32 = arith.constant 0 : i32
    %c0_i32_0 = arith.constant 0 : i32
    %c0_i32_1 = arith.constant 0 : i32
    %c0_i32_2 = arith.constant 0 : i32
    return %c0_i32, %c0_i32_0, %c0_i32_1 : i32, i32, i32
  }
  func.func @transform_7(%arg0: i32) -> (i32, i32, i32) {
    %c0_i32 = arith.constant 0 : i32
    %c0_i32_0 = arith.constant 0 : i32
    %c0_i32_1 = arith.constant 0 : i32
    %c0_i32_2 = arith.constant 0 : i32
    return %c0_i32, %c0_i32_0, %c0_i32_1 : i32, i32, i32
  }
  func.func @transform_8(%arg0: i32) -> (i32, i32, i32) {
    %c0_i32 = arith.constant 0 : i32
    %c0_i32_0 = arith.constant 0 : i32
    %c0_i32_1 = arith.constant 0 : i32
    %c0_i32_2 = arith.constant 0 : i32
    return %c0_i32, %c0_i32_0, %c0_i32_1 : i32, i32, i32
  }
  func.func @transform_9(%arg0: i32) -> (i32, i32, i32) {
    %c0_i32 = arith.constant 0 : i32
    %c0_i32_0 = arith.constant 0 : i32
    %c0_i32_1 = arith.constant 0 : i32
    %c0_i32_2 = arith.constant 0 : i32
    return %c0_i32, %c0_i32_0, %c0_i32_1 : i32, i32, i32
  }
  func.func @transform_10(%arg0: i32) -> (i32, i32, i32) {
    %c0_i32 = arith.constant 0 : i32
    %c0_i32_0 = arith.constant 0 : i32
    %c0_i32_1 = arith.constant 0 : i32
    %c0_i32_2 = arith.constant 0 : i32
    return %c0_i32, %c0_i32_0, %c0_i32_1 : i32, i32, i32
  }
  func.func @transform_11(%arg0: i32) -> (i32, i32) {
    %c0_i32 = arith.constant 0 : i32
    %c0_i32_0 = arith.constant 0 : i32
    %c0_i32_1 = arith.constant 0 : i32
    return %c0_i32, %c0_i32_0 : i32, i32
  }
  func.func @transform_12(%arg0: i32) -> (i32, i32) {
    %c0_i32 = arith.constant 0 : i32
    %c0_i32_0 = arith.constant 0 : i32
    %c0_i32_1 = arith.constant 0 : i32
    return %c0_i32, %c0_i32_0 : i32, i32
  }
  func.func @transform_13(%arg0: i32) -> (i32, i32, i32) {
    %c0_i32 = arith.constant 0 : i32
    %c0_i32_0 = arith.constant 0 : i32
    %c0_i32_1 = arith.constant 0 : i32
    return %arg0, %c0_i32, %c0_i32_0 : i32, i32, i32
  }
}

</mosaic_0001>

<llo_original>
// kernel: model_forward.1
$region0: #{model_forward.1}
  #allocation0 [shape = 'u32[]', space=smem, size = 0x4, offset = 0x4, fixed_abs, tag = 'smem constant byte address 0x4 - core index']
  #allocation1 [shape = 'u32[72,128]{1,0:T(1,128)}', space=vmem, size = 0x9000, scoped, tag = 'internal scratch']
  #allocation2 [shape = 'f32[1,1]{1,0:T(1,128)S(1)}', space=vmem, size = 0x200, scoped, tag = 'scoped memory for model_forward.1']
  %s0 = inlined_call_operand.vmem [shape: f32[2,16,4], index: 0, kind: input, shape index: {}]
  %s1 = inlined_call_operand.vmem [shape: f32[4,32], index: 1, kind: input, shape index: {}]
  %s2 = inlined_call_operand.vmem [shape: f32[1,32], index: 2, kind: input, shape index: {}]
  %s3 = inlined_call_operand.vmem [shape: f32[4,1,32], index: 3, kind: input, shape index: {}]
  %s4 = inlined_call_operand.vmem [shape: f32[4,8,32], index: 4, kind: input, shape index: {}]
  %s5 = inlined_call_operand.vmem [shape: f32[4,8,32], index: 5, kind: input, shape index: {}]
  %s6 = inlined_call_operand.hbm [shape: f32[4,8,32], index: 6, kind: input, shape index: {}]
  %s7 = inlined_call_operand.hbm [shape: f32[4,8,32], index: 7, kind: input, shape index: {}]
  %s8 = inlined_call_operand.hbm [shape: f32[4,1,32], index: 8, kind: input, shape index: {}]
  %s9 = inlined_call_operand.hbm [shape: f32[4,32,64], index: 9, kind: input, shape index: {}]
  %s10 = inlined_call_operand.hbm [shape: f32[4,1,64], index: 10, kind: input, shape index: {}]
  %s11 = inlined_call_operand.vmem [shape: f32[32,1], index: 11, kind: input, shape index: {}]
  %s12 = inlined_call_operand.<no memory space> [shape: f32[1,1], index: 12, kind: input, shape index: {}]
  %s13 = inlined_call_operand.vmem [shape: f32[2,1,1], index: 13, kind: output, shape index: {}]
  %s14 = sld [smem:[#allocation0]]
  $region105: #{model_forward.1} parent=0
    _
  %s16 = ssub.s32 1, %s14
  %s17 = scalar_select 0, %s16, %s14
  %v18 = vstv %s12
  %19 = vst [vmem:[#allocation2] sm:$0x1] %v18
  $region1: #{model_forward.1} parent=0
    #allocation3 [shape = 'u8[16384]{0}', space=vmem, size = 0x4000, scoped, tag = 'input window, operand 6, single buffered']
    #allocation4 [shape = 's32[2]{0}', space=sflag, size = 0x8, scoped, tag = 'scoped memory for model_forward.1']
    #allocation5 [shape = 'u8[16384]{0}', space=vmem, size = 0x4000, scoped, tag = 'input window, operand 7, single buffered']
    #allocation6 [shape = 's32[1]{0}', space=sflag, size = 0x4, scoped, tag = 'scoped memory for model_forward.1']
    #allocation7 [shape = 'u8[2048]{0}', space=vmem, size = 0x800, scoped, tag = 'input window, operand 8, single buffered']
    #allocation8 [shape = 'u8[65536]{0}', space=vmem, size = 0x10000, scoped, tag = 'input window, operand 9, single buffered']
    #allocation9 [shape = 's32[1]{0}', space=sflag, size = 0x4, scoped, tag = 'scoped memory for model_forward.1']
    #allocation10 [shape = 'u8[2048]{0}', space=vmem, size = 0x800, scoped, tag = 'input window, operand 10, single buffered']
    %20 = vsyncpa [#allocation4], 0
    %21 = vsyncpa [#allocation6], 0
    %22 = vsyncpa [#allocation9], 0
    loop: start=0, step=1, limit=4
    $region2: #{model_forward.1} parent=1 // loop_pre_header
      _
    $region3: #{model_forward.1} parent=1 // loop_header
      %s24 = sphi 0, %s28
      %p25 = scmp.ge.s32.totalorder %s24, 4
      %s34 = sphi 0, %s36
      %s37 = sphi 0, %s34
      %s38 = sphi 0, %s37
      %s54 = sphi 0, %s38
      %s58 = sphi 0, %s58
      %s60 = sphi 0, %s58
      %s61 = sphi 0, %s60
      %s75 = sphi 0, %s61
      %s79 = sphi 0, %s79
      %s81 = sphi 0, %s79
      %s82 = sphi 0, %s81
      %s96 = sphi 0, %s82
      %s100 = sphi 0, %s100
      %s102 = sphi 0, %s100
      %s103 = sphi 0, %s102
      %s117 = sphi 0, %s103
      %s121 = sphi 0, %s121
      %s123 = sphi 0, %s121
      %s124 = sphi 0, %s123
      %s138 = sphi 0, %s124
      %s142 = sphi 0, %s142
      %s144 = sphi 0, %s142
      %s145 = sphi 0, %s144
      %s159 = sphi 0, %s145
      %s163 = sphi 0, %s163
      %s165 = sphi 0, %s163
      %s166 = sphi 0, %s165
      %s180 = sphi 0, %s166
      %s184 = sphi 0, %s184
      %s186 = sphi 0, %s184
      %s187 = sphi 0, %s186
      %s201 = sphi 0, %s187
      %s205 = sphi 0, %s205
      %s207 = sphi 0, %s205
      %s208 = sphi 0, %s207
      %s222 = sphi 0, %s208
      %s226 = sphi 0, %s226
      %s228 = sphi 0, %s226
      %s229 = sphi 0, %s228
      %s243 = sphi 0, %s229
      %s247 = sphi 0, %s247
      %s249 = sphi 0, %s247
      %s250 = sphi 0, %s249
      %s264 = sphi 0, %s250
      %s268 = sphi 0, %s268
      %s270 = sphi 0, %s268
      %s271 = sphi 0, %s270
      %s285 = sphi 0, %s271
      %s289 = sphi 0, %s289
      %s291 = sphi 0, %s289
      %s292 = sphi 0, %s291
      %s306 = sphi 0, %s292
      %s312 = sphi 0, %s314
      %s315 = sphi 0, %s312
      %s316 = sphi 0, %s315
      %s332 = sphi 0, %s316
    $region4: #{model_forward.1} parent=1 // loop_header_branch
      %27 = sbr.rel (%p25) target = $region8
    $region5: #{model_forward.1} parent=1 // loop_body
      %s29 = ssub.s32 %s24, 1
      %s30 = ssub.s32 %s24, 2
      %s31 = sadd.s32 %s24, 1
      %s32 = ssub.s32 %s24, %s31
      %p33 = scmp.eq.s32.totalorder %s32, 0
      %s35 = sadd.s32 %s34, 1
      %s36 = scalar_select %p33, %s34, %s35
      %p39 = pneg %p33
      %p40 = scmp.eq.s32.totalorder %s24, 1
      %p41 = por %p39, %p40
      %p42 = scmp.ne.s32.totalorder %s34, %s37
      %p43 = scmp.eq.s32.totalorder %s24, 0
      %p44 = por %p42, %p43
      %p45 = scmp.ne.s32.totalorder %s34, %s37
      %p46 = scmp.eq.s32.totalorder %s29, 1
      %p47 = por %p45, %p46
      %p48 = scmp.ne.s32.totalorder %s37, %s38
      %p49 = scmp.eq.s32.totalorder %s29, 0
      %p50 = por %p48, %p49
      %p51 = scmp.ne.s32.totalorder %s37, %s38
      %p52 = scmp.eq.s32.totalorder %s30, 1
      %p53 = por %p51, %p52
      %p55 = scmp.ne.s32.totalorder %s38, %s54
      %p56 = scmp.eq.s32.totalorder %s30, 0
      %p57 = por %p55, %p56
      %s59 = sadd.s32 %s58, 1
      %p62 = scmp.eq.s32.totalorder %s24, 1
      %p63 = scmp.ne.s32.totalorder %s58, %s60
      %p64 = scmp.eq.s32.totalorder %s24, 0
      %p65 = por %p63, %p64
      %p66 = scmp.ne.s32.totalorder %s58, %s60
      %p67 = scmp.eq.s32.totalorder %s29, 1
      %p68 = por %p66, %p67
      %p69 = scmp.ne.s32.totalorder %s60, %s61
      %p70 = scmp.eq.s32.totalorder %s29, 0
      %p71 = por %p69, %p70
      %p72 = scmp.ne.s32.totalorder %s60, %s61
      %p73 = scmp.eq.s32.totalorder %s30, 1
      %p74 = por %p72, %p73
      %p76 = scmp.ne.s32.totalorder %s61, %s75
      %p77 = scmp.eq.s32.totalorder %s30, 0
      %p78 = por %p76, %p77
      %s80 = sadd.s32 %s79, 1
      %p83 = scmp.eq.s32.totalorder %s24, 1
      %p84 = scmp.ne.s32.totalorder %s79, %s81
      %p85 = scmp.eq.s32.totalorder %s24, 0
      %p86 = por %p84, %p85
      %p87 = scmp.ne.s32.totalorder %s79, %s81
      %p88 = scmp.eq.s32.totalorder %s29, 1
      %p89 = por %p87, %p88
      %p90 = scmp.ne.s32.totalorder %s81, %s82
      %p91 = scmp.eq.s32.totalorder %s29, 0
      %p92 = por %p90, %p91
      %p93 = scmp.ne.s32.totalorder %s81, %s82
      %p94 = scmp.eq.s32.totalorder %s30, 1
      %p95 = por %p93, %p94
      %p97 = scmp.ne.s32.totalorder %s82, %s96
      %p98 = scmp.eq.s32.totalorder %s30, 0
      %p99 = por %p97, %p98
      %s101 = sadd.s32 %s100, 1
      %p104 = scmp.eq.s32.totalorder %s24, 1
      %p105 = scmp.ne.s32.totalorder %s100, %s102
      %p106 = scmp.eq.s32.totalorder %s24, 0
      %p107 = por %p105, %p106
      %p108 = scmp.ne.s32.totalorder %s100, %s102
      %p109 = scmp.eq.s32.totalorder %s29, 1
      %p110 = por %p108, %p109
      %p111 = scmp.ne.s32.totalorder %s102, %s103
      %p112 = scmp.eq.s32.totalorder %s29, 0
      %p113 = por %p111, %p112
      %p114 = scmp.ne.s32.totalorder %s102, %s103
      %p115 = scmp.eq.s32.totalorder %s30, 1
      %p116 = por %p114, %p115
      %p118 = scmp.ne.s32.totalorder %s103, %s117
      %p119 = scmp.eq.s32.totalorder %s30, 0
      %p120 = por %p118, %p119
      %s122 = sadd.s32 %s121, 1
      %p125 = scmp.eq.s32.totalorder %s24, 1
      %p126 = scmp.ne.s32.totalorder %s121, %s123
      %p127 = scmp.eq.s32.totalorder %s24, 0
      %p128 = por %p126, %p127
      %p129 = scmp.ne.s32.totalorder %s121, %s123
      %p130 = scmp.eq.s32.totalorder %s29, 1
      %p131 = por %p129, %p130
      %p132 = scmp.ne.s32.totalorder %s123, %s124
      %p133 = scmp.eq.s32.totalorder %s29, 0
      %p134 = por %p132, %p133
      %p135 = scmp.ne.s32.totalorder %s123, %s124
      %p136 = scmp.eq.s32.totalorder %s30, 1
      %p137 = por %p135, %p136
      %p139 = scmp.ne.s32.totalorder %s124, %s138
      %p140 = scmp.eq.s32.totalorder %s30, 0
      %p141 = por %p139, %p140
      %s143 = sadd.s32 %s142, 1
      %p146 = scmp.eq.s32.totalorder %s24, 1
      %p147 = scmp.ne.s32.totalorder %s142, %s144
      %p148 = scmp.eq.s32.totalorder %s24, 0
      %p149 = por %p147, %p148
      %p150 = scmp.ne.s32.totalorder %s142, %s144
      %p151 = scmp.eq.s32.totalorder %s29, 1
      %p152 = por %p150, %p151
      %p153 = scmp.ne.s32.totalorder %s144, %s145
      %p154 = scmp.eq.s32.totalorder %s29, 0
      %p155 = por %p153, %p154
      %p156 = scmp.ne.s32.totalorder %s144, %s145
      %p157 = scmp.eq.s32.totalorder %s30, 1
      %p158 = por %p156, %p157
      %p160 = scmp.ne.s32.totalorder %s145, %s159
      %p161 = scmp.eq.s32.totalorder %s30, 0
      %p162 = por %p160, %p161
      %s164 = sadd.s32 %s163, 1
      %p167 = scmp.eq.s32.totalorder %s24, 1
      %p168 = scmp.ne.s32.totalorder %s163, %s165
      %p169 = scmp.eq.s32.totalorder %s24, 0
      %p170 = por %p168, %p169
      %p171 = scmp.ne.s32.totalorder %s163, %s165
      %p172 = scmp.eq.s32.totalorder %s29, 1
      %p173 = por %p171, %p172
      %p174 = scmp.ne.s32.totalorder %s165, %s166
      %p175 = scmp.eq.s32.totalorder %s29, 0
      %p176 = por %p174, %p175
      %p177 = scmp.ne.s32.totalorder %s165, %s166
      %p178 = scmp.eq.s32.totalorder %s30, 1
      %p179 = por %p177, %p178
      %p181 = scmp.ne.s32.totalorder %s166, %s180
      %p182 = scmp.eq.s32.totalorder %s30, 0
      %p183 = por %p181, %p182
      %s185 = sadd.s32 %s184, 1
      %p188 = scmp.eq.s32.totalorder %s24, 1
      %p189 = scmp.ne.s32.totalorder %s184, %s186
      %p190 = scmp.eq.s32.totalorder %s24, 0
      %p191 = por %p189, %p190
      %p192 = scmp.ne.s32.totalorder %s184, %s186
      %p193 = scmp.eq.s32.totalorder %s29, 1
      %p194 = por %p192, %p193
      %p195 = scmp.ne.s32.totalorder %s186, %s187
      %p196 = scmp.eq.s32.totalorder %s29, 0
      %p197 = por %p195, %p196
      %p198 = scmp.ne.s32.totalorder %s186, %s187
      %p199 = scmp.eq.s32.totalorder %s30, 1
      %p200 = por %p198, %p199
      %p202 = scmp.ne.s32.totalorder %s187, %s201
      %p203 = scmp.eq.s32.totalorder %s30, 0
      %p204 = por %p202, %p203
      %s206 = sadd.s32 %s205, 1
      %p209 = scmp.eq.s32.totalorder %s24, 1
      %p210 = scmp.ne.s32.totalorder %s205, %s207
      %p211 = scmp.eq.s32.totalorder %s24, 0
      %p212 = por %p210, %p211
      %p213 = scmp.ne.s32.totalorder %s205, %s207
      %p214 = scmp.eq.s32.totalorder %s29, 1
      %p215 = por %p213, %p214
      %p216 = scmp.ne.s32.totalorder %s207, %s208
      %p217 = scmp.eq.s32.totalorder %s29, 0
      %p218 = por %p216, %p217
      %p219 = scmp.ne.s32.totalorder %s207, %s208
      %p220 = scmp.eq.s32.totalorder %s30, 1
      %p221 = por %p219, %p220
      %p223 = scmp.ne.s32.totalorder %s208, %s222
      %p224 = scmp.eq.s32.totalorder %s30, 0
      %p225 = por %p223, %p224
      %s227 = sadd.s32 %s226, 1
      %p230 = scmp.eq.s32.totalorder %s24, 1
      %p231 = scmp.ne.s32.totalorder %s226, %s228
      %p232 = scmp.eq.s32.totalorder %s24, 0
      %p233 = por %p231, %p232
      %p234 = scmp.ne.s32.totalorder %s226, %s228
      %p235 = scmp.eq.s32.totalorder %s29, 1
      %p236 = por %p234, %p235
      %p237 = scmp.ne.s32.totalorder %s228, %s229
      %p238 = scmp.eq.s32.totalorder %s29, 0
      %p239 = por %p237, %p238
      %p240 = scmp.ne.s32.totalorder %s228, %s229
      %p241 = scmp.eq.s32.totalorder %s30, 1
      %p242 = por %p240, %p241
      %p244 = scmp.ne.s32.totalorder %s229, %s243
      %p245 = scmp.eq.s32.totalorder %s30, 0
      %p246 = por %p244, %p245
      %s248 = sadd.s32 %s247, 1
      %p251 = scmp.eq.s32.totalorder %s24, 1
      %p252 = scmp.ne.s32.totalorder %s247, %s249
      %p253 = scmp.eq.s32.totalorder %s24, 0
      %p254 = por %p252, %p253
      %p255 = scmp.ne.s32.totalorder %s247, %s249
      %p256 = scmp.eq.s32.totalorder %s29, 1
      %p257 = por %p255, %p256
      %p258 = scmp.ne.s32.totalorder %s249, %s250
      %p259 = scmp.eq.s32.totalorder %s29, 0
      %p260 = por %p258, %p259
      %p261 = scmp.ne.s32.totalorder %s249, %s250
      %p262 = scmp.eq.s32.totalorder %s30, 1
      %p263 = por %p261, %p262
      %p265 = scmp.ne.s32.totalorder %s250, %s264
      %p266 = scmp.eq.s32.totalorder %s30, 0
      %p267 = por %p265, %p266
      %s269 = sadd.s32 %s268, 1
      %p272 = scmp.eq.s32.totalorder %s24, 1
      %p273 = scmp.ne.s32.totalorder %s268, %s270
      %p274 = scmp.eq.s32.totalorder %s24, 0
      %p275 = por %p273, %p274
      %p276 = scmp.ne.s32.totalorder %s268, %s270
      %p277 = scmp.eq.s32.totalorder %s29, 1
      %p278 = por %p276, %p277
      %p279 = scmp.ne.s32.totalorder %s270, %s271
      %p280 = scmp.eq.s32.totalorder %s29, 0
      %p281 = por %p279, %p280
      %p282 = scmp.ne.s32.totalorder %s270, %s271
      %p283 = scmp.eq.s32.totalorder %s30, 1
      %p284 = por %p282, %p283
      %p286 = scmp.ne.s32.totalorder %s271, %s285
      %p287 = scmp.eq.s32.totalorder %s30, 0
      %p288 = por %p286, %p287
      %s290 = sadd.s32 %s289, 1
      %p293 = scmp.eq.s32.totalorder %s24, 1
      %p294 = scmp.ne.s32.totalorder %s289, %s291
      %p295 = scmp.eq.s32.totalorder %s24, 0
      %p296 = por %p294, %p295
      %p297 = scmp.ne.s32.totalorder %s289, %s291
      %p298 = scmp.eq.s32.totalorder %s29, 1
      %p299 = por %p297, %p298
      %p300 = scmp.ne.s32.totalorder %s291, %s292
      %p301 = scmp.eq.s32.totalorder %s29, 0
      %p302 = por %p300, %p301
      %p303 = scmp.ne.s32.totalorder %s291, %s292
      %p304 = scmp.eq.s32.totalorder %s30, 1
      %p305 = por %p303, %p304
      %p307 = scmp.ne.s32.totalorder %s292, %s306
      %p308 = scmp.eq.s32.totalorder %s30, 0
      %p309 = por %p307, %p308
      %s310 = ssub.s32 %s24, %s31
      %p311 = scmp.eq.s32.totalorder %s310, 0
      %s313 = sadd.s32 %s312, 1
      %s314 = scalar_select %p311, %s312, %s313
      %p317 = pneg %p311
      %p318 = scmp.eq.s32.totalorder %s24, 1
      %p319 = por %p317, %p318
      %p320 = scmp.ne.s32.totalorder %s312, %s315
      %p321 = scmp.eq.s32.totalorder %s24, 0
      %p322 = por %p320, %p321
      %p323 = scmp.ne.s32.totalorder %s312, %s315
      %p324 = scmp.eq.s32.totalorder %s29, 1
      %p325 = por %p323, %p324
      %p326 = scmp.ne.s32.totalorder %s315, %s316
      %p327 = scmp.eq.s32.totalorder %s29, 0
      %p328 = por %p326, %p327
      %p329 = scmp.ne.s32.totalorder %s315, %s316
      %p330 = scmp.eq.s32.totalorder %s30, 1
      %p331 = por %p329, %p330
      %p333 = scmp.ne.s32.totalorder %s316, %s332
      %p334 = scmp.eq.s32.totalorder %s30, 0
      %p335 = por %p333, %p334
      %p336 = scmp.le.s32.totalorder 1, %s24
      %p337 = scmp.lt.s32.totalorder %s24, 3
      %p338 = pnand %p336, %p337
      %p339 = pneg %p338
      // Predicated region
      $region9: #{model_forward.1} parent=5 // pred_check
        _
      $region10: #{model_forward.1} parent=5 // pred_check_branch
        %341 = sbr.rel (%p338) target = $region12
      $region11: #{model_forward.1} parent=5 // pred_region
        %s342 = ssub.s32 %s24, 1
        // Predicated region
        $region13: #{model_forward.1} parent=11 // pred_check
          %p343 = pneg %p71
        $region14: #{model_forward.1} parent=11 // pred_check_branch
          %345 = sbr.rel (%p343) target = $region16
        $region15: #{model_forward.1} parent=11 // pred_region
          _
        $region16: #{model_forward.1} parent=11 // pred_fallthru
          _
        // Predicated region
        $region17: #{model_forward.1} parent=11 // pred_check
          %p346 = pneg %p92
        $region18: #{model_forward.1} parent=11 // pred_check_branch
          %348 = sbr.rel (%p346) target = $region20
        $region19: #{model_forward.1} parent=11 // pred_region
          _
        $region20: #{model_forward.1} parent=11 // pred_fallthru
          _
        // Predicated region
        $region21: #{model_forward.1} parent=11 // pred_check
          %p349 = pneg %p113
        $region22: #{model_forward.1} parent=11 // pred_check_branch
          %351 = sbr.rel (%p349) target = $region24
        $region23: #{model_forward.1} parent=11 // pred_region
          _
        $region24: #{model_forward.1} parent=11 // pred_fallthru
          _
        // Predicated region
        $region25: #{model_forward.1} parent=11 // pred_check
          %p352 = pneg %p134
        $region26: #{model_forward.1} parent=11 // pred_check_branch
          %354 = sbr.rel (%p352) target = $region28
        $region27: #{model_forward.1} parent=11 // pred_region
          _
        $region28: #{model_forward.1} parent=11 // pred_fallthru
          _
        // Predicated region
        $region29: #{model_forward.1} parent=11 // pred_check
          %p355 = pneg %p155
        $region30: #{model_forward.1} parent=11 // pred_check_branch
          %357 = sbr.rel (%p355) target = $region32
        $region31: #{model_forward.1} parent=11 // pred_region
          _
        $region32: #{model_forward.1} parent=11 // pred_fallthru
          _
        // Predicated region
        $region33: #{model_forward.1} parent=11 // pred_check
          %p358 = pneg %p176
        $region34: #{model_forward.1} parent=11 // pred_check_branch
          %360 = sbr.rel (%p358) target = $region36
        $region35: #{model_forward.1} parent=11 // pred_region
          %362 = vsyncadd [#allocation4], 0
          %s363 = sshll.u32 %s6, 4
          %s364 = int_to_ptr.hbm [resolvable:$true] %s363
          %s365 = sshll.u32 [#allocation3], 4
          %s366 = int_to_ptr.vmem [resolvable:$true] %s365
          %371 = dma.hbm_to_vmem [thread:$0]  %s364, 512, %s366, [#allocation4], 128, 128, 8
        $region36: #{model_forward.1} parent=11 // pred_fallthru
          _
        // Predicated region
        $region37: #{model_forward.1} parent=11 // pred_check
          %p372 = pneg %p197
        $region38: #{model_forward.1} parent=11 // pred_check_branch
          %374 = sbr.rel (%p372) target = $region40
        $region39: #{model_forward.1} parent=11 // pred_region
          %376 = vsyncadd [#allocation6], 0
          %s377 = sshll.u32 %s7, 4
          %s378 = int_to_ptr.hbm [resolvable:$true] %s377
          %s379 = sshll.u32 [#allocation5], 4
          %s380 = int_to_ptr.vmem [resolvable:$true] %s379
          %385 = dma.hbm_to_vmem [thread:$0]  %s378, 512, %s380, [#allocation6], 128, 128, 8
        $region40: #{model_forward.1} parent=11 // pred_fallthru
          _
        // Predicated region
        $region41: #{model_forward.1} parent=11 // pred_check
          %p386 = pneg %p218
        $region42: #{model_forward.1} parent=11 // pred_check_branch
          %388 = sbr.rel (%p386) target = $region44
        $region43: #{model_forward.1} parent=11 // pred_region
          %390 = vsyncadd [#allocation6], 0
          %s391 = sshll.u32 %s8, 4
          %s392 = int_to_ptr.hbm [resolvable:$true] %s391
          %s393 = sshll.u32 [#allocation7], 4
          %s394 = int_to_ptr.vmem [resolvable:$true] %s393
          %399 = dma.hbm_to_vmem [thread:$0]  %s392, 64, %s394, [#allocation6], 16, 16, 1
        $region44: #{model_forward.1} parent=11 // pred_fallthru
          _
        // Predicated region
        $region45: #{model_forward.1} parent=11 // pred_check
          %p400 = pneg %p239
        $region46: #{model_forward.1} parent=11 // pred_check_branch
          %402 = sbr.rel (%p400) target = $region48
        $region47: #{model_forward.1} parent=11 // pred_region
          %404 = vsyncadd [#allocation9], 0
          %s405 = sshll.u32 %s9, 4
          %s406 = int_to_ptr.hbm [resolvable:$true] %s405
          %s407 = sshll.u32 [#allocation8], 4
          %s408 = int_to_ptr.vmem [resolvable:$true] %s407
          %413 = dma.hbm_to_vmem [thread:$0]  %s406, 2048, %s408, [#allocation9], 128, 128, 8
        $region48: #{model_forward.1} parent=11 // pred_fallthru
          _
        // Predicated region
        $region49: #{model_forward.1} parent=11 // pred_check
          %p414 = pneg %p260
        $region50: #{model_forward.1} parent=11 // pred_check_branch
          %416 = sbr.rel (%p414) target = $region52
        $region51: #{model_forward.1} parent=11 // pred_region
          %418 = vsyncadd [#allocation9], 0
          %s419 = sshll.u32 %s10, 4
          %s420 = int_to_ptr.hbm [resolvable:$true] %s419
          %s421 = sshll.u32 [#allocation10], 4
          %s422 = int_to_ptr.vmem [resolvable:$true] %s421
          %427 = dma.hbm_to_vmem [thread:$0]  %s420, 64, %s422, [#allocation9], 16, 16, 1
        $region52: #{model_forward.1} parent=11 // pred_fallthru
          _
        // Predicated region
        $region53: #{model_forward.1} parent=11 // pred_check
          %p428 = pneg %p281
        $region54: #{model_forward.1} parent=11 // pred_check_branch
          %430 = sbr.rel (%p428) target = $region56
        $region55: #{model_forward.1} parent=11 // pred_region
          _
        $region56: #{model_forward.1} parent=11 // pred_fallthru
          _
        // Predicated region
        $region57: #{model_forward.1} parent=11 // pred_check
          %p431 = pneg %p302
        $region58: #{model_forward.1} parent=11 // pred_check_branch
          %433 = sbr.rel (%p431) target = $region60
        $region59: #{model_forward.1} parent=11 // pred_region
          _
        $region60: #{model_forward.1} parent=11 // pred_fallthru
          _
      $region12: #{model_forward.1} parent=5 // pred_fallthru
        _
      %p434 = scmp.lt.s32.totalorder %s24, 2
      // Predicated region
      $region61: #{model_forward.1} parent=5 // pred_check
        %p435 = pneg %p434
      $region62: #{model_forward.1} parent=5 // pred_check_branch
        %437 = sbr.rel (%p435) target = $region64
      $region63: #{model_forward.1} parent=5 // pred_region
        // Predicated region
        $region65: #{model_forward.1} parent=63 // pred_check
          %p438 = pneg %p44
        $region66: #{model_forward.1} parent=63 // pred_check_branch
          %440 = sbr.rel (%p438) target = $region68
        $region67: #{model_forward.1} parent=63 // pred_region
          %p441 = scmp.lt.s32.totalorder %s24, 1
          %s442 = scalar_select %p441, %s24, 1
          %s443 = smul.addr %s442, 2
          %s444 = smul.addr %s443, 8
          %s445 = scalar_lea.vmem %s0, %s444
        $region68: #{model_forward.1} parent=63 // pred_fallthru
          _
      $region64: #{model_forward.1} parent=5 // pred_fallthru
        _
      %p446 = scmp.le.s32.totalorder 1, %s24
      %p447 = scmp.lt.s32.totalorder %s24, 3
      %p448 = pnand %p446, %p447
      %p449 = pneg %p448
      // Predicated region
      $region69: #{model_forward.1} parent=5 // pred_check
        _
      $region70: #{model_forward.1} parent=5 // pred_check_branch
        %451 = sbr.rel (%p448) target = $region72
      $region71: #{model_forward.1} parent=5 // pred_region
        %s452 = ssub.s32 %s24, 1
        // Predicated region
        $region73: #{model_forward.1} parent=71 // pred_check
          %p453 = pneg %p176
        $region74: #{model_forward.1} parent=71 // pred_check_branch
          %455 = sbr.rel (%p453) target = $region76
        $region75: #{model_forward.1} parent=71 // pred_region
          %457 = dma.done [#allocation4], 512
        $region76: #{model_forward.1} parent=71 // pred_fallthru
          _
        // Predicated region
        $region77: #{model_forward.1} parent=71 // pred_check
          %p458 = pneg %p197
        $region78: #{model_forward.1} parent=71 // pred_check_branch
          %460 = sbr.rel (%p458) target = $region80
        $region79: #{model_forward.1} parent=71 // pred_region
          %462 = dma.done [#allocation6], 512
        $region80: #{model_forward.1} parent=71 // pred_fallthru
          _
        // Predicated region
        $region81: #{model_forward.1} parent=71 // pred_check
          %p463 = pneg %p218
        $region82: #{model_forward.1} parent=71 // pred_check_branch
          %465 = sbr.rel (%p463) target = $region84
        $region83: #{model_forward.1} parent=71 // pred_region
          %467 = dma.done [#allocation6], 64
        $region84: #{model_forward.1} parent=71 // pred_fallthru
          _
        // Predicated region
        $region85: #{model_forward.1} parent=71 // pred_check
          %p468 = pneg %p239
        $region86: #{model_forward.1} parent=71 // pred_check_branch
          %470 = sbr.rel (%p468) target = $region88
        $region87: #{model_forward.1} parent=71 // pred_region
          %472 = dma.done [#allocation9], 2048
        $region88: #{model_forward.1} parent=71 // pred_fallthru
          _
        // Predicated region
        $region89: #{model_forward.1} parent=71 // pred_check
          %p473 = pneg %p260
        $region90: #{model_forward.1} parent=71 // pred_check_branch
          %475 = sbr.rel (%p473) target = $region92
        $region91: #{model_forward.1} parent=71 // pred_region
          %477 = dma.done [#allocation9], 64
        $region92: #{model_forward.1} parent=71 // pred_fallthru
          _
        %p478 = scmp.lt.s32.totalorder %s29, 1
        %s479 = scalar_select %p478, %s29, 1
        %s480 = smul.addr %s479, 2
        %s481 = smul.addr %s480, 8
        %s482 = scalar_lea.vmem %s0, %s481
        %p483 = pneg %p50
        %p484 = pneg %p47
        %p485 = pneg %p71
        %p486 = pneg %p68
        %p487 = pneg %p92
        %p488 = pneg %p89
        %p489 = pneg %p113
        %p490 = pneg %p110
        %p491 = pneg %p134
        %p492 = pneg %p131
        %p493 = pneg %p155
        %p494 = pneg %p152
        %p495 = pneg %p176
        %p496 = pneg %p173
        %p497 = pneg %p197
        %p498 = pneg %p194
        %p499 = pneg %p218
        %p500 = pneg %p215
        %p501 = pneg %p239
        %p502 = pneg %p236
        %p503 = pneg %p260
        %p504 = pneg %p257
        %p505 = pneg %p281
        %p506 = pneg %p278
        %p507 = pneg %p302
        %p508 = pneg %p299
        %p509 = pneg %p328
        %p510 = pneg %p325
        %p511 = scmp.lt.s32.totalorder %s29, 1
        %s512 = scalar_select %p511, %s29, 1
        %s513 = scalar_lea.vmem %s13, %s512
        %p514 = scmp.lt.s32.totalorder %s29, 1
        %s515 = scalar_select %p514, %s29, 1
        %s516 = smul.addr %s515, 2
        %s517 = smul.addr %s516, 8
        %s518 = scalar_lea.vmem %s0, %s517
        %p519 = scmp.lt.s32.totalorder %s29, 1
        %s520 = scalar_select %p519, %s29, 1
        %s521 = scalar_lea.vmem %s13, %s520
        %v522 = vld [vmem:[%s518] sm:$0xff]
        %v523 = vld [vmem:[%s518 + $0x8] sm:$0xff]
        %v524 = vld [vmem:[%s1] sm:$0xf]
        %v525 = vld [vmem:[%s2] sm:$0x1]
        %v527 = vperm.slane %v525, 0
        %vm529 = vcmask 31744
        %v531 = vsel %vm529, %v522, 0
        %v534 = vsel %vm529, %v523, 0
        %vm536 = vcmask 1043456
        %v538 = vsel %vm536, %v524, 0
        %540 = vmatpush.msra.mxu0 0.0
        %541 = vmatpush.msra.mxu0 0.0
        %542 = vmatpush.msra.mxu0 0.0
        %543 = vmatpush.msra.mxu0 0.0
        %544 = vmatpush.msra.mxu0 0.0
        %545 = vmatpush.msra.mxu0 0.0
        %546 = vmatpush.msra.mxu0 0.0
        %547 = vmatpush.msra.mxu0 0.0
        %548 = vmatpush.msra.mxu0 0.0
        %549 = vmatpush.msra.mxu0 0.0
        %550 = vmatpush.msra.mxu0 0.0
        %551 = vmatpush.msra.mxu0 0.0
        %552 = vmatpush.msra.mxu0 0.0
        %553 = vmatpush.msra.mxu0 0.0
        %554 = vmatpush.msra.mxu0 0.0
        %555 = vmatpush.msra.mxu0 %v538
        %556 = vmatmul.f32.gmra.mxu0 %v531
        %v557 = vpop.f32.mrf.mxu0
        %v558 = vadd.f32 %v527, %v557
        %559 = vmatmul.f32.gmra.mxu0 %v534
        %v560 = vpop.f32.mrf.mxu0
        %v561 = vadd.f32 %v527, %v560
        %562 = vdwg.mxu0
        %v563 = vlaneseq
        %v564 = vshrl.u32 %v563, 7
        %v565 = vadd.s32 %v564, 8
        %vm566 = vcmp.ge.s32.totalorder %v564, 1
        %vm567 = vcmp.ge.s32.totalorder %v565, 1
        %vm568 = vcmp.ge.s32.totalorder %v564, 2
        %vm569 = vcmp.ge.s32.totalorder %v565, 2
        %vm570 = vcmp.ge.s32.totalorder %v564, 3
        %vm571 = vcmp.ge.s32.totalorder %v565, 3
        %vm572 = vcmp.ge.s32.totalorder %v564, 4
        %vm573 = vcmp.ge.s32.totalorder %v565, 4
        %vm574 = vcmp.ge.s32.totalorder %v564, 5
        %vm575 = vcmp.ge.s32.totalorder %v565, 5
        %vm576 = vcmp.ge.s32.totalorder %v564, 6
        %vm577 = vcmp.ge.s32.totalorder %v565, 6
        %vm578 = vcmp.ge.s32.totalorder %v564, 7
        %vm579 = vcmp.ge.s32.totalorder %v565, 7
        %vm580 = vcmp.ge.s32.totalorder %v564, 8
        %vm581 = vcmp.ge.s32.totalorder %v565, 8
        %vm582 = vcmp.ge.s32.totalorder %v564, 9
        %vm583 = vcmp.ge.s32.totalorder %v565, 9
        %vm584 = vcmp.ge.s32.totalorder %v564, 10
        %vm585 = vcmp.ge.s32.totalorder %v565, 10
        %vm586 = vcmp.ge.s32.totalorder %v564, 11
        %vm587 = vcmp.ge.s32.totalorder %v565, 11
        %vm588 = vcmp.ge.s32.totalorder %v564, 12
        %vm589 = vcmp.ge.s32.totalorder %v565, 12
        %vm590 = vcmp.ge.s32.totalorder %v564, 13
        %vm591 = vcmp.ge.s32.totalorder %v565, 13
        %vm592 = vcmp.ge.s32.totalorder %v564, 14
        %vm593 = vcmp.ge.s32.totalorder %v565, 14
        %vm594 = vcmp.ge.s32.totalorder %v564, 15
        %vm595 = vcmp.ge.s32.totalorder %v565, 15
        %v596 = vld [vmem:[%s3] sm:$0x1]
        %v597 = vmul.f32 %v596, 1.442695
        %v598 = vpow.pop %v597
        %v599 = vld [vmem:[%s4] sm:$0xff]
        %v600 = vmul.f32 %v599, 1.442695
        %v601 = vpow.pop %v600
        %v602 = vsub.f32 0.0, %v601
        %v603 = vld [vmem:[%s5] sm:$0xff]
        %v605 = vperm.slane %v598, 0
        %v607 = vmul.f32 %v602, %v605
        %v608 = vmul.f32 %v603, %v605
        %v609 = vmul.f32 %v607, 1.442695
        %v610 = vpow.pop %v609
        %v611 = vand.u32 2147483647, %v608
        %vm612 = vcmp.le.f32.partialorder %v611, 0.7853982
        %vm613 = vcmp.lt.s32.totalorder %v608, 0
        %v614 = vand.u32 %v608, 2139095040
        %v615 = vshrl.u32 %v614, 23
        %v616 = vsub.s32 %v615, 127
        %v617 = vand.u32 2147483647, %v608
        %v618 = vand.u32 %v617, 8388607
        %v619 = vor.u32 %v618, 8388608
        %v620 = vsub.s32 0, %v619
        %v621 = vadd.s32 %v616, 1
        %vm622 = vcmp.gt.s32.totalorder %v621, 0
        %v623 = vsel %vm622, %v621, 0
        %v624 = vshrl.u32 %v623, 5
        %v625 = vand.u32 %v623, 31
        %v626 = vsub.s32 32, %v625
        %v627 = vshrl.u32 683565275, %v626
        %v628 = vshll.u32 683565275, %v625
        %v629 = vshrl.u32 2475754826, %v626
        %v630 = vor.u32 %v628, %v629
        %v631 = vshll.u32 2475754826, %v625
        %v632 = vshrl.u32 2131351028, %v626
        %v633 = vor.u32 %v631, %v632
        %v634 = vshll.u32 2131351028, %v625
        %v635 = vshrl.u32 2102212464, %v626
        %v636 = vor.u32 %v634, %v635
        %v637 = vshll.u32 2102212464, %v625
        %v638 = vshrl.u32 920167782, %v626
        %v639 = vor.u32 %v637, %v638
        %v640 = vshll.u32 920167782, %v625
        %v641 = vshrl.u32 1326507024, %v626
        %v642 = vor.u32 %v640, %v641
        %vm643 = vcmp.lt.s32.totalorder %v624, 1
        %vm644 = vcmp.lt.s32.totalorder %v624, 2
        %vm645 = vcmp.lt.s32.totalorder %v624, 3
        %vm646 = vcmp.lt.s32.totalorder %v624, 4
        %v647 = vsel %vm643, %v627, %v630
        %v648 = vsel %vm646, %v636, 2102212464
        %v649 = vsel %vm645, %v633, %v648
        %v650 = vsel %vm644, %v647, %v649
        %v651 = vsel %vm643, %v630, %v633
        %v652 = vsel %vm646, %v639, 920167782
        %v653 = vsel %vm645, %v636, %v652
        %v654 = vsel %vm644, %v651, %v653
        %v655 = vsel %vm643, %v633, %v636
        %v656 = vsel %vm646, %v642, 1326507024
        %v657 = vsel %vm645, %v639, %v656
        %v658 = vsel %vm644, %v655, %v657
        %v659 = vshll.u32 %v619, 8
        %v660 = vand.u32 %v659, 65535
        %v661 = vshrl.u32 %v659, 16
        %v662 = vand.u32 %v658, 65535
        %v663 = vshrl.u32 %v658, 16
        %v664 = vmul.u32 %v660, %v662
        %v665 = vmul.u32 %v660, %v663
        %v666 = vmul.u32 %v661, %v662
        %v667 = vmul.u32 %v661, %v663
        %v668 = vshll.u32 %v665, 16
        %v669 = vshrl.u32 %v665, 16
        %v670 = vshll.u32 %v666, 16
        %v671 = vshrl.u32 %v666, 16
        %vm672 = vc.u32 %v664, %v668
        %v673 = vsel %vm672, 1, 0
        %v674 = vadd.s32 %v664, %v668
        %v675 = vadd.s32 %v667, %v673
        %vm676 = vc.u32 %v674, %v670
        %v677 = vsel %vm676, 1, 0
        %v678 = vadd.s32 %v674, %v670
        %v679 = vadd.s32 %v675, %v677
        %v680 = vadd.s32 %v679, %v669
        %v681 = vadd.s32 %v680, %v671
        %v682 = vand.u32 %v659, 65535
        %v683 = vshrl.u32 %v659, 16
        %v684 = vand.u32 %v654, 65535
        %v685 = vshrl.u32 %v654, 16
        %v686 = vmul.u32 %v682, %v684
        %v687 = vmul.u32 %v682, %v685
        %v688 = vmul.u32 %v683, %v684
        %v689 = vmul.u32 %v683, %v685
        %v690 = vshll.u32 %v687, 16
        %v691 = vshrl.u32 %v687, 16
        %v692 = vshll.u32 %v688, 16
        %v693 = vshrl.u32 %v688, 16
        %vm694 = vc.u32 %v686, %v690
        %v695 = vsel %vm694, 1, 0
        %v696 = vadd.s32 %v686, %v690
        %v697 = vadd.s32 %v689, %v695
        %vm698 = vc.u32 %v696, %v692
        %v699 = vsel %vm698, 1, 0
        %v700 = vadd.s32 %v696, %v692
        %v701 = vadd.s32 %v697, %v699
        %v702 = vadd.s32 %v701, %v691
        %v703 = vadd.s32 %v702, %v693
        %v704 = vmul.u32 %v659, %v650
        %v705 = vadd.s32 %v681, %v700
        %vm706 = vc.u32 %v681, %v700
        %v707 = vadd.s32 %v703, 1
        %v708 = vsel %vm706, %v707, %v703
        %v709 = vadd.s32 %v704, %v708
        %v710 = vadd.s32 %v709, 536870912
        %v711 = vshrl.u32 %v710, 30
        %v712 = vshll.u32 %v711, 30
        %v713 = vsub.s32 %v709, %v712
        %vm714 = vcmp.lt.s32.totalorder %v713, 0
        %v715 = vsub.s32 0, %v713
        %v716 = vsel %vm714, %v715, %v713
        %v717 = vclz %v716
        %v718 = vsub.s32 %v717, 2
        %vm719 = vcmp.gt.s32.totalorder 0, %v718
        %v720 = vsel %vm719, 0, %v718
        %v721 = vsub.s32 32, %v720
        %v722 = vshll.u32 %v713, %v720
        %v723 = vshrl.u32 %v705, %v721
        %v724 = vor.u32 %v722, %v723
        %v725 = vsub.s32 4294967266, %v720
        %v726 = vadd.s32 %v725, 127
        %v727 = vshll.u32 %v726, 23
        %v728 = vor.u32 4788187, %v727
        %v729 = vand.u32 2147483647, %v728
        %v731 = vcvt.s32.f32 %v724
        %v732 = vmul.f32 %v731, %v729
        %v733 = vxor.u32 %v732, 2147483648
        %v734 = vsel %vm613, %v733, %v732
        %v735 = vsub.s32 4, %v711
        %v736 = vsel %vm613, %v735, %v711
        %v737 = vsel %vm612, %v608, %v734
        %v738 = vsel %vm612, 0, %v736
        %v739 = vmul.f32 %v737, %v737
        %v740 = vmul.f32 %v739, -0.001358992
        %v741 = vadd.f32 %v740, 0.041655596
        %v742 = vmul.f32 %v739, %v741
        %v743 = vadd.f32 %v742, -0.4999988
        %v744 = vmul.f32 %v739, %v743
        %v745 = vadd.f32 1.0, %v744
        %v746 = vmul.f32 %v737, %v737
        %v747 = vmul.f32 %v746, -0.00019511016
        %v748 = vadd.f32 %v747, 0.008332121
        %v749 = vmul.f32 %v746, %v748
        %v750 = vadd.f32 %v749, -0.16666654
        %v751 = vmul.f32 %v746, %v750
        %v752 = vadd.f32 %v751, 1.0
        %v753 = vmul.f32 %v752, %v737
        %vm754 = vweird.f32 %v608
        %v755 = vand.u32 %v738, 3
        %vm756 = vcmp.lt.s32.totalorder %v755, 2
        %vm757 = vcmp.eq.s32.totalorder %v755, 0
        %v758 = vxor.u32 %v753, 2147483648
        %v759 = vsel %vm757, %v745, %v758
        %vm760 = vcmp.eq.s32.totalorder %v755, 2
        %v761 = vxor.u32 %v745, 2147483648
        %v762 = vsel %vm760, %v761, %v753
        %v763 = vsel %vm756, %v759, %v762
        %v764 = vsel %vm754, nan, %v763
        %v765 = vmul.f32 %v610, %v764
        %v766 = vand.u32 2147483647, %v608
        %vm767 = vcmp.le.f32.partialorder %v766, 0.7853982
        %vm768 = vcmp.lt.s32.totalorder %v608, 0
        %v769 = vand.u32 %v608, 2139095040
        %v770 = vshrl.u32 %v769, 23
        %v771 = vsub.s32 %v770, 127
        %v772 = vand.u32 2147483647, %v608
        %v773 = vand.u32 %v772, 8388607
        %v774 = vor.u32 %v773, 8388608
        %v775 = vsub.s32 0, %v774
        %v776 = vadd.s32 %v771, 1
        %vm777 = vcmp.gt.s32.totalorder %v776, 0
        %v778 = vsel %vm777, %v776, 0
        %v779 = vshrl.u32 %v778, 5
        %v780 = vand.u32 %v778, 31
        %v781 = vsub.s32 32, %v780
        %v782 = vshrl.u32 683565275, %v781
        %v783 = vshll.u32 683565275, %v780
        %v784 = vshrl.u32 2475754826, %v781
        %v785 = vor.u32 %v783, %v784
        %v786 = vshll.u32 2475754826, %v780
        %v787 = vshrl.u32 2131351028, %v781
        %v788 = vor.u32 %v786, %v787
        %v789 = vshll.u32 2131351028, %v780
        %v790 = vshrl.u32 2102212464, %v781
        %v791 = vor.u32 %v789, %v790
        %v792 = vshll.u32 2102212464, %v780
        %v793 = vshrl.u32 920167782, %v781
        %v794 = vor.u32 %v792, %v793
        %v795 = vshll.u32 920167782, %v780
        %v796 = vshrl.u32 1326507024, %v781
        %v797 = vor.u32 %v795, %v796
        %vm798 = vcmp.lt.s32.totalorder %v779, 1
        %vm799 = vcmp.lt.s32.totalorder %v779, 2
        %vm800 = vcmp.lt.s32.totalorder %v779, 3
        %vm801 = vcmp.lt.s32.totalorder %v779, 4
        %v802 = vsel %vm798, %v782, %v785
        %v803 = vsel %vm801, %v791, 2102212464
        %v804 = vsel %vm800, %v788, %v803
        %v805 = vsel %vm799, %v802, %v804
        %v806 = vsel %vm798, %v785, %v788
        %v807 = vsel %vm801, %v794, 920167782
        %v808 = vsel %vm800, %v791, %v807
        %v809 = vsel %vm799, %v806, %v808
        %v810 = vsel %vm798, %v788, %v791
        %v811 = vsel %vm801, %v797, 1326507024
        %v812 = vsel %vm800, %v794, %v811
        %v813 = vsel %vm799, %v810, %v812
        %v814 = vshll.u32 %v774, 8
        %v815 = vand.u32 %v814, 65535
        %v816 = vshrl.u32 %v814, 16
        %v817 = vand.u32 %v813, 65535
        %v818 = vshrl.u32 %v813, 16
        %v819 = vmul.u32 %v815, %v817
        %v820 = vmul.u32 %v815, %v818
        %v821 = vmul.u32 %v816, %v817
        %v822 = vmul.u32 %v816, %v818
        %v823 = vshll.u32 %v820, 16
        %v824 = vshrl.u32 %v820, 16
        %v825 = vshll.u32 %v821, 16
        %v826 = vshrl.u32 %v821, 16
        %vm827 = vc.u32 %v819, %v823
        %v828 = vsel %vm827, 1, 0
        %v829 = vadd.s32 %v819, %v823
        %v830 = vadd.s32 %v822, %v828
        %vm831 = vc.u32 %v829, %v825
        %v832 = vsel %vm831, 1, 0
        %v833 = vadd.s32 %v829, %v825
        %v834 = vadd.s32 %v830, %v832
        %v835 = vadd.s32 %v834, %v824
        %v836 = vadd.s32 %v835, %v826
        %v837 = vand.u32 %v814, 65535
        %v838 = vshrl.u32 %v814, 16
        %v839 = vand.u32 %v809, 65535
        %v840 = vshrl.u32 %v809, 16
        %v841 = vmul.u32 %v837, %v839
        %v842 = vmul.u32 %v837, %v840
        %v843 = vmul.u32 %v838, %v839
        %v844 = vmul.u32 %v838, %v840
        %v845 = vshll.u32 %v842, 16
        %v846 = vshrl.u32 %v842, 16
        %v847 = vshll.u32 %v843, 16
        %v848 = vshrl.u32 %v843, 16
        %vm849 = vc.u32 %v841, %v845
        %v850 = vsel %vm849, 1, 0
        %v851 = vadd.s32 %v841, %v845
        %v852 = vadd.s32 %v844, %v850
        %vm853 = vc.u32 %v851, %v847
        %v854 = vsel %vm853, 1, 0
        %v855 = vadd.s32 %v851, %v847
        %v856 = vadd.s32 %v852, %v854
        %v857 = vadd.s32 %v856, %v846
        %v858 = vadd.s32 %v857, %v848
        %v859 = vmul.u32 %v814, %v805
        %v860 = vadd.s32 %v836, %v855
        %vm861 = vc.u32 %v836, %v855
        %v862 = vadd.s32 %v858, 1
        %v863 = vsel %vm861, %v862, %v858
        %v864 = vadd.s32 %v859, %v863
        %v865 = vadd.s32 %v864, 536870912
        %v866 = vshrl.u32 %v865, 30
        %v867 = vshll.u32 %v866, 30
        %v868 = vsub.s32 %v864, %v867
        %vm869 = vcmp.lt.s32.totalorder %v868, 0
        %v870 = vsub.s32 0, %v868
        %v871 = vsel %vm869, %v870, %v868
        %v872 = vclz %v871
        %v873 = vsub.s32 %v872, 2
        %vm874 = vcmp.gt.s32.totalorder 0, %v873
        %v875 = vsel %vm874, 0, %v873
        %v876 = vsub.s32 32, %v875
        %v877 = vshll.u32 %v868, %v875
        %v878 = vshrl.u32 %v860, %v876
        %v879 = vor.u32 %v877, %v878
        %v880 = vsub.s32 4294967266, %v875
        %v881 = vadd.s32 %v880, 127
        %v882 = vshll.u32 %v881, 23
        %v883 = vor.u32 4788187, %v882
        %v884 = vand.u32 2147483647, %v883
        %v886 = vcvt.s32.f32 %v879
        %v887 = vmul.f32 %v886, %v884
        %v888 = vxor.u32 %v887, 2147483648
        %v889 = vsel %vm768, %v888, %v887
        %v890 = vsub.s32 4, %v866
        %v891 = vsel %vm768, %v890, %v866
        %v892 = vsel %vm767, %v608, %v889
        %v893 = vsel %vm767, 0, %v891
        %v894 = vmul.f32 %v892, %v892
        %v895 = vmul.f32 %v894, -0.001358992
        %v896 = vadd.f32 %v895, 0.041655596
        %v897 = vmul.f32 %v894, %v896
        %v898 = vadd.f32 %v897, -0.4999988
        %v899 = vmul.f32 %v894, %v898
        %v900 = vadd.f32 1.0, %v899
        %v901 = vmul.f32 %v892, %v892
        %v902 = vmul.f32 %v901, -0.00019511016
        %v903 = vadd.f32 %v902, 0.008332121
        %v904 = vmul.f32 %v901, %v903
        %v905 = vadd.f32 %v904, -0.16666654
        %v906 = vmul.f32 %v901, %v905
        %v907 = vadd.f32 %v906, 1.0
        %v908 = vmul.f32 %v907, %v892
        %vm909 = vweird.f32 %v608
        %v910 = vadd.s32 %v893, 3
        %v911 = vand.u32 %v910, 3
        %vm912 = vcmp.lt.s32.totalorder %v911, 2
        %vm913 = vcmp.eq.s32.totalorder %v911, 0
        %v914 = vxor.u32 %v908, 2147483648
        %v915 = vsel %vm913, %v900, %v914
        %vm916 = vcmp.eq.s32.totalorder %v911, 2
        %v917 = vxor.u32 %v900, 2147483648
        %v918 = vsel %vm916, %v917, %v908
        %v919 = vsel %vm912, %v915, %v918
        %v920 = vsel %vm909, nan, %v919
        %v921 = vmul.f32 %v610, %v920
        %v922 = vmul.f32 %v602, %v602
        %v923 = vmul.f32 %v603, %v603
        %v924 = vadd.f32 %v922, %v923
        %v925 = vrcp.pop %v924
        %v926 = vmul.f32 %v924, %v925
        %v927 = vsub.f32 2.0, %v926
        %v928 = vmul.f32 %v925, %v927
        %v929 = vsub.f32 %v765, 1.0
        %v930 = vmul.f32 %v929, %v602
        %v931 = vmul.f32 %v921, %v603
        %v932 = vadd.f32 %v930, %v931
        %v933 = vmul.f32 %v932, %v928
        %v934 = vmul.f32 %v921, %v602
        %v935 = vmul.f32 %v929, %v603
        %v936 = vsub.f32 %v934, %v935
        %v937 = vmul.f32 %v936, %v928
        %v938 = vld [vmem:[#allocation3] sm:$0xff]
        %v939 = vld [vmem:[#allocation5] sm:$0xff]
        %v940 = vmul.f32 %v938, %v933
        %v941 = vmul.f32 %v939, %v937
        %v942 = vsub.f32 %v940, %v941
        %v943 = vmul.f32 %v938, %v937
        %v944 = vmul.f32 %v939, %v933
        %v945 = vadd.f32 %v943, %v944
        %v946 = vmul.f32 %v765, %v765
        %v947 = vmul.f32 %v921, %v921
        %v948 = vsub.f32 %v946, %v947
        %v949 = vmul.f32 %v765, 2.0
        %v950 = vmul.f32 %v949, %v921
        %v951 = vmul.f32 %v942, %v765
        %v952 = vmul.f32 %v945, %v921
        %v953 = vsub.f32 %v951, %v952
        %v954 = vmul.f32 %v942, %v921
        %v955 = vmul.f32 %v945, %v765
        %v956 = vadd.f32 %v954, %v955
        %vm957 = vcmask 261120
        %v958 = vsel %vm957, %v942, 0.0
        %v959 = vrot.slane %v958, 4
        %v960 = vadd.f32 %v958, %v959
        %v961 = vrot.slane %v960, 2
        %v962 = vadd.f32 %v960, %v961
        %v963 = vrot.slane %v962, 1
        %v964 = vadd.f32 %v962, %v963
        %v965 = vmul.f32 %v964, 2.0
        %v966 = vmul.f32 %v558, %v965
        %v967 = vmul.f32 %v561, %v965
        %v968 = vsel %vm957, %v953, 0.0
        %v969 = vrot.slane %v968, 4
        %v970 = vadd.f32 %v968, %v969
        %v971 = vrot.slane %v970, 2
        %v972 = vadd.f32 %v970, %v971
        %v973 = vrot.slane %v972, 1
        %v974 = vadd.f32 %v972, %v973
        %v975 = vmul.f32 %v974, 2.0
        %v976 = vmul.f32 %v953, %v948
        %v977 = vmul.f32 %v956, %v950
        %v978 = vsub.f32 %v976, %v977
        %v979 = vmul.f32 %v953, %v950
        %v980 = vmul.f32 %v956, %v948
        %v981 = vadd.f32 %v979, %v980
        %v982 = vrot.slane %v558, 7
        %v983 = vrot.slane %v561, 7
        %vm984 = vcmp.lt.s32.totalorder %v564, 1
        %v985 = vsel %vm984, %v982, %v983
        %v986 = vsel %vm984, %v983, %v982
        %v987 = vsel %vm566, %v986, 0.0
        %v988 = vsel %vm567, %v985, 0.0
        %v989 = vmul.f32 %v975, %v987
        %v990 = vmul.f32 %v975, %v988
        %v991 = vadd.f32 %v989, 0.0
        %v992 = vadd.f32 %v990, 0.0
        %v993 = vmul.f32 %v942, %v948
        %v994 = vmul.f32 %v945, %v950
        %v995 = vsub.f32 %v993, %v994
        %v996 = vmul.f32 %v942, %v950
        %v997 = vmul.f32 %v945, %v948
        %v998 = vadd.f32 %v996, %v997
        %v999 = vsel %vm957, %v995, 0.0
        %v1000 = vrot.slane %v999, 4
        %v1001 = vadd.f32 %v999, %v1000
        %v1002 = vrot.slane %v1001, 2
        %v1003 = vadd.f32 %v1001, %v1002
        %v1004 = vrot.slane %v1003, 1
        %v1005 = vadd.f32 %v1003, %v1004
        %v1006 = vmul.f32 %v1005, 2.0
        %v1007 = vrot.slane %v558, 6
        %v1008 = vrot.slane %v561, 6
        %vm1009 = vcmp.lt.s32.totalorder %v564, 2
        %v1010 = vsel %vm1009, %v1007, %v1008
        %v1011 = vsel %vm1009, %v1008, %v1007
        %v1012 = vsel %vm568, %v1011, 0.0
        %v1013 = vsel %vm569, %v1010, 0.0
        %v1014 = vmul.f32 %v1006, %v1012
        %v1015 = vmul.f32 %v1006, %v1013
        %v1016 = vadd.f32 %v966, %v1014
        %v1017 = vadd.f32 %v967, %v1015
        %v1018 = vsel %vm957, %v978, 0.0
        %v1019 = vrot.slane %v1018, 4
        %v1020 = vadd.f32 %v1018, %v1019
        %v1021 = vrot.slane %v1020, 2
        %v1022 = vadd.f32 %v1020, %v1021
        %v1023 = vrot.slane %v1022, 1
        %v1024 = vadd.f32 %v1022, %v1023
        %v1025 = vmul.f32 %v1024, 2.0
        %v1026 = vmul.f32 %v978, %v948
        %v1027 = vmul.f32 %v981, %v950
        %v1028 = vsub.f32 %v1026, %v1027
        %v1029 = vmul.f32 %v978, %v950
        %v1030 = vmul.f32 %v981, %v948
        %v1031 = vadd.f32 %v1029, %v1030
        %v1032 = vrot.slane %v558, 5
        %v1033 = vrot.slane %v561, 5
        %vm1034 = vcmp.lt.s32.totalorder %v564, 3
        %v1035 = vsel %vm1034, %v1032, %v1033
        %v1036 = vsel %vm1034, %v1033, %v1032
        %v1037 = vsel %vm570, %v1036, 0.0
        %v1038 = vsel %vm571, %v1035, 0.0
        %v1039 = vmul.f32 %v1025, %v1037
        %v1040 = vmul.f32 %v1025, %v1038
        %v1041 = vadd.f32 %v991, %v1039
        %v1042 = vadd.f32 %v992, %v1040
        %v1043 = vmul.f32 %v995, %v948
        %v1044 = vmul.f32 %v998, %v950
        %v1045 = vsub.f32 %v1043, %v1044
        %v1046 = vmul.f32 %v995, %v950
        %v1047 = vmul.f32 %v998, %v948
        %v1048 = vadd.f32 %v1046, %v1047
        %v1049 = vsel %vm957, %v1045, 0.0
        %v1050 = vrot.slane %v1049, 4
        %v1051 = vadd.f32 %v1049, %v1050
        %v1052 = vrot.slane %v1051, 2
        %v1053 = vadd.f32 %v1051, %v1052
        %v1054 = vrot.slane %v1053, 1
        %v1055 = vadd.f32 %v1053, %v1054
        %v1056 = vmul.f32 %v1055, 2.0
        %v1057 = vrot.slane %v558, 4
        %v1058 = vrot.slane %v561, 4
        %vm1059 = vcmp.lt.s32.totalorder %v564, 4
        %v1060 = vsel %vm1059, %v1057, %v1058
        %v1061 = vsel %vm1059, %v1058, %v1057
        %v1062 = vsel %vm572, %v1061, 0.0
        %v1063 = vsel %vm573, %v1060, 0.0
        %v1064 = vmul.f32 %v1056, %v1062
        %v1065 = vmul.f32 %v1056, %v1063
        %v1066 = vadd.f32 %v1016, %v1064
        %v1067 = vadd.f32 %v1017, %v1065
        %v1068 = vsel %vm957, %v1028, 0.0
        %v1069 = vrot.slane %v1068, 4
        %v1070 = vadd.f32 %v1068, %v1069
        %v1071 = vrot.slane %v1070, 2
        %v1072 = vadd.f32 %v1070, %v1071
        %v1073 = vrot.slane %v1072, 1
        %v1074 = vadd.f32 %v1072, %v1073
        %v1075 = vmul.f32 %v1074, 2.0
        %v1076 = vmul.f32 %v1028, %v948
        %v1077 = vmul.f32 %v1031, %v950
        %v1078 = vsub.f32 %v1076, %v1077
        %v1079 = vmul.f32 %v1028, %v950
        %v1080 = vmul.f32 %v1031, %v948
        %v1081 = vadd.f32 %v1079, %v1080
        %v1082 = vrot.slane %v558, 3
        %v1083 = vrot.slane %v561, 3
        %vm1084 = vcmp.lt.s32.totalorder %v564, 5
        %v1085 = vsel %vm1084, %v1082, %v1083
        %v1086 = vsel %vm1084, %v1083, %v1082
        %v1087 = vsel %vm574, %v1086, 0.0
        %v1088 = vsel %vm575, %v1085, 0.0
        %v1089 = vmul.f32 %v1075, %v1087
        %v1090 = vmul.f32 %v1075, %v1088
        %v1091 = vadd.f32 %v1041, %v1089
        %v1092 = vadd.f32 %v1042, %v1090
        %v1093 = vmul.f32 %v1045, %v948
        %v1094 = vmul.f32 %v1048, %v950
        %v1095 = vsub.f32 %v1093, %v1094
        %v1096 = vmul.f32 %v1045, %v950
        %v1097 = vmul.f32 %v1048, %v948
        %v1098 = vadd.f32 %v1096, %v1097
        %v1099 = vsel %vm957, %v1095, 0.0
        %v1100 = vrot.slane %v1099, 4
        %v1101 = vadd.f32 %v1099, %v1100
        %v1102 = vrot.slane %v1101, 2
        %v1103 = vadd.f32 %v1101, %v1102
        %v1104 = vrot.slane %v1103, 1
        %v1105 = vadd.f32 %v1103, %v1104
        %v1106 = vmul.f32 %v1105, 2.0
        %v1107 = vrot.slane %v558, 2
        %v1108 = vrot.slane %v561, 2
        %vm1109 = vcmp.lt.s32.totalorder %v564, 6
        %v1110 = vsel %vm1109, %v1107, %v1108
        %v1111 = vsel %vm1109, %v1108, %v1107
        %v1112 = vsel %vm576, %v1111, 0.0
        %v1113 = vsel %vm577, %v1110, 0.0
        %v1114 = vmul.f32 %v1106, %v1112
        %v1115 = vmul.f32 %v1106, %v1113
        %v1116 = vadd.f32 %v1066, %v1114
        %v1117 = vadd.f32 %v1067, %v1115
        %v1118 = vsel %vm957, %v1078, 0.0
        %v1119 = vrot.slane %v1118, 4
        %v1120 = vadd.f32 %v1118, %v1119
        %v1121 = vrot.slane %v1120, 2
        %v1122 = vadd.f32 %v1120, %v1121
        %v1123 = vrot.slane %v1122, 1
        %v1124 = vadd.f32 %v1122, %v1123
        %v1125 = vmul.f32 %v1124, 2.0
        %v1126 = vmul.f32 %v1078, %v948
        %v1127 = vmul.f32 %v1081, %v950
        %v1128 = vsub.f32 %v1126, %v1127
        %v1129 = vmul.f32 %v1078, %v950
        %v1130 = vmul.f32 %v1081, %v948
        %v1131 = vadd.f32 %v1129, %v1130
        %v1132 = vrot.slane %v558, 1
        %v1133 = vrot.slane %v561, 1
        %vm1134 = vcmp.lt.s32.totalorder %v564, 7
        %v1135 = vsel %vm1134, %v1132, %v1133
        %v1136 = vsel %vm1134, %v1133, %v1132
        %v1137 = vsel %vm578, %v1136, 0.0
        %v1138 = vsel %vm579, %v1135, 0.0
        %v1139 = vmul.f32 %v1125, %v1137
        %v1140 = vmul.f32 %v1125, %v1138
        %v1141 = vadd.f32 %v1091, %v1139
        %v1142 = vadd.f32 %v1092, %v1140
        %v1143 = vmul.f32 %v1095, %v948
        %v1144 = vmul.f32 %v1098, %v950
        %v1145 = vsub.f32 %v1143, %v1144
        %v1146 = vmul.f32 %v1095, %v950
        %v1147 = vmul.f32 %v1098, %v948
        %v1148 = vadd.f32 %v1146, %v1147
        %v1149 = vsel %vm957, %v1145, 0.0
        %v1150 = vrot.slane %v1149, 4
        %v1151 = vadd.f32 %v1149, %v1150
        %v1152 = vrot.slane %v1151, 2
        %v1153 = vadd.f32 %v1151, %v1152
        %v1154 = vrot.slane %v1153, 1
        %v1155 = vadd.f32 %v1153, %v1154
        %v1156 = vmul.f32 %v1155, 2.0
        %v1157 = vsel %vm580, %v561, 0.0
        %v1158 = vsel %vm581, %v558, 0.0
        %v1159 = vmul.f32 %v1156, %v1157
        %v1160 = vmul.f32 %v1156, %v1158
        %v1161 = vadd.f32 %v1116, %v1159
        %v1162 = vadd.f32 %v1117, %v1160
        %v1163 = vsel %vm957, %v1128, 0.0
        %v1164 = vrot.slane %v1163, 4
        %v1165 = vadd.f32 %v1163, %v1164
        %v1166 = vrot.slane %v1165, 2
        %v1167 = vadd.f32 %v1165, %v1166
        %v1168 = vrot.slane %v1167, 1
        %v1169 = vadd.f32 %v1167, %v1168
        %v1170 = vmul.f32 %v1169, 2.0
        %v1171 = vmul.f32 %v1128, %v948
        %v1172 = vmul.f32 %v1131, %v950
        %v1173 = vsub.f32 %v1171, %v1172
        %v1174 = vmul.f32 %v1128, %v950
        %v1175 = vmul.f32 %v1131, %v948
        %v1176 = vadd.f32 %v1174, %v1175
        %v1177 = vsel %vm582, %v985, 0.0
        %v1178 = vsel %vm583, %v986, 0.0
        %v1179 = vmul.f32 %v1170, %v1177
        %v1180 = vmul.f32 %v1170, %v1178
        %v1181 = vadd.f32 %v1141, %v1179
        %v1182 = vadd.f32 %v1142, %v1180
        %v1183 = vmul.f32 %v1145, %v948
        %v1184 = vmul.f32 %v1148, %v950
        %v1185 = vsub.f32 %v1183, %v1184
        %v1186 = vmul.f32 %v1145, %v950
        %v1187 = vmul.f32 %v1148, %v948
        %v1188 = vadd.f32 %v1186, %v1187
        %v1189 = vsel %vm957, %v1185, 0.0
        %v1190 = vrot.slane %v1189, 4
        %v1191 = vadd.f32 %v1189, %v1190
        %v1192 = vrot.slane %v1191, 2
        %v1193 = vadd.f32 %v1191, %v1192
        %v1194 = vrot.slane %v1193, 1
        %v1195 = vadd.f32 %v1193, %v1194
        %v1196 = vmul.f32 %v1195, 2.0
        %v1197 = vsel %vm584, %v1010, 0.0
        %v1198 = vsel %vm585, %v1011, 0.0
        %v1199 = vmul.f32 %v1196, %v1197
        %v1200 = vmul.f32 %v1196, %v1198
        %v1201 = vadd.f32 %v1161, %v1199
        %v1202 = vadd.f32 %v1162, %v1200
        %v1203 = vsel %vm957, %v1173, 0.0
        %v1204 = vrot.slane %v1203, 4
        %v1205 = vadd.f32 %v1203, %v1204
        %v1206 = vrot.slane %v1205, 2
        %v1207 = vadd.f32 %v1205, %v1206
        %v1208 = vrot.slane %v1207, 1
        %v1209 = vadd.f32 %v1207, %v1208
        %v1210 = vmul.f32 %v1209, 2.0
        %v1211 = vmul.f32 %v1173, %v948
        %v1212 = vmul.f32 %v1176, %v950
        %v1213 = vsub.f32 %v1211, %v1212
        %v1214 = vmul.f32 %v1173, %v950
        %v1215 = vmul.f32 %v1176, %v948
        %v1216 = vadd.f32 %v1214, %v1215
        %v1217 = vsel %vm586, %v1035, 0.0
        %v1218 = vsel %vm587, %v1036, 0.0
        %v1219 = vmul.f32 %v1210, %v1217
        %v1220 = vmul.f32 %v1210, %v1218
        %v1221 = vadd.f32 %v1181, %v1219
        %v1222 = vadd.f32 %v1182, %v1220
        %v1223 = vmul.f32 %v1185, %v948
        %v1224 = vmul.f32 %v1188, %v950
        %v1225 = vsub.f32 %v1223, %v1224
        %v1226 = vmul.f32 %v1185, %v950
        %v1227 = vmul.f32 %v1188, %v948
        %v1228 = vadd.f32 %v1226, %v1227
        %v1229 = vsel %vm957, %v1225, 0.0
        %v1230 = vrot.slane %v1229, 4
        %v1231 = vadd.f32 %v1229, %v1230
        %v1232 = vrot.slane %v1231, 2
        %v1233 = vadd.f32 %v1231, %v1232
        %v1234 = vrot.slane %v1233, 1
        %v1235 = vadd.f32 %v1233, %v1234
        %v1236 = vmul.f32 %v1235, 2.0
        %v1237 = vsel %vm588, %v1060, 0.0
        %v1238 = vsel %vm589, %v1061, 0.0
        %v1239 = vmul.f32 %v1236, %v1237
        %v1240 = vmul.f32 %v1236, %v1238
        %v1241 = vadd.f32 %v1201, %v1239
        %v1242 = vadd.f32 %v1202, %v1240
        %v1243 = vsel %vm957, %v1213, 0.0
        %v1244 = vrot.slane %v1243, 4
        %v1245 = vadd.f32 %v1243, %v1244
        %v1246 = vrot.slane %v1245, 2
        %v1247 = vadd.f32 %v1245, %v1246
        %v1248 = vrot.slane %v1247, 1
        %v1249 = vadd.f32 %v1247, %v1248
        %v1250 = vmul.f32 %v1249, 2.0
        %v1251 = vmul.f32 %v1213, %v948
        %v1252 = vmul.f32 %v1216, %v950
        %v1253 = vsub.f32 %v1251, %v1252
        %v1254 = vsel %vm590, %v1085, 0.0
        %v1255 = vsel %vm591, %v1086, 0.0
        %v1256 = vmul.f32 %v1250, %v1254
        %v1257 = vmul.f32 %v1250, %v1255
        %v1258 = vadd.f32 %v1221, %v1256
        %v1259 = vadd.f32 %v1222, %v1257
        %v1260 = vmul.f32 %v1225, %v948
        %v1261 = vmul.f32 %v1228, %v950
        %v1262 = vsub.f32 %v1260, %v1261
        %v1263 = vsel %vm957, %v1262, 0.0
        %v1264 = vrot.slane %v1263, 4
        %v1265 = vadd.f32 %v1263, %v1264
        %v1266 = vrot.slane %v1265, 2
        %v1267 = vadd.f32 %v1265, %v1266
        %v1268 = vrot.slane %v1267, 1
        %v1269 = vadd.f32 %v1267, %v1268
        %v1270 = vmul.f32 %v1269, 2.0
        %v1271 = vsel %vm592, %v1110, 0.0
        %v1272 = vsel %vm593, %v1111, 0.0
        %v1273 = vmul.f32 %v1270, %v1271
        %v1274 = vmul.f32 %v1270, %v1272
        %v1275 = vadd.f32 %v1241, %v1273
        %v1276 = vadd.f32 %v1242, %v1274
        %v1277 = vsel %vm957, %v1253, 0.0
        %v1278 = vrot.slane %v1277, 4
        %v1279 = vadd.f32 %v1277, %v1278
        %v1280 = vrot.slane %v1279, 2
        %v1281 = vadd.f32 %v1279, %v1280
        %v1282 = vrot.slane %v1281, 1
        %v1283 = vadd.f32 %v1281, %v1282
        %v1284 = vmul.f32 %v1283, 2.0
        %v1285 = vsel %vm594, %v1135, 0.0
        %v1286 = vsel %vm595, %v1136, 0.0
        %v1287 = vmul.f32 %v1284, %v1285
        %v1288 = vmul.f32 %v1284, %v1286
        %v1289 = vadd.f32 %v1258, %v1287
        %v1290 = vadd.f32 %v1259, %v1288
        %v1291 = vadd.f32 %v1275, %v1289
        %v1292 = vadd.f32 %v1276, %v1290
        %v1293 = vld [vmem:[#allocation7] sm:$0x1]
        %v1295 = vperm.slane %v1293, 0
        %v1297 = vmul.f32 %v558, %v1295
        %v1298 = vmul.f32 %v561, %v1295
        %v1299 = vadd.f32 %v1291, %v1297
        %v1300 = vadd.f32 %v1292, %v1298
        %v1301 = vmul.f32 %v1299, 0.5
        %v1302 = vmul.f32 %v1300, 0.5
        %v1303 = vmul.f32 %v1299, 0.70710677
        %v1304 = vmul.f32 %v1300, 0.70710677
        %v1305 = vmax.f32 %v1303, -4.0
        %v1306 = vmax.f32 %v1304, -4.0
        %v1307 = vmin.f32 %v1305, 4.0
        %v1308 = vmin.f32 %v1306, 4.0
        %v1309 = vmul.f32 %v1307, %v1307
        %v1310 = vmul.f32 %v1308, %v1308
        %v1311 = vmul.f32 %v1309, -2.7261424e-10
        %v1312 = vmul.f32 %v1310, -2.7261424e-10
        %v1313 = vadd.f32 %v1311, 2.7706815e-08
        %v1314 = vadd.f32 %v1312, 2.7706815e-08
        %v1315 = vmul.f32 %v1313, %v1309
        %v1316 = vmul.f32 %v1314, %v1310
        %v1317 = vadd.f32 %v1315, -2.101024e-06
        %v1318 = vadd.f32 %v1316, -2.101024e-06
        %v1319 = vmul.f32 %v1317, %v1309
        %v1320 = vmul.f32 %v1318, %v1310
        %v1321 = vadd.f32 %v1319, -5.6925062e-05
        %v1322 = vadd.f32 %v1320, -5.6925062e-05
        %v1323 = vmul.f32 %v1321, %v1309
        %v1324 = vmul.f32 %v1322, %v1310
        %v1325 = vadd.f32 %v1323, -0.00073499064
        %v1326 = vadd.f32 %v1324, -0.00073499064
        %v1327 = vmul.f32 %v1325, %v1309
        %v1328 = vmul.f32 %v1326, %v1310
        %v1329 = vadd.f32 %v1327, -0.0029546
        %v1330 = vadd.f32 %v1328, -0.0029546
        %v1331 = vmul.f32 %v1329, %v1309
        %v1332 = vmul.f32 %v1330, %v1310
        %v1333 = vadd.f32 %v1331, -0.016096033
        %v1334 = vadd.f32 %v1332, -0.016096033
        %v1335 = vmul.f32 %v1333, %v1307
        %v1336 = vmul.f32 %v1334, %v1308
        %v1337 = vmul.f32 %v1309, -1.45660715e-05
        %v1338 = vmul.f32 %v1310, -1.45660715e-05
        %v1339 = vadd.f32 %v1337, -0.00021337405
        %v1340 = vadd.f32 %v1338, -0.00021337405
        %v1341 = vmul.f32 %v1339, %v1309
        %v1342 = vmul.f32 %v1340, %v1310
        %v1343 = vadd.f32 %v1341, -0.001682827
        %v1344 = vadd.f32 %v1342, -0.001682827
        %v1345 = vmul.f32 %v1343, %v1309
        %v1346 = vmul.f32 %v1344, %v1310
        %v1347 = vadd.f32 %v1345, -0.0073733293
        %v1348 = vadd.f32 %v1346, -0.0073733293
        %v1349 = vmul.f32 %v1347, %v1309
        %v1350 = vmul.f32 %v1348, %v1310
        %v1351 = vadd.f32 %v1349, -0.014264739
        %v1352 = vadd.f32 %v1350, -0.014264739
        %v1353 = vrcp.pop %v1351
        %v1354 = vrcp.pop %v1352
        %v1355 = vmul.f32 %v1351, %v1353
        %v1356 = vmul.f32 %v1352, %v1354
        %v1357 = vsub.f32 2.0, %v1355
        %v1358 = vsub.f32 2.0, %v1356
        %v1359 = vmul.f32 %v1353, %v1357
        %v1360 = vmul.f32 %v1354, %v1358
        %v1361 = vmul.f32 %v1335, %v1359
        %v1362 = vmul.f32 %v1336, %v1360
        %v1363 = vadd.f32 %v1361, 1.0
        %v1364 = vadd.f32 %v1362, 1.0
        %v1365 = vmul.f32 %v1301, %v1363
        %v1366 = vmul.f32 %v1302, %v1364
        %v1367 = vld [vmem:[#allocation8] sm:$0xff]
        %v1368 = vld [vmem:[#allocation8 + $0x8] sm:$0xff]
        %v1369 = vld [vmem:[#allocation8 + $0x10] sm:$0xff]
        %v1370 = vld [vmem:[#allocation8 + $0x18] sm:$0xff]
        %v1371 = vld [vmem:[#allocation10] sm:$0x1]
        %v1373 = vperm.slane %v1371, 0
        %v1376 = vsel %vm957, %v1365, 0
        %v1379 = vsel %vm957, %v1366, 0
        %1381 = vmatpush.msra.mxu0 0.0
        %1382 = vmatpush.msra.mxu0 0.0
        %1383 = vmatpush.msra.mxu0 0.0
        %1384 = vmatpush.msra.mxu0 0.0
        %1385 = vmatpush.msra.mxu0 0.0
        %1386 = vmatpush.msra.mxu0 0.0
        %1387 = vmatpush.msra.mxu0 0.0
        %1388 = vmatpush.msra.mxu0 0.0
        %1389 = vmatpush.msra.mxu0 0.0
        %1390 = vmatpush.msra.mxu0 0.0
        %1391 = vmatpush.msra.mxu0 0.0
        %1392 = vmatpush.msra.mxu0 0.0
        %1393 = vmatpush.msra.mxu0 %v1370
        %1394 = vmatpush.msra.mxu0 %v1369
        %1395 = vmatpush.msra.mxu0 %v1368
        %1396 = vmatpush.msra.mxu0 %v1367
        %1397 = vmatmul.f32.gmra.mxu0 %v1376
        %v1398 = vpop.f32.mrf.mxu0
        %v1399 = vadd.f32 %v1373, %v1398
        %1400 = vmatmul.f32.gmra.mxu0 %v1379
        %v1401 = vpop.f32.mrf.mxu0
        %v1402 = vadd.f32 %v1373, %v1401
        %1403 = vdwg.mxu0
        %v1404 = vxor.u32 %v1399, 2147483648
        %v1405 = vxor.u32 %v1402, 2147483648
        %v1406 = vmul.f32 %v1404, 1.442695
        %v1407 = vpow.pop %v1406
        %v1408 = vmul.f32 %v1405, 1.442695
        %v1409 = vpow.pop %v1408
        %v1410 = vadd.f32 %v1407, 1.0
        %v1411 = vadd.f32 %v1409, 1.0
        %v1412 = vrcp.pop %v1410
        %v1413 = vmul.f32 %v1410, %v1412
        %v1414 = vsub.f32 1.0, %v1413
        %v1415 = vmul.f32 %v1412, %v1414
        %v1416 = vadd.f32 %v1412, %v1415
        %vm1417 = vweird.f32 %v1410
        %vm1418 = vweird.f32 %v1412
        %vm1419 = vmor %vm1417, %vm1418
        %v1420 = vsel %vm1419, %v1412, %v1416
        %v1421 = vand.u32 2147483647, %v1410
        %vm1422 = vcmp.eq.f32.partialorder %v1421, 8.507059e+37
        %v1423 = vand.u32 %v1410, 2147483648
        %v1424 = vor.u32 1.1754944e-38, %v1423
        %v1425 = vsel %vm1422, %v1424, %v1420
        %v1426 = vmul.f32 1.0, %v1425
        %v1427 = vrcp.pop %v1411
        %v1428 = vmul.f32 %v1411, %v1427
        %v1429 = vsub.f32 1.0, %v1428
        %v1430 = vmul.f32 %v1427, %v1429
        %v1431 = vadd.f32 %v1427, %v1430
        %vm1432 = vweird.f32 %v1411
        %vm1433 = vweird.f32 %v1427
        %vm1434 = vmor %vm1432, %vm1433
        %v1435 = vsel %vm1434, %v1427, %v1431
        %v1436 = vand.u32 2147483647, %v1411
        %vm1437 = vcmp.eq.f32.partialorder %v1436, 8.507059e+37
        %v1438 = vand.u32 %v1411, 2147483648
        %v1439 = vor.u32 1.1754944e-38, %v1438
        %v1440 = vsel %vm1437, %v1439, %v1435
        %v1441 = vmul.f32 1.0, %v1440
        %1444 = vrot.lane.b32.xlu0 %v1426, 96
        %v1445 = vpop.permute.xlu0 %1444
        %1446 = vrot.lane.b32.xlu0 %v1441, 96
        %v1447 = vpop.permute.xlu0 %1446
        %v1450 = vmul.f32 %v1399, %v1445
        %v1451 = vmul.f32 %v1402, %v1447
        %v1452 = vadd.f32 %v1450, %v558
        %v1453 = vadd.f32 %v1451, %v561
        %s1454 = scalar_lea.vmem %s3, 1
        %v1455 = vld [vmem:[%s1454] sm:$0x1]
        %v1456 = vmul.f32 %v1455, 1.442695
        %v1457 = vpow.pop %v1456
        %s1458 = scalar_lea.vmem %s4, 8
        %v1459 = vld [vmem:[%s1458] sm:$0xff]
        %v1460 = vmul.f32 %v1459, 1.442695
        %v1461 = vpow.pop %v1460
        %v1462 = vsub.f32 0.0, %v1461
        %s1463 = scalar_lea.vmem %s5, 8
        %v1464 = vld [vmem:[%s1463] sm:$0xff]
        %v1466 = vperm.slane %v1457, 0
        %v1468 = vmul.f32 %v1462, %v1466
        %v1469 = vmul.f32 %v1464, %v1466
        %v1470 = vmul.f32 %v1468, 1.442695
        %v1471 = vpow.pop %v1470
        %v1472 = vand.u32 2147483647, %v1469
        %vm1473 = vcmp.le.f32.partialorder %v1472, 0.7853982
        %vm1474 = vcmp.lt.s32.totalorder %v1469, 0
        %v1475 = vand.u32 %v1469, 2139095040
        %v1476 = vshrl.u32 %v1475, 23
        %v1477 = vsub.s32 %v1476, 127
        %v1478 = vand.u32 2147483647, %v1469
        %v1479 = vand.u32 %v1478, 8388607
        %v1480 = vor.u32 %v1479, 8388608
        %v1481 = vsub.s32 0, %v1480
        %v1482 = vadd.s32 %v1477, 1
        %vm1483 = vcmp.gt.s32.totalorder %v1482, 0
        %v1484 = vsel %vm1483, %v1482, 0
        %v1485 = vshrl.u32 %v1484, 5
        %v1486 = vand.u32 %v1484, 31
        %v1487 = vsub.s32 32, %v1486
        %v1488 = vshrl.u32 683565275, %v1487
        %v1489 = vshll.u32 683565275, %v1486
        %v1490 = vshrl.u32 2475754826, %v1487
        %v1491 = vor.u32 %v1489, %v1490
        %v1492 = vshll.u32 2475754826, %v1486
        %v1493 = vshrl.u32 2131351028, %v1487
        %v1494 = vor.u32 %v1492, %v1493
        %v1495 = vshll.u32 2131351028, %v1486
        %v1496 = vshrl.u32 2102212464, %v1487
        %v1497 = vor.u32 %v1495, %v1496
        %v1498 = vshll.u32 2102212464, %v1486
        %v1499 = vshrl.u32 920167782, %v1487
        %v1500 = vor.u32 %v1498, %v1499
        %v1501 = vshll.u32 920167782, %v1486
        %v1502 = vshrl.u32 1326507024, %v1487
        %v1503 = vor.u32 %v1501, %v1502
        %vm1504 = vcmp.lt.s32.totalorder %v1485, 1
        %vm1505 = vcmp.lt.s32.totalorder %v1485, 2
        %vm1506 = vcmp.lt.s32.totalorder %v1485, 3
        %vm1507 = vcmp.lt.s32.totalorder %v1485, 4
        %v1508 = vsel %vm1504, %v1488, %v1491
        %v1509 = vsel %vm1507, %v1497, 2102212464
        %v1510 = vsel %vm1506, %v1494, %v1509
        %v1511 = vsel %vm1505, %v1508, %v1510
        %v1512 = vsel %vm1504, %v1491, %v1494
        %v1513 = vsel %vm1507, %v1500, 920167782
        %v1514 = vsel %vm1506, %v1497, %v1513
        %v1515 = vsel %vm1505, %v1512, %v1514
        %v1516 = vsel %vm1504, %v1494, %v1497
        %v1517 = vsel %vm1507, %v1503, 1326507024
        %v1518 = vsel %vm1506, %v1500, %v1517
        %v1519 = vsel %vm1505, %v1516, %v1518
        %v1520 = vshll.u32 %v1480, 8
        %v1521 = vand.u32 %v1520, 65535
        %v1522 = vshrl.u32 %v1520, 16
        %v1523 = vand.u32 %v1519, 65535
        %v1524 = vshrl.u32 %v1519, 16
        %v1525 = vmul.u32 %v1521, %v1523
        %v1526 = vmul.u32 %v1521, %v1524
        %v1527 = vmul.u32 %v1522, %v1523
        %v1528 = vmul.u32 %v1522, %v1524
        %v1529 = vshll.u32 %v1526, 16
        %v1530 = vshrl.u32 %v1526, 16
        %v1531 = vshll.u32 %v1527, 16
        %v1532 = vshrl.u32 %v1527, 16
        %vm1533 = vc.u32 %v1525, %v1529
        %v1534 = vsel %vm1533, 1, 0
        %v1535 = vadd.s32 %v1525, %v1529
        %v1536 = vadd.s32 %v1528, %v1534
        %vm1537 = vc.u32 %v1535, %v1531
        %v1538 = vsel %vm1537, 1, 0
        %v1539 = vadd.s32 %v1535, %v1531
        %v1540 = vadd.s32 %v1536, %v1538
        %v1541 = vadd.s32 %v1540, %v1530
        %v1542 = vadd.s32 %v1541, %v1532
        %v1543 = vand.u32 %v1520, 65535
        %v1544 = vshrl.u32 %v1520, 16
        %v1545 = vand.u32 %v1515, 65535
        %v1546 = vshrl.u32 %v1515, 16
        %v1547 = vmul.u32 %v1543, %v1545
        %v1548 = vmul.u32 %v1543, %v1546
        %v1549 = vmul.u32 %v1544, %v1545
        %v1550 = vmul.u32 %v1544, %v1546
        %v1551 = vshll.u32 %v1548, 16
        %v1552 = vshrl.u32 %v1548, 16
        %v1553 = vshll.u32 %v1549, 16
        %v1554 = vshrl.u32 %v1549, 16
        %vm1555 = vc.u32 %v1547, %v1551
        %v1556 = vsel %vm1555, 1, 0
        %v1557 = vadd.s32 %v1547, %v1551
        %v1558 = vadd.s32 %v1550, %v1556
        %vm1559 = vc.u32 %v1557, %v1553
        %v1560 = vsel %vm1559, 1, 0
        %v1561 = vadd.s32 %v1557, %v1553
        %v1562 = vadd.s32 %v1558, %v1560
        %v1563 = vadd.s32 %v1562, %v1552
        %v1564 = vadd.s32 %v1563, %v1554
        %v1565 = vmul.u32 %v1520, %v1511
        %v1566 = vadd.s32 %v1542, %v1561
        %vm1567 = vc.u32 %v1542, %v1561
        %v1568 = vadd.s32 %v1564, 1
        %v1569 = vsel %vm1567, %v1568, %v1564
        %v1570 = vadd.s32 %v1565, %v1569
        %v1571 = vadd.s32 %v1570, 536870912
        %v1572 = vshrl.u32 %v1571, 30
        %v1573 = vshll.u32 %v1572, 30
        %v1574 = vsub.s32 %v1570, %v1573
        %vm1575 = vcmp.lt.s32.totalorder %v1574, 0
        %v1576 = vsub.s32 0, %v1574
        %v1577 = vsel %vm1575, %v1576, %v1574
        %v1578 = vclz %v1577
        %v1579 = vsub.s32 %v1578, 2
        %vm1580 = vcmp.gt.s32.totalorder 0, %v1579
        %v1581 = vsel %vm1580, 0, %v1579
        %v1582 = vsub.s32 32, %v1581
        %v1583 = vshll.u32 %v1574, %v1581
        %v1584 = vshrl.u32 %v1566, %v1582
        %v1585 = vor.u32 %v1583, %v1584
        %v1586 = vsub.s32 4294967266, %v1581
        %v1587 = vadd.s32 %v1586, 127
        %v1588 = vshll.u32 %v1587, 23
        %v1589 = vor.u32 4788187, %v1588
        %v1590 = vand.u32 2147483647, %v1589
        %v1592 = vcvt.s32.f32 %v1585
        %v1593 = vmul.f32 %v1592, %v1590
        %v1594 = vxor.u32 %v1593, 2147483648
        %v1595 = vsel %vm1474, %v1594, %v1593
        %v1596 = vsub.s32 4, %v1572
        %v1597 = vsel %vm1474, %v1596, %v1572
        %v1598 = vsel %vm1473, %v1469, %v1595
        %v1599 = vsel %vm1473, 0, %v1597
        %v1600 = vmul.f32 %v1598, %v1598
        %v1601 = vmul.f32 %v1600, -0.001358992
        %v1602 = vadd.f32 %v1601, 0.041655596
        %v1603 = vmul.f32 %v1600, %v1602
        %v1604 = vadd.f32 %v1603, -0.4999988
        %v1605 = vmul.f32 %v1600, %v1604
        %v1606 = vadd.f32 1.0, %v1605
        %v1607 = vmul.f32 %v1598, %v1598
        %v1608 = vmul.f32 %v1607, -0.00019511016
        %v1609 = vadd.f32 %v1608, 0.008332121
        %v1610 = vmul.f32 %v1607, %v1609
        %v1611 = vadd.f32 %v1610, -0.16666654
        %v1612 = vmul.f32 %v1607, %v1611
        %v1613 = vadd.f32 %v1612, 1.0
        %v1614 = vmul.f32 %v1613, %v1598
        %vm1615 = vweird.f32 %v1469
        %v1616 = vand.u32 %v1599, 3
        %vm1617 = vcmp.lt.s32.totalorder %v1616, 2
        %vm1618 = vcmp.eq.s32.totalorder %v1616, 0
        %v1619 = vxor.u32 %v1614, 2147483648
        %v1620 = vsel %vm1618, %v1606, %v1619
        %vm1621 = vcmp.eq.s32.totalorder %v1616, 2
        %v1622 = vxor.u32 %v1606, 2147483648
        %v1623 = vsel %vm1621, %v1622, %v1614
        %v1624 = vsel %vm1617, %v1620, %v1623
        %v1625 = vsel %vm1615, nan, %v1624
        %v1626 = vmul.f32 %v1471, %v1625
        %v1627 = vand.u32 2147483647, %v1469
        %vm1628 = vcmp.le.f32.partialorder %v1627, 0.7853982
        %vm1629 = vcmp.lt.s32.totalorder %v1469, 0
        %v1630 = vand.u32 %v1469, 2139095040
        %v1631 = vshrl.u32 %v1630, 23
        %v1632 = vsub.s32 %v1631, 127
        %v1633 = vand.u32 2147483647, %v1469
        %v1634 = vand.u32 %v1633, 8388607
        %v1635 = vor.u32 %v1634, 8388608
        %v1636 = vsub.s32 0, %v1635
        %v1637 = vadd.s32 %v1632, 1
        %vm1638 = vcmp.gt.s32.totalorder %v1637, 0
        %v1639 = vsel %vm1638, %v1637, 0
        %v1640 = vshrl.u32 %v1639, 5
        %v1641 = vand.u32 %v1639, 31
        %v1642 = vsub.s32 32, %v1641
        %v1643 = vshrl.u32 683565275, %v1642
        %v1644 = vshll.u32 683565275, %v1641
        %v1645 = vshrl.u32 2475754826, %v1642
        %v1646 = vor.u32 %v1644, %v1645
        %v1647 = vshll.u32 2475754826, %v1641
        %v1648 = vshrl.u32 2131351028, %v1642
        %v1649 = vor.u32 %v1647, %v1648
        %v1650 = vshll.u32 2131351028, %v1641
        %v1651 = vshrl.u32 2102212464, %v1642
        %v1652 = vor.u32 %v1650, %v1651
        %v1653 = vshll.u32 2102212464, %v1641
        %v1654 = vshrl.u32 920167782, %v1642
        %v1655 = vor.u32 %v1653, %v1654
        %v1656 = vshll.u32 920167782, %v1641
        %v1657 = vshrl.u32 1326507024, %v1642
        %v1658 = vor.u32 %v1656, %v1657
        %vm1659 = vcmp.lt.s32.totalorder %v1640, 1
        %vm1660 = vcmp.lt.s32.totalorder %v1640, 2
        %vm1661 = vcmp.lt.s32.totalorder %v1640, 3
        %vm1662 = vcmp.lt.s32.totalorder %v1640, 4
        %v1663 = vsel %vm1659, %v1643, %v1646
        %v1664 = vsel %vm1662, %v1652, 2102212464
        %v1665 = vsel %vm1661, %v1649, %v1664
        %v1666 = vsel %vm1660, %v1663, %v1665
        %v1667 = vsel %vm1659, %v1646, %v1649
        %v1668 = vsel %vm1662, %v1655, 920167782
        %v1669 = vsel %vm1661, %v1652, %v1668
        %v1670 = vsel %vm1660, %v1667, %v1669
        %v1671 = vsel %vm1659, %v1649, %v1652
        %v1672 = vsel %vm1662, %v1658, 1326507024
        %v1673 = vsel %vm1661, %v1655, %v1672
        %v1674 = vsel %vm1660, %v1671, %v1673
        %v1675 = vshll.u32 %v1635, 8
        %v1676 = vand.u32 %v1675, 65535
        %v1677 = vshrl.u32 %v1675, 16
        %v1678 = vand.u32 %v1674, 65535
        %v1679 = vshrl.u32 %v1674, 16
        %v1680 = vmul.u32 %v1676, %v1678
        %v1681 = vmul.u32 %v1676, %v1679
        %v1682 = vmul.u32 %v1677, %v1678
        %v1683 = vmul.u32 %v1677, %v1679
        %v1684 = vshll.u32 %v1681, 16
        %v1685 = vshrl.u32 %v1681, 16
        %v1686 = vshll.u32 %v1682, 16
        %v1687 = vshrl.u32 %v1682, 16
        %vm1688 = vc.u32 %v1680, %v1684
        %v1689 = vsel %vm1688, 1, 0
        %v1690 = vadd.s32 %v1680, %v1684
        %v1691 = vadd.s32 %v1683, %v1689
        %vm1692 = vc.u32 %v1690, %v1686
        %v1693 = vsel %vm1692, 1, 0
        %v1694 = vadd.s32 %v1690, %v1686
        %v1695 = vadd.s32 %v1691, %v1693
        %v1696 = vadd.s32 %v1695, %v1685
        %v1697 = vadd.s32 %v1696, %v1687
        %v1698 = vand.u32 %v1675, 65535
        %v1699 = vshrl.u32 %v1675, 16
        %v1700 = vand.u32 %v1670, 65535
        %v1701 = vshrl.u32 %v1670, 16
        %v1702 = vmul.u32 %v1698, %v1700
        %v1703 = vmul.u32 %v1698, %v1701
        %v1704 = vmul.u32 %v1699, %v1700
        %v1705 = vmul.u32 %v1699, %v1701
        %v1706 = vshll.u32 %v1703, 16
        %v1707 = vshrl.u32 %v1703, 16
        %v1708 = vshll.u32 %v1704, 16
        %v1709 = vshrl.u32 %v1704, 16
        %vm1710 = vc.u32 %v1702, %v1706
        %v1711 = vsel %vm1710, 1, 0
        %v1712 = vadd.s32 %v1702, %v1706
        %v1713 = vadd.s32 %v1705, %v1711
        %vm1714 = vc.u32 %v1712, %v1708
        %v1715 = vsel %vm1714, 1, 0
        %v1716 = vadd.s32 %v1712, %v1708
        %v1717 = vadd.s32 %v1713, %v1715
        %v1718 = vadd.s32 %v1717, %v1707
        %v1719 = vadd.s32 %v1718, %v1709
        %v1720 = vmul.u32 %v1675, %v1666
        %v1721 = vadd.s32 %v1697, %v1716
        %vm1722 = vc.u32 %v1697, %v1716
        %v1723 = vadd.s32 %v1719, 1
        %v1724 = vsel %vm1722, %v1723, %v1719
        %v1725 = vadd.s32 %v1720, %v1724
        %v1726 = vadd.s32 %v1725, 536870912
        %v1727 = vshrl.u32 %v1726, 30
        %v1728 = vshll.u32 %v1727, 30
        %v1729 = vsub.s32 %v1725, %v1728
        %vm1730 = vcmp.lt.s32.totalorder %v1729, 0
        %v1731 = vsub.s32 0, %v1729
        %v1732 = vsel %vm1730, %v1731, %v1729
        %v1733 = vclz %v1732
        %v1734 = vsub.s32 %v1733, 2
        %vm1735 = vcmp.gt.s32.totalorder 0, %v1734
        %v1736 = vsel %vm1735, 0, %v1734
        %v1737 = vsub.s32 32, %v1736
        %v1738 = vshll.u32 %v1729, %v1736
        %v1739 = vshrl.u32 %v1721, %v1737
        %v1740 = vor.u32 %v1738, %v1739
        %v1741 = vsub.s32 4294967266, %v1736
        %v1742 = vadd.s32 %v1741, 127
        %v1743 = vshll.u32 %v1742, 23
        %v1744 = vor.u32 4788187, %v1743
        %v1745 = vand.u32 2147483647, %v1744
        %v1747 = vcvt.s32.f32 %v1740
        %v1748 = vmul.f32 %v1747, %v1745
        %v1749 = vxor.u32 %v1748, 2147483648
        %v1750 = vsel %vm1629, %v1749, %v1748
        %v1751 = vsub.s32 4, %v1727
        %v1752 = vsel %vm1629, %v1751, %v1727
        %v1753 = vsel %vm1628, %v1469, %v1750
        %v1754 = vsel %vm1628, 0, %v1752
        %v1755 = vmul.f32 %v1753, %v1753
        %v1756 = vmul.f32 %v1755, -0.001358992
        %v1757 = vadd.f32 %v1756, 0.041655596
        %v1758 = vmul.f32 %v1755, %v1757
        %v1759 = vadd.f32 %v1758, -0.4999988
        %v1760 = vmul.f32 %v1755, %v1759
        %v1761 = vadd.f32 1.0, %v1760
        %v1762 = vmul.f32 %v1753, %v1753
        %v1763 = vmul.f32 %v1762, -0.00019511016
        %v1764 = vadd.f32 %v1763, 0.008332121
        %v1765 = vmul.f32 %v1762, %v1764
        %v1766 = vadd.f32 %v1765, -0.16666654
        %v1767 = vmul.f32 %v1762, %v1766
        %v1768 = vadd.f32 %v1767, 1.0
        %v1769 = vmul.f32 %v1768, %v1753
        %vm1770 = vweird.f32 %v1469
        %v1771 = vadd.s32 %v1754, 3
        %v1772 = vand.u32 %v1771, 3
        %vm1773 = vcmp.lt.s32.totalorder %v1772, 2
        %vm1774 = vcmp.eq.s32.totalorder %v1772, 0
        %v1775 = vxor.u32 %v1769, 2147483648
        %v1776 = vsel %vm1774, %v1761, %v1775
        %vm1777 = vcmp.eq.s32.totalorder %v1772, 2
        %v1778 = vxor.u32 %v1761, 2147483648
        %v1779 = vsel %vm1777, %v1778, %v1769
        %v1780 = vsel %vm1773, %v1776, %v1779
        %v1781 = vsel %vm1770, nan, %v1780
        %v1782 = vmul.f32 %v1471, %v1781
        %v1783 = vmul.f32 %v1462, %v1462
        %v1784 = vmul.f32 %v1464, %v1464
        %v1785 = vadd.f32 %v1783, %v1784
        %v1786 = vrcp.pop %v1785
        %v1787 = vmul.f32 %v1785, %v1786
        %v1788 = vsub.f32 2.0, %v1787
        %v1789 = vmul.f32 %v1786, %v1788
        %v1790 = vsub.f32 %v1626, 1.0
        %v1791 = vmul.f32 %v1790, %v1462
        %v1792 = vmul.f32 %v1782, %v1464
        %v1793 = vadd.f32 %v1791, %v1792
        %v1794 = vmul.f32 %v1793, %v1789
        %v1795 = vmul.f32 %v1782, %v1462
        %v1796 = vmul.f32 %v1790, %v1464
        %v1797 = vsub.f32 %v1795, %v1796
        %v1798 = vmul.f32 %v1797, %v1789
        %s1799 = scalar_lea.vmem [#allocation3], 8
        %v1800 = vld [vmem:[%s1799] sm:$0xff]
        %s1801 = scalar_lea.vmem [#allocation5], 8
        %v1802 = vld [vmem:[%s1801] sm:$0xff]
        %v1803 = vmul.f32 %v1800, %v1794
        %v1804 = vmul.f32 %v1802, %v1798
        %v1805 = vsub.f32 %v1803, %v1804
        %v1806 = vmul.f32 %v1800, %v1798
        %v1807 = vmul.f32 %v1802, %v1794
        %v1808 = vadd.f32 %v1806, %v1807
        %v1809 = vmul.f32 %v1626, %v1626
        %v1810 = vmul.f32 %v1782, %v1782
        %v1811 = vsub.f32 %v1809, %v1810
        %v1812 = vmul.f32 %v1626, 2.0
        %v1813 = vmul.f32 %v1812, %v1782
        %v1814 = vmul.f32 %v1805, %v1626
        %v1815 = vmul.f32 %v1808, %v1782
        %v1816 = vsub.f32 %v1814, %v1815
        %v1817 = vmul.f32 %v1805, %v1782
        %v1818 = vmul.f32 %v1808, %v1626
        %v1819 = vadd.f32 %v1817, %v1818
        %v1820 = vsel %vm957, %v1805, 0.0
        %v1821 = vrot.slane %v1820, 4
        %v1822 = vadd.f32 %v1820, %v1821
        %v1823 = vrot.slane %v1822, 2
        %v1824 = vadd.f32 %v1822, %v1823
        %v1825 = vrot.slane %v1824, 1
        %v1826 = vadd.f32 %v1824, %v1825
        %v1827 = vmul.f32 %v1826, 2.0
        %v1828 = vmul.f32 %v1452, %v1827
        %v1829 = vmul.f32 %v1453, %v1827
        %v1830 = vsel %vm957, %v1816, 0.0
        %v1831 = vrot.slane %v1830, 4
        %v1832 = vadd.f32 %v1830, %v1831
        %v1833 = vrot.slane %v1832, 2
        %v1834 = vadd.f32 %v1832, %v1833
        %v1835 = vrot.slane %v1834, 1
        %v1836 = vadd.f32 %v1834, %v1835
        %v1837 = vmul.f32 %v1836, 2.0
        %v1838 = vmul.f32 %v1816, %v1811
        %v1839 = vmul.f32 %v1819, %v1813
        %v1840 = vsub.f32 %v1838, %v1839
        %v1841 = vmul.f32 %v1816, %v1813
        %v1842 = vmul.f32 %v1819, %v1811
        %v1843 = vadd.f32 %v1841, %v1842
        %v1844 = vrot.slane %v1452, 7
        %v1845 = vrot.slane %v1453, 7
        %v1846 = vsel %vm984, %v1844, %v1845
        %v1847 = vsel %vm984, %v1845, %v1844
        %v1848 = vsel %vm566, %v1847, 0.0
        %v1849 = vsel %vm567, %v1846, 0.0
        %v1850 = vmul.f32 %v1837, %v1848
        %v1851 = vmul.f32 %v1837, %v1849
        %v1852 = vadd.f32 %v1850, 0.0
        %v1853 = vadd.f32 %v1851, 0.0
        %v1854 = vmul.f32 %v1805, %v1811
        %v1855 = vmul.f32 %v1808, %v1813
        %v1856 = vsub.f32 %v1854, %v1855
        %v1857 = vmul.f32 %v1805, %v1813
        %v1858 = vmul.f32 %v1808, %v1811
        %v1859 = vadd.f32 %v1857, %v1858
        %v1860 = vsel %vm957, %v1856, 0.0
        %v1861 = vrot.slane %v1860, 4
        %v1862 = vadd.f32 %v1860, %v1861
        %v1863 = vrot.slane %v1862, 2
        %v1864 = vadd.f32 %v1862, %v1863
        %v1865 = vrot.slane %v1864, 1
        %v1866 = vadd.f32 %v1864, %v1865
        %v1867 = vmul.f32 %v1866, 2.0
        %v1868 = vrot.slane %v1452, 6
        %v1869 = vrot.slane %v1453, 6
        %v1870 = vsel %vm1009, %v1868, %v1869
        %v1871 = vsel %vm1009, %v1869, %v1868
        %v1872 = vsel %vm568, %v1871, 0.0
        %v1873 = vsel %vm569, %v1870, 0.0
        %v1874 = vmul.f32 %v1867, %v1872
        %v1875 = vmul.f32 %v1867, %v1873
        %v1876 = vadd.f32 %v1828, %v1874
        %v1877 = vadd.f32 %v1829, %v1875
        %v1878 = vsel %vm957, %v1840, 0.0
        %v1879 = vrot.slane %v1878, 4
        %v1880 = vadd.f32 %v1878, %v1879
        %v1881 = vrot.slane %v1880, 2
        %v1882 = vadd.f32 %v1880, %v1881
        %v1883 = vrot.slane %v1882, 1
        %v1884 = vadd.f32 %v1882, %v1883
        %v1885 = vmul.f32 %v1884, 2.0
        %v1886 = vmul.f32 %v1840, %v1811
        %v1887 = vmul.f32 %v1843, %v1813
        %v1888 = vsub.f32 %v1886, %v1887
        %v1889 = vmul.f32 %v1840, %v1813
        %v1890 = vmul.f32 %v1843, %v1811
        %v1891 = vadd.f32 %v1889, %v1890
        %v1892 = vrot.slane %v1452, 5
        %v1893 = vrot.slane %v1453, 5
        %v1894 = vsel %vm1034, %v1892, %v1893
        %v1895 = vsel %vm1034, %v1893, %v1892
        %v1896 = vsel %vm570, %v1895, 0.0
        %v1897 = vsel %vm571, %v1894, 0.0
        %v1898 = vmul.f32 %v1885, %v1896
        %v1899 = vmul.f32 %v1885, %v1897
        %v1900 = vadd.f32 %v1852, %v1898
        %v1901 = vadd.f32 %v1853, %v1899
        %v1902 = vmul.f32 %v1856, %v1811
        %v1903 = vmul.f32 %v1859, %v1813
        %v1904 = vsub.f32 %v1902, %v1903
        %v1905 = vmul.f32 %v1856, %v1813
        %v1906 = vmul.f32 %v1859, %v1811
        %v1907 = vadd.f32 %v1905, %v1906
        %v1908 = vsel %vm957, %v1904, 0.0
        %v1909 = vrot.slane %v1908, 4
        %v1910 = vadd.f32 %v1908, %v1909
        %v1911 = vrot.slane %v1910, 2
        %v1912 = vadd.f32 %v1910, %v1911
        %v1913 = vrot.slane %v1912, 1
        %v1914 = vadd.f32 %v1912, %v1913
        %v1915 = vmul.f32 %v1914, 2.0
        %v1916 = vrot.slane %v1452, 4
        %v1917 = vrot.slane %v1453, 4
        %v1918 = vsel %vm1059, %v1916, %v1917
        %v1919 = vsel %vm1059, %v1917, %v1916
        %v1920 = vsel %vm572, %v1919, 0.0
        %v1921 = vsel %vm573, %v1918, 0.0
        %v1922 = vmul.f32 %v1915, %v1920
        %v1923 = vmul.f32 %v1915, %v1921
        %v1924 = vadd.f32 %v1876, %v1922
        %v1925 = vadd.f32 %v1877, %v1923
        %v1926 = vsel %vm957, %v1888, 0.0
        %v1927 = vrot.slane %v1926, 4
        %v1928 = vadd.f32 %v1926, %v1927
        %v1929 = vrot.slane %v1928, 2
        %v1930 = vadd.f32 %v1928, %v1929
        %v1931 = vrot.slane %v1930, 1
        %v1932 = vadd.f32 %v1930, %v1931
        %v1933 = vmul.f32 %v1932, 2.0
        %v1934 = vmul.f32 %v1888, %v1811
        %v1935 = vmul.f32 %v1891, %v1813
        %v1936 = vsub.f32 %v1934, %v1935
        %v1937 = vmul.f32 %v1888, %v1813
        %v1938 = vmul.f32 %v1891, %v1811
        %v1939 = vadd.f32 %v1937, %v1938
        %v1940 = vrot.slane %v1452, 3
        %v1941 = vrot.slane %v1453, 3
        %v1942 = vsel %vm1084, %v1940, %v1941
        %v1943 = vsel %vm1084, %v1941, %v1940
        %v1944 = vsel %vm574, %v1943, 0.0
        %v1945 = vsel %vm575, %v1942, 0.0
        %v1946 = vmul.f32 %v1933, %v1944
        %v1947 = vmul.f32 %v1933, %v1945
        %v1948 = vadd.f32 %v1900, %v1946
        %v1949 = vadd.f32 %v1901, %v1947
        %v1950 = vmul.f32 %v1904, %v1811
        %v1951 = vmul.f32 %v1907, %v1813
        %v1952 = vsub.f32 %v1950, %v1951
        %v1953 = vmul.f32 %v1904, %v1813
        %v1954 = vmul.f32 %v1907, %v1811
        %v1955 = vadd.f32 %v1953, %v1954
        %v1956 = vsel %vm957, %v1952, 0.0
        %v1957 = vrot.slane %v1956, 4
        %v1958 = vadd.f32 %v1956, %v1957
        %v1959 = vrot.slane %v1958, 2
        %v1960 = vadd.f32 %v1958, %v1959
        %v1961 = vrot.slane %v1960, 1
        %v1962 = vadd.f32 %v1960, %v1961
        %v1963 = vmul.f32 %v1962, 2.0
        %v1964 = vrot.slane %v1452, 2
        %v1965 = vrot.slane %v1453, 2
        %v1966 = vsel %vm1109, %v1964, %v1965
        %v1967 = vsel %vm1109, %v1965, %v1964
        %v1968 = vsel %vm576, %v1967, 0.0
        %v1969 = vsel %vm577, %v1966, 0.0
        %v1970 = vmul.f32 %v1963, %v1968
        %v1971 = vmul.f32 %v1963, %v1969
        %v1972 = vadd.f32 %v1924, %v1970
        %v1973 = vadd.f32 %v1925, %v1971
        %v1974 = vsel %vm957, %v1936, 0.0
        %v1975 = vrot.slane %v1974, 4
        %v1976 = vadd.f32 %v1974, %v1975
        %v1977 = vrot.slane %v1976, 2
        %v1978 = vadd.f32 %v1976, %v1977
        %v1979 = vrot.slane %v1978, 1
        %v1980 = vadd.f32 %v1978, %v1979
        %v1981 = vmul.f32 %v1980, 2.0
        %v1982 = vmul.f32 %v1936, %v1811
        %v1983 = vmul.f32 %v1939, %v1813
        %v1984 = vsub.f32 %v1982, %v1983
        %v1985 = vmul.f32 %v1936, %v1813
        %v1986 = vmul.f32 %v1939, %v1811
        %v1987 = vadd.f32 %v1985, %v1986
        %v1988 = vrot.slane %v1452, 1
        %v1989 = vrot.slane %v1453, 1
        %v1990 = vsel %vm1134, %v1988, %v1989
        %v1991 = vsel %vm1134, %v1989, %v1988
        %v1992 = vsel %vm578, %v1991, 0.0
        %v1993 = vsel %vm579, %v1990, 0.0
        %v1994 = vmul.f32 %v1981, %v1992
        %v1995 = vmul.f32 %v1981, %v1993
        %v1996 = vadd.f32 %v1948, %v1994
        %v1997 = vadd.f32 %v1949, %v1995
        %v1998 = vmul.f32 %v1952, %v1811
        %v1999 = vmul.f32 %v1955, %v1813
        %v2000 = vsub.f32 %v1998, %v1999
        %v2001 = vmul.f32 %v1952, %v1813
        %v2002 = vmul.f32 %v1955, %v1811
        %v2003 = vadd.f32 %v2001, %v2002
        %v2004 = vsel %vm957, %v2000, 0.0
        %v2005 = vrot.slane %v2004, 4
        %v2006 = vadd.f32 %v2004, %v2005
        %v2007 = vrot.slane %v2006, 2
        %v2008 = vadd.f32 %v2006, %v2007
        %v2009 = vrot.slane %v2008, 1
        %v2010 = vadd.f32 %v2008, %v2009
        %v2011 = vmul.f32 %v2010, 2.0
        %v2012 = vsel %vm580, %v1453, 0.0
        %v2013 = vsel %vm581, %v1452, 0.0
        %v2014 = vmul.f32 %v2011, %v2012
        %v2015 = vmul.f32 %v2011, %v2013
        %v2016 = vadd.f32 %v1972, %v2014
        %v2017 = vadd.f32 %v1973, %v2015
        %v2018 = vsel %vm957, %v1984, 0.0
        %v2019 = vrot.slane %v2018, 4
        %v2020 = vadd.f32 %v2018, %v2019
        %v2021 = vrot.slane %v2020, 2
        %v2022 = vadd.f32 %v2020, %v2021
        %v2023 = vrot.slane %v2022, 1
        %v2024 = vadd.f32 %v2022, %v2023
        %v2025 = vmul.f32 %v2024, 2.0
        %v2026 = vmul.f32 %v1984, %v1811
        %v2027 = vmul.f32 %v1987, %v1813
        %v2028 = vsub.f32 %v2026, %v2027
        %v2029 = vmul.f32 %v1984, %v1813
        %v2030 = vmul.f32 %v1987, %v1811
        %v2031 = vadd.f32 %v2029, %v2030
        %v2032 = vsel %vm582, %v1846, 0.0
        %v2033 = vsel %vm583, %v1847, 0.0
        %v2034 = vmul.f32 %v2025, %v2032
        %v2035 = vmul.f32 %v2025, %v2033
        %v2036 = vadd.f32 %v1996, %v2034
        %v2037 = vadd.f32 %v1997, %v2035
        %v2038 = vmul.f32 %v2000, %v1811
        %v2039 = vmul.f32 %v2003, %v1813
        %v2040 = vsub.f32 %v2038, %v2039
        %v2041 = vmul.f32 %v2000, %v1813
        %v2042 = vmul.f32 %v2003, %v1811
        %v2043 = vadd.f32 %v2041, %v2042
        %v2044 = vsel %vm957, %v2040, 0.0
        %v2045 = vrot.slane %v2044, 4
        %v2046 = vadd.f32 %v2044, %v2045
        %v2047 = vrot.slane %v2046, 2
        %v2048 = vadd.f32 %v2046, %v2047
        %v2049 = vrot.slane %v2048, 1
        %v2050 = vadd.f32 %v2048, %v2049
        %v2051 = vmul.f32 %v2050, 2.0
        %v2052 = vsel %vm584, %v1870, 0.0
        %v2053 = vsel %vm585, %v1871, 0.0
        %v2054 = vmul.f32 %v2051, %v2052
        %v2055 = vmul.f32 %v2051, %v2053
        %v2056 = vadd.f32 %v2016, %v2054
        %v2057 = vadd.f32 %v2017, %v2055
        %v2058 = vsel %vm957, %v2028, 0.0
        %v2059 = vrot.slane %v2058, 4
        %v2060 = vadd.f32 %v2058, %v2059
        %v2061 = vrot.slane %v2060, 2
        %v2062 = vadd.f32 %v2060, %v2061
        %v2063 = vrot.slane %v2062, 1
        %v2064 = vadd.f32 %v2062, %v2063
        %v2065 = vmul.f32 %v2064, 2.0
        %v2066 = vmul.f32 %v2028, %v1811
        %v2067 = vmul.f32 %v2031, %v1813
        %v2068 = vsub.f32 %v2066, %v2067
        %v2069 = vmul.f32 %v2028, %v1813
        %v2070 = vmul.f32 %v2031, %v1811
        %v2071 = vadd.f32 %v2069, %v2070
        %v2072 = vsel %vm586, %v1894, 0.0
        %v2073 = vsel %vm587, %v1895, 0.0
        %v2074 = vmul.f32 %v2065, %v2072
        %v2075 = vmul.f32 %v2065, %v2073
        %v2076 = vadd.f32 %v2036, %v2074
        %v2077 = vadd.f32 %v2037, %v2075
        %v2078 = vmul.f32 %v2040, %v1811
        %v2079 = vmul.f32 %v2043, %v1813
        %v2080 = vsub.f32 %v2078, %v2079
        %v2081 = vmul.f32 %v2040, %v1813
        %v2082 = vmul.f32 %v2043, %v1811
        %v2083 = vadd.f32 %v2081, %v2082
        %v2084 = vsel %vm957, %v2080, 0.0
        %v2085 = vrot.slane %v2084, 4
        %v2086 = vadd.f32 %v2084, %v2085
        %v2087 = vrot.slane %v2086, 2
        %v2088 = vadd.f32 %v2086, %v2087
        %v2089 = vrot.slane %v2088, 1
        %v2090 = vadd.f32 %v2088, %v2089
        %v2091 = vmul.f32 %v2090, 2.0
        %v2092 = vsel %vm588, %v1918, 0.0
        %v2093 = vsel %vm589, %v1919, 0.0
        %v2094 = vmul.f32 %v2091, %v2092
        %v2095 = vmul.f32 %v2091, %v2093
        %v2096 = vadd.f32 %v2056, %v2094
        %v2097 = vadd.f32 %v2057, %v2095
        %v2098 = vsel %vm957, %v2068, 0.0
        %v2099 = vrot.slane %v2098, 4
        %v2100 = vadd.f32 %v2098, %v2099
        %v2101 = vrot.slane %v2100, 2
        %v2102 = vadd.f32 %v2100, %v2101
        %v2103 = vrot.slane %v2102, 1
        %v2104 = vadd.f32 %v2102, %v2103
        %v2105 = vmul.f32 %v2104, 2.0
        %v2106 = vmul.f32 %v2068, %v1811
        %v2107 = vmul.f32 %v2071, %v1813
        %v2108 = vsub.f32 %v2106, %v2107
        %v2109 = vsel %vm590, %v1942, 0.0
        %v2110 = vsel %vm591, %v1943, 0.0
        %v2111 = vmul.f32 %v2105, %v2109
        %v2112 = vmul.f32 %v2105, %v2110
        %v2113 = vadd.f32 %v2076, %v2111
        %v2114 = vadd.f32 %v2077, %v2112
        %v2115 = vmul.f32 %v2080, %v1811
        %v2116 = vmul.f32 %v2083, %v1813
        %v2117 = vsub.f32 %v2115, %v2116
        %v2118 = vsel %vm957, %v2117, 0.0
        %v2119 = vrot.slane %v2118, 4
        %v2120 = vadd.f32 %v2118, %v2119
        %v2121 = vrot.slane %v2120, 2
        %v2122 = vadd.f32 %v2120, %v2121
        %v2123 = vrot.slane %v2122, 1
        %v2124 = vadd.f32 %v2122, %v2123
        %v2125 = vmul.f32 %v2124, 2.0
        %v2126 = vsel %vm592, %v1966, 0.0
        %v2127 = vsel %vm593, %v1967, 0.0
        %v2128 = vmul.f32 %v2125, %v2126
        %v2129 = vmul.f32 %v2125, %v2127
        %v2130 = vadd.f32 %v2096, %v2128
        %v2131 = vadd.f32 %v2097, %v2129
        %v2132 = vsel %vm957, %v2108, 0.0
        %v2133 = vrot.slane %v2132, 4
        %v2134 = vadd.f32 %v2132, %v2133
        %v2135 = vrot.slane %v2134, 2
        %v2136 = vadd.f32 %v2134, %v2135
        %v2137 = vrot.slane %v2136, 1
        %v2138 = vadd.f32 %v2136, %v2137
        %v2139 = vmul.f32 %v2138, 2.0
        %v2140 = vsel %vm594, %v1990, 0.0
        %v2141 = vsel %vm595, %v1991, 0.0
        %v2142 = vmul.f32 %v2139, %v2140
        %v2143 = vmul.f32 %v2139, %v2141
        %v2144 = vadd.f32 %v2113, %v2142
        %v2145 = vadd.f32 %v2114, %v2143
        %v2146 = vadd.f32 %v2130, %v2144
        %v2147 = vadd.f32 %v2131, %v2145
        %s2148 = scalar_lea.vmem [#allocation7], 1
        %v2149 = vld [vmem:[%s2148] sm:$0x1]
        %v2151 = vperm.slane %v2149, 0
        %v2153 = vmul.f32 %v1452, %v2151
        %v2154 = vmul.f32 %v1453, %v2151
        %v2155 = vadd.f32 %v2146, %v2153
        %v2156 = vadd.f32 %v2147, %v2154
        %v2157 = vmul.f32 %v2155, 0.5
        %v2158 = vmul.f32 %v2156, 0.5
        %v2159 = vmul.f32 %v2155, 0.70710677
        %v2160 = vmul.f32 %v2156, 0.70710677
        %v2161 = vmax.f32 %v2159, -4.0
        %v2162 = vmax.f32 %v2160, -4.0
        %v2163 = vmin.f32 %v2161, 4.0
        %v2164 = vmin.f32 %v2162, 4.0
        %v2165 = vmul.f32 %v2163, %v2163
        %v2166 = vmul.f32 %v2164, %v2164
        %v2167 = vmul.f32 %v2165, -2.7261424e-10
        %v2168 = vmul.f32 %v2166, -2.7261424e-10
        %v2169 = vadd.f32 %v2167, 2.7706815e-08
        %v2170 = vadd.f32 %v2168, 2.7706815e-08
        %v2171 = vmul.f32 %v2169, %v2165
        %v2172 = vmul.f32 %v2170, %v2166
        %v2173 = vadd.f32 %v2171, -2.101024e-06
        %v2174 = vadd.f32 %v2172, -2.101024e-06
        %v2175 = vmul.f32 %v2173, %v2165
        %v2176 = vmul.f32 %v2174, %v2166
        %v2177 = vadd.f32 %v2175, -5.6925062e-05
        %v2178 = vadd.f32 %v2176, -5.6925062e-05
        %v2179 = vmul.f32 %v2177, %v2165
        %v2180 = vmul.f32 %v2178, %v2166
        %v2181 = vadd.f32 %v2179, -0.00073499064
        %v2182 = vadd.f32 %v2180, -0.00073499064
        %v2183 = vmul.f32 %v2181, %v2165
        %v2184 = vmul.f32 %v2182, %v2166
        %v2185 = vadd.f32 %v2183, -0.0029546
        %v2186 = vadd.f32 %v2184, -0.0029546
        %v2187 = vmul.f32 %v2185, %v2165
        %v2188 = vmul.f32 %v2186, %v2166
        %v2189 = vadd.f32 %v2187, -0.016096033
        %v2190 = vadd.f32 %v2188, -0.016096033
        %v2191 = vmul.f32 %v2189, %v2163
        %v2192 = vmul.f32 %v2190, %v2164
        %v2193 = vmul.f32 %v2165, -1.45660715e-05
        %v2194 = vmul.f32 %v2166, -1.45660715e-05
        %v2195 = vadd.f32 %v2193, -0.00021337405
        %v2196 = vadd.f32 %v2194, -0.00021337405
        %v2197 = vmul.f32 %v2195, %v2165
        %v2198 = vmul.f32 %v2196, %v2166
        %v2199 = vadd.f32 %v2197, -0.001682827
        %v2200 = vadd.f32 %v2198, -0.001682827
        %v2201 = vmul.f32 %v2199, %v2165
        %v2202 = vmul.f32 %v2200, %v2166
        %v2203 = vadd.f32 %v2201, -0.0073733293
        %v2204 = vadd.f32 %v2202, -0.0073733293
        %v2205 = vmul.f32 %v2203, %v2165
        %v2206 = vmul.f32 %v2204, %v2166
        %v2207 = vadd.f32 %v2205, -0.014264739
        %v2208 = vadd.f32 %v2206, -0.014264739
        %v2209 = vrcp.pop %v2207
        %v2210 = vrcp.pop %v2208
        %v2211 = vmul.f32 %v2207, %v2209
        %v2212 = vmul.f32 %v2208, %v2210
        %v2213 = vsub.f32 2.0, %v2211
        %v2214 = vsub.f32 2.0, %v2212
        %v2215 = vmul.f32 %v2209, %v2213
        %v2216 = vmul.f32 %v2210, %v2214
        %v2217 = vmul.f32 %v2191, %v2215
        %v2218 = vmul.f32 %v2192, %v2216
        %v2219 = vadd.f32 %v2217, 1.0
        %v2220 = vadd.f32 %v2218, 1.0
        %v2221 = vmul.f32 %v2157, %v2219
        %v2222 = vmul.f32 %v2158, %v2220
        %s2223 = scalar_lea.vmem [#allocation8], 32
        %v2224 = vld [vmem:[%s2223] sm:$0xff]
        %v2225 = vld [vmem:[%s2223 + $0x8] sm:$0xff]
        %v2226 = vld [vmem:[%s2223 + $0x10] sm:$0xff]
        %v2227 = vld [vmem:[%s2223 + $0x18] sm:$0xff]
        %s2228 = scalar_lea.vmem [#allocation10], 1
        %v2229 = vld [vmem:[%s2228] sm:$0x1]
        %v2231 = vperm.slane %v2229, 0
        %v2234 = vsel %vm957, %v2221, 0
        %v2237 = vsel %vm957, %v2222, 0
        %2239 = vmatpush.msra.mxu0 0.0
        %2240 = vmatpush.msra.mxu0 0.0
        %2241 = vmatpush.msra.mxu0 0.0
        %2242 = vmatpush.msra.mxu0 0.0
        %2243 = vmatpush.msra.mxu0 0.0
        %2244 = vmatpush.msra.mxu0 0.0
        %2245 = vmatpush.msra.mxu0 0.0
        %2246 = vmatpush.msra.mxu0 0.0
        %2247 = vmatpush.msra.mxu0 0.0
        %2248 = vmatpush.msra.mxu0 0.0
        %2249 = vmatpush.msra.mxu0 0.0
        %2250 = vmatpush.msra.mxu0 0.0
        %2251 = vmatpush.msra.mxu0 %v2227
        %2252 = vmatpush.msra.mxu0 %v2226
        %2253 = vmatpush.msra.mxu0 %v2225
        %2254 = vmatpush.msra.mxu0 %v2224
        %2255 = vmatmul.f32.gmra.mxu0 %v2234
        %v2256 = vpop.f32.mrf.mxu0
        %v2257 = vadd.f32 %v2231, %v2256
        %2258 = vmatmul.f32.gmra.mxu0 %v2237
        %v2259 = vpop.f32.mrf.mxu0
        %v2260 = vadd.f32 %v2231, %v2259
        %2261 = vdwg.mxu0
        %v2262 = vxor.u32 %v2257, 2147483648
        %v2263 = vxor.u32 %v2260, 2147483648
        %v2264 = vmul.f32 %v2262, 1.442695
        %v2265 = vpow.pop %v2264
        %v2266 = vmul.f32 %v2263, 1.442695
        %v2267 = vpow.pop %v2266
        %v2268 = vadd.f32 %v2265, 1.0
        %v2269 = vadd.f32 %v2267, 1.0
        %v2270 = vrcp.pop %v2268
        %v2271 = vmul.f32 %v2268, %v2270
        %v2272 = vsub.f32 1.0, %v2271
        %v2273 = vmul.f32 %v2270, %v2272
        %v2274 = vadd.f32 %v2270, %v2273
        %vm2275 = vweird.f32 %v2268
        %vm2276 = vweird.f32 %v2270
        %vm2277 = vmor %vm2275, %vm2276
        %v2278 = vsel %vm2277, %v2270, %v2274
        %v2279 = vand.u32 2147483647, %v2268
        %vm2280 = vcmp.eq.f32.partialorder %v2279, 8.507059e+37
        %v2281 = vand.u32 %v2268, 2147483648
        %v2282 = vor.u32 1.1754944e-38, %v2281
        %v2283 = vsel %vm2280, %v2282, %v2278
        %v2284 = vmul.f32 1.0, %v2283
        %v2285 = vrcp.pop %v2269
        %v2286 = vmul.f32 %v2269, %v2285
        %v2287 = vsub.f32 1.0, %v2286
        %v2288 = vmul.f32 %v2285, %v2287
        %v2289 = vadd.f32 %v2285, %v2288
        %vm2290 = vweird.f32 %v2269
        %vm2291 = vweird.f32 %v2285
        %vm2292 = vmor %vm2290, %vm2291
        %v2293 = vsel %vm2292, %v2285, %v2289
        %v2294 = vand.u32 2147483647, %v2269
        %vm2295 = vcmp.eq.f32.partialorder %v2294, 8.507059e+37
        %v2296 = vand.u32 %v2269, 2147483648
        %v2297 = vor.u32 1.1754944e-38, %v2296
        %v2298 = vsel %vm2295, %v2297, %v2293
        %v2299 = vmul.f32 1.0, %v2298
        %2302 = vrot.lane.b32.xlu0 %v2284, 96
        %v2303 = vpop.permute.xlu0 %2302
        %2304 = vrot.lane.b32.xlu0 %v2299, 96
        %v2305 = vpop.permute.xlu0 %2304
        %v2308 = vmul.f32 %v2257, %v2303
        %v2309 = vmul.f32 %v2260, %v2305
        %v2310 = vadd.f32 %v2308, %v1452
        %v2311 = vadd.f32 %v2309, %v1453
        %s2312 = scalar_lea.vmem %s3, 2
        %v2313 = vld [vmem:[%s2312] sm:$0x1]
        %v2314 = vmul.f32 %v2313, 1.442695
        %v2315 = vpow.pop %v2314
        %s2316 = scalar_lea.vmem %s4, 16
        %v2317 = vld [vmem:[%s2316] sm:$0xff]
        %v2318 = vmul.f32 %v2317, 1.442695
        %v2319 = vpow.pop %v2318
        %v2320 = vsub.f32 0.0, %v2319
        %s2321 = scalar_lea.vmem %s5, 16
        %v2322 = vld [vmem:[%s2321] sm:$0xff]
        %v2324 = vperm.slane %v2315, 0
        %v2326 = vmul.f32 %v2320, %v2324
        %v2327 = vmul.f32 %v2322, %v2324
        %v2328 = vmul.f32 %v2326, 1.442695
        %v2329 = vpow.pop %v2328
        %v2330 = vand.u32 2147483647, %v2327
        %vm2331 = vcmp.le.f32.partialorder %v2330, 0.7853982
        %vm2332 = vcmp.lt.s32.totalorder %v2327, 0
        %v2333 = vand.u32 %v2327, 2139095040
        %v2334 = vshrl.u32 %v2333, 23
        %v2335 = vsub.s32 %v2334, 127
        %v2336 = vand.u32 2147483647, %v2327
        %v2337 = vand.u32 %v2336, 8388607
        %v2338 = vor.u32 %v2337, 8388608
        %v2339 = vsub.s32 0, %v2338
        %v2340 = vadd.s32 %v2335, 1
        %vm2341 = vcmp.gt.s32.totalorder %v2340, 0
        %v2342 = vsel %vm2341, %v2340, 0
        %v2343 = vshrl.u32 %v2342, 5
        %v2344 = vand.u32 %v2342, 31
        %v2345 = vsub.s32 32, %v2344
        %v2346 = vshrl.u32 683565275, %v2345
        %v2347 = vshll.u32 683565275, %v2344
        %v2348 = vshrl.u32 2475754826, %v2345
        %v2349 = vor.u32 %v2347, %v2348
        %v2350 = vshll.u32 2475754826, %v2344
        %v2351 = vshrl.u32 2131351028, %v2345
        %v2352 = vor.u32 %v2350, %v2351
        %v2353 = vshll.u32 2131351028, %v2344
        %v2354 = vshrl.u32 2102212464, %v2345
        %v2355 = vor.u32 %v2353, %v2354
        %v2356 = vshll.u32 2102212464, %v2344
        %v2357 = vshrl.u32 920167782, %v2345
        %v2358 = vor.u32 %v2356, %v2357
        %v2359 = vshll.u32 920167782, %v2344
        %v2360 = vshrl.u32 1326507024, %v2345
        %v2361 = vor.u32 %v2359, %v2360
        %vm2362 = vcmp.lt.s32.totalorder %v2343, 1
        %vm2363 = vcmp.lt.s32.totalorder %v2343, 2
        %vm2364 = vcmp.lt.s32.totalorder %v2343, 3
        %vm2365 = vcmp.lt.s32.totalorder %v2343, 4
        %v2366 = vsel %vm2362, %v2346, %v2349
        %v2367 = vsel %vm2365, %v2355, 2102212464
        %v2368 = vsel %vm2364, %v2352, %v2367
        %v2369 = vsel %vm2363, %v2366, %v2368
        %v2370 = vsel %vm2362, %v2349, %v2352
        %v2371 = vsel %vm2365, %v2358, 920167782
        %v2372 = vsel %vm2364, %v2355, %v2371
        %v2373 = vsel %vm2363, %v2370, %v2372
        %v2374 = vsel %vm2362, %v2352, %v2355
        %v2375 = vsel %vm2365, %v2361, 1326507024
        %v2376 = vsel %vm2364, %v2358, %v2375
        %v2377 = vsel %vm2363, %v2374, %v2376
        %v2378 = vshll.u32 %v2338, 8
        %v2379 = vand.u32 %v2378, 65535
        %v2380 = vshrl.u32 %v2378, 16
        %v2381 = vand.u32 %v2377, 65535
        %v2382 = vshrl.u32 %v2377, 16
        %v2383 = vmul.u32 %v2379, %v2381
        %v2384 = vmul.u32 %v2379, %v2382
        %v2385 = vmul.u32 %v2380, %v2381
        %v2386 = vmul.u32 %v2380, %v2382
        %v2387 = vshll.u32 %v2384, 16
        %v2388 = vshrl.u32 %v2384, 16
        %v2389 = vshll.u32 %v2385, 16
        %v2390 = vshrl.u32 %v2385, 16
        %vm2391 = vc.u32 %v2383, %v2387
        %v2392 = vsel %vm2391, 1, 0
        %v2393 = vadd.s32 %v2383, %v2387
        %v2394 = vadd.s32 %v2386, %v2392
        %vm2395 = vc.u32 %v2393, %v2389
        %v2396 = vsel %vm2395, 1, 0
        %v2397 = vadd.s32 %v2393, %v2389
        %v2398 = vadd.s32 %v2394, %v2396
        %v2399 = vadd.s32 %v2398, %v2388
        %v2400 = vadd.s32 %v2399, %v2390
        %v2401 = vand.u32 %v2378, 65535
        %v2402 = vshrl.u32 %v2378, 16
        %v2403 = vand.u32 %v2373, 65535
        %v2404 = vshrl.u32 %v2373, 16
        %v2405 = vmul.u32 %v2401, %v2403
        %v2406 = vmul.u32 %v2401, %v2404
        %v2407 = vmul.u32 %v2402, %v2403
        %v2408 = vmul.u32 %v2402, %v2404
        %v2409 = vshll.u32 %v2406, 16
        %v2410 = vshrl.u32 %v2406, 16
        %v2411 = vshll.u32 %v2407, 16
        %v2412 = vshrl.u32 %v2407, 16
        %vm2413 = vc.u32 %v2405, %v2409
        %v2414 = vsel %vm2413, 1, 0
        %v2415 = vadd.s32 %v2405, %v2409
        %v2416 = vadd.s32 %v2408, %v2414
        %vm2417 = vc.u32 %v2415, %v2411
        %v2418 = vsel %vm2417, 1, 0
        %v2419 = vadd.s32 %v2415, %v2411
        %v2420 = vadd.s32 %v2416, %v2418
        %v2421 = vadd.s32 %v2420, %v2410
        %v2422 = vadd.s32 %v2421, %v2412
        %v2423 = vmul.u32 %v2378, %v2369
        %v2424 = vadd.s32 %v2400, %v2419
        %vm2425 = vc.u32 %v2400, %v2419
        %v2426 = vadd.s32 %v2422, 1
        %v2427 = vsel %vm2425, %v2426, %v2422
        %v2428 = vadd.s32 %v2423, %v2427
        %v2429 = vadd.s32 %v2428, 536870912
        %v2430 = vshrl.u32 %v2429, 30
        %v2431 = vshll.u32 %v2430, 30
        %v2432 = vsub.s32 %v2428, %v2431
        %vm2433 = vcmp.lt.s32.totalorder %v2432, 0
        %v2434 = vsub.s32 0, %v2432
        %v2435 = vsel %vm2433, %v2434, %v2432
        %v2436 = vclz %v2435
        %v2437 = vsub.s32 %v2436, 2
        %vm2438 = vcmp.gt.s32.totalorder 0, %v2437
        %v2439 = vsel %vm2438, 0, %v2437
        %v2440 = vsub.s32 32, %v2439
        %v2441 = vshll.u32 %v2432, %v2439
        %v2442 = vshrl.u32 %v2424, %v2440
        %v2443 = vor.u32 %v2441, %v2442
        %v2444 = vsub.s32 4294967266, %v2439
        %v2445 = vadd.s32 %v2444, 127
        %v2446 = vshll.u32 %v2445, 23
        %v2447 = vor.u32 4788187, %v2446
        %v2448 = vand.u32 2147483647, %v2447
        %v2450 = vcvt.s32.f32 %v2443
        %v2451 = vmul.f32 %v2450, %v2448
        %v2452 = vxor.u32 %v2451, 2147483648
        %v2453 = vsel %vm2332, %v2452, %v2451
        %v2454 = vsub.s32 4, %v2430
        %v2455 = vsel %vm2332, %v2454, %v2430
        %v2456 = vsel %vm2331, %v2327, %v2453
        %v2457 = vsel %vm2331, 0, %v2455
        %v2458 = vmul.f32 %v2456, %v2456
        %v2459 = vmul.f32 %v2458, -0.001358992
        %v2460 = vadd.f32 %v2459, 0.041655596
        %v2461 = vmul.f32 %v2458, %v2460
        %v2462 = vadd.f32 %v2461, -0.4999988
        %v2463 = vmul.f32 %v2458, %v2462
        %v2464 = vadd.f32 1.0, %v2463
        %v2465 = vmul.f32 %v2456, %v2456
        %v2466 = vmul.f32 %v2465, -0.00019511016
        %v2467 = vadd.f32 %v2466, 0.008332121
        %v2468 = vmul.f32 %v2465, %v2467
        %v2469 = vadd.f32 %v2468, -0.16666654
        %v2470 = vmul.f32 %v2465, %v2469
        %v2471 = vadd.f32 %v2470, 1.0
        %v2472 = vmul.f32 %v2471, %v2456
        %vm2473 = vweird.f32 %v2327
        %v2474 = vand.u32 %v2457, 3
        %vm2475 = vcmp.lt.s32.totalorder %v2474, 2
        %vm2476 = vcmp.eq.s32.totalorder %v2474, 0
        %v2477 = vxor.u32 %v2472, 2147483648
        %v2478 = vsel %vm2476, %v2464, %v2477
        %vm2479 = vcmp.eq.s32.totalorder %v2474, 2
        %v2480 = vxor.u32 %v2464, 2147483648
        %v2481 = vsel %vm2479, %v2480, %v2472
        %v2482 = vsel %vm2475, %v2478, %v2481
        %v2483 = vsel %vm2473, nan, %v2482
        %v2484 = vmul.f32 %v2329, %v2483
        %v2485 = vand.u32 2147483647, %v2327
        %vm2486 = vcmp.le.f32.partialorder %v2485, 0.7853982
        %vm2487 = vcmp.lt.s32.totalorder %v2327, 0
        %v2488 = vand.u32 %v2327, 2139095040
        %v2489 = vshrl.u32 %v2488, 23
        %v2490 = vsub.s32 %v2489, 127
        %v2491 = vand.u32 2147483647, %v2327
        %v2492 = vand.u32 %v2491, 8388607
        %v2493 = vor.u32 %v2492, 8388608
        %v2494 = vsub.s32 0, %v2493
        %v2495 = vadd.s32 %v2490, 1
        %vm2496 = vcmp.gt.s32.totalorder %v2495, 0
        %v2497 = vsel %vm2496, %v2495, 0
        %v2498 = vshrl.u32 %v2497, 5
        %v2499 = vand.u32 %v2497, 31
        %v2500 = vsub.s32 32, %v2499
        %v2501 = vshrl.u32 683565275, %v2500
        %v2502 = vshll.u32 683565275, %v2499
        %v2503 = vshrl.u32 2475754826, %v2500
        %v2504 = vor.u32 %v2502, %v2503
        %v2505 = vshll.u32 2475754826, %v2499
        %v2506 = vshrl.u32 2131351028, %v2500
        %v2507 = vor.u32 %v2505, %v2506
        %v2508 = vshll.u32 2131351028, %v2499
        %v2509 = vshrl.u32 2102212464, %v2500
        %v2510 = vor.u32 %v2508, %v2509
        %v2511 = vshll.u32 2102212464, %v2499
        %v2512 = vshrl.u32 920167782, %v2500
        %v2513 = vor.u32 %v2511, %v2512
        %v2514 = vshll.u32 920167782, %v2499
        %v2515 = vshrl.u32 1326507024, %v2500
        %v2516 = vor.u32 %v2514, %v2515
        %vm2517 = vcmp.lt.s32.totalorder %v2498, 1
        %vm2518 = vcmp.lt.s32.totalorder %v2498, 2
        %vm2519 = vcmp.lt.s32.totalorder %v2498, 3
        %vm2520 = vcmp.lt.s32.totalorder %v2498, 4
        %v2521 = vsel %vm2517, %v2501, %v2504
        %v2522 = vsel %vm2520, %v2510, 2102212464
        %v2523 = vsel %vm2519, %v2507, %v2522
        %v2524 = vsel %vm2518, %v2521, %v2523
        %v2525 = vsel %vm2517, %v2504, %v2507
        %v2526 = vsel %vm2520, %v2513, 920167782
        %v2527 = vsel %vm2519, %v2510, %v2526
        %v2528 = vsel %vm2518, %v2525, %v2527
        %v2529 = vsel %vm2517, %v2507, %v2510
        %v2530 = vsel %vm2520, %v2516, 1326507024
        %v2531 = vsel %vm2519, %v2513, %v2530
        %v2532 = vsel %vm2518, %v2529, %v2531
        %v2533 = vshll.u32 %v2493, 8
        %v2534 = vand.u32 %v2533, 65535
        %v2535 = vshrl.u32 %v2533, 16
        %v2536 = vand.u32 %v2532, 65535
        %v2537 = vshrl.u32 %v2532, 16
        %v2538 = vmul.u32 %v2534, %v2536
        %v2539 = vmul.u32 %v2534, %v2537
        %v2540 = vmul.u32 %v2535, %v2536
        %v2541 = vmul.u32 %v2535, %v2537
        %v2542 = vshll.u32 %v2539, 16
        %v2543 = vshrl.u32 %v2539, 16
        %v2544 = vshll.u32 %v2540, 16
        %v2545 = vshrl.u32 %v2540, 16
        %vm2546 = vc.u32 %v2538, %v2542
        %v2547 = vsel %vm2546, 1, 0
        %v2548 = vadd.s32 %v2538, %v2542
        %v2549 = vadd.s32 %v2541, %v2547
        %vm2550 = vc.u32 %v2548, %v2544
        %v2551 = vsel %vm2550, 1, 0
        %v2552 = vadd.s32 %v2548, %v2544
        %v2553 = vadd.s32 %v2549, %v2551
        %v2554 = vadd.s32 %v2553, %v2543
        %v2555 = vadd.s32 %v2554, %v2545
        %v2556 = vand.u32 %v2533, 65535
        %v2557 = vshrl.u32 %v2533, 16
        %v2558 = vand.u32 %v2528, 65535
        %v2559 = vshrl.u32 %v2528, 16
        %v2560 = vmul.u32 %v2556, %v2558
        %v2561 = vmul.u32 %v2556, %v2559
        %v2562 = vmul.u32 %v2557, %v2558
        %v2563 = vmul.u32 %v2557, %v2559
        %v2564 = vshll.u32 %v2561, 16
        %v2565 = vshrl.u32 %v2561, 16
        %v2566 = vshll.u32 %v2562, 16
        %v2567 = vshrl.u32 %v2562, 16
        %vm2568 = vc.u32 %v2560, %v2564
        %v2569 = vsel %vm2568, 1, 0
        %v2570 = vadd.s32 %v2560, %v2564
        %v2571 = vadd.s32 %v2563, %v2569
        %vm2572 = vc.u32 %v2570, %v2566
        %v2573 = vsel %vm2572, 1, 0
        %v2574 = vadd.s32 %v2570, %v2566
        %v2575 = vadd.s32 %v2571, %v2573
        %v2576 = vadd.s32 %v2575, %v2565
        %v2577 = vadd.s32 %v2576, %v2567
        %v2578 = vmul.u32 %v2533, %v2524
        %v2579 = vadd.s32 %v2555, %v2574
        %vm2580 = vc.u32 %v2555, %v2574
        %v2581 = vadd.s32 %v2577, 1
        %v2582 = vsel %vm2580, %v2581, %v2577
        %v2583 = vadd.s32 %v2578, %v2582
        %v2584 = vadd.s32 %v2583, 536870912
        %v2585 = vshrl.u32 %v2584, 30
        %v2586 = vshll.u32 %v2585, 30
        %v2587 = vsub.s32 %v2583, %v2586
        %vm2588 = vcmp.lt.s32.totalorder %v2587, 0
        %v2589 = vsub.s32 0, %v2587
        %v2590 = vsel %vm2588, %v2589, %v2587
        %v2591 = vclz %v2590
        %v2592 = vsub.s32 %v2591, 2
        %vm2593 = vcmp.gt.s32.totalorder 0, %v2592
        %v2594 = vsel %vm2593, 0, %v2592
        %v2595 = vsub.s32 32, %v2594
        %v2596 = vshll.u32 %v2587, %v2594
        %v2597 = vshrl.u32 %v2579, %v2595
        %v2598 = vor.u32 %v2596, %v2597
        %v2599 = vsub.s32 4294967266, %v2594
        %v2600 = vadd.s32 %v2599, 127
        %v2601 = vshll.u32 %v2600, 23
        %v2602 = vor.u32 4788187, %v2601
        %v2603 = vand.u32 2147483647, %v2602
        %v2605 = vcvt.s32.f32 %v2598
        %v2606 = vmul.f32 %v2605, %v2603
        %v2607 = vxor.u32 %v2606, 2147483648
        %v2608 = vsel %vm2487, %v2607, %v2606
        %v2609 = vsub.s32 4, %v2585
        %v2610 = vsel %vm2487, %v2609, %v2585
        %v2611 = vsel %vm2486, %v2327, %v2608
        %v2612 = vsel %vm2486, 0, %v2610
        %v2613 = vmul.f32 %v2611, %v2611
        %v2614 = vmul.f32 %v2613, -0.001358992
        %v2615 = vadd.f32 %v2614, 0.041655596
        %v2616 = vmul.f32 %v2613, %v2615
        %v2617 = vadd.f32 %v2616, -0.4999988
        %v2618 = vmul.f32 %v2613, %v2617
        %v2619 = vadd.f32 1.0, %v2618
        %v2620 = vmul.f32 %v2611, %v2611
        %v2621 = vmul.f32 %v2620, -0.00019511016
        %v2622 = vadd.f32 %v2621, 0.008332121
        %v2623 = vmul.f32 %v2620, %v2622
        %v2624 = vadd.f32 %v2623, -0.16666654
        %v2625 = vmul.f32 %v2620, %v2624
        %v2626 = vadd.f32 %v2625, 1.0
        %v2627 = vmul.f32 %v2626, %v2611
        %vm2628 = vweird.f32 %v2327
        %v2629 = vadd.s32 %v2612, 3
        %v2630 = vand.u32 %v2629, 3
        %vm2631 = vcmp.lt.s32.totalorder %v2630, 2
        %vm2632 = vcmp.eq.s32.totalorder %v2630, 0
        %v2633 = vxor.u32 %v2627, 2147483648
        %v2634 = vsel %vm2632, %v2619, %v2633
        %vm2635 = vcmp.eq.s32.totalorder %v2630, 2
        %v2636 = vxor.u32 %v2619, 2147483648
        %v2637 = vsel %vm2635, %v2636, %v2627
        %v2638 = vsel %vm2631, %v2634, %v2637
        %v2639 = vsel %vm2628, nan, %v2638
        %v2640 = vmul.f32 %v2329, %v2639
        %v2641 = vmul.f32 %v2320, %v2320
        %v2642 = vmul.f32 %v2322, %v2322
        %v2643 = vadd.f32 %v2641, %v2642
        %v2644 = vrcp.pop %v2643
        %v2645 = vmul.f32 %v2643, %v2644
        %v2646 = vsub.f32 2.0, %v2645
        %v2647 = vmul.f32 %v2644, %v2646
        %v2648 = vsub.f32 %v2484, 1.0
        %v2649 = vmul.f32 %v2648, %v2320
        %v2650 = vmul.f32 %v2640, %v2322
        %v2651 = vadd.f32 %v2649, %v2650
        %v2652 = vmul.f32 %v2651, %v2647
        %v2653 = vmul.f32 %v2640, %v2320
        %v2654 = vmul.f32 %v2648, %v2322
        %v2655 = vsub.f32 %v2653, %v2654
        %v2656 = vmul.f32 %v2655, %v2647
        %s2657 = scalar_lea.vmem [#allocation3], 16
        %v2658 = vld [vmem:[%s2657] sm:$0xff]
        %s2659 = scalar_lea.vmem [#allocation5], 16
        %v2660 = vld [vmem:[%s2659] sm:$0xff]
        %v2661 = vmul.f32 %v2658, %v2652
        %v2662 = vmul.f32 %v2660, %v2656
        %v2663 = vsub.f32 %v2661, %v2662
        %v2664 = vmul.f32 %v2658, %v2656
        %v2665 = vmul.f32 %v2660, %v2652
        %v2666 = vadd.f32 %v2664, %v2665
        %v2667 = vmul.f32 %v2484, %v2484
        %v2668 = vmul.f32 %v2640, %v2640
        %v2669 = vsub.f32 %v2667, %v2668
        %v2670 = vmul.f32 %v2484, 2.0
        %v2671 = vmul.f32 %v2670, %v2640
        %v2672 = vmul.f32 %v2663, %v2484
        %v2673 = vmul.f32 %v2666, %v2640
        %v2674 = vsub.f32 %v2672, %v2673
        %v2675 = vmul.f32 %v2663, %v2640
        %v2676 = vmul.f32 %v2666, %v2484
        %v2677 = vadd.f32 %v2675, %v2676
        %v2678 = vsel %vm957, %v2663, 0.0
        %v2679 = vrot.slane %v2678, 4
        %v2680 = vadd.f32 %v2678, %v2679
        %v2681 = vrot.slane %v2680, 2
        %v2682 = vadd.f32 %v2680, %v2681
        %v2683 = vrot.slane %v2682, 1
        %v2684 = vadd.f32 %v2682, %v2683
        %v2685 = vmul.f32 %v2684, 2.0
        %v2686 = vmul.f32 %v2310, %v2685
        %v2687 = vmul.f32 %v2311, %v2685
        %v2688 = vsel %vm957, %v2674, 0.0
        %v2689 = vrot.slane %v2688, 4
        %v2690 = vadd.f32 %v2688, %v2689
        %v2691 = vrot.slane %v2690, 2
        %v2692 = vadd.f32 %v2690, %v2691
        %v2693 = vrot.slane %v2692, 1
        %v2694 = vadd.f32 %v2692, %v2693
        %v2695 = vmul.f32 %v2694, 2.0
        %v2696 = vmul.f32 %v2674, %v2669
        %v2697 = vmul.f32 %v2677, %v2671
        %v2698 = vsub.f32 %v2696, %v2697
        %v2699 = vmul.f32 %v2674, %v2671
        %v2700 = vmul.f32 %v2677, %v2669
        %v2701 = vadd.f32 %v2699, %v2700
        %v2702 = vrot.slane %v2310, 7
        %v2703 = vrot.slane %v2311, 7
        %v2704 = vsel %vm984, %v2702, %v2703
        %v2705 = vsel %vm984, %v2703, %v2702
        %v2706 = vsel %vm566, %v2705, 0.0
        %v2707 = vsel %vm567, %v2704, 0.0
        %v2708 = vmul.f32 %v2695, %v2706
        %v2709 = vmul.f32 %v2695, %v2707
        %v2710 = vadd.f32 %v2708, 0.0
        %v2711 = vadd.f32 %v2709, 0.0
        %v2712 = vmul.f32 %v2663, %v2669
        %v2713 = vmul.f32 %v2666, %v2671
        %v2714 = vsub.f32 %v2712, %v2713
        %v2715 = vmul.f32 %v2663, %v2671
        %v2716 = vmul.f32 %v2666, %v2669
        %v2717 = vadd.f32 %v2715, %v2716
        %v2718 = vsel %vm957, %v2714, 0.0
        %v2719 = vrot.slane %v2718, 4
        %v2720 = vadd.f32 %v2718, %v2719
        %v2721 = vrot.slane %v2720, 2
        %v2722 = vadd.f32 %v2720, %v2721
        %v2723 = vrot.slane %v2722, 1
        %v2724 = vadd.f32 %v2722, %v2723
        %v2725 = vmul.f32 %v2724, 2.0
        %v2726 = vrot.slane %v2310, 6
        %v2727 = vrot.slane %v2311, 6
        %v2728 = vsel %vm1009, %v2726, %v2727
        %v2729 = vsel %vm1009, %v2727, %v2726
        %v2730 = vsel %vm568, %v2729, 0.0
        %v2731 = vsel %vm569, %v2728, 0.0
        %v2732 = vmul.f32 %v2725, %v2730
        %v2733 = vmul.f32 %v2725, %v2731
        %v2734 = vadd.f32 %v2686, %v2732
        %v2735 = vadd.f32 %v2687, %v2733
        %v2736 = vsel %vm957, %v2698, 0.0
        %v2737 = vrot.slane %v2736, 4
        %v2738 = vadd.f32 %v2736, %v2737
        %v2739 = vrot.slane %v2738, 2
        %v2740 = vadd.f32 %v2738, %v2739
        %v2741 = vrot.slane %v2740, 1
        %v2742 = vadd.f32 %v2740, %v2741
        %v2743 = vmul.f32 %v2742, 2.0
        %v2744 = vmul.f32 %v2698, %v2669
        %v2745 = vmul.f32 %v2701, %v2671
        %v2746 = vsub.f32 %v2744, %v2745
        %v2747 = vmul.f32 %v2698, %v2671
        %v2748 = vmul.f32 %v2701, %v2669
        %v2749 = vadd.f32 %v2747, %v2748
        %v2750 = vrot.slane %v2310, 5
        %v2751 = vrot.slane %v2311, 5
        %v2752 = vsel %vm1034, %v2750, %v2751
        %v2753 = vsel %vm1034, %v2751, %v2750
        %v2754 = vsel %vm570, %v2753, 0.0
        %v2755 = vsel %vm571, %v2752, 0.0
        %v2756 = vmul.f32 %v2743, %v2754
        %v2757 = vmul.f32 %v2743, %v2755
        %v2758 = vadd.f32 %v2710, %v2756
        %v2759 = vadd.f32 %v2711, %v2757
        %v2760 = vmul.f32 %v2714, %v2669
        %v2761 = vmul.f32 %v2717, %v2671
        %v2762 = vsub.f32 %v2760, %v2761
        %v2763 = vmul.f32 %v2714, %v2671
        %v2764 = vmul.f32 %v2717, %v2669
        %v2765 = vadd.f32 %v2763, %v2764
        %v2766 = vsel %vm957, %v2762, 0.0
        %v2767 = vrot.slane %v2766, 4
        %v2768 = vadd.f32 %v2766, %v2767
        %v2769 = vrot.slane %v2768, 2
        %v2770 = vadd.f32 %v2768, %v2769
        %v2771 = vrot.slane %v2770, 1
        %v2772 = vadd.f32 %v2770, %v2771
        %v2773 = vmul.f32 %v2772, 2.0
        %v2774 = vrot.slane %v2310, 4
        %v2775 = vrot.slane %v2311, 4
        %v2776 = vsel %vm1059, %v2774, %v2775
        %v2777 = vsel %vm1059, %v2775, %v2774
        %v2778 = vsel %vm572, %v2777, 0.0
        %v2779 = vsel %vm573, %v2776, 0.0
        %v2780 = vmul.f32 %v2773, %v2778
        %v2781 = vmul.f32 %v2773, %v2779
        %v2782 = vadd.f32 %v2734, %v2780
        %v2783 = vadd.f32 %v2735, %v2781
        %v2784 = vsel %vm957, %v2746, 0.0
        %v2785 = vrot.slane %v2784, 4
        %v2786 = vadd.f32 %v2784, %v2785
        %v2787 = vrot.slane %v2786, 2
        %v2788 = vadd.f32 %v2786, %v2787
        %v2789 = vrot.slane %v2788, 1
        %v2790 = vadd.f32 %v2788, %v2789
        %v2791 = vmul.f32 %v2790, 2.0
        %v2792 = vmul.f32 %v2746, %v2669
        %v2793 = vmul.f32 %v2749, %v2671
        %v2794 = vsub.f32 %v2792, %v2793
        %v2795 = vmul.f32 %v2746, %v2671
        %v2796 = vmul.f32 %v2749, %v2669
        %v2797 = vadd.f32 %v2795, %v2796
        %v2798 = vrot.slane %v2310, 3
        %v2799 = vrot.slane %v2311, 3
        %v2800 = vsel %vm1084, %v2798, %v2799
        %v2801 = vsel %vm1084, %v2799, %v2798
        %v2802 = vsel %vm574, %v2801, 0.0
        %v2803 = vsel %vm575, %v2800, 0.0
        %v2804 = vmul.f32 %v2791, %v2802
        %v2805 = vmul.f32 %v2791, %v2803
        %v2806 = vadd.f32 %v2758, %v2804
        %v2807 = vadd.f32 %v2759, %v2805
        %v2808 = vmul.f32 %v2762, %v2669
        %v2809 = vmul.f32 %v2765, %v2671
        %v2810 = vsub.f32 %v2808, %v2809
        %v2811 = vmul.f32 %v2762, %v2671
        %v2812 = vmul.f32 %v2765, %v2669
        %v2813 = vadd.f32 %v2811, %v2812
        %v2814 = vsel %vm957, %v2810, 0.0
        %v2815 = vrot.slane %v2814, 4
        %v2816 = vadd.f32 %v2814, %v2815
        %v2817 = vrot.slane %v2816, 2
        %v2818 = vadd.f32 %v2816, %v2817
        %v2819 = vrot.slane %v2818, 1
        %v2820 = vadd.f32 %v2818, %v2819
        %v2821 = vmul.f32 %v2820, 2.0
        %v2822 = vrot.slane %v2310, 2
        %v2823 = vrot.slane %v2311, 2
        %v2824 = vsel %vm1109, %v2822, %v2823
        %v2825 = vsel %vm1109, %v2823, %v2822
        %v2826 = vsel %vm576, %v2825, 0.0
        %v2827 = vsel %vm577, %v2824, 0.0
        %v2828 = vmul.f32 %v2821, %v2826
        %v2829 = vmul.f32 %v2821, %v2827
        %v2830 = vadd.f32 %v2782, %v2828
        %v2831 = vadd.f32 %v2783, %v2829
        %v2832 = vsel %vm957, %v2794, 0.0
        %v2833 = vrot.slane %v2832, 4
        %v2834 = vadd.f32 %v2832, %v2833
        %v2835 = vrot.slane %v2834, 2
        %v2836 = vadd.f32 %v2834, %v2835
        %v2837 = vrot.slane %v2836, 1
        %v2838 = vadd.f32 %v2836, %v2837
        %v2839 = vmul.f32 %v2838, 2.0
        %v2840 = vmul.f32 %v2794, %v2669
        %v2841 = vmul.f32 %v2797, %v2671
        %v2842 = vsub.f32 %v2840, %v2841
        %v2843 = vmul.f32 %v2794, %v2671
        %v2844 = vmul.f32 %v2797, %v2669
        %v2845 = vadd.f32 %v2843, %v2844
        %v2846 = vrot.slane %v2310, 1
        %v2847 = vrot.slane %v2311, 1
        %v2848 = vsel %vm1134, %v2846, %v2847
        %v2849 = vsel %vm1134, %v2847, %v2846
        %v2850 = vsel %vm578, %v2849, 0.0
        %v2851 = vsel %vm579, %v2848, 0.0
        %v2852 = vmul.f32 %v2839, %v2850
        %v2853 = vmul.f32 %v2839, %v2851
        %v2854 = vadd.f32 %v2806, %v2852
        %v2855 = vadd.f32 %v2807, %v2853
        %v2856 = vmul.f32 %v2810, %v2669
        %v2857 = vmul.f32 %v2813, %v2671
        %v2858 = vsub.f32 %v2856, %v2857
        %v2859 = vmul.f32 %v2810, %v2671
        %v2860 = vmul.f32 %v2813, %v2669
        %v2861 = vadd.f32 %v2859, %v2860
        %v2862 = vsel %vm957, %v2858, 0.0
        %v2863 = vrot.slane %v2862, 4
        %v2864 = vadd.f32 %v2862, %v2863
        %v2865 = vrot.slane %v2864, 2
        %v2866 = vadd.f32 %v2864, %v2865
        %v2867 = vrot.slane %v2866, 1
        %v2868 = vadd.f32 %v2866, %v2867
        %v2869 = vmul.f32 %v2868, 2.0
        %v2870 = vsel %vm580, %v2311, 0.0
        %v2871 = vsel %vm581, %v2310, 0.0
        %v2872 = vmul.f32 %v2869, %v2870
        %v2873 = vmul.f32 %v2869, %v2871
        %v2874 = vadd.f32 %v2830, %v2872
        %v2875 = vadd.f32 %v2831, %v2873
        %v2876 = vsel %vm957, %v2842, 0.0
        %v2877 = vrot.slane %v2876, 4
        %v2878 = vadd.f32 %v2876, %v2877
        %v2879 = vrot.slane %v2878, 2
        %v2880 = vadd.f32 %v2878, %v2879
        %v2881 = vrot.slane %v2880, 1
        %v2882 = vadd.f32 %v2880, %v2881
        %v2883 = vmul.f32 %v2882, 2.0
        %v2884 = vmul.f32 %v2842, %v2669
        %v2885 = vmul.f32 %v2845, %v2671
        %v2886 = vsub.f32 %v2884, %v2885
        %v2887 = vmul.f32 %v2842, %v2671
        %v2888 = vmul.f32 %v2845, %v2669
        %v2889 = vadd.f32 %v2887, %v2888
        %v2890 = vsel %vm582, %v2704, 0.0
        %v2891 = vsel %vm583, %v2705, 0.0
        %v2892 = vmul.f32 %v2883, %v2890
        %v2893 = vmul.f32 %v2883, %v2891
        %v2894 = vadd.f32 %v2854, %v2892
        %v2895 = vadd.f32 %v2855, %v2893
        %v2896 = vmul.f32 %v2858, %v2669
        %v2897 = vmul.f32 %v2861, %v2671
        %v2898 = vsub.f32 %v2896, %v2897
        %v2899 = vmul.f32 %v2858, %v2671
        %v2900 = vmul.f32 %v2861, %v2669
        %v2901 = vadd.f32 %v2899, %v2900
        %v2902 = vsel %vm957, %v2898, 0.0
        %v2903 = vrot.slane %v2902, 4
        %v2904 = vadd.f32 %v2902, %v2903
        %v2905 = vrot.slane %v2904, 2
        %v2906 = vadd.f32 %v2904, %v2905
        %v2907 = vrot.slane %v2906, 1
        %v2908 = vadd.f32 %v2906, %v2907
        %v2909 = vmul.f32 %v2908, 2.0
        %v2910 = vsel %vm584, %v2728, 0.0
        %v2911 = vsel %vm585, %v2729, 0.0
        %v2912 = vmul.f32 %v2909, %v2910
        %v2913 = vmul.f32 %v2909, %v2911
        %v2914 = vadd.f32 %v2874, %v2912
        %v2915 = vadd.f32 %v2875, %v2913
        %v2916 = vsel %vm957, %v2886, 0.0
        %v2917 = vrot.slane %v2916, 4
        %v2918 = vadd.f32 %v2916, %v2917
        %v2919 = vrot.slane %v2918, 2
        %v2920 = vadd.f32 %v2918, %v2919
        %v2921 = vrot.slane %v2920, 1
        %v2922 = vadd.f32 %v2920, %v2921
        %v2923 = vmul.f32 %v2922, 2.0
        %v2924 = vmul.f32 %v2886, %v2669
        %v2925 = vmul.f32 %v2889, %v2671
        %v2926 = vsub.f32 %v2924, %v2925
        %v2927 = vmul.f32 %v2886, %v2671
        %v2928 = vmul.f32 %v2889, %v2669
        %v2929 = vadd.f32 %v2927, %v2928
        %v2930 = vsel %vm586, %v2752, 0.0
        %v2931 = vsel %vm587, %v2753, 0.0
        %v2932 = vmul.f32 %v2923, %v2930
        %v2933 = vmul.f32 %v2923, %v2931
        %v2934 = vadd.f32 %v2894, %v2932
        %v2935 = vadd.f32 %v2895, %v2933
        %v2936 = vmul.f32 %v2898, %v2669
        %v2937 = vmul.f32 %v2901, %v2671
        %v2938 = vsub.f32 %v2936, %v2937
        %v2939 = vmul.f32 %v2898, %v2671
        %v2940 = vmul.f32 %v2901, %v2669
        %v2941 = vadd.f32 %v2939, %v2940
        %v2942 = vsel %vm957, %v2938, 0.0
        %v2943 = vrot.slane %v2942, 4
        %v2944 = vadd.f32 %v2942, %v2943
        %v2945 = vrot.slane %v2944, 2
        %v2946 = vadd.f32 %v2944, %v2945
        %v2947 = vrot.slane %v2946, 1
        %v2948 = vadd.f32 %v2946, %v2947
        %v2949 = vmul.f32 %v2948, 2.0
        %v2950 = vsel %vm588, %v2776, 0.0
        %v2951 = vsel %vm589, %v2777, 0.0
        %v2952 = vmul.f32 %v2949, %v2950
        %v2953 = vmul.f32 %v2949, %v2951
        %v2954 = vadd.f32 %v2914, %v2952
        %v2955 = vadd.f32 %v2915, %v2953
        %v2956 = vsel %vm957, %v2926, 0.0
        %v2957 = vrot.slane %v2956, 4
        %v2958 = vadd.f32 %v2956, %v2957
        %v2959 = vrot.slane %v2958, 2
        %v2960 = vadd.f32 %v2958, %v2959
        %v2961 = vrot.slane %v2960, 1
        %v2962 = vadd.f32 %v2960, %v2961
        %v2963 = vmul.f32 %v2962, 2.0
        %v2964 = vmul.f32 %v2926, %v2669
        %v2965 = vmul.f32 %v2929, %v2671
        %v2966 = vsub.f32 %v2964, %v2965
        %v2967 = vsel %vm590, %v2800, 0.0
        %v2968 = vsel %vm591, %v2801, 0.0
        %v2969 = vmul.f32 %v2963, %v2967
        %v2970 = vmul.f32 %v2963, %v2968
        %v2971 = vadd.f32 %v2934, %v2969
        %v2972 = vadd.f32 %v2935, %v2970
        %v2973 = vmul.f32 %v2938, %v2669
        %v2974 = vmul.f32 %v2941, %v2671
        %v2975 = vsub.f32 %v2973, %v2974
        %v2976 = vsel %vm957, %v2975, 0.0
        %v2977 = vrot.slane %v2976, 4
        %v2978 = vadd.f32 %v2976, %v2977
        %v2979 = vrot.slane %v2978, 2
        %v2980 = vadd.f32 %v2978, %v2979
        %v2981 = vrot.slane %v2980, 1
        %v2982 = vadd.f32 %v2980, %v2981
        %v2983 = vmul.f32 %v2982, 2.0
        %v2984 = vsel %vm592, %v2824, 0.0
        %v2985 = vsel %vm593, %v2825, 0.0
        %v2986 = vmul.f32 %v2983, %v2984
        %v2987 = vmul.f32 %v2983, %v2985
        %v2988 = vadd.f32 %v2954, %v2986
        %v2989 = vadd.f32 %v2955, %v2987
        %v2990 = vsel %vm957, %v2966, 0.0
        %v2991 = vrot.slane %v2990, 4
        %v2992 = vadd.f32 %v2990, %v2991
        %v2993 = vrot.slane %v2992, 2
        %v2994 = vadd.f32 %v2992, %v2993
        %v2995 = vrot.slane %v2994, 1
        %v2996 = vadd.f32 %v2994, %v2995
        %v2997 = vmul.f32 %v2996, 2.0
        %v2998 = vsel %vm594, %v2848, 0.0
        %v2999 = vsel %vm595, %v2849, 0.0
        %v3000 = vmul.f32 %v2997, %v2998
        %v3001 = vmul.f32 %v2997, %v2999
        %v3002 = vadd.f32 %v2971, %v3000
        %v3003 = vadd.f32 %v2972, %v3001
        %v3004 = vadd.f32 %v2988, %v3002
        %v3005 = vadd.f32 %v2989, %v3003
        %s3006 = scalar_lea.vmem [#allocation7], 2
        %v3007 = vld [vmem:[%s3006] sm:$0x1]
        %v3009 = vperm.slane %v3007, 0
        %v3011 = vmul.f32 %v2310, %v3009
        %v3012 = vmul.f32 %v2311, %v3009
        %v3013 = vadd.f32 %v3004, %v3011
        %v3014 = vadd.f32 %v3005, %v3012
        %v3015 = vmul.f32 %v3013, 0.5
        %v3016 = vmul.f32 %v3014, 0.5
        %v3017 = vmul.f32 %v3013, 0.70710677
        %v3018 = vmul.f32 %v3014, 0.70710677
        %v3019 = vmax.f32 %v3017, -4.0
        %v3020 = vmax.f32 %v3018, -4.0
        %v3021 = vmin.f32 %v3019, 4.0
        %v3022 = vmin.f32 %v3020, 4.0
        %v3023 = vmul.f32 %v3021, %v3021
        %v3024 = vmul.f32 %v3022, %v3022
        %v3025 = vmul.f32 %v3023, -2.7261424e-10
        %v3026 = vmul.f32 %v3024, -2.7261424e-10
        %v3027 = vadd.f32 %v3025, 2.7706815e-08
        %v3028 = vadd.f32 %v3026, 2.7706815e-08
        %v3029 = vmul.f32 %v3027, %v3023
        %v3030 = vmul.f32 %v3028, %v3024
        %v3031 = vadd.f32 %v3029, -2.101024e-06
        %v3032 = vadd.f32 %v3030, -2.101024e-06
        %v3033 = vmul.f32 %v3031, %v3023
        %v3034 = vmul.f32 %v3032, %v3024
        %v3035 = vadd.f32 %v3033, -5.6925062e-05
        %v3036 = vadd.f32 %v3034, -5.6925062e-05
        %v3037 = vmul.f32 %v3035, %v3023
        %v3038 = vmul.f32 %v3036, %v3024
        %v3039 = vadd.f32 %v3037, -0.00073499064
        %v3040 = vadd.f32 %v3038, -0.00073499064
        %v3041 = vmul.f32 %v3039, %v3023
        %v3042 = vmul.f32 %v3040, %v3024
        %v3043 = vadd.f32 %v3041, -0.0029546
        %v3044 = vadd.f32 %v3042, -0.0029546
        %v3045 = vmul.f32 %v3043, %v3023
        %v3046 = vmul.f32 %v3044, %v3024
        %v3047 = vadd.f32 %v3045, -0.016096033
        %v3048 = vadd.f32 %v3046, -0.016096033
        %v3049 = vmul.f32 %v3047, %v3021
        %v3050 = vmul.f32 %v3048, %v3022
        %v3051 = vmul.f32 %v3023, -1.45660715e-05
        %v3052 = vmul.f32 %v3024, -1.45660715e-05
        %v3053 = vadd.f32 %v3051, -0.00021337405
        %v3054 = vadd.f32 %v3052, -0.00021337405
        %v3055 = vmul.f32 %v3053, %v3023
        %v3056 = vmul.f32 %v3054, %v3024
        %v3057 = vadd.f32 %v3055, -0.001682827
        %v3058 = vadd.f32 %v3056, -0.001682827
        %v3059 = vmul.f32 %v3057, %v3023
        %v3060 = vmul.f32 %v3058, %v3024
        %v3061 = vadd.f32 %v3059, -0.0073733293
        %v3062 = vadd.f32 %v3060, -0.0073733293
        %v3063 = vmul.f32 %v3061, %v3023
        %v3064 = vmul.f32 %v3062, %v3024
        %v3065 = vadd.f32 %v3063, -0.014264739
        %v3066 = vadd.f32 %v3064, -0.014264739
        %v3067 = vrcp.pop %v3065
        %v3068 = vrcp.pop %v3066
        %v3069 = vmul.f32 %v3065, %v3067
        %v3070 = vmul.f32 %v3066, %v3068
        %v3071 = vsub.f32 2.0, %v3069
        %v3072 = vsub.f32 2.0, %v3070
        %v3073 = vmul.f32 %v3067, %v3071
        %v3074 = vmul.f32 %v3068, %v3072
        %v3075 = vmul.f32 %v3049, %v3073
        %v3076 = vmul.f32 %v3050, %v3074
        %v3077 = vadd.f32 %v3075, 1.0
        %v3078 = vadd.f32 %v3076, 1.0
        %v3079 = vmul.f32 %v3015, %v3077
        %v3080 = vmul.f32 %v3016, %v3078
        %s3081 = scalar_lea.vmem [#allocation8], 64
        %v3082 = vld [vmem:[%s3081] sm:$0xff]
        %v3083 = vld [vmem:[%s3081 + $0x8] sm:$0xff]
        %v3084 = vld [vmem:[%s3081 + $0x10] sm:$0xff]
        %v3085 = vld [vmem:[%s3081 + $0x18] sm:$0xff]
        %s3086 = scalar_lea.vmem [#allocation10], 2
        %v3087 = vld [vmem:[%s3086] sm:$0x1]
        %v3089 = vperm.slane %v3087, 0
        %v3092 = vsel %vm957, %v3079, 0
        %v3095 = vsel %vm957, %v3080, 0
        %3097 = vmatpush.msra.mxu0 0.0
        %3098 = vmatpush.msra.mxu0 0.0
        %3099 = vmatpush.msra.mxu0 0.0
        %3100 = vmatpush.msra.mxu0 0.0
        %3101 = vmatpush.msra.mxu0 0.0
        %3102 = vmatpush.msra.mxu0 0.0
        %3103 = vmatpush.msra.mxu0 0.0
        %3104 = vmatpush.msra.mxu0 0.0
        %3105 = vmatpush.msra.mxu0 0.0
        %3106 = vmatpush.msra.mxu0 0.0
        %3107 = vmatpush.msra.mxu0 0.0
        %3108 = vmatpush.msra.mxu0 0.0
        %3109 = vmatpush.msra.mxu0 %v3085
        %3110 = vmatpush.msra.mxu0 %v3084
        %3111 = vmatpush.msra.mxu0 %v3083
        %3112 = vmatpush.msra.mxu0 %v3082
        %3113 = vmatmul.f32.gmra.mxu0 %v3092
        %v3114 = vpop.f32.mrf.mxu0
        %v3115 = vadd.f32 %v3089, %v3114
        %3116 = vmatmul.f32.gmra.mxu0 %v3095
        %v3117 = vpop.f32.mrf.mxu0
        %v3118 = vadd.f32 %v3089, %v3117
        %3119 = vdwg.mxu0
        %v3120 = vxor.u32 %v3115, 2147483648
        %v3121 = vxor.u32 %v3118, 2147483648
        %v3122 = vmul.f32 %v3120, 1.442695
        %v3123 = vpow.pop %v3122
        %v3124 = vmul.f32 %v3121, 1.442695
        %v3125 = vpow.pop %v3124
        %v3126 = vadd.f32 %v3123, 1.0
        %v3127 = vadd.f32 %v3125, 1.0
        %v3128 = vrcp.pop %v3126
        %v3129 = vmul.f32 %v3126, %v3128
        %v3130 = vsub.f32 1.0, %v3129
        %v3131 = vmul.f32 %v3128, %v3130
        %v3132 = vadd.f32 %v3128, %v3131
        %vm3133 = vweird.f32 %v3126
        %vm3134 = vweird.f32 %v3128
        %vm3135 = vmor %vm3133, %vm3134
        %v3136 = vsel %vm3135, %v3128, %v3132
        %v3137 = vand.u32 2147483647, %v3126
        %vm3138 = vcmp.eq.f32.partialorder %v3137, 8.507059e+37
        %v3139 = vand.u32 %v3126, 2147483648
        %v3140 = vor.u32 1.1754944e-38, %v3139
        %v3141 = vsel %vm3138, %v3140, %v3136
        %v3142 = vmul.f32 1.0, %v3141
        %v3143 = vrcp.pop %v3127
        %v3144 = vmul.f32 %v3127, %v3143
        %v3145 = vsub.f32 1.0, %v3144
        %v3146 = vmul.f32 %v3143, %v3145
        %v3147 = vadd.f32 %v3143, %v3146
        %vm3148 = vweird.f32 %v3127
        %vm3149 = vweird.f32 %v3143
        %vm3150 = vmor %vm3148, %vm3149
        %v3151 = vsel %vm3150, %v3143, %v3147
        %v3152 = vand.u32 2147483647, %v3127
        %vm3153 = vcmp.eq.f32.partialorder %v3152, 8.507059e+37
        %v3154 = vand.u32 %v3127, 2147483648
        %v3155 = vor.u32 1.1754944e-38, %v3154
        %v3156 = vsel %vm3153, %v3155, %v3151
        %v3157 = vmul.f32 1.0, %v3156
        %3160 = vrot.lane.b32.xlu0 %v3142, 96
        %v3161 = vpop.permute.xlu0 %3160
        %3162 = vrot.lane.b32.xlu0 %v3157, 96
        %v3163 = vpop.permute.xlu0 %3162
        %v3166 = vmul.f32 %v3115, %v3161
        %v3167 = vmul.f32 %v3118, %v3163
        %v3168 = vadd.f32 %v3166, %v2310
        %v3169 = vadd.f32 %v3167, %v2311
        %s3170 = scalar_lea.vmem %s3, 3
        %v3171 = vld [vmem:[%s3170] sm:$0x1]
        %v3172 = vmul.f32 %v3171, 1.442695
        %v3173 = vpow.pop %v3172
        %s3174 = scalar_lea.vmem %s4, 24
        %v3175 = vld [vmem:[%s3174] sm:$0xff]
        %v3176 = vmul.f32 %v3175, 1.442695
        %v3177 = vpow.pop %v3176
        %v3178 = vsub.f32 0.0, %v3177
        %s3179 = scalar_lea.vmem %s5, 24
        %v3180 = vld [vmem:[%s3179] sm:$0xff]
        %v3182 = vperm.slane %v3173, 0
        %v3184 = vmul.f32 %v3178, %v3182
        %v3185 = vmul.f32 %v3180, %v3182
        %v3186 = vmul.f32 %v3184, 1.442695
        %v3187 = vpow.pop %v3186
        %v3188 = vand.u32 2147483647, %v3185
        %vm3189 = vcmp.le.f32.partialorder %v3188, 0.7853982
        %vm3190 = vcmp.lt.s32.totalorder %v3185, 0
        %v3191 = vand.u32 %v3185, 2139095040
        %v3192 = vshrl.u32 %v3191, 23
        %v3193 = vsub.s32 %v3192, 127
        %v3194 = vand.u32 2147483647, %v3185
        %v3195 = vand.u32 %v3194, 8388607
        %v3196 = vor.u32 %v3195, 8388608
        %v3197 = vsub.s32 0, %v3196
        %v3198 = vadd.s32 %v3193, 1
        %vm3199 = vcmp.gt.s32.totalorder %v3198, 0
        %v3200 = vsel %vm3199, %v3198, 0
        %v3201 = vshrl.u32 %v3200, 5
        %v3202 = vand.u32 %v3200, 31
        %v3203 = vsub.s32 32, %v3202
        %v3204 = vshrl.u32 683565275, %v3203
        %v3205 = vshll.u32 683565275, %v3202
        %v3206 = vshrl.u32 2475754826, %v3203
        %v3207 = vor.u32 %v3205, %v3206
        %v3208 = vshll.u32 2475754826, %v3202
        %v3209 = vshrl.u32 2131351028, %v3203
        %v3210 = vor.u32 %v3208, %v3209
        %v3211 = vshll.u32 2131351028, %v3202
        %v3212 = vshrl.u32 2102212464, %v3203
        %v3213 = vor.u32 %v3211, %v3212
        %v3214 = vshll.u32 2102212464, %v3202
        %v3215 = vshrl.u32 920167782, %v3203
        %v3216 = vor.u32 %v3214, %v3215
        %v3217 = vshll.u32 920167782, %v3202
        %v3218 = vshrl.u32 1326507024, %v3203
        %v3219 = vor.u32 %v3217, %v3218
        %vm3220 = vcmp.lt.s32.totalorder %v3201, 1
        %vm3221 = vcmp.lt.s32.totalorder %v3201, 2
        %vm3222 = vcmp.lt.s32.totalorder %v3201, 3
        %vm3223 = vcmp.lt.s32.totalorder %v3201, 4
        %v3224 = vsel %vm3220, %v3204, %v3207
        %v3225 = vsel %vm3223, %v3213, 2102212464
        %v3226 = vsel %vm3222, %v3210, %v3225
        %v3227 = vsel %vm3221, %v3224, %v3226
        %v3228 = vsel %vm3220, %v3207, %v3210
        %v3229 = vsel %vm3223, %v3216, 920167782
        %v3230 = vsel %vm3222, %v3213, %v3229
        %v3231 = vsel %vm3221, %v3228, %v3230
        %v3232 = vsel %vm3220, %v3210, %v3213
        %v3233 = vsel %vm3223, %v3219, 1326507024
        %v3234 = vsel %vm3222, %v3216, %v3233
        %v3235 = vsel %vm3221, %v3232, %v3234
        %v3236 = vshll.u32 %v3196, 8
        %v3237 = vand.u32 %v3236, 65535
        %v3238 = vshrl.u32 %v3236, 16
        %v3239 = vand.u32 %v3235, 65535
        %v3240 = vshrl.u32 %v3235, 16
        %v3241 = vmul.u32 %v3237, %v3239
        %v3242 = vmul.u32 %v3237, %v3240
        %v3243 = vmul.u32 %v3238, %v3239
        %v3244 = vmul.u32 %v3238, %v3240
        %v3245 = vshll.u32 %v3242, 16
        %v3246 = vshrl.u32 %v3242, 16
        %v3247 = vshll.u32 %v3243, 16
        %v3248 = vshrl.u32 %v3243, 16
        %vm3249 = vc.u32 %v3241, %v3245
        %v3250 = vsel %vm3249, 1, 0
        %v3251 = vadd.s32 %v3241, %v3245
        %v3252 = vadd.s32 %v3244, %v3250
        %vm3253 = vc.u32 %v3251, %v3247
        %v3254 = vsel %vm3253, 1, 0
        %v3255 = vadd.s32 %v3251, %v3247
        %v3256 = vadd.s32 %v3252, %v3254
        %v3257 = vadd.s32 %v3256, %v3246
        %v3258 = vadd.s32 %v3257, %v3248
        %v3259 = vand.u32 %v3236, 65535
        %v3260 = vshrl.u32 %v3236, 16
        %v3261 = vand.u32 %v3231, 65535
        %v3262 = vshrl.u32 %v3231, 16
        %v3263 = vmul.u32 %v3259, %v3261
        %v3264 = vmul.u32 %v3259, %v3262
        %v3265 = vmul.u32 %v3260, %v3261
        %v3266 = vmul.u32 %v3260, %v3262
        %v3267 = vshll.u32 %v3264, 16
        %v3268 = vshrl.u32 %v3264, 16
        %v3269 = vshll.u32 %v3265, 16
        %v3270 = vshrl.u32 %v3265, 16
        %vm3271 = vc.u32 %v3263, %v3267
        %v3272 = vsel %vm3271, 1, 0
        %v3273 = vadd.s32 %v3263, %v3267
        %v3274 = vadd.s32 %v3266, %v3272
        %vm3275 = vc.u32 %v3273, %v3269
        %v3276 = vsel %vm3275, 1, 0
        %v3277 = vadd.s32 %v3273, %v3269
        %v3278 = vadd.s32 %v3274, %v3276
        %v3279 = vadd.s32 %v3278, %v3268
        %v3280 = vadd.s32 %v3279, %v3270
        %v3281 = vmul.u32 %v3236, %v3227
        %v3282 = vadd.s32 %v3258, %v3277
        %vm3283 = vc.u32 %v3258, %v3277
        %v3284 = vadd.s32 %v3280, 1
        %v3285 = vsel %vm3283, %v3284, %v3280
        %v3286 = vadd.s32 %v3281, %v3285
        %v3287 = vadd.s32 %v3286, 536870912
        %v3288 = vshrl.u32 %v3287, 30
        %v3289 = vshll.u32 %v3288, 30
        %v3290 = vsub.s32 %v3286, %v3289
        %vm3291 = vcmp.lt.s32.totalorder %v3290, 0
        %v3292 = vsub.s32 0, %v3290
        %v3293 = vsel %vm3291, %v3292, %v3290
        %v3294 = vclz %v3293
        %v3295 = vsub.s32 %v3294, 2
        %vm3296 = vcmp.gt.s32.totalorder 0, %v3295
        %v3297 = vsel %vm3296, 0, %v3295
        %v3298 = vsub.s32 32, %v3297
        %v3299 = vshll.u32 %v3290, %v3297
        %v3300 = vshrl.u32 %v3282, %v3298
        %v3301 = vor.u32 %v3299, %v3300
        %v3302 = vsub.s32 4294967266, %v3297
        %v3303 = vadd.s32 %v3302, 127
        %v3304 = vshll.u32 %v3303, 23
        %v3305 = vor.u32 4788187, %v3304
        %v3306 = vand.u32 2147483647, %v3305
        %v3308 = vcvt.s32.f32 %v3301
        %v3309 = vmul.f32 %v3308, %v3306
        %v3310 = vxor.u32 %v3309, 2147483648
        %v3311 = vsel %vm3190, %v3310, %v3309
        %v3312 = vsub.s32 4, %v3288
        %v3313 = vsel %vm3190, %v3312, %v3288
        %v3314 = vsel %vm3189, %v3185, %v3311
        %v3315 = vsel %vm3189, 0, %v3313
        %v3316 = vmul.f32 %v3314, %v3314
        %v3317 = vmul.f32 %v3316, -0.001358992
        %v3318 = vadd.f32 %v3317, 0.041655596
        %v3319 = vmul.f32 %v3316, %v3318
        %v3320 = vadd.f32 %v3319, -0.4999988
        %v3321 = vmul.f32 %v3316, %v3320
        %v3322 = vadd.f32 1.0, %v3321
        %v3323 = vmul.f32 %v3314, %v3314
        %v3324 = vmul.f32 %v3323, -0.00019511016
        %v3325 = vadd.f32 %v3324, 0.008332121
        %v3326 = vmul.f32 %v3323, %v3325
        %v3327 = vadd.f32 %v3326, -0.16666654
        %v3328 = vmul.f32 %v3323, %v3327
        %v3329 = vadd.f32 %v3328, 1.0
        %v3330 = vmul.f32 %v3329, %v3314
        %vm3331 = vweird.f32 %v3185
        %v3332 = vand.u32 %v3315, 3
        %vm3333 = vcmp.lt.s32.totalorder %v3332, 2
        %vm3334 = vcmp.eq.s32.totalorder %v3332, 0
        %v3335 = vxor.u32 %v3330, 2147483648
        %v3336 = vsel %vm3334, %v3322, %v3335
        %vm3337 = vcmp.eq.s32.totalorder %v3332, 2
        %v3338 = vxor.u32 %v3322, 2147483648
        %v3339 = vsel %vm3337, %v3338, %v3330
        %v3340 = vsel %vm3333, %v3336, %v3339
        %v3341 = vsel %vm3331, nan, %v3340
        %v3342 = vmul.f32 %v3187, %v3341
        %v3343 = vand.u32 2147483647, %v3185
        %vm3344 = vcmp.le.f32.partialorder %v3343, 0.7853982
        %vm3345 = vcmp.lt.s32.totalorder %v3185, 0
        %v3346 = vand.u32 %v3185, 2139095040
        %v3347 = vshrl.u32 %v3346, 23
        %v3348 = vsub.s32 %v3347, 127
        %v3349 = vand.u32 2147483647, %v3185
        %v3350 = vand.u32 %v3349, 8388607
        %v3351 = vor.u32 %v3350, 8388608
        %v3352 = vsub.s32 0, %v3351
        %v3353 = vadd.s32 %v3348, 1
        %vm3354 = vcmp.gt.s32.totalorder %v3353, 0
        %v3355 = vsel %vm3354, %v3353, 0
        %v3356 = vshrl.u32 %v3355, 5
        %v3357 = vand.u32 %v3355, 31
        %v3358 = vsub.s32 32, %v3357
        %v3359 = vshrl.u32 683565275, %v3358
        %v3360 = vshll.u32 683565275, %v3357
        %v3361 = vshrl.u32 2475754826, %v3358
        %v3362 = vor.u32 %v3360, %v3361
        %v3363 = vshll.u32 2475754826, %v3357
        %v3364 = vshrl.u32 2131351028, %v3358
        %v3365 = vor.u32 %v3363, %v3364
        %v3366 = vshll.u32 2131351028, %v3357
        %v3367 = vshrl.u32 2102212464, %v3358
        %v3368 = vor.u32 %v3366, %v3367
        %v3369 = vshll.u32 2102212464, %v3357
        %v3370 = vshrl.u32 920167782, %v3358
        %v3371 = vor.u32 %v3369, %v3370
        %v3372 = vshll.u32 920167782, %v3357
        %v3373 = vshrl.u32 1326507024, %v3358
        %v3374 = vor.u32 %v3372, %v3373
        %vm3375 = vcmp.lt.s32.totalorder %v3356, 1
        %vm3376 = vcmp.lt.s32.totalorder %v3356, 2
        %vm3377 = vcmp.lt.s32.totalorder %v3356, 3
        %vm3378 = vcmp.lt.s32.totalorder %v3356, 4
        %v3379 = vsel %vm3375, %v3359, %v3362
        %v3380 = vsel %vm3378, %v3368, 2102212464
        %v3381 = vsel %vm3377, %v3365, %v3380
        %v3382 = vsel %vm3376, %v3379, %v3381
        %v3383 = vsel %vm3375, %v3362, %v3365
        %v3384 = vsel %vm3378, %v3371, 920167782
        %v3385 = vsel %vm3377, %v3368, %v3384
        %v3386 = vsel %vm3376, %v3383, %v3385
        %v3387 = vsel %vm3375, %v3365, %v3368
        %v3388 = vsel %vm3378, %v3374, 1326507024
        %v3389 = vsel %vm3377, %v3371, %v3388
        %v3390 = vsel %vm3376, %v3387, %v3389
        %v3391 = vshll.u32 %v3351, 8
        %v3392 = vand.u32 %v3391, 65535
        %v3393 = vshrl.u32 %v3391, 16
        %v3394 = vand.u32 %v3390, 65535
        %v3395 = vshrl.u32 %v3390, 16
        %v3396 = vmul.u32 %v3392, %v3394
        %v3397 = vmul.u32 %v3392, %v3395
        %v3398 = vmul.u32 %v3393, %v3394
        %v3399 = vmul.u32 %v3393, %v3395
        %v3400 = vshll.u32 %v3397, 16
        %v3401 = vshrl.u32 %v3397, 16
        %v3402 = vshll.u32 %v3398, 16
        %v3403 = vshrl.u32 %v3398, 16
        %vm3404 = vc.u32 %v3396, %v3400
        %v3405 = vsel %vm3404, 1, 0
        %v3406 = vadd.s32 %v3396, %v3400
        %v3407 = vadd.s32 %v3399, %v3405
        %vm3408 = vc.u32 %v3406, %v3402
        %v3409 = vsel %vm3408, 1, 0
        %v3410 = vadd.s32 %v3406, %v3402
        %v3411 = vadd.s32 %v3407, %v3409
        %v3412 = vadd.s32 %v3411, %v3401
        %v3413 = vadd.s32 %v3412, %v3403
        %v3414 = vand.u32 %v3391, 65535
        %v3415 = vshrl.u32 %v3391, 16
        %v3416 = vand.u32 %v3386, 65535
        %v3417 = vshrl.u32 %v3386, 16
        %v3418 = vmul.u32 %v3414, %v3416
        %v3419 = vmul.u32 %v3414, %v3417
        %v3420 = vmul.u32 %v3415, %v3416
        %v3421 = vmul.u32 %v3415, %v3417
        %v3422 = vshll.u32 %v3419, 16
        %v3423 = vshrl.u32 %v3419, 16
        %v3424 = vshll.u32 %v3420, 16
        %v3425 = vshrl.u32 %v3420, 16
        %vm3426 = vc.u32 %v3418, %v3422
        %v3427 = vsel %vm3426, 1, 0
        %v3428 = vadd.s32 %v3418, %v3422
        %v3429 = vadd.s32 %v3421, %v3427
        %vm3430 = vc.u32 %v3428, %v3424
        %v3431 = vsel %vm3430, 1, 0
        %v3432 = vadd.s32 %v3428, %v3424
        %v3433 = vadd.s32 %v3429, %v3431
        %v3434 = vadd.s32 %v3433, %v3423
        %v3435 = vadd.s32 %v3434, %v3425
        %v3436 = vmul.u32 %v3391, %v3382
        %v3437 = vadd.s32 %v3413, %v3432
        %vm3438 = vc.u32 %v3413, %v3432
        %v3439 = vadd.s32 %v3435, 1
        %v3440 = vsel %vm3438, %v3439, %v3435
        %v3441 = vadd.s32 %v3436, %v3440
        %v3442 = vadd.s32 %v3441, 536870912
        %v3443 = vshrl.u32 %v3442, 30
        %v3444 = vshll.u32 %v3443, 30
        %v3445 = vsub.s32 %v3441, %v3444
        %vm3446 = vcmp.lt.s32.totalorder %v3445, 0
        %v3447 = vsub.s32 0, %v3445
        %v3448 = vsel %vm3446, %v3447, %v3445
        %v3449 = vclz %v3448
        %v3450 = vsub.s32 %v3449, 2
        %vm3451 = vcmp.gt.s32.totalorder 0, %v3450
        %v3452 = vsel %vm3451, 0, %v3450
        %v3453 = vsub.s32 32, %v3452
        %v3454 = vshll.u32 %v3445, %v3452
        %v3455 = vshrl.u32 %v3437, %v3453
        %v3456 = vor.u32 %v3454, %v3455
        %v3457 = vsub.s32 4294967266, %v3452
        %v3458 = vadd.s32 %v3457, 127
        %v3459 = vshll.u32 %v3458, 23
        %v3460 = vor.u32 4788187, %v3459
        %v3461 = vand.u32 2147483647, %v3460
        %v3463 = vcvt.s32.f32 %v3456
        %v3464 = vmul.f32 %v3463, %v3461
        %v3465 = vxor.u32 %v3464, 2147483648
        %v3466 = vsel %vm3345, %v3465, %v3464
        %v3467 = vsub.s32 4, %v3443
        %v3468 = vsel %vm3345, %v3467, %v3443
        %v3469 = vsel %vm3344, %v3185, %v3466
        %v3470 = vsel %vm3344, 0, %v3468
        %v3471 = vmul.f32 %v3469, %v3469
        %v3472 = vmul.f32 %v3471, -0.001358992
        %v3473 = vadd.f32 %v3472, 0.041655596
        %v3474 = vmul.f32 %v3471, %v3473
        %v3475 = vadd.f32 %v3474, -0.4999988
        %v3476 = vmul.f32 %v3471, %v3475
        %v3477 = vadd.f32 1.0, %v3476
        %v3478 = vmul.f32 %v3469, %v3469
        %v3479 = vmul.f32 %v3478, -0.00019511016
        %v3480 = vadd.f32 %v3479, 0.008332121
        %v3481 = vmul.f32 %v3478, %v3480
        %v3482 = vadd.f32 %v3481, -0.16666654
        %v3483 = vmul.f32 %v3478, %v3482
        %v3484 = vadd.f32 %v3483, 1.0
        %v3485 = vmul.f32 %v3484, %v3469
        %vm3486 = vweird.f32 %v3185
        %v3487 = vadd.s32 %v3470, 3
        %v3488 = vand.u32 %v3487, 3
        %vm3489 = vcmp.lt.s32.totalorder %v3488, 2
        %vm3490 = vcmp.eq.s32.totalorder %v3488, 0
        %v3491 = vxor.u32 %v3485, 2147483648
        %v3492 = vsel %vm3490, %v3477, %v3491
        %vm3493 = vcmp.eq.s32.totalorder %v3488, 2
        %v3494 = vxor.u32 %v3477, 2147483648
        %v3495 = vsel %vm3493, %v3494, %v3485
        %v3496 = vsel %vm3489, %v3492, %v3495
        %v3497 = vsel %vm3486, nan, %v3496
        %v3498 = vmul.f32 %v3187, %v3497
        %v3499 = vmul.f32 %v3178, %v3178
        %v3500 = vmul.f32 %v3180, %v3180
        %v3501 = vadd.f32 %v3499, %v3500
        %v3502 = vrcp.pop %v3501
        %v3503 = vmul.f32 %v3501, %v3502
        %v3504 = vsub.f32 2.0, %v3503
        %v3505 = vmul.f32 %v3502, %v3504
        %v3506 = vsub.f32 %v3342, 1.0
        %v3507 = vmul.f32 %v3506, %v3178
        %v3508 = vmul.f32 %v3498, %v3180
        %v3509 = vadd.f32 %v3507, %v3508
        %v3510 = vmul.f32 %v3509, %v3505
        %v3511 = vmul.f32 %v3498, %v3178
        %v3512 = vmul.f32 %v3506, %v3180
        %v3513 = vsub.f32 %v3511, %v3512
        %v3514 = vmul.f32 %v3513, %v3505
        %s3515 = scalar_lea.vmem [#allocation3], 24
        %v3516 = vld [vmem:[%s3515] sm:$0xff]
        %s3517 = scalar_lea.vmem [#allocation5], 24
        %v3518 = vld [vmem:[%s3517] sm:$0xff]
        %v3519 = vmul.f32 %v3516, %v3510
        %v3520 = vmul.f32 %v3518, %v3514
        %v3521 = vsub.f32 %v3519, %v3520
        %v3522 = vmul.f32 %v3516, %v3514
        %v3523 = vmul.f32 %v3518, %v3510
        %v3524 = vadd.f32 %v3522, %v3523
        %v3525 = vmul.f32 %v3342, %v3342
        %v3526 = vmul.f32 %v3498, %v3498
        %v3527 = vsub.f32 %v3525, %v3526
        %v3528 = vmul.f32 %v3342, 2.0
        %v3529 = vmul.f32 %v3528, %v3498
        %v3530 = vmul.f32 %v3521, %v3342
        %v3531 = vmul.f32 %v3524, %v3498
        %v3532 = vsub.f32 %v3530, %v3531
        %v3533 = vmul.f32 %v3521, %v3498
        %v3534 = vmul.f32 %v3524, %v3342
        %v3535 = vadd.f32 %v3533, %v3534
        %v3536 = vsel %vm957, %v3521, 0.0
        %v3537 = vrot.slane %v3536, 4
        %v3538 = vadd.f32 %v3536, %v3537
        %v3539 = vrot.slane %v3538, 2
        %v3540 = vadd.f32 %v3538, %v3539
        %v3541 = vrot.slane %v3540, 1
        %v3542 = vadd.f32 %v3540, %v3541
        %v3543 = vmul.f32 %v3542, 2.0
        %v3544 = vmul.f32 %v3168, %v3543
        %v3545 = vmul.f32 %v3169, %v3543
        %v3546 = vsel %vm957, %v3532, 0.0
        %v3547 = vrot.slane %v3546, 4
        %v3548 = vadd.f32 %v3546, %v3547
        %v3549 = vrot.slane %v3548, 2
        %v3550 = vadd.f32 %v3548, %v3549
        %v3551 = vrot.slane %v3550, 1
        %v3552 = vadd.f32 %v3550, %v3551
        %v3553 = vmul.f32 %v3552, 2.0
        %v3554 = vmul.f32 %v3532, %v3527
        %v3555 = vmul.f32 %v3535, %v3529
        %v3556 = vsub.f32 %v3554, %v3555
        %v3557 = vmul.f32 %v3532, %v3529
        %v3558 = vmul.f32 %v3535, %v3527
        %v3559 = vadd.f32 %v3557, %v3558
        %v3560 = vrot.slane %v3168, 7
        %v3561 = vrot.slane %v3169, 7
        %v3562 = vsel %vm984, %v3560, %v3561
        %v3563 = vsel %vm984, %v3561, %v3560
        %v3564 = vsel %vm566, %v3563, 0.0
        %v3565 = vsel %vm567, %v3562, 0.0
        %v3566 = vmul.f32 %v3553, %v3564
        %v3567 = vmul.f32 %v3553, %v3565
        %v3568 = vadd.f32 %v3566, 0.0
        %v3569 = vadd.f32 %v3567, 0.0
        %v3570 = vmul.f32 %v3521, %v3527
        %v3571 = vmul.f32 %v3524, %v3529
        %v3572 = vsub.f32 %v3570, %v3571
        %v3573 = vmul.f32 %v3521, %v3529
        %v3574 = vmul.f32 %v3524, %v3527
        %v3575 = vadd.f32 %v3573, %v3574
        %v3576 = vsel %vm957, %v3572, 0.0
        %v3577 = vrot.slane %v3576, 4
        %v3578 = vadd.f32 %v3576, %v3577
        %v3579 = vrot.slane %v3578, 2
        %v3580 = vadd.f32 %v3578, %v3579
        %v3581 = vrot.slane %v3580, 1
        %v3582 = vadd.f32 %v3580, %v3581
        %v3583 = vmul.f32 %v3582, 2.0
        %v3584 = vrot.slane %v3168, 6
        %v3585 = vrot.slane %v3169, 6
        %v3586 = vsel %vm1009, %v3584, %v3585
        %v3587 = vsel %vm1009, %v3585, %v3584
        %v3588 = vsel %vm568, %v3587, 0.0
        %v3589 = vsel %vm569, %v3586, 0.0
        %v3590 = vmul.f32 %v3583, %v3588
        %v3591 = vmul.f32 %v3583, %v3589
        %v3592 = vadd.f32 %v3544, %v3590
        %v3593 = vadd.f32 %v3545, %v3591
        %v3594 = vsel %vm957, %v3556, 0.0
        %v3595 = vrot.slane %v3594, 4
        %v3596 = vadd.f32 %v3594, %v3595
        %v3597 = vrot.slane %v3596, 2
        %v3598 = vadd.f32 %v3596, %v3597
        %v3599 = vrot.slane %v3598, 1
        %v3600 = vadd.f32 %v3598, %v3599
        %v3601 = vmul.f32 %v3600, 2.0
        %v3602 = vmul.f32 %v3556, %v3527
        %v3603 = vmul.f32 %v3559, %v3529
        %v3604 = vsub.f32 %v3602, %v3603
        %v3605 = vmul.f32 %v3556, %v3529
        %v3606 = vmul.f32 %v3559, %v3527
        %v3607 = vadd.f32 %v3605, %v3606
        %v3608 = vrot.slane %v3168, 5
        %v3609 = vrot.slane %v3169, 5
        %v3610 = vsel %vm1034, %v3608, %v3609
        %v3611 = vsel %vm1034, %v3609, %v3608
        %v3612 = vsel %vm570, %v3611, 0.0
        %v3613 = vsel %vm571, %v3610, 0.0
        %v3614 = vmul.f32 %v3601, %v3612
        %v3615 = vmul.f32 %v3601, %v3613
        %v3616 = vadd.f32 %v3568, %v3614
        %v3617 = vadd.f32 %v3569, %v3615
        %v3618 = vmul.f32 %v3572, %v3527
        %v3619 = vmul.f32 %v3575, %v3529
        %v3620 = vsub.f32 %v3618, %v3619
        %v3621 = vmul.f32 %v3572, %v3529
        %v3622 = vmul.f32 %v3575, %v3527
        %v3623 = vadd.f32 %v3621, %v3622
        %v3624 = vsel %vm957, %v3620, 0.0
        %v3625 = vrot.slane %v3624, 4
        %v3626 = vadd.f32 %v3624, %v3625
        %v3627 = vrot.slane %v3626, 2
        %v3628 = vadd.f32 %v3626, %v3627
        %v3629 = vrot.slane %v3628, 1
        %v3630 = vadd.f32 %v3628, %v3629
        %v3631 = vmul.f32 %v3630, 2.0
        %v3632 = vrot.slane %v3168, 4
        %v3633 = vrot.slane %v3169, 4
        %v3634 = vsel %vm1059, %v3632, %v3633
        %v3635 = vsel %vm1059, %v3633, %v3632
        %v3636 = vsel %vm572, %v3635, 0.0
        %v3637 = vsel %vm573, %v3634, 0.0
        %v3638 = vmul.f32 %v3631, %v3636
        %v3639 = vmul.f32 %v3631, %v3637
        %v3640 = vadd.f32 %v3592, %v3638
        %v3641 = vadd.f32 %v3593, %v3639
        %v3642 = vsel %vm957, %v3604, 0.0
        %v3643 = vrot.slane %v3642, 4
        %v3644 = vadd.f32 %v3642, %v3643
        %v3645 = vrot.slane %v3644, 2
        %v3646 = vadd.f32 %v3644, %v3645
        %v3647 = vrot.slane %v3646, 1
        %v3648 = vadd.f32 %v3646, %v3647
        %v3649 = vmul.f32 %v3648, 2.0
        %v3650 = vmul.f32 %v3604, %v3527
        %v3651 = vmul.f32 %v3607, %v3529
        %v3652 = vsub.f32 %v3650, %v3651
        %v3653 = vmul.f32 %v3604, %v3529
        %v3654 = vmul.f32 %v3607, %v3527
        %v3655 = vadd.f32 %v3653, %v3654
        %v3656 = vrot.slane %v3168, 3
        %v3657 = vrot.slane %v3169, 3
        %v3658 = vsel %vm1084, %v3656, %v3657
        %v3659 = vsel %vm1084, %v3657, %v3656
        %v3660 = vsel %vm574, %v3659, 0.0
        %v3661 = vsel %vm575, %v3658, 0.0
        %v3662 = vmul.f32 %v3649, %v3660
        %v3663 = vmul.f32 %v3649, %v3661
        %v3664 = vadd.f32 %v3616, %v3662
        %v3665 = vadd.f32 %v3617, %v3663
        %v3666 = vmul.f32 %v3620, %v3527
        %v3667 = vmul.f32 %v3623, %v3529
        %v3668 = vsub.f32 %v3666, %v3667
        %v3669 = vmul.f32 %v3620, %v3529
        %v3670 = vmul.f32 %v3623, %v3527
        %v3671 = vadd.f32 %v3669, %v3670
        %v3672 = vsel %vm957, %v3668, 0.0
        %v3673 = vrot.slane %v3672, 4
        %v3674 = vadd.f32 %v3672, %v3673
        %v3675 = vrot.slane %v3674, 2
        %v3676 = vadd.f32 %v3674, %v3675
        %v3677 = vrot.slane %v3676, 1
        %v3678 = vadd.f32 %v3676, %v3677
        %v3679 = vmul.f32 %v3678, 2.0
        %v3680 = vrot.slane %v3168, 2
        %v3681 = vrot.slane %v3169, 2
        %v3682 = vsel %vm1109, %v3680, %v3681
        %v3683 = vsel %vm1109, %v3681, %v3680
        %v3684 = vsel %vm576, %v3683, 0.0
        %v3685 = vsel %vm577, %v3682, 0.0
        %v3686 = vmul.f32 %v3679, %v3684
        %v3687 = vmul.f32 %v3679, %v3685
        %v3688 = vadd.f32 %v3640, %v3686
        %v3689 = vadd.f32 %v3641, %v3687
        %v3690 = vsel %vm957, %v3652, 0.0
        %v3691 = vrot.slane %v3690, 4
        %v3692 = vadd.f32 %v3690, %v3691
        %v3693 = vrot.slane %v3692, 2
        %v3694 = vadd.f32 %v3692, %v3693
        %v3695 = vrot.slane %v3694, 1
        %v3696 = vadd.f32 %v3694, %v3695
        %v3697 = vmul.f32 %v3696, 2.0
        %v3698 = vmul.f32 %v3652, %v3527
        %v3699 = vmul.f32 %v3655, %v3529
        %v3700 = vsub.f32 %v3698, %v3699
        %v3701 = vmul.f32 %v3652, %v3529
        %v3702 = vmul.f32 %v3655, %v3527
        %v3703 = vadd.f32 %v3701, %v3702
        %v3704 = vrot.slane %v3168, 1
        %v3705 = vrot.slane %v3169, 1
        %v3706 = vsel %vm1134, %v3704, %v3705
        %v3707 = vsel %vm1134, %v3705, %v3704
        %v3708 = vsel %vm578, %v3707, 0.0
        %v3709 = vsel %vm579, %v3706, 0.0
        %v3710 = vmul.f32 %v3697, %v3708
        %v3711 = vmul.f32 %v3697, %v3709
        %v3712 = vadd.f32 %v3664, %v3710
        %v3713 = vadd.f32 %v3665, %v3711
        %v3714 = vmul.f32 %v3668, %v3527
        %v3715 = vmul.f32 %v3671, %v3529
        %v3716 = vsub.f32 %v3714, %v3715
        %v3717 = vmul.f32 %v3668, %v3529
        %v3718 = vmul.f32 %v3671, %v3527
        %v3719 = vadd.f32 %v3717, %v3718
        %v3720 = vsel %vm957, %v3716, 0.0
        %v3721 = vrot.slane %v3720, 4
        %v3722 = vadd.f32 %v3720, %v3721
        %v3723 = vrot.slane %v3722, 2
        %v3724 = vadd.f32 %v3722, %v3723
        %v3725 = vrot.slane %v3724, 1
        %v3726 = vadd.f32 %v3724, %v3725
        %v3727 = vmul.f32 %v3726, 2.0
        %v3728 = vsel %vm580, %v3169, 0.0
        %v3729 = vsel %vm581, %v3168, 0.0
        %v3730 = vmul.f32 %v3727, %v3728
        %v3731 = vmul.f32 %v3727, %v3729
        %v3732 = vadd.f32 %v3688, %v3730
        %v3733 = vadd.f32 %v3689, %v3731
        %v3734 = vsel %vm957, %v3700, 0.0
        %v3735 = vrot.slane %v3734, 4
        %v3736 = vadd.f32 %v3734, %v3735
        %v3737 = vrot.slane %v3736, 2
        %v3738 = vadd.f32 %v3736, %v3737
        %v3739 = vrot.slane %v3738, 1
        %v3740 = vadd.f32 %v3738, %v3739
        %v3741 = vmul.f32 %v3740, 2.0
        %v3742 = vmul.f32 %v3700, %v3527
        %v3743 = vmul.f32 %v3703, %v3529
        %v3744 = vsub.f32 %v3742, %v3743
        %v3745 = vmul.f32 %v3700, %v3529
        %v3746 = vmul.f32 %v3703, %v3527
        %v3747 = vadd.f32 %v3745, %v3746
        %v3748 = vsel %vm582, %v3562, 0.0
        %v3749 = vsel %vm583, %v3563, 0.0
        %v3750 = vmul.f32 %v3741, %v3748
        %v3751 = vmul.f32 %v3741, %v3749
        %v3752 = vadd.f32 %v3712, %v3750
        %v3753 = vadd.f32 %v3713, %v3751
        %v3754 = vmul.f32 %v3716, %v3527
        %v3755 = vmul.f32 %v3719, %v3529
        %v3756 = vsub.f32 %v3754, %v3755
        %v3757 = vmul.f32 %v3716, %v3529
        %v3758 = vmul.f32 %v3719, %v3527
        %v3759 = vadd.f32 %v3757, %v3758
        %v3760 = vsel %vm957, %v3756, 0.0
        %v3761 = vrot.slane %v3760, 4
        %v3762 = vadd.f32 %v3760, %v3761
        %v3763 = vrot.slane %v3762, 2
        %v3764 = vadd.f32 %v3762, %v3763
        %v3765 = vrot.slane %v3764, 1
        %v3766 = vadd.f32 %v3764, %v3765
        %v3767 = vmul.f32 %v3766, 2.0
        %v3768 = vsel %vm584, %v3586, 0.0
        %v3769 = vsel %vm585, %v3587, 0.0
        %v3770 = vmul.f32 %v3767, %v3768
        %v3771 = vmul.f32 %v3767, %v3769
        %v3772 = vadd.f32 %v3732, %v3770
        %v3773 = vadd.f32 %v3733, %v3771
        %v3774 = vsel %vm957, %v3744, 0.0
        %v3775 = vrot.slane %v3774, 4
        %v3776 = vadd.f32 %v3774, %v3775
        %v3777 = vrot.slane %v3776, 2
        %v3778 = vadd.f32 %v3776, %v3777
        %v3779 = vrot.slane %v3778, 1
        %v3780 = vadd.f32 %v3778, %v3779
        %v3781 = vmul.f32 %v3780, 2.0
        %v3782 = vmul.f32 %v3744, %v3527
        %v3783 = vmul.f32 %v3747, %v3529
        %v3784 = vsub.f32 %v3782, %v3783
        %v3785 = vmul.f32 %v3744, %v3529
        %v3786 = vmul.f32 %v3747, %v3527
        %v3787 = vadd.f32 %v3785, %v3786
        %v3788 = vsel %vm586, %v3610, 0.0
        %v3789 = vsel %vm587, %v3611, 0.0
        %v3790 = vmul.f32 %v3781, %v3788
        %v3791 = vmul.f32 %v3781, %v3789
        %v3792 = vadd.f32 %v3752, %v3790
        %v3793 = vadd.f32 %v3753, %v3791
        %v3794 = vmul.f32 %v3756, %v3527
        %v3795 = vmul.f32 %v3759, %v3529
        %v3796 = vsub.f32 %v3794, %v3795
        %v3797 = vmul.f32 %v3756, %v3529
        %v3798 = vmul.f32 %v3759, %v3527
        %v3799 = vadd.f32 %v3797, %v3798
        %v3800 = vsel %vm957, %v3796, 0.0
        %v3801 = vrot.slane %v3800, 4
        %v3802 = vadd.f32 %v3800, %v3801
        %v3803 = vrot.slane %v3802, 2
        %v3804 = vadd.f32 %v3802, %v3803
        %v3805 = vrot.slane %v3804, 1
        %v3806 = vadd.f32 %v3804, %v3805
        %v3807 = vmul.f32 %v3806, 2.0
        %v3808 = vsel %vm588, %v3634, 0.0
        %v3809 = vsel %vm589, %v3635, 0.0
        %v3810 = vmul.f32 %v3807, %v3808
        %v3811 = vmul.f32 %v3807, %v3809
        %v3812 = vadd.f32 %v3772, %v3810
        %v3813 = vadd.f32 %v3773, %v3811
        %v3814 = vsel %vm957, %v3784, 0.0
        %v3815 = vrot.slane %v3814, 4
        %v3816 = vadd.f32 %v3814, %v3815
        %v3817 = vrot.slane %v3816, 2
        %v3818 = vadd.f32 %v3816, %v3817
        %v3819 = vrot.slane %v3818, 1
        %v3820 = vadd.f32 %v3818, %v3819
        %v3821 = vmul.f32 %v3820, 2.0
        %v3822 = vmul.f32 %v3784, %v3527
        %v3823 = vmul.f32 %v3787, %v3529
        %v3824 = vsub.f32 %v3822, %v3823
        %v3825 = vsel %vm590, %v3658, 0.0
        %v3826 = vsel %vm591, %v3659, 0.0
        %v3827 = vmul.f32 %v3821, %v3825
        %v3828 = vmul.f32 %v3821, %v3826
        %v3829 = vadd.f32 %v3792, %v3827
        %v3830 = vadd.f32 %v3793, %v3828
        %v3831 = vmul.f32 %v3796, %v3527
        %v3832 = vmul.f32 %v3799, %v3529
        %v3833 = vsub.f32 %v3831, %v3832
        %v3834 = vsel %vm957, %v3833, 0.0
        %v3835 = vrot.slane %v3834, 4
        %v3836 = vadd.f32 %v3834, %v3835
        %v3837 = vrot.slane %v3836, 2
        %v3838 = vadd.f32 %v3836, %v3837
        %v3839 = vrot.slane %v3838, 1
        %v3840 = vadd.f32 %v3838, %v3839
        %v3841 = vmul.f32 %v3840, 2.0
        %v3842 = vsel %vm592, %v3682, 0.0
        %v3843 = vsel %vm593, %v3683, 0.0
        %v3844 = vmul.f32 %v3841, %v3842
        %v3845 = vmul.f32 %v3841, %v3843
        %v3846 = vadd.f32 %v3812, %v3844
        %v3847 = vadd.f32 %v3813, %v3845
        %v3848 = vsel %vm957, %v3824, 0.0
        %v3849 = vrot.slane %v3848, 4
        %v3850 = vadd.f32 %v3848, %v3849
        %v3851 = vrot.slane %v3850, 2
        %v3852 = vadd.f32 %v3850, %v3851
        %v3853 = vrot.slane %v3852, 1
        %v3854 = vadd.f32 %v3852, %v3853
        %v3855 = vmul.f32 %v3854, 2.0
        %v3856 = vsel %vm594, %v3706, 0.0
        %v3857 = vsel %vm595, %v3707, 0.0
        %v3858 = vmul.f32 %v3855, %v3856
        %v3859 = vmul.f32 %v3855, %v3857
        %v3860 = vadd.f32 %v3829, %v3858
        %v3861 = vadd.f32 %v3830, %v3859
        %v3862 = vadd.f32 %v3846, %v3860
        %v3863 = vadd.f32 %v3847, %v3861
        %s3864 = scalar_lea.vmem [#allocation7], 3
        %v3865 = vld [vmem:[%s3864] sm:$0x1]
        %v3867 = vperm.slane %v3865, 0
        %v3869 = vmul.f32 %v3168, %v3867
        %v3870 = vmul.f32 %v3169, %v3867
        %v3871 = vadd.f32 %v3862, %v3869
        %v3872 = vadd.f32 %v3863, %v3870
        %v3873 = vmul.f32 %v3871, 0.5
        %v3874 = vmul.f32 %v3872, 0.5
        %v3875 = vmul.f32 %v3871, 0.70710677
        %v3876 = vmul.f32 %v3872, 0.70710677
        %v3877 = vmax.f32 %v3875, -4.0
        %v3878 = vmax.f32 %v3876, -4.0
        %v3879 = vmin.f32 %v3877, 4.0
        %v3880 = vmin.f32 %v3878, 4.0
        %v3881 = vmul.f32 %v3879, %v3879
        %v3882 = vmul.f32 %v3880, %v3880
        %v3883 = vmul.f32 %v3881, -2.7261424e-10
        %v3884 = vmul.f32 %v3882, -2.7261424e-10
        %v3885 = vadd.f32 %v3883, 2.7706815e-08
        %v3886 = vadd.f32 %v3884, 2.7706815e-08
        %v3887 = vmul.f32 %v3885, %v3881
        %v3888 = vmul.f32 %v3886, %v3882
        %v3889 = vadd.f32 %v3887, -2.101024e-06
        %v3890 = vadd.f32 %v3888, -2.101024e-06
        %v3891 = vmul.f32 %v3889, %v3881
        %v3892 = vmul.f32 %v3890, %v3882
        %v3893 = vadd.f32 %v3891, -5.6925062e-05
        %v3894 = vadd.f32 %v3892, -5.6925062e-05
        %v3895 = vmul.f32 %v3893, %v3881
        %v3896 = vmul.f32 %v3894, %v3882
        %v3897 = vadd.f32 %v3895, -0.00073499064
        %v3898 = vadd.f32 %v3896, -0.00073499064
        %v3899 = vmul.f32 %v3897, %v3881
        %v3900 = vmul.f32 %v3898, %v3882
        %v3901 = vadd.f32 %v3899, -0.0029546
        %v3902 = vadd.f32 %v3900, -0.0029546
        %v3903 = vmul.f32 %v3901, %v3881
        %v3904 = vmul.f32 %v3902, %v3882
        %v3905 = vadd.f32 %v3903, -0.016096033
        %v3906 = vadd.f32 %v3904, -0.016096033
        %v3907 = vmul.f32 %v3905, %v3879
        %v3908 = vmul.f32 %v3906, %v3880
        %v3909 = vmul.f32 %v3881, -1.45660715e-05
        %v3910 = vmul.f32 %v3882, -1.45660715e-05
        %v3911 = vadd.f32 %v3909, -0.00021337405
        %v3912 = vadd.f32 %v3910, -0.00021337405
        %v3913 = vmul.f32 %v3911, %v3881
        %v3914 = vmul.f32 %v3912, %v3882
        %v3915 = vadd.f32 %v3913, -0.001682827
        %v3916 = vadd.f32 %v3914, -0.001682827
        %v3917 = vmul.f32 %v3915, %v3881
        %v3918 = vmul.f32 %v3916, %v3882
        %v3919 = vadd.f32 %v3917, -0.0073733293
        %v3920 = vadd.f32 %v3918, -0.0073733293
        %v3921 = vmul.f32 %v3919, %v3881
        %v3922 = vmul.f32 %v3920, %v3882
        %v3923 = vadd.f32 %v3921, -0.014264739
        %v3924 = vadd.f32 %v3922, -0.014264739
        %v3925 = vrcp.pop %v3923
        %v3926 = vrcp.pop %v3924
        %v3927 = vmul.f32 %v3923, %v3925
        %v3928 = vmul.f32 %v3924, %v3926
        %v3929 = vsub.f32 2.0, %v3927
        %v3930 = vsub.f32 2.0, %v3928
        %v3931 = vmul.f32 %v3925, %v3929
        %v3932 = vmul.f32 %v3926, %v3930
        %v3933 = vmul.f32 %v3907, %v3931
        %v3934 = vmul.f32 %v3908, %v3932
        %v3935 = vadd.f32 %v3933, 1.0
        %v3936 = vadd.f32 %v3934, 1.0
        %v3937 = vmul.f32 %v3873, %v3935
        %v3938 = vmul.f32 %v3874, %v3936
        %s3939 = scalar_lea.vmem [#allocation8], 96
        %v3940 = vld [vmem:[%s3939] sm:$0xff]
        %v3941 = vld [vmem:[%s3939 + $0x8] sm:$0xff]
        %v3942 = vld [vmem:[%s3939 + $0x10] sm:$0xff]
        %v3943 = vld [vmem:[%s3939 + $0x18] sm:$0xff]
        %s3944 = scalar_lea.vmem [#allocation10], 3
        %v3945 = vld [vmem:[%s3944] sm:$0x1]
        %v3947 = vperm.slane %v3945, 0
        %v3950 = vsel %vm957, %v3937, 0
        %v3953 = vsel %vm957, %v3938, 0
        %3955 = vmatpush.msra.mxu0 0.0
        %3956 = vmatpush.msra.mxu0 0.0
        %3957 = vmatpush.msra.mxu0 0.0
        %3958 = vmatpush.msra.mxu0 0.0
        %3959 = vmatpush.msra.mxu0 0.0
        %3960 = vmatpush.msra.mxu0 0.0
        %3961 = vmatpush.msra.mxu0 0.0
        %3962 = vmatpush.msra.mxu0 0.0
        %3963 = vmatpush.msra.mxu0 0.0
        %3964 = vmatpush.msra.mxu0 0.0
        %3965 = vmatpush.msra.mxu0 0.0
        %3966 = vmatpush.msra.mxu0 0.0
        %3967 = vmatpush.msra.mxu0 %v3943
        %3968 = vmatpush.msra.mxu0 %v3942
        %3969 = vmatpush.msra.mxu0 %v3941
        %3970 = vmatpush.msra.mxu0 %v3940
        %3971 = vmatmul.f32.gmra.mxu0 %v3950
        %v3972 = vpop.f32.mrf.mxu0
        %3973 = vmatmul.f32.gmra.mxu0 %v3953
        %v3974 = vpop.f32.mrf.mxu0
        %v3975 = vadd.f32 %v3947, %v3974
        %3976 = vdwg.mxu0
        %v3977 = vxor.u32 %v3975, 2147483648
        %v3978 = vmul.f32 %v3977, 1.442695
        %v3979 = vpow.pop %v3978
        %v3980 = vadd.f32 %v3979, 1.0
        %v3981 = vrcp.pop %v3980
        %v3982 = vmul.f32 %v3980, %v3981
        %v3983 = vsub.f32 1.0, %v3982
        %v3984 = vmul.f32 %v3981, %v3983
        %v3985 = vadd.f32 %v3981, %v3984
        %vm3986 = vweird.f32 %v3980
        %vm3987 = vweird.f32 %v3981
        %vm3988 = vmor %vm3986, %vm3987
        %v3989 = vsel %vm3988, %v3981, %v3985
        %v3990 = vand.u32 2147483647, %v3980
        %vm3991 = vcmp.eq.f32.partialorder %v3990, 8.507059e+37
        %v3992 = vand.u32 %v3980, 2147483648
        %v3993 = vor.u32 1.1754944e-38, %v3992
        %v3994 = vsel %vm3991, %v3993, %v3989
        %v3995 = vmul.f32 1.0, %v3994
        %3997 = vrot.lane.b32.xlu0 %v3995, 96
        %v3998 = vpop.permute.xlu0 %3997
        %v4000 = vmul.f32 %v3975, %v3998
        %v4001 = vadd.f32 %v4000, %v3169
        %v4002 = vld [vmem:[%s11] sm:$0xff]
        %v4003 = vld [vmem:[%s11 + $0x8] sm:$0xff]
        %v4004 = vld [vmem:[%s11 + $0x10] sm:$0xff]
        %v4005 = vld [vmem:[%s11 + $0x18] sm:$0xff]
        %v4006 = vld [vmem:[#allocation2] sm:$0x1]
        %v4008 = vrot.slane %v4001, 7
        %v4009 = vsel %vm957, %v4008, 0
        %4011 = vmatpush.msra.mxu0 0.0
        %4012 = vmatpush.msra.mxu0 0.0
        %4013 = vmatpush.msra.mxu0 0.0
        %4014 = vmatpush.msra.mxu0 0.0
        %4015 = vmatpush.msra.mxu0 0.0
        %4016 = vmatpush.msra.mxu0 0.0
        %4017 = vmatpush.msra.mxu0 0.0
        %4018 = vmatpush.msra.mxu0 0.0
        %4019 = vmatpush.msra.mxu0 0.0
        %4020 = vmatpush.msra.mxu0 0.0
        %4021 = vmatpush.msra.mxu0 0.0
        %4022 = vmatpush.msra.mxu0 0.0
        %4023 = vmatpush.msra.mxu0 %v4005
        %4024 = vmatpush.msra.mxu0 %v4004
        %4025 = vmatpush.msra.mxu0 %v4003
        %4026 = vmatpush.msra.mxu0 %v4002
        %4027 = vmatmul.f32.gmra.mxu0 %v4009
        %v4028 = vpop.f32.mrf.mxu0
        %v4029 = vadd.f32 %v4006, %v4028
        %4030 = vdwg.mxu0
        %vm4031 = vcmask 0
        %4032 = vst.msk [vmem:[%s521] sm:$0x1] %vm4031, %v4029
        %p4033 = scmp.lt.s32.totalorder %s29, 1
        %s4034 = scalar_select %p4033, %s29, 1
        %s4035 = scalar_lea.vmem %s13, %s4034
        // Predicated region
        $region93: #{model_forward.1} parent=71 // pred_check
          %p4036 = pneg %p325
        $region94: #{model_forward.1} parent=71 // pred_check_branch
          %4038 = sbr.rel (%p4036) target = $region96
        $region95: #{model_forward.1} parent=71 // pred_region
          _
        $region96: #{model_forward.1} parent=71 // pred_fallthru
          _
      $region72: #{model_forward.1} parent=5 // pred_fallthru
        _
      %p4039 = scmp.le.s32.totalorder 2, %s24
      // Predicated region
      $region97: #{model_forward.1} parent=5 // pred_check
        %p4040 = pneg %p4039
      $region98: #{model_forward.1} parent=5 // pred_check_branch
        %4042 = sbr.rel (%p4040) target = $region100
      $region99: #{model_forward.1} parent=5 // pred_region
        %s4043 = ssub.s32 %s24, 2
        // Predicated region
        $region101: #{model_forward.1} parent=99 // pred_check
          %p4044 = pneg %p331
        $region102: #{model_forward.1} parent=99 // pred_check_branch
          %4046 = sbr.rel (%p4044) target = $region104
        $region103: #{model_forward.1} parent=99 // pred_region
          %p4047 = scmp.lt.s32.totalorder %s30, 1
          %s4048 = scalar_select %p4047, %s30, 1
          %s4049 = scalar_lea.vmem %s13, %s4048
        $region104: #{model_forward.1} parent=99 // pred_fallthru
          _
      $region100: #{model_forward.1} parent=5 // pred_fallthru
        _
    $region6: #{model_forward.1} parent=1 // loop_footer
      %s28 = sadd.s32 1, %s24
    $region7: #{model_forward.1} parent=1 // loop_footer_branch
      %23 = sbr.rel target = $region3
    $region8: #{model_forward.1} parent=1 // loop_exit
      _
    %4050 = vsyncpa [#allocation4], 1
    %s4051 = scalar_lea.sflag [#allocation4], 1
    %4052 = vsyncpa %s4051, 1
    %4053 = vsyncpa [#allocation6], 1
    %4054 = vsyncpa [#allocation9], 1

</llo_original>
